<compile_context>
chip_gen: v6e
topology: v6e:2x2x1
jax: 0.10.0
libtpu: 0.0.40
codegen_flags: <defaults>
</compile_context>

<pallas_src>
import jax
import jax.numpy as jnp
from jax import lax
from jax.experimental import pallas as pl
from jax.experimental.pallas import tpu as pltpu

# --- small, structure-consistent dims ---
SEQ = 8      # sequence length
EMB = 32     # embedding_dim (small stand-in for 300)
HID = 128    # HIDDEN_LAYER_SIZE
PROJ = 64    # PROJECTION_SIZE
G = 4 * HID  # gate width per direction
G2 = 2 * G   # fwd || bwd gate width


def elmo_kernel(x_ref, wr_ref, br_ref,
                wih1_ref, b1_ref, whh1_ref,
                wih2_ref, b2_ref,
                whh2_hbm_ref, mix_ref,
                emb_ref,
                whh2_vmem, dma_sem):
    H, T = HID, SEQ
    f32, bf16 = jnp.float32, jnp.bfloat16

    # Overlap the layer-2 recurrent-weight DMA (HBM -> VMEM) with the reshape /
    # layer-1 work; wait only right before the layer-2 recurrence.  (wih2_eff /
    # b2 are needed during layer 1 for the pipelined projection, so they stay as
    # normal auto-DMA'd VMEM inputs.)
    whh2_cp = pltpu.make_async_copy(whh2_hbm_ref, whh2_vmem, dma_sem)
    whh2_cp.start()

    # 0) reshape: xr = x @ Wr + br  ->  [T, H]
    xr = jnp.dot(x_ref[...], wr_ref[...],
                 preferred_element_type=f32) + br_ref[...]

    # 1) hoisted layer-1 input-side gate projections for both directions:
    #    gx1[t, 0:G]  = xr[t] @ Wih_f1 + b_f1   (forward,  time order)
    #    gx1[t, G:2G] = xr[t] @ Wih_b1 + b_b1   (backward, read back at T-1-t)
    gx1 = jnp.dot(xr.astype(bf16), wih1_ref[...],
                  preferred_element_type=f32) + b1_ref[...]

    # Pre-arranged per-step [2, G] gate inputs (row 0 = fwd, row 1 = bwd) and
    # [2, H] residual inputs.  All of this is off the serial h-recurrence chain,
    # so the scheduler can compute it ahead of / under the recurrent steps.
    gates_pre1 = [jnp.concatenate([gx1[t:t + 1, 0:G],
                                   gx1[T - 1 - t:T - t, G:G2]], axis=0)
                  for t in range(T)]
    xr_pairs = [jnp.concatenate([xr[t:t + 1, :],
                                 xr[T - 1 - t:T - t, :]], axis=0)
                for t in range(T)]

    # Row mask for picking the valid half of the fused [2, 2G] recurrent dot:
    # row 0 (forward state) uses columns 0:G, row 1 (backward state) uses G:2G.
    row_is_fwd = lax.broadcasted_iota(jnp.int32, (2, G), 0) == 0

    def pick(rec):                       # [2, 2G] -> [2, G]
        return jnp.where(row_is_fwd, rec[:, 0:G], rec[:, G:G2])

    def cell(gates, c):
        # gate order was pre-permuted on the host to (i, f, o, g):
        s = jax.nn.sigmoid(gates[:, 0:3 * H])        # i | f | o in one EUP pass
        g = jnp.tanh(gates[:, 3 * H:4 * H])
        c_new = s[:, H:2 * H] * c + s[:, 0:H] * g
        h_new = s[:, 2 * H:3 * H] * jnp.tanh(c_new)
        return h_new, c_new

    # 2) layer-1 fused fwd/bwd recurrence, fully unrolled (T is compile-time).
    #    The layer-2 input-side projection (wp folded into wih2 on the host) is
    #    computed per step so it hides under the EUP-bound cell nonlinearity.
    h = jnp.zeros((2, H), f32)           # row 0 = forward, row 1 = backward
    c = jnp.zeros((2, H), f32)
    gates_pre2 = []
    for t in range(T):
        g = gates_pre1[t]
        if t > 0:                        # h == 0 at t == 0 -> skip recurrent dot
            rec = jnp.dot(h.astype(bf16), whh1_ref[...],
                          preferred_element_type=f32)
            g = g + pick(rec)
        h, c = cell(g, c)
        # residual + folded projection: layer-2 gate inputs for step t (both dirs)
        x2 = (h + xr_pairs[t]).astype(bf16)              # [2, H]
        raw = jnp.dot(x2, wih2_ref[...],
                      preferred_element_type=f32) + b2_ref[...]
        gates_pre2.append(pick(raw))
    h1 = h

    # 3) layer-2 fused fwd/bwd recurrence (only final hidden states are needed).
    whh2_cp.wait()
    h = jnp.zeros((2, H), f32)
    c = jnp.zeros((2, H), f32)
    for t in range(T):
        g = gates_pre2[t]
        if t > 0:
            rec = jnp.dot(h.astype(bf16), whh2_vmem[...],
                          preferred_element_type=f32)
            g = g + pick(rec)
        h, c = cell(g, c)
    h2 = h

    # 4) ElMO scalar mixture: softmax(sp) * gamma was precomputed on the host
    #    into mix = [w0*gamma, w1*gamma].
    # TODO(synk): ElMO's dropout on the mixed embeddings is identity in eval mode.
    emb_ref[...] = mix_ref[0] * h1 + mix_ref[1] * h2


def _permute_gates(w):
    """PyTorch LSTM gate order (i, f, g, o) -> kernel order (i, f, o, g)."""
    H = HID
    return jnp.concatenate(
        [w[..., 0:2 * H], w[..., 3 * H:4 * H], w[..., 2 * H:3 * H]], axis=-1)


def prep_kernel_params(p):
    """One-time host-side weight prep: permute, fwd||bwd concat, wp fold, bf16."""
    bf16 = jnp.bfloat16
    # fold the bias-free projection into layer-2's input weights (exact up to
    # one bf16 rounding of the fused weight)
    wih2_f_eff = p["wp"] @ _permute_gates(p["wih_f2"])
    wih2_b_eff = p["wp"] @ _permute_gates(p["wih_b2"])
    mix = jax.nn.softmax(p["sp"][0]) * p["gamma"][0, 0]          # [2]
    return {
        "wr": p["wr"].astype(bf16),
        "br": p["br"],
        "wih1": jnp.concatenate([_permute_gates(p["wih_f1"]),
                                 _permute_gates(p["wih_b1"])], axis=1).astype(bf16),
        "b1": jnp.concatenate([_permute_gates(p["b_f1"]),
                               _permute_gates(p["b_b1"])], axis=1),
        "whh1": jnp.concatenate([_permute_gates(p["whh_f1"]),
                                 _permute_gates(p["whh_b1"])], axis=1).astype(bf16),
        "wih2": jnp.concatenate([wih2_f_eff, wih2_b_eff], axis=1).astype(bf16),
        "b2": jnp.concatenate([_permute_gates(p["b_f2"]),
                               _permute_gates(p["b_b2"])], axis=1),
        "whh2": jnp.concatenate([_permute_gates(p["whh_f2"]),
                                 _permute_gates(p["whh_b2"])], axis=1).astype(bf16),
        "mix": mix,
    }


def elmo_forward(x_bf16, kp):
    """x_bf16: [SEQ, EMB] bf16; kp: output of prep_kernel_params (cached)."""
    vmem = pl.BlockSpec(memory_space=pltpu.MemorySpace.VMEM)
    smem = pl.BlockSpec(memory_space=pltpu.MemorySpace.SMEM)
    hbm = pl.BlockSpec(memory_space=pl.ANY)     # layer-2 recurrent weights: manual DMA
    return pl.pallas_call(
        elmo_kernel,
        out_shape=jax.ShapeDtypeStruct((2, HID), jnp.float32),
        in_specs=[vmem] * 8 + [hbm, smem],
        out_specs=vmem,
        scratch_shapes=[
            pltpu.VMEM((HID, G2), jnp.bfloat16),    # whh2 landing buffer
            pltpu.SemaphoreType.DMA(()),            # its completion semaphore
        ],
        compiler_params=pltpu.CompilerParams(vmem_limit_bytes=8 * 1024 * 1024),
    )(x_bf16, kp["wr"], kp["br"],
      kp["wih1"], kp["b1"], kp["whh1"],
      kp["wih2"], kp["b2"],
      kp["whh2"], kp["mix"])


# ---------------- pure-JAX reference (for correctness check) ----------------
def _lstm_ref(x, wih, whh, b):
    H = HID

    def step(carry, x_t):
        h, c = carry
        gates = x_t @ wih + h @ whh + b[0]
        i = jax.nn.sigmoid(gates[0:H])
        f = jax.nn.sigmoid(gates[H:2 * H])
        g = jnp.tanh(gates[2 * H:3 * H])
        o = jax.nn.sigmoid(gates[3 * H:4 * H])
        c = f * c + i * g
        h = o * jnp.tanh(c)
        return (h, c), h

    (h, _), outs = lax.scan(step, (jnp.zeros(H), jnp.zeros(H)), x)
    return outs, h


def elmo_reference(x, p):
    xr = x @ p["wr"] + p["br"][0]
    out_f1, h_f1 = _lstm_ref(xr, p["wih_f1"], p["whh_f1"], p["b_f1"])
    out_b1, h_b1 = _lstm_ref(xr[::-1], p["wih_b1"], p["whh_b1"], p["b_b1"])
    x2f = (out_f1 + xr) @ p["wp"]
    x2b = (out_b1 + xr[::-1]) @ p["wp"]
    _, h_f2 = _lstm_ref(x2f, p["wih_f2"], p["whh_f2"], p["b_f2"])
    _, h_b2 = _lstm_ref(x2b, p["wih_b2"], p["whh_b2"], p["b_b2"])
    h1 = jnp.stack([h_f1, h_b1])
    h2 = jnp.stack([h_f2, h_b2])
    w = jax.nn.softmax(p["sp"][0])
    return p["gamma"][0, 0] * (w[0] * h1 + w[1] * h2)


def make_params(key):
    """Deterministic synthetic parameters (shapes from BiLM/ElMO __init__).
    NOTE: uses a single combined bias per LSTM; real PyTorch LSTMs have b_ih and
    b_hh which must be summed on the host before feeding this kernel."""
    def uni(k, shape, fan_in):
        bound = 1.0 / jnp.sqrt(jnp.float32(fan_in))
        return jax.random.uniform(k, shape, jnp.float32, -bound, bound)

    ks = jax.random.split(key, 20)
    p = {}
    # reshape: Linear(EMB, HID)  -> pre-transposed [EMB, HID]
    p["wr"] = uni(ks[0], (EMB, HID), EMB)
    p["br"] = uni(ks[1], (1, HID), EMB)
    # LSTMs: weight_ih [in, 4H], weight_hh [H, 4H], combined bias [1, 4H]
    def lstm_params(k0, k1, k2, in_dim):
        return (uni(k0, (in_dim, 4 * HID), HID),
                uni(k1, (HID, 4 * HID), HID),
                uni(k2, (1, 4 * HID), HID))
    p["wih_f1"], p["whh_f1"], p["b_f1"] = lstm_params(ks[2], ks[3], ks[4], HID)
    p["wih_b1"], p["whh_b1"], p["b_b1"] = lstm_params(ks[5], ks[6], ks[7], HID)
    # proj: Linear(HID, PROJ, bias=False) -> pre-transposed [HID, PROJ]
    p["wp"] = uni(ks[8], (HID, PROJ), HID)
    p["wih_f2"], p["whh_f2"], p["b_f2"] = lstm_params(ks[9], ks[10], ks[11], PROJ)
    p["wih_b2"], p["whh_b2"], p["b_b2"] = lstm_params(ks[12], ks[13], ks[14], PROJ)
    # ElMO mixture params: exactly as in __init__ ([0, 0] and gamma = 1)
    p["sp"] = jnp.zeros((1, 2), jnp.float32)
    p["gamma"] = jnp.ones((1, 1), jnp.float32)
    return p


if __name__ == "__main__":
    key = jax.random.PRNGKey(0)
    k_x, k_p = jax.random.split(key)
    x = jax.random.normal(k_x, (SEQ, EMB), jnp.float32)
    params = make_params(k_p)

    # Host prep is hoisted out of the per-call path (done once, cached).
    kp = jax.tree_util.tree_map(jax.block_until_ready, prep_kernel_params(params))
    x_bf16 = x.astype(jnp.bfloat16)

    emb = jax.block_until_ready(elmo_forward(x_bf16, kp))
    ref = jax.block_until_ready(elmo_reference(x, params))
    assert emb.shape == (2, HID)
    max_err = float(jnp.max(jnp.abs(emb - ref)))
    assert max_err < 5e-2, f"mismatch vs reference: {max_err}"
    print("KERNEL_OK")
</pallas_src>

<mosaic_0001>
module attributes {stable_mosaic.version = 11 : i64} {
  func.func @elmo_kernel(%arg0: memref<8x32xbf16, #tpu.memory_space<vmem>>, %arg1: memref<32x128xbf16, #tpu.memory_space<vmem>>, %arg2: memref<1x128xf32, #tpu.memory_space<vmem>>, %arg3: memref<128x1024xbf16, #tpu.memory_space<vmem>>, %arg4: memref<1x1024xf32, #tpu.memory_space<vmem>>, %arg5: memref<128x1024xbf16, #tpu.memory_space<vmem>>, %arg6: memref<128x1024xbf16, #tpu.memory_space<vmem>>, %arg7: memref<1x1024xf32, #tpu.memory_space<vmem>>, %arg8: memref<128x1024xbf16, #tpu.memory_space<any>>, %arg9: memref<2xf32, #tpu.memory_space<smem>>, %arg10: memref<2x128xf32, #tpu.memory_space<vmem>>, %arg11: memref<128x1024xbf16, #tpu.memory_space<vmem>>, %arg12: memref<!tpu.dma_semaphore, #tpu.memory_space<semaphore_mem>>) attributes {dimension_semantics = [], scalar_prefetch = 0 : i64, scratch_operands = 2 : i64, tpu.core_type = #tpu.core_type<tc>} {
    tpu.enqueue_dma source(%arg8 : memref<128x1024xbf16, #tpu.memory_space<any>>) target(%arg11 : memref<128x1024xbf16, #tpu.memory_space<vmem>>) target_semaphore(%arg12 : memref<!tpu.dma_semaphore, #tpu.memory_space<semaphore_mem>>)
    %c0 = arith.constant 0 : index
    %c0_0 = arith.constant 0 : index
    %0 = vector.load %arg0[%c0, %c0_0] : memref<8x32xbf16, #tpu.memory_space<vmem>>, vector<8x32xbf16>
    %c0_1 = arith.constant 0 : index
    %c0_2 = arith.constant 0 : index
    %1 = vector.load %arg1[%c0_1, %c0_2] : memref<32x128xbf16, #tpu.memory_space<vmem>>, vector<32x128xbf16>
    %cst = arith.constant dense<0.000000e+00> : vector<8x128xf32>
    %2 = tpu.matmul %0, %1, %cst {dimension_numbers = #tpu.dot_dimension_numbers<[1], [0], [0], [1], [0, 0, 1, 1], [], []>} : vector<8x32xbf16>, vector<32x128xbf16>, vector<8x128xf32> -> vector<8x128xf32>
    %c0_3 = arith.constant 0 : index
    %c0_4 = arith.constant 0 : index
    %3 = vector.load %arg2[%c0_3, %c0_4] : memref<1x128xf32, #tpu.memory_space<vmem>>, vector<1x128xf32>
    %4 = vector.broadcast %3 : vector<1x128xf32> to vector<8x128xf32>
    %5 = arith.addf %2, %4 : vector<8x128xf32>
    %6 = arith.truncf %5 : vector<8x128xf32> to vector<8x128xbf16>
    %c0_5 = arith.constant 0 : index
    %c0_6 = arith.constant 0 : index
    %7 = vector.load %arg3[%c0_5, %c0_6] : memref<128x1024xbf16, #tpu.memory_space<vmem>>, vector<128x1024xbf16>
    %cst_7 = arith.constant dense<0.000000e+00> : vector<8x1024xf32>
    %8 = tpu.matmul %6, %7, %cst_7 {dimension_numbers = #tpu.dot_dimension_numbers<[1], [0], [0], [1], [0, 0, 1, 1], [], []>} : vector<8x128xbf16>, vector<128x1024xbf16>, vector<8x1024xf32> -> vector<8x1024xf32>
    %c0_8 = arith.constant 0 : index
    %c0_9 = arith.constant 0 : index
    %9 = vector.load %arg4[%c0_8, %c0_9] : memref<1x1024xf32, #tpu.memory_space<vmem>>, vector<1x1024xf32>
    %10 = vector.broadcast %9 : vector<1x1024xf32> to vector<8x1024xf32>
    %11 = arith.addf %8, %10 : vector<8x1024xf32>
    %12 = vector.extract_strided_slice %11 {offsets = [0, 0], sizes = [1, 512], strides = [1, 1]} : vector<8x1024xf32> to vector<1x512xf32>
    %13 = vector.extract_strided_slice %11 {offsets = [7, 512], sizes = [1, 512], strides = [1, 1]} : vector<8x1024xf32> to vector<1x512xf32>
    %14 = tpu.concatenate %12, %13 in 0 : vector<1x512xf32>, vector<1x512xf32> -> vector<2x512xf32>
    %15 = vector.extract_strided_slice %11 {offsets = [1, 0], sizes = [1, 512], strides = [1, 1]} : vector<8x1024xf32> to vector<1x512xf32>
    %16 = vector.extract_strided_slice %11 {offsets = [6, 512], sizes = [1, 512], strides = [1, 1]} : vector<8x1024xf32> to vector<1x512xf32>
    %17 = tpu.concatenate %15, %16 in 0 : vector<1x512xf32>, vector<1x512xf32> -> vector<2x512xf32>
    %18 = vector.extract_strided_slice %11 {offsets = [2, 0], sizes = [1, 512], strides = [1, 1]} : vector<8x1024xf32> to vector<1x512xf32>
    %19 = vector.extract_strided_slice %11 {offsets = [5, 512], sizes = [1, 512], strides = [1, 1]} : vector<8x1024xf32> to vector<1x512xf32>
    %20 = tpu.concatenate %18, %19 in 0 : vector<1x512xf32>, vector<1x512xf32> -> vector<2x512xf32>
    %21 = vector.extract_strided_slice %11 {offsets = [3, 0], sizes = [1, 512], strides = [1, 1]} : vector<8x1024xf32> to vector<1x512xf32>
    %22 = vector.extract_strided_slice %11 {offsets = [4, 512], sizes = [1, 512], strides = [1, 1]} : vector<8x1024xf32> to vector<1x512xf32>
    %23 = tpu.concatenate %21, %22 in 0 : vector<1x512xf32>, vector<1x512xf32> -> vector<2x512xf32>
    %24 = vector.extract_strided_slice %11 {offsets = [4, 0], sizes = [1, 512], strides = [1, 1]} : vector<8x1024xf32> to vector<1x512xf32>
    %25 = vector.extract_strided_slice %11 {offsets = [3, 512], sizes = [1, 512], strides = [1, 1]} : vector<8x1024xf32> to vector<1x512xf32>
    %26 = tpu.concatenate %24, %25 in 0 : vector<1x512xf32>, vector<1x512xf32> -> vector<2x512xf32>
    %27 = vector.extract_strided_slice %11 {offsets = [5, 0], sizes = [1, 512], strides = [1, 1]} : vector<8x1024xf32> to vector<1x512xf32>
    %28 = vector.extract_strided_slice %11 {offsets = [2, 512], sizes = [1, 512], strides = [1, 1]} : vector<8x1024xf32> to vector<1x512xf32>
    %29 = tpu.concatenate %27, %28 in 0 : vector<1x512xf32>, vector<1x512xf32> -> vector<2x512xf32>
    %30 = vector.extract_strided_slice %11 {offsets = [6, 0], sizes = [1, 512], strides = [1, 1]} : vector<8x1024xf32> to vector<1x512xf32>
    %31 = vector.extract_strided_slice %11 {offsets = [1, 512], sizes = [1, 512], strides = [1, 1]} : vector<8x1024xf32> to vector<1x512xf32>
    %32 = tpu.concatenate %30, %31 in 0 : vector<1x512xf32>, vector<1x512xf32> -> vector<2x512xf32>
    %33 = vector.extract_strided_slice %11 {offsets = [7, 0], sizes = [1, 512], strides = [1, 1]} : vector<8x1024xf32> to vector<1x512xf32>
    %34 = vector.extract_strided_slice %11 {offsets = [0, 512], sizes = [1, 512], strides = [1, 1]} : vector<8x1024xf32> to vector<1x512xf32>
    %35 = tpu.concatenate %33, %34 in 0 : vector<1x512xf32>, vector<1x512xf32> -> vector<2x512xf32>
    %36 = vector.extract_strided_slice %5 {offsets = [0, 0], sizes = [1, 128], strides = [1, 1]} : vector<8x128xf32> to vector<1x128xf32>
    %37 = vector.extract_strided_slice %5 {offsets = [7, 0], sizes = [1, 128], strides = [1, 1]} : vector<8x128xf32> to vector<1x128xf32>
    %38 = tpu.concatenate %36, %37 in 0 : vector<1x128xf32>, vector<1x128xf32> -> vector<2x128xf32>
    %39 = vector.extract_strided_slice %5 {offsets = [1, 0], sizes = [1, 128], strides = [1, 1]} : vector<8x128xf32> to vector<1x128xf32>
    %40 = vector.extract_strided_slice %5 {offsets = [6, 0], sizes = [1, 128], strides = [1, 1]} : vector<8x128xf32> to vector<1x128xf32>
    %41 = tpu.concatenate %39, %40 in 0 : vector<1x128xf32>, vector<1x128xf32> -> vector<2x128xf32>
    %42 = vector.extract_strided_slice %5 {offsets = [2, 0], sizes = [1, 128], strides = [1, 1]} : vector<8x128xf32> to vector<1x128xf32>
    %43 = vector.extract_strided_slice %5 {offsets = [5, 0], sizes = [1, 128], strides = [1, 1]} : vector<8x128xf32> to vector<1x128xf32>
    %44 = tpu.concatenate %42, %43 in 0 : vector<1x128xf32>, vector<1x128xf32> -> vector<2x128xf32>
    %45 = vector.extract_strided_slice %5 {offsets = [3, 0], sizes = [1, 128], strides = [1, 1]} : vector<8x128xf32> to vector<1x128xf32>
    %46 = vector.extract_strided_slice %5 {offsets = [4, 0], sizes = [1, 128], strides = [1, 1]} : vector<8x128xf32> to vector<1x128xf32>
    %47 = tpu.concatenate %45, %46 in 0 : vector<1x128xf32>, vector<1x128xf32> -> vector<2x128xf32>
    %48 = vector.extract_strided_slice %5 {offsets = [4, 0], sizes = [1, 128], strides = [1, 1]} : vector<8x128xf32> to vector<1x128xf32>
    %49 = vector.extract_strided_slice %5 {offsets = [3, 0], sizes = [1, 128], strides = [1, 1]} : vector<8x128xf32> to vector<1x128xf32>
    %50 = tpu.concatenate %48, %49 in 0 : vector<1x128xf32>, vector<1x128xf32> -> vector<2x128xf32>
    %51 = vector.extract_strided_slice %5 {offsets = [5, 0], sizes = [1, 128], strides = [1, 1]} : vector<8x128xf32> to vector<1x128xf32>
    %52 = vector.extract_strided_slice %5 {offsets = [2, 0], sizes = [1, 128], strides = [1, 1]} : vector<8x128xf32> to vector<1x128xf32>
    %53 = tpu.concatenate %51, %52 in 0 : vector<1x128xf32>, vector<1x128xf32> -> vector<2x128xf32>
    %54 = vector.extract_strided_slice %5 {offsets = [6, 0], sizes = [1, 128], strides = [1, 1]} : vector<8x128xf32> to vector<1x128xf32>
    %55 = vector.extract_strided_slice %5 {offsets = [1, 0], sizes = [1, 128], strides = [1, 1]} : vector<8x128xf32> to vector<1x128xf32>
    %56 = tpu.concatenate %54, %55 in 0 : vector<1x128xf32>, vector<1x128xf32> -> vector<2x128xf32>
    %57 = vector.extract_strided_slice %5 {offsets = [7, 0], sizes = [1, 128], strides = [1, 1]} : vector<8x128xf32> to vector<1x128xf32>
    %58 = vector.extract_strided_slice %5 {offsets = [0, 0], sizes = [1, 128], strides = [1, 1]} : vector<8x128xf32> to vector<1x128xf32>
    %59 = tpu.concatenate %57, %58 in 0 : vector<1x128xf32>, vector<1x128xf32> -> vector<2x128xf32>
    %60 = tpu.iota {dimensions = array<i32: 0>} : vector<2x512xi32>
    %c0_i32 = arith.constant 0 : i32
    %61 = vector.broadcast %c0_i32 : i32 to vector<2x512xi32>
    %62 = arith.cmpi eq, %60, %61 : vector<2x512xi32>
    %cst_10 = arith.constant 0.000000e+00 : f32
    %63 = vector.broadcast %cst_10 : f32 to vector<2x128xf32>
    %64 = vector.extract_strided_slice %14 {offsets = [0, 0], sizes = [2, 384], strides = [1, 1]} : vector<2x512xf32> to vector<2x384xf32>
    %65 = arith.negf %64 : vector<2x384xf32>
    %66 = math.exp %65 : vector<2x384xf32>
    %cst_11 = arith.constant 1.000000e+00 : f32
    %67 = vector.broadcast %cst_11 : f32 to vector<2x384xf32>
    %68 = arith.addf %67, %66 : vector<2x384xf32>
    %69 = arith.divf %67, %68 : vector<2x384xf32>
    %70 = vector.extract_strided_slice %14 {offsets = [0, 384], sizes = [2, 128], strides = [1, 1]} : vector<2x512xf32> to vector<2x128xf32>
    %71 = math.tanh %70 : vector<2x128xf32>
    %72 = vector.extract_strided_slice %69 {offsets = [0, 128], sizes = [2, 128], strides = [1, 1]} : vector<2x384xf32> to vector<2x128xf32>
    %73 = arith.mulf %72, %63 : vector<2x128xf32>
    %74 = vector.extract_strided_slice %69 {offsets = [0, 0], sizes = [2, 128], strides = [1, 1]} : vector<2x384xf32> to vector<2x128xf32>
    %75 = arith.mulf %74, %71 : vector<2x128xf32>
    %76 = arith.addf %73, %75 : vector<2x128xf32>
    %77 = vector.extract_strided_slice %69 {offsets = [0, 256], sizes = [2, 128], strides = [1, 1]} : vector<2x384xf32> to vector<2x128xf32>
    %78 = math.tanh %76 : vector<2x128xf32>
    %79 = arith.mulf %77, %78 : vector<2x128xf32>
    %80 = arith.addf %79, %38 : vector<2x128xf32>
    %81 = arith.truncf %80 : vector<2x128xf32> to vector<2x128xbf16>
    %c0_12 = arith.constant 0 : index
    %c0_13 = arith.constant 0 : index
    %82 = vector.load %arg6[%c0_12, %c0_13] : memref<128x1024xbf16, #tpu.memory_space<vmem>>, vector<128x1024xbf16>
    %cst_14 = arith.constant dense<0.000000e+00> : vector<2x1024xf32>
    %83 = tpu.matmul %81, %82, %cst_14 {dimension_numbers = #tpu.dot_dimension_numbers<[1], [0], [0], [1], [0, 0, 1, 1], [], []>} : vector<2x128xbf16>, vector<128x1024xbf16>, vector<2x1024xf32> -> vector<2x1024xf32>
    %c0_15 = arith.constant 0 : index
    %c0_16 = arith.constant 0 : index
    %84 = vector.load %arg7[%c0_15, %c0_16] : memref<1x1024xf32, #tpu.memory_space<vmem>>, vector<1x1024xf32>
    %85 = vector.broadcast %84 : vector<1x1024xf32> to vector<2x1024xf32>
    %86 = arith.addf %83, %85 : vector<2x1024xf32>
    %87 = vector.extract_strided_slice %86 {offsets = [0, 0], sizes = [2, 512], strides = [1, 1]} : vector<2x1024xf32> to vector<2x512xf32>
    %88 = vector.extract_strided_slice %86 {offsets = [0, 512], sizes = [2, 512], strides = [1, 1]} : vector<2x1024xf32> to vector<2x512xf32>
    %89 = arith.select %62, %87, %88 : vector<2x512xi1>, vector<2x512xf32>
    %90 = arith.truncf %79 : vector<2x128xf32> to vector<2x128xbf16>
    %c0_17 = arith.constant 0 : index
    %c0_18 = arith.constant 0 : index
    %91 = vector.load %arg5[%c0_17, %c0_18] : memref<128x1024xbf16, #tpu.memory_space<vmem>>, vector<128x1024xbf16>
    %cst_19 = arith.constant dense<0.000000e+00> : vector<2x1024xf32>
    %92 = tpu.matmul %90, %91, %cst_19 {dimension_numbers = #tpu.dot_dimension_numbers<[1], [0], [0], [1], [0, 0, 1, 1], [], []>} : vector<2x128xbf16>, vector<128x1024xbf16>, vector<2x1024xf32> -> vector<2x1024xf32>
    %93 = vector.extract_strided_slice %92 {offsets = [0, 0], sizes = [2, 512], strides = [1, 1]} : vector<2x1024xf32> to vector<2x512xf32>
    %94 = vector.extract_strided_slice %92 {offsets = [0, 512], sizes = [2, 512], strides = [1, 1]} : vector<2x1024xf32> to vector<2x512xf32>
    %95 = arith.select %62, %93, %94 : vector<2x512xi1>, vector<2x512xf32>
    %96 = arith.addf %17, %95 : vector<2x512xf32>
    %97 = vector.extract_strided_slice %96 {offsets = [0, 0], sizes = [2, 384], strides = [1, 1]} : vector<2x512xf32> to vector<2x384xf32>
    %98 = arith.negf %97 : vector<2x384xf32>
    %99 = math.exp %98 : vector<2x384xf32>
    %cst_20 = arith.constant 1.000000e+00 : f32
    %100 = vector.broadcast %cst_20 : f32 to vector<2x384xf32>
    %101 = arith.addf %100, %99 : vector<2x384xf32>
    %102 = arith.divf %100, %101 : vector<2x384xf32>
    %103 = vector.extract_strided_slice %96 {offsets = [0, 384], sizes = [2, 128], strides = [1, 1]} : vector<2x512xf32> to vector<2x128xf32>
    %104 = math.tanh %103 : vector<2x128xf32>
    %105 = vector.extract_strided_slice %102 {offsets = [0, 128], sizes = [2, 128], strides = [1, 1]} : vector<2x384xf32> to vector<2x128xf32>
    %106 = arith.mulf %105, %76 : vector<2x128xf32>
    %107 = vector.extract_strided_slice %102 {offsets = [0, 0], sizes = [2, 128], strides = [1, 1]} : vector<2x384xf32> to vector<2x128xf32>
    %108 = arith.mulf %107, %104 : vector<2x128xf32>
    %109 = arith.addf %106, %108 : vector<2x128xf32>
    %110 = vector.extract_strided_slice %102 {offsets = [0, 256], sizes = [2, 128], strides = [1, 1]} : vector<2x384xf32> to vector<2x128xf32>
    %111 = math.tanh %109 : vector<2x128xf32>
    %112 = arith.mulf %110, %111 : vector<2x128xf32>
    %113 = arith.addf %112, %41 : vector<2x128xf32>
    %114 = arith.truncf %113 : vector<2x128xf32> to vector<2x128xbf16>
    %c0_21 = arith.constant 0 : index
    %c0_22 = arith.constant 0 : index
    %115 = vector.load %arg6[%c0_21, %c0_22] : memref<128x1024xbf16, #tpu.memory_space<vmem>>, vector<128x1024xbf16>
    %cst_23 = arith.constant dense<0.000000e+00> : vector<2x1024xf32>
    %116 = tpu.matmul %114, %115, %cst_23 {dimension_numbers = #tpu.dot_dimension_numbers<[1], [0], [0], [1], [0, 0, 1, 1], [], []>} : vector<2x128xbf16>, vector<128x1024xbf16>, vector<2x1024xf32> -> vector<2x1024xf32>
    %c0_24 = arith.constant 0 : index
    %c0_25 = arith.constant 0 : index
    %117 = vector.load %arg7[%c0_24, %c0_25] : memref<1x1024xf32, #tpu.memory_space<vmem>>, vector<1x1024xf32>
    %118 = vector.broadcast %117 : vector<1x1024xf32> to vector<2x1024xf32>
    %119 = arith.addf %116, %118 : vector<2x1024xf32>
    %120 = vector.extract_strided_slice %119 {offsets = [0, 0], sizes = [2, 512], strides = [1, 1]} : vector<2x1024xf32> to vector<2x512xf32>
    %121 = vector.extract_strided_slice %119 {offsets = [0, 512], sizes = [2, 512], strides = [1, 1]} : vector<2x1024xf32> to vector<2x512xf32>
    %122 = arith.select %62, %120, %121 : vector<2x512xi1>, vector<2x512xf32>
    %123 = arith.truncf %112 : vector<2x128xf32> to vector<2x128xbf16>
    %c0_26 = arith.constant 0 : index
    %c0_27 = arith.constant 0 : index
    %124 = vector.load %arg5[%c0_26, %c0_27] : memref<128x1024xbf16, #tpu.memory_space<vmem>>, vector<128x1024xbf16>
    %cst_28 = arith.constant dense<0.000000e+00> : vector<2x1024xf32>
    %125 = tpu.matmul %123, %124, %cst_28 {dimension_numbers = #tpu.dot_dimension_numbers<[1], [0], [0], [1], [0, 0, 1, 1], [], []>} : vector<2x128xbf16>, vector<128x1024xbf16>, vector<2x1024xf32> -> vector<2x1024xf32>
    %126 = vector.extract_strided_slice %125 {offsets = [0, 0], sizes = [2, 512], strides = [1, 1]} : vector<2x1024xf32> to vector<2x512xf32>
    %127 = vector.extract_strided_slice %125 {offsets = [0, 512], sizes = [2, 512], strides = [1, 1]} : vector<2x1024xf32> to vector<2x512xf32>
    %128 = arith.select %62, %126, %127 : vector<2x512xi1>, vector<2x512xf32>
    %129 = arith.addf %20, %128 : vector<2x512xf32>
    %130 = vector.extract_strided_slice %129 {offsets = [0, 0], sizes = [2, 384], strides = [1, 1]} : vector<2x512xf32> to vector<2x384xf32>
    %131 = arith.negf %130 : vector<2x384xf32>
    %132 = math.exp %131 : vector<2x384xf32>
    %cst_29 = arith.constant 1.000000e+00 : f32
    %133 = vector.broadcast %cst_29 : f32 to vector<2x384xf32>
    %134 = arith.addf %133, %132 : vector<2x384xf32>
    %135 = arith.divf %133, %134 : vector<2x384xf32>
    %136 = vector.extract_strided_slice %129 {offsets = [0, 384], sizes = [2, 128], strides = [1, 1]} : vector<2x512xf32> to vector<2x128xf32>
    %137 = math.tanh %136 : vector<2x128xf32>
    %138 = vector.extract_strided_slice %135 {offsets = [0, 128], sizes = [2, 128], strides = [1, 1]} : vector<2x384xf32> to vector<2x128xf32>
    %139 = arith.mulf %138, %109 : vector<2x128xf32>
    %140 = vector.extract_strided_slice %135 {offsets = [0, 0], sizes = [2, 128], strides = [1, 1]} : vector<2x384xf32> to vector<2x128xf32>
    %141 = arith.mulf %140, %137 : vector<2x128xf32>
    %142 = arith.addf %139, %141 : vector<2x128xf32>
    %143 = vector.extract_strided_slice %135 {offsets = [0, 256], sizes = [2, 128], strides = [1, 1]} : vector<2x384xf32> to vector<2x128xf32>
    %144 = math.tanh %142 : vector<2x128xf32>
    %145 = arith.mulf %143, %144 : vector<2x128xf32>
    %146 = arith.addf %145, %44 : vector<2x128xf32>
    %147 = arith.truncf %146 : vector<2x128xf32> to vector<2x128xbf16>
    %c0_30 = arith.constant 0 : index
    %c0_31 = arith.constant 0 : index
    %148 = vector.load %arg6[%c0_30, %c0_31] : memref<128x1024xbf16, #tpu.memory_space<vmem>>, vector<128x1024xbf16>
    %cst_32 = arith.constant dense<0.000000e+00> : vector<2x1024xf32>
    %149 = tpu.matmul %147, %148, %cst_32 {dimension_numbers = #tpu.dot_dimension_numbers<[1], [0], [0], [1], [0, 0, 1, 1], [], []>} : vector<2x128xbf16>, vector<128x1024xbf16>, vector<2x1024xf32> -> vector<2x1024xf32>
    %c0_33 = arith.constant 0 : index
    %c0_34 = arith.constant 0 : index
    %150 = vector.load %arg7[%c0_33, %c0_34] : memref<1x1024xf32, #tpu.memory_space<vmem>>, vector<1x1024xf32>
    %151 = vector.broadcast %150 : vector<1x1024xf32> to vector<2x1024xf32>
    %152 = arith.addf %149, %151 : vector<2x1024xf32>
    %153 = vector.extract_strided_slice %152 {offsets = [0, 0], sizes = [2, 512], strides = [1, 1]} : vector<2x1024xf32> to vector<2x512xf32>
    %154 = vector.extract_strided_slice %152 {offsets = [0, 512], sizes = [2, 512], strides = [1, 1]} : vector<2x1024xf32> to vector<2x512xf32>
    %155 = arith.select %62, %153, %154 : vector<2x512xi1>, vector<2x512xf32>
    %156 = arith.truncf %145 : vector<2x128xf32> to vector<2x128xbf16>
    %c0_35 = arith.constant 0 : index
    %c0_36 = arith.constant 0 : index
    %157 = vector.load %arg5[%c0_35, %c0_36] : memref<128x1024xbf16, #tpu.memory_space<vmem>>, vector<128x1024xbf16>
    %cst_37 = arith.constant dense<0.000000e+00> : vector<2x1024xf32>
    %158 = tpu.matmul %156, %157, %cst_37 {dimension_numbers = #tpu.dot_dimension_numbers<[1], [0], [0], [1], [0, 0, 1, 1], [], []>} : vector<2x128xbf16>, vector<128x1024xbf16>, vector<2x1024xf32> -> vector<2x1024xf32>
    %159 = vector.extract_strided_slice %158 {offsets = [0, 0], sizes = [2, 512], strides = [1, 1]} : vector<2x1024xf32> to vector<2x512xf32>
    %160 = vector.extract_strided_slice %158 {offsets = [0, 512], sizes = [2, 512], strides = [1, 1]} : vector<2x1024xf32> to vector<2x512xf32>
    %161 = arith.select %62, %159, %160 : vector<2x512xi1>, vector<2x512xf32>
    %162 = arith.addf %23, %161 : vector<2x512xf32>
    %163 = vector.extract_strided_slice %162 {offsets = [0, 0], sizes = [2, 384], strides = [1, 1]} : vector<2x512xf32> to vector<2x384xf32>
    %164 = arith.negf %163 : vector<2x384xf32>
    %165 = math.exp %164 : vector<2x384xf32>
    %cst_38 = arith.constant 1.000000e+00 : f32
    %166 = vector.broadcast %cst_38 : f32 to vector<2x384xf32>
    %167 = arith.addf %166, %165 : vector<2x384xf32>
    %168 = arith.divf %166, %167 : vector<2x384xf32>
    %169 = vector.extract_strided_slice %162 {offsets = [0, 384], sizes = [2, 128], strides = [1, 1]} : vector<2x512xf32> to vector<2x128xf32>
    %170 = math.tanh %169 : vector<2x128xf32>
    %171 = vector.extract_strided_slice %168 {offsets = [0, 128], sizes = [2, 128], strides = [1, 1]} : vector<2x384xf32> to vector<2x128xf32>
    %172 = arith.mulf %171, %142 : vector<2x128xf32>
    %173 = vector.extract_strided_slice %168 {offsets = [0, 0], sizes = [2, 128], strides = [1, 1]} : vector<2x384xf32> to vector<2x128xf32>
    %174 = arith.mulf %173, %170 : vector<2x128xf32>
    %175 = arith.addf %172, %174 : vector<2x128xf32>
    %176 = vector.extract_strided_slice %168 {offsets = [0, 256], sizes = [2, 128], strides = [1, 1]} : vector<2x384xf32> to vector<2x128xf32>
    %177 = math.tanh %175 : vector<2x128xf32>
    %178 = arith.mulf %176, %177 : vector<2x128xf32>
    %179 = arith.addf %178, %47 : vector<2x128xf32>
    %180 = arith.truncf %179 : vector<2x128xf32> to vector<2x128xbf16>
    %c0_39 = arith.constant 0 : index
    %c0_40 = arith.constant 0 : index
    %181 = vector.load %arg6[%c0_39, %c0_40] : memref<128x1024xbf16, #tpu.memory_space<vmem>>, vector<128x1024xbf16>
    %cst_41 = arith.constant dense<0.000000e+00> : vector<2x1024xf32>
    %182 = tpu.matmul %180, %181, %cst_41 {dimension_numbers = #tpu.dot_dimension_numbers<[1], [0], [0], [1], [0, 0, 1, 1], [], []>} : vector<2x128xbf16>, vector<128x1024xbf16>, vector<2x1024xf32> -> vector<2x1024xf32>
    %c0_42 = arith.constant 0 : index
    %c0_43 = arith.constant 0 : index
    %183 = vector.load %arg7[%c0_42, %c0_43] : memref<1x1024xf32, #tpu.memory_space<vmem>>, vector<1x1024xf32>
    %184 = vector.broadcast %183 : vector<1x1024xf32> to vector<2x1024xf32>
    %185 = arith.addf %182, %184 : vector<2x1024xf32>
    %186 = vector.extract_strided_slice %185 {offsets = [0, 0], sizes = [2, 512], strides = [1, 1]} : vector<2x1024xf32> to vector<2x512xf32>
    %187 = vector.extract_strided_slice %185 {offsets = [0, 512], sizes = [2, 512], strides = [1, 1]} : vector<2x1024xf32> to vector<2x512xf32>
    %188 = arith.select %62, %186, %187 : vector<2x512xi1>, vector<2x512xf32>
    %189 = arith.truncf %178 : vector<2x128xf32> to vector<2x128xbf16>
    %c0_44 = arith.constant 0 : index
    %c0_45 = arith.constant 0 : index
    %190 = vector.load %arg5[%c0_44, %c0_45] : memref<128x1024xbf16, #tpu.memory_space<vmem>>, vector<128x1024xbf16>
    %cst_46 = arith.constant dense<0.000000e+00> : vector<2x1024xf32>
    %191 = tpu.matmul %189, %190, %cst_46 {dimension_numbers = #tpu.dot_dimension_numbers<[1], [0], [0], [1], [0, 0, 1, 1], [], []>} : vector<2x128xbf16>, vector<128x1024xbf16>, vector<2x1024xf32> -> vector<2x1024xf32>
    %192 = vector.extract_strided_slice %191 {offsets = [0, 0], sizes = [2, 512], strides = [1, 1]} : vector<2x1024xf32> to vector<2x512xf32>
    %193 = vector.extract_strided_slice %191 {offsets = [0, 512], sizes = [2, 512], strides = [1, 1]} : vector<2x1024xf32> to vector<2x512xf32>
    %194 = arith.select %62, %192, %193 : vector<2x512xi1>, vector<2x512xf32>
    %195 = arith.addf %26, %194 : vector<2x512xf32>
    %196 = vector.extract_strided_slice %195 {offsets = [0, 0], sizes = [2, 384], strides = [1, 1]} : vector<2x512xf32> to vector<2x384xf32>
    %197 = arith.negf %196 : vector<2x384xf32>
    %198 = math.exp %197 : vector<2x384xf32>
    %cst_47 = arith.constant 1.000000e+00 : f32
    %199 = vector.broadcast %cst_47 : f32 to vector<2x384xf32>
    %200 = arith.addf %199, %198 : vector<2x384xf32>
    %201 = arith.divf %199, %200 : vector<2x384xf32>
    %202 = vector.extract_strided_slice %195 {offsets = [0, 384], sizes = [2, 128], strides = [1, 1]} : vector<2x512xf32> to vector<2x128xf32>
    %203 = math.tanh %202 : vector<2x128xf32>
    %204 = vector.extract_strided_slice %201 {offsets = [0, 128], sizes = [2, 128], strides = [1, 1]} : vector<2x384xf32> to vector<2x128xf32>
    %205 = arith.mulf %204, %175 : vector<2x128xf32>
    %206 = vector.extract_strided_slice %201 {offsets = [0, 0], sizes = [2, 128], strides = [1, 1]} : vector<2x384xf32> to vector<2x128xf32>
    %207 = arith.mulf %206, %203 : vector<2x128xf32>
    %208 = arith.addf %205, %207 : vector<2x128xf32>
    %209 = vector.extract_strided_slice %201 {offsets = [0, 256], sizes = [2, 128], strides = [1, 1]} : vector<2x384xf32> to vector<2x128xf32>
    %210 = math.tanh %208 : vector<2x128xf32>
    %211 = arith.mulf %209, %210 : vector<2x128xf32>
    %212 = arith.addf %211, %50 : vector<2x128xf32>
    %213 = arith.truncf %212 : vector<2x128xf32> to vector<2x128xbf16>
    %c0_48 = arith.constant 0 : index
    %c0_49 = arith.constant 0 : index
    %214 = vector.load %arg6[%c0_48, %c0_49] : memref<128x1024xbf16, #tpu.memory_space<vmem>>, vector<128x1024xbf16>
    %cst_50 = arith.constant dense<0.000000e+00> : vector<2x1024xf32>
    %215 = tpu.matmul %213, %214, %cst_50 {dimension_numbers = #tpu.dot_dimension_numbers<[1], [0], [0], [1], [0, 0, 1, 1], [], []>} : vector<2x128xbf16>, vector<128x1024xbf16>, vector<2x1024xf32> -> vector<2x1024xf32>
    %c0_51 = arith.constant 0 : index
    %c0_52 = arith.constant 0 : index
    %216 = vector.load %arg7[%c0_51, %c0_52] : memref<1x1024xf32, #tpu.memory_space<vmem>>, vector<1x1024xf32>
    %217 = vector.broadcast %216 : vector<1x1024xf32> to vector<2x1024xf32>
    %218 = arith.addf %215, %217 : vector<2x1024xf32>
    %219 = vector.extract_strided_slice %218 {offsets = [0, 0], sizes = [2, 512], strides = [1, 1]} : vector<2x1024xf32> to vector<2x512xf32>
    %220 = vector.extract_strided_slice %218 {offsets = [0, 512], sizes = [2, 512], strides = [1, 1]} : vector<2x1024xf32> to vector<2x512xf32>
    %221 = arith.select %62, %219, %220 : vector<2x512xi1>, vector<2x512xf32>
    %222 = arith.truncf %211 : vector<2x128xf32> to vector<2x128xbf16>
    %c0_53 = arith.constant 0 : index
    %c0_54 = arith.constant 0 : index
    %223 = vector.load %arg5[%c0_53, %c0_54] : memref<128x1024xbf16, #tpu.memory_space<vmem>>, vector<128x1024xbf16>
    %cst_55 = arith.constant dense<0.000000e+00> : vector<2x1024xf32>
    %224 = tpu.matmul %222, %223, %cst_55 {dimension_numbers = #tpu.dot_dimension_numbers<[1], [0], [0], [1], [0, 0, 1, 1], [], []>} : vector<2x128xbf16>, vector<128x1024xbf16>, vector<2x1024xf32> -> vector<2x1024xf32>
    %225 = vector.extract_strided_slice %224 {offsets = [0, 0], sizes = [2, 512], strides = [1, 1]} : vector<2x1024xf32> to vector<2x512xf32>
    %226 = vector.extract_strided_slice %224 {offsets = [0, 512], sizes = [2, 512], strides = [1, 1]} : vector<2x1024xf32> to vector<2x512xf32>
    %227 = arith.select %62, %225, %226 : vector<2x512xi1>, vector<2x512xf32>
    %228 = arith.addf %29, %227 : vector<2x512xf32>
    %229 = vector.extract_strided_slice %228 {offsets = [0, 0], sizes = [2, 384], strides = [1, 1]} : vector<2x512xf32> to vector<2x384xf32>
    %230 = arith.negf %229 : vector<2x384xf32>
    %231 = math.exp %230 : vector<2x384xf32>
    %cst_56 = arith.constant 1.000000e+00 : f32
    %232 = vector.broadcast %cst_56 : f32 to vector<2x384xf32>
    %233 = arith.addf %232, %231 : vector<2x384xf32>
    %234 = arith.divf %232, %233 : vector<2x384xf32>
    %235 = vector.extract_strided_slice %228 {offsets = [0, 384], sizes = [2, 128], strides = [1, 1]} : vector<2x512xf32> to vector<2x128xf32>
    %236 = math.tanh %235 : vector<2x128xf32>
    %237 = vector.extract_strided_slice %234 {offsets = [0, 128], sizes = [2, 128], strides = [1, 1]} : vector<2x384xf32> to vector<2x128xf32>
    %238 = arith.mulf %237, %208 : vector<2x128xf32>
    %239 = vector.extract_strided_slice %234 {offsets = [0, 0], sizes = [2, 128], strides = [1, 1]} : vector<2x384xf32> to vector<2x128xf32>
    %240 = arith.mulf %239, %236 : vector<2x128xf32>
    %241 = arith.addf %238, %240 : vector<2x128xf32>
    %242 = vector.extract_strided_slice %234 {offsets = [0, 256], sizes = [2, 128], strides = [1, 1]} : vector<2x384xf32> to vector<2x128xf32>
    %243 = math.tanh %241 : vector<2x128xf32>
    %244 = arith.mulf %242, %243 : vector<2x128xf32>
    %245 = arith.addf %244, %53 : vector<2x128xf32>
    %246 = arith.truncf %245 : vector<2x128xf32> to vector<2x128xbf16>
    %c0_57 = arith.constant 0 : index
    %c0_58 = arith.constant 0 : index
    %247 = vector.load %arg6[%c0_57, %c0_58] : memref<128x1024xbf16, #tpu.memory_space<vmem>>, vector<128x1024xbf16>
    %cst_59 = arith.constant dense<0.000000e+00> : vector<2x1024xf32>
    %248 = tpu.matmul %246, %247, %cst_59 {dimension_numbers = #tpu.dot_dimension_numbers<[1], [0], [0], [1], [0, 0, 1, 1], [], []>} : vector<2x128xbf16>, vector<128x1024xbf16>, vector<2x1024xf32> -> vector<2x1024xf32>
    %c0_60 = arith.constant 0 : index
    %c0_61 = arith.constant 0 : index
    %249 = vector.load %arg7[%c0_60, %c0_61] : memref<1x1024xf32, #tpu.memory_space<vmem>>, vector<1x1024xf32>
    %250 = vector.broadcast %249 : vector<1x1024xf32> to vector<2x1024xf32>
    %251 = arith.addf %248, %250 : vector<2x1024xf32>
    %252 = vector.extract_strided_slice %251 {offsets = [0, 0], sizes = [2, 512], strides = [1, 1]} : vector<2x1024xf32> to vector<2x512xf32>
    %253 = vector.extract_strided_slice %251 {offsets = [0, 512], sizes = [2, 512], strides = [1, 1]} : vector<2x1024xf32> to vector<2x512xf32>
    %254 = arith.select %62, %252, %253 : vector<2x512xi1>, vector<2x512xf32>
    %255 = arith.truncf %244 : vector<2x128xf32> to vector<2x128xbf16>
    %c0_62 = arith.constant 0 : index
    %c0_63 = arith.constant 0 : index
    %256 = vector.load %arg5[%c0_62, %c0_63] : memref<128x1024xbf16, #tpu.memory_space<vmem>>, vector<128x1024xbf16>
    %cst_64 = arith.constant dense<0.000000e+00> : vector<2x1024xf32>
    %257 = tpu.matmul %255, %256, %cst_64 {dimension_numbers = #tpu.dot_dimension_numbers<[1], [0], [0], [1], [0, 0, 1, 1], [], []>} : vector<2x128xbf16>, vector<128x1024xbf16>, vector<2x1024xf32> -> vector<2x1024xf32>
    %258 = vector.extract_strided_slice %257 {offsets = [0, 0], sizes = [2, 512], strides = [1, 1]} : vector<2x1024xf32> to vector<2x512xf32>
    %259 = vector.extract_strided_slice %257 {offsets = [0, 512], sizes = [2, 512], strides = [1, 1]} : vector<2x1024xf32> to vector<2x512xf32>
    %260 = arith.select %62, %258, %259 : vector<2x512xi1>, vector<2x512xf32>
    %261 = arith.addf %32, %260 : vector<2x512xf32>
    %262 = vector.extract_strided_slice %261 {offsets = [0, 0], sizes = [2, 384], strides = [1, 1]} : vector<2x512xf32> to vector<2x384xf32>
    %263 = arith.negf %262 : vector<2x384xf32>
    %264 = math.exp %263 : vector<2x384xf32>
    %cst_65 = arith.constant 1.000000e+00 : f32
    %265 = vector.broadcast %cst_65 : f32 to vector<2x384xf32>
    %266 = arith.addf %265, %264 : vector<2x384xf32>
    %267 = arith.divf %265, %266 : vector<2x384xf32>
    %268 = vector.extract_strided_slice %261 {offsets = [0, 384], sizes = [2, 128], strides = [1, 1]} : vector<2x512xf32> to vector<2x128xf32>
    %269 = math.tanh %268 : vector<2x128xf32>
    %270 = vector.extract_strided_slice %267 {offsets = [0, 128], sizes = [2, 128], strides = [1, 1]} : vector<2x384xf32> to vector<2x128xf32>
    %271 = arith.mulf %270, %241 : vector<2x128xf32>
    %272 = vector.extract_strided_slice %267 {offsets = [0, 0], sizes = [2, 128], strides = [1, 1]} : vector<2x384xf32> to vector<2x128xf32>
    %273 = arith.mulf %272, %269 : vector<2x128xf32>
    %274 = arith.addf %271, %273 : vector<2x128xf32>
    %275 = vector.extract_strided_slice %267 {offsets = [0, 256], sizes = [2, 128], strides = [1, 1]} : vector<2x384xf32> to vector<2x128xf32>
    %276 = math.tanh %274 : vector<2x128xf32>
    %277 = arith.mulf %275, %276 : vector<2x128xf32>
    %278 = arith.addf %277, %56 : vector<2x128xf32>
    %279 = arith.truncf %278 : vector<2x128xf32> to vector<2x128xbf16>
    %c0_66 = arith.constant 0 : index
    %c0_67 = arith.constant 0 : index
    %280 = vector.load %arg6[%c0_66, %c0_67] : memref<128x1024xbf16, #tpu.memory_space<vmem>>, vector<128x1024xbf16>
    %cst_68 = arith.constant dense<0.000000e+00> : vector<2x1024xf32>
    %281 = tpu.matmul %279, %280, %cst_68 {dimension_numbers = #tpu.dot_dimension_numbers<[1], [0], [0], [1], [0, 0, 1, 1], [], []>} : vector<2x128xbf16>, vector<128x1024xbf16>, vector<2x1024xf32> -> vector<2x1024xf32>
    %c0_69 = arith.constant 0 : index
    %c0_70 = arith.constant 0 : index
    %282 = vector.load %arg7[%c0_69, %c0_70] : memref<1x1024xf32, #tpu.memory_space<vmem>>, vector<1x1024xf32>
    %283 = vector.broadcast %282 : vector<1x1024xf32> to vector<2x1024xf32>
    %284 = arith.addf %281, %283 : vector<2x1024xf32>
    %285 = vector.extract_strided_slice %284 {offsets = [0, 0], sizes = [2, 512], strides = [1, 1]} : vector<2x1024xf32> to vector<2x512xf32>
    %286 = vector.extract_strided_slice %284 {offsets = [0, 512], sizes = [2, 512], strides = [1, 1]} : vector<2x1024xf32> to vector<2x512xf32>
    %287 = arith.select %62, %285, %286 : vector<2x512xi1>, vector<2x512xf32>
    %288 = arith.truncf %277 : vector<2x128xf32> to vector<2x128xbf16>
    %c0_71 = arith.constant 0 : index
    %c0_72 = arith.constant 0 : index
    %289 = vector.load %arg5[%c0_71, %c0_72] : memref<128x1024xbf16, #tpu.memory_space<vmem>>, vector<128x1024xbf16>
    %cst_73 = arith.constant dense<0.000000e+00> : vector<2x1024xf32>
    %290 = tpu.matmul %288, %289, %cst_73 {dimension_numbers = #tpu.dot_dimension_numbers<[1], [0], [0], [1], [0, 0, 1, 1], [], []>} : vector<2x128xbf16>, vector<128x1024xbf16>, vector<2x1024xf32> -> vector<2x1024xf32>
    %291 = vector.extract_strided_slice %290 {offsets = [0, 0], sizes = [2, 512], strides = [1, 1]} : vector<2x1024xf32> to vector<2x512xf32>
    %292 = vector.extract_strided_slice %290 {offsets = [0, 512], sizes = [2, 512], strides = [1, 1]} : vector<2x1024xf32> to vector<2x512xf32>
    %293 = arith.select %62, %291, %292 : vector<2x512xi1>, vector<2x512xf32>
    %294 = arith.addf %35, %293 : vector<2x512xf32>
    %295 = vector.extract_strided_slice %294 {offsets = [0, 0], sizes = [2, 384], strides = [1, 1]} : vector<2x512xf32> to vector<2x384xf32>
    %296 = arith.negf %295 : vector<2x384xf32>
    %297 = math.exp %296 : vector<2x384xf32>
    %cst_74 = arith.constant 1.000000e+00 : f32
    %298 = vector.broadcast %cst_74 : f32 to vector<2x384xf32>
    %299 = arith.addf %298, %297 : vector<2x384xf32>
    %300 = arith.divf %298, %299 : vector<2x384xf32>
    %301 = vector.extract_strided_slice %294 {offsets = [0, 384], sizes = [2, 128], strides = [1, 1]} : vector<2x512xf32> to vector<2x128xf32>
    %302 = math.tanh %301 : vector<2x128xf32>
    %303 = vector.extract_strided_slice %300 {offsets = [0, 128], sizes = [2, 128], strides = [1, 1]} : vector<2x384xf32> to vector<2x128xf32>
    %304 = arith.mulf %303, %274 : vector<2x128xf32>
    %305 = vector.extract_strided_slice %300 {offsets = [0, 0], sizes = [2, 128], strides = [1, 1]} : vector<2x384xf32> to vector<2x128xf32>
    %306 = arith.mulf %305, %302 : vector<2x128xf32>
    %307 = arith.addf %304, %306 : vector<2x128xf32>
    %308 = vector.extract_strided_slice %300 {offsets = [0, 256], sizes = [2, 128], strides = [1, 1]} : vector<2x384xf32> to vector<2x128xf32>
    %309 = math.tanh %307 : vector<2x128xf32>
    %310 = arith.mulf %308, %309 : vector<2x128xf32>
    %311 = arith.addf %310, %59 : vector<2x128xf32>
    %312 = arith.truncf %311 : vector<2x128xf32> to vector<2x128xbf16>
    %c0_75 = arith.constant 0 : index
    %c0_76 = arith.constant 0 : index
    %313 = vector.load %arg6[%c0_75, %c0_76] : memref<128x1024xbf16, #tpu.memory_space<vmem>>, vector<128x1024xbf16>
    %cst_77 = arith.constant dense<0.000000e+00> : vector<2x1024xf32>
    %314 = tpu.matmul %312, %313, %cst_77 {dimension_numbers = #tpu.dot_dimension_numbers<[1], [0], [0], [1], [0, 0, 1, 1], [], []>} : vector<2x128xbf16>, vector<128x1024xbf16>, vector<2x1024xf32> -> vector<2x1024xf32>
    %c0_78 = arith.constant 0 : index
    %c0_79 = arith.constant 0 : index
    %315 = vector.load %arg7[%c0_78, %c0_79] : memref<1x1024xf32, #tpu.memory_space<vmem>>, vector<1x1024xf32>
    %316 = vector.broadcast %315 : vector<1x1024xf32> to vector<2x1024xf32>
    %317 = arith.addf %314, %316 : vector<2x1024xf32>
    %318 = vector.extract_strided_slice %317 {offsets = [0, 0], sizes = [2, 512], strides = [1, 1]} : vector<2x1024xf32> to vector<2x512xf32>
    %319 = vector.extract_strided_slice %317 {offsets = [0, 512], sizes = [2, 512], strides = [1, 1]} : vector<2x1024xf32> to vector<2x512xf32>
    %320 = arith.select %62, %318, %319 : vector<2x512xi1>, vector<2x512xf32>
    tpu.wait_dma2 semaphore(%arg12 : memref<!tpu.dma_semaphore, #tpu.memory_space<semaphore_mem>>) src(%arg8 : memref<128x1024xbf16, #tpu.memory_space<any>>) dst(%arg11 : memref<128x1024xbf16, #tpu.memory_space<vmem>>)
    %cst_80 = arith.constant 0.000000e+00 : f32
    %321 = vector.broadcast %cst_80 : f32 to vector<2x128xf32>
    %322 = vector.extract_strided_slice %89 {offsets = [0, 0], sizes = [2, 384], strides = [1, 1]} : vector<2x512xf32> to vector<2x384xf32>
    %323 = arith.negf %322 : vector<2x384xf32>
    %324 = math.exp %323 : vector<2x384xf32>
    %cst_81 = arith.constant 1.000000e+00 : f32
    %325 = vector.broadcast %cst_81 : f32 to vector<2x384xf32>
    %326 = arith.addf %325, %324 : vector<2x384xf32>
    %327 = arith.divf %325, %326 : vector<2x384xf32>
    %328 = vector.extract_strided_slice %89 {offsets = [0, 384], sizes = [2, 128], strides = [1, 1]} : vector<2x512xf32> to vector<2x128xf32>
    %329 = math.tanh %328 : vector<2x128xf32>
    %330 = vector.extract_strided_slice %327 {offsets = [0, 128], sizes = [2, 128], strides = [1, 1]} : vector<2x384xf32> to vector<2x128xf32>
    %331 = arith.mulf %330, %321 : vector<2x128xf32>
    %332 = vector.extract_strided_slice %327 {offsets = [0, 0], sizes = [2, 128], strides = [1, 1]} : vector<2x384xf32> to vector<2x128xf32>
    %333 = arith.mulf %332, %329 : vector<2x128xf32>
    %334 = arith.addf %331, %333 : vector<2x128xf32>
    %335 = vector.extract_strided_slice %327 {offsets = [0, 256], sizes = [2, 128], strides = [1, 1]} : vector<2x384xf32> to vector<2x128xf32>
    %336 = math.tanh %334 : vector<2x128xf32>
    %337 = arith.mulf %335, %336 : vector<2x128xf32>
    %338 = arith.truncf %337 : vector<2x128xf32> to vector<2x128xbf16>
    %c0_82 = arith.constant 0 : index
    %c0_83 = arith.constant 0 : index
    %339 = vector.load %arg11[%c0_82, %c0_83] : memref<128x1024xbf16, #tpu.memory_space<vmem>>, vector<128x1024xbf16>
    %cst_84 = arith.constant dense<0.000000e+00> : vector<2x1024xf32>
    %340 = tpu.matmul %338, %339, %cst_84 {dimension_numbers = #tpu.dot_dimension_numbers<[1], [0], [0], [1], [0, 0, 1, 1], [], []>} : vector<2x128xbf16>, vector<128x1024xbf16>, vector<2x1024xf32> -> vector<2x1024xf32>
    %341 = vector.extract_strided_slice %340 {offsets = [0, 0], sizes = [2, 512], strides = [1, 1]} : vector<2x1024xf32> to vector<2x512xf32>
    %342 = vector.extract_strided_slice %340 {offsets = [0, 512], sizes = [2, 512], strides = [1, 1]} : vector<2x1024xf32> to vector<2x512xf32>
    %343 = arith.select %62, %341, %342 : vector<2x512xi1>, vector<2x512xf32>
    %344 = arith.addf %122, %343 : vector<2x512xf32>
    %345 = vector.extract_strided_slice %344 {offsets = [0, 0], sizes = [2, 384], strides = [1, 1]} : vector<2x512xf32> to vector<2x384xf32>
    %346 = arith.negf %345 : vector<2x384xf32>
    %347 = math.exp %346 : vector<2x384xf32>
    %cst_85 = arith.constant 1.000000e+00 : f32
    %348 = vector.broadcast %cst_85 : f32 to vector<2x384xf32>
    %349 = arith.addf %348, %347 : vector<2x384xf32>
    %350 = arith.divf %348, %349 : vector<2x384xf32>
    %351 = vector.extract_strided_slice %344 {offsets = [0, 384], sizes = [2, 128], strides = [1, 1]} : vector<2x512xf32> to vector<2x128xf32>
    %352 = math.tanh %351 : vector<2x128xf32>
    %353 = vector.extract_strided_slice %350 {offsets = [0, 128], sizes = [2, 128], strides = [1, 1]} : vector<2x384xf32> to vector<2x128xf32>
    %354 = arith.mulf %353, %334 : vector<2x128xf32>
    %355 = vector.extract_strided_slice %350 {offsets = [0, 0], sizes = [2, 128], strides = [1, 1]} : vector<2x384xf32> to vector<2x128xf32>
    %356 = arith.mulf %355, %352 : vector<2x128xf32>
    %357 = arith.addf %354, %356 : vector<2x128xf32>
    %358 = vector.extract_strided_slice %350 {offsets = [0, 256], sizes = [2, 128], strides = [1, 1]} : vector<2x384xf32> to vector<2x128xf32>
    %359 = math.tanh %357 : vector<2x128xf32>
    %360 = arith.mulf %358, %359 : vector<2x128xf32>
    %361 = arith.truncf %360 : vector<2x128xf32> to vector<2x128xbf16>
    %c0_86 = arith.constant 0 : index
    %c0_87 = arith.constant 0 : index
    %362 = vector.load %arg11[%c0_86, %c0_87] : memref<128x1024xbf16, #tpu.memory_space<vmem>>, vector<128x1024xbf16>
    %cst_88 = arith.constant dense<0.000000e+00> : vector<2x1024xf32>
    %363 = tpu.matmul %361, %362, %cst_88 {dimension_numbers = #tpu.dot_dimension_numbers<[1], [0], [0], [1], [0, 0, 1, 1], [], []>} : vector<2x128xbf16>, vector<128x1024xbf16>, vector<2x1024xf32> -> vector<2x1024xf32>
    %364 = vector.extract_strided_slice %363 {offsets = [0, 0], sizes = [2, 512], strides = [1, 1]} : vector<2x1024xf32> to vector<2x512xf32>
    %365 = vector.extract_strided_slice %363 {offsets = [0, 512], sizes = [2, 512], strides = [1, 1]} : vector<2x1024xf32> to vector<2x512xf32>
    %366 = arith.select %62, %364, %365 : vector<2x512xi1>, vector<2x512xf32>
    %367 = arith.addf %155, %366 : vector<2x512xf32>
    %368 = vector.extract_strided_slice %367 {offsets = [0, 0], sizes = [2, 384], strides = [1, 1]} : vector<2x512xf32> to vector<2x384xf32>
    %369 = arith.negf %368 : vector<2x384xf32>
    %370 = math.exp %369 : vector<2x384xf32>
    %cst_89 = arith.constant 1.000000e+00 : f32
    %371 = vector.broadcast %cst_89 : f32 to vector<2x384xf32>
    %372 = arith.addf %371, %370 : vector<2x384xf32>
    %373 = arith.divf %371, %372 : vector<2x384xf32>
    %374 = vector.extract_strided_slice %367 {offsets = [0, 384], sizes = [2, 128], strides = [1, 1]} : vector<2x512xf32> to vector<2x128xf32>
    %375 = math.tanh %374 : vector<2x128xf32>
    %376 = vector.extract_strided_slice %373 {offsets = [0, 128], sizes = [2, 128], strides = [1, 1]} : vector<2x384xf32> to vector<2x128xf32>
    %377 = arith.mulf %376, %357 : vector<2x128xf32>
    %378 = vector.extract_strided_slice %373 {offsets = [0, 0], sizes = [2, 128], strides = [1, 1]} : vector<2x384xf32> to vector<2x128xf32>
    %379 = arith.mulf %378, %375 : vector<2x128xf32>
    %380 = arith.addf %377, %379 : vector<2x128xf32>
    %381 = vector.extract_strided_slice %373 {offsets = [0, 256], sizes = [2, 128], strides = [1, 1]} : vector<2x384xf32> to vector<2x128xf32>
    %382 = math.tanh %380 : vector<2x128xf32>
    %383 = arith.mulf %381, %382 : vector<2x128xf32>
    %384 = arith.truncf %383 : vector<2x128xf32> to vector<2x128xbf16>
    %c0_90 = arith.constant 0 : index
    %c0_91 = arith.constant 0 : index
    %385 = vector.load %arg11[%c0_90, %c0_91] : memref<128x1024xbf16, #tpu.memory_space<vmem>>, vector<128x1024xbf16>
    %cst_92 = arith.constant dense<0.000000e+00> : vector<2x1024xf32>
    %386 = tpu.matmul %384, %385, %cst_92 {dimension_numbers = #tpu.dot_dimension_numbers<[1], [0], [0], [1], [0, 0, 1, 1], [], []>} : vector<2x128xbf16>, vector<128x1024xbf16>, vector<2x1024xf32> -> vector<2x1024xf32>
    %387 = vector.extract_strided_slice %386 {offsets = [0, 0], sizes = [2, 512], strides = [1, 1]} : vector<2x1024xf32> to vector<2x512xf32>
    %388 = vector.extract_strided_slice %386 {offsets = [0, 512], sizes = [2, 512], strides = [1, 1]} : vector<2x1024xf32> to vector<2x512xf32>
    %389 = arith.select %62, %387, %388 : vector<2x512xi1>, vector<2x512xf32>
    %390 = arith.addf %188, %389 : vector<2x512xf32>
    %391 = vector.extract_strided_slice %390 {offsets = [0, 0], sizes = [2, 384], strides = [1, 1]} : vector<2x512xf32> to vector<2x384xf32>
    %392 = arith.negf %391 : vector<2x384xf32>
    %393 = math.exp %392 : vector<2x384xf32>
    %cst_93 = arith.constant 1.000000e+00 : f32
    %394 = vector.broadcast %cst_93 : f32 to vector<2x384xf32>
    %395 = arith.addf %394, %393 : vector<2x384xf32>
    %396 = arith.divf %394, %395 : vector<2x384xf32>
    %397 = vector.extract_strided_slice %390 {offsets = [0, 384], sizes = [2, 128], strides = [1, 1]} : vector<2x512xf32> to vector<2x128xf32>
    %398 = math.tanh %397 : vector<2x128xf32>
    %399 = vector.extract_strided_slice %396 {offsets = [0, 128], sizes = [2, 128], strides = [1, 1]} : vector<2x384xf32> to vector<2x128xf32>
    %400 = arith.mulf %399, %380 : vector<2x128xf32>
    %401 = vector.extract_strided_slice %396 {offsets = [0, 0], sizes = [2, 128], strides = [1, 1]} : vector<2x384xf32> to vector<2x128xf32>
    %402 = arith.mulf %401, %398 : vector<2x128xf32>
    %403 = arith.addf %400, %402 : vector<2x128xf32>
    %404 = vector.extract_strided_slice %396 {offsets = [0, 256], sizes = [2, 128], strides = [1, 1]} : vector<2x384xf32> to vector<2x128xf32>
    %405 = math.tanh %403 : vector<2x128xf32>
    %406 = arith.mulf %404, %405 : vector<2x128xf32>
    %407 = arith.truncf %406 : vector<2x128xf32> to vector<2x128xbf16>
    %c0_94 = arith.constant 0 : index
    %c0_95 = arith.constant 0 : index
    %408 = vector.load %arg11[%c0_94, %c0_95] : memref<128x1024xbf16, #tpu.memory_space<vmem>>, vector<128x1024xbf16>
    %cst_96 = arith.constant dense<0.000000e+00> : vector<2x1024xf32>
    %409 = tpu.matmul %407, %408, %cst_96 {dimension_numbers = #tpu.dot_dimension_numbers<[1], [0], [0], [1], [0, 0, 1, 1], [], []>} : vector<2x128xbf16>, vector<128x1024xbf16>, vector<2x1024xf32> -> vector<2x1024xf32>
    %410 = vector.extract_strided_slice %409 {offsets = [0, 0], sizes = [2, 512], strides = [1, 1]} : vector<2x1024xf32> to vector<2x512xf32>
    %411 = vector.extract_strided_slice %409 {offsets = [0, 512], sizes = [2, 512], strides = [1, 1]} : vector<2x1024xf32> to vector<2x512xf32>
    %412 = arith.select %62, %410, %411 : vector<2x512xi1>, vector<2x512xf32>
    %413 = arith.addf %221, %412 : vector<2x512xf32>
    %414 = vector.extract_strided_slice %413 {offsets = [0, 0], sizes = [2, 384], strides = [1, 1]} : vector<2x512xf32> to vector<2x384xf32>
    %415 = arith.negf %414 : vector<2x384xf32>
    %416 = math.exp %415 : vector<2x384xf32>
    %cst_97 = arith.constant 1.000000e+00 : f32
    %417 = vector.broadcast %cst_97 : f32 to vector<2x384xf32>
    %418 = arith.addf %417, %416 : vector<2x384xf32>
    %419 = arith.divf %417, %418 : vector<2x384xf32>
    %420 = vector.extract_strided_slice %413 {offsets = [0, 384], sizes = [2, 128], strides = [1, 1]} : vector<2x512xf32> to vector<2x128xf32>
    %421 = math.tanh %420 : vector<2x128xf32>
    %422 = vector.extract_strided_slice %419 {offsets = [0, 128], sizes = [2, 128], strides = [1, 1]} : vector<2x384xf32> to vector<2x128xf32>
    %423 = arith.mulf %422, %403 : vector<2x128xf32>
    %424 = vector.extract_strided_slice %419 {offsets = [0, 0], sizes = [2, 128], strides = [1, 1]} : vector<2x384xf32> to vector<2x128xf32>
    %425 = arith.mulf %424, %421 : vector<2x128xf32>
    %426 = arith.addf %423, %425 : vector<2x128xf32>
    %427 = vector.extract_strided_slice %419 {offsets = [0, 256], sizes = [2, 128], strides = [1, 1]} : vector<2x384xf32> to vector<2x128xf32>
    %428 = math.tanh %426 : vector<2x128xf32>
    %429 = arith.mulf %427, %428 : vector<2x128xf32>
    %430 = arith.truncf %429 : vector<2x128xf32> to vector<2x128xbf16>
    %c0_98 = arith.constant 0 : index
    %c0_99 = arith.constant 0 : index
    %431 = vector.load %arg11[%c0_98, %c0_99] : memref<128x1024xbf16, #tpu.memory_space<vmem>>, vector<128x1024xbf16>
    %cst_100 = arith.constant dense<0.000000e+00> : vector<2x1024xf32>
    %432 = tpu.matmul %430, %431, %cst_100 {dimension_numbers = #tpu.dot_dimension_numbers<[1], [0], [0], [1], [0, 0, 1, 1], [], []>} : vector<2x128xbf16>, vector<128x1024xbf16>, vector<2x1024xf32> -> vector<2x1024xf32>
    %433 = vector.extract_strided_slice %432 {offsets = [0, 0], sizes = [2, 512], strides = [1, 1]} : vector<2x1024xf32> to vector<2x512xf32>
    %434 = vector.extract_strided_slice %432 {offsets = [0, 512], sizes = [2, 512], strides = [1, 1]} : vector<2x1024xf32> to vector<2x512xf32>
    %435 = arith.select %62, %433, %434 : vector<2x512xi1>, vector<2x512xf32>
    %436 = arith.addf %254, %435 : vector<2x512xf32>
    %437 = vector.extract_strided_slice %436 {offsets = [0, 0], sizes = [2, 384], strides = [1, 1]} : vector<2x512xf32> to vector<2x384xf32>
    %438 = arith.negf %437 : vector<2x384xf32>
    %439 = math.exp %438 : vector<2x384xf32>
    %cst_101 = arith.constant 1.000000e+00 : f32
    %440 = vector.broadcast %cst_101 : f32 to vector<2x384xf32>
    %441 = arith.addf %440, %439 : vector<2x384xf32>
    %442 = arith.divf %440, %441 : vector<2x384xf32>
    %443 = vector.extract_strided_slice %436 {offsets = [0, 384], sizes = [2, 128], strides = [1, 1]} : vector<2x512xf32> to vector<2x128xf32>
    %444 = math.tanh %443 : vector<2x128xf32>
    %445 = vector.extract_strided_slice %442 {offsets = [0, 128], sizes = [2, 128], strides = [1, 1]} : vector<2x384xf32> to vector<2x128xf32>
    %446 = arith.mulf %445, %426 : vector<2x128xf32>
    %447 = vector.extract_strided_slice %442 {offsets = [0, 0], sizes = [2, 128], strides = [1, 1]} : vector<2x384xf32> to vector<2x128xf32>
    %448 = arith.mulf %447, %444 : vector<2x128xf32>
    %449 = arith.addf %446, %448 : vector<2x128xf32>
    %450 = vector.extract_strided_slice %442 {offsets = [0, 256], sizes = [2, 128], strides = [1, 1]} : vector<2x384xf32> to vector<2x128xf32>
    %451 = math.tanh %449 : vector<2x128xf32>
    %452 = arith.mulf %450, %451 : vector<2x128xf32>
    %453 = arith.truncf %452 : vector<2x128xf32> to vector<2x128xbf16>
    %c0_102 = arith.constant 0 : index
    %c0_103 = arith.constant 0 : index
    %454 = vector.load %arg11[%c0_102, %c0_103] : memref<128x1024xbf16, #tpu.memory_space<vmem>>, vector<128x1024xbf16>
    %cst_104 = arith.constant dense<0.000000e+00> : vector<2x1024xf32>
    %455 = tpu.matmul %453, %454, %cst_104 {dimension_numbers = #tpu.dot_dimension_numbers<[1], [0], [0], [1], [0, 0, 1, 1], [], []>} : vector<2x128xbf16>, vector<128x1024xbf16>, vector<2x1024xf32> -> vector<2x1024xf32>
    %456 = vector.extract_strided_slice %455 {offsets = [0, 0], sizes = [2, 512], strides = [1, 1]} : vector<2x1024xf32> to vector<2x512xf32>
    %457 = vector.extract_strided_slice %455 {offsets = [0, 512], sizes = [2, 512], strides = [1, 1]} : vector<2x1024xf32> to vector<2x512xf32>
    %458 = arith.select %62, %456, %457 : vector<2x512xi1>, vector<2x512xf32>
    %459 = arith.addf %287, %458 : vector<2x512xf32>
    %460 = vector.extract_strided_slice %459 {offsets = [0, 0], sizes = [2, 384], strides = [1, 1]} : vector<2x512xf32> to vector<2x384xf32>
    %461 = arith.negf %460 : vector<2x384xf32>
    %462 = math.exp %461 : vector<2x384xf32>
    %cst_105 = arith.constant 1.000000e+00 : f32
    %463 = vector.broadcast %cst_105 : f32 to vector<2x384xf32>
    %464 = arith.addf %463, %462 : vector<2x384xf32>
    %465 = arith.divf %463, %464 : vector<2x384xf32>
    %466 = vector.extract_strided_slice %459 {offsets = [0, 384], sizes = [2, 128], strides = [1, 1]} : vector<2x512xf32> to vector<2x128xf32>
    %467 = math.tanh %466 : vector<2x128xf32>
    %468 = vector.extract_strided_slice %465 {offsets = [0, 128], sizes = [2, 128], strides = [1, 1]} : vector<2x384xf32> to vector<2x128xf32>
    %469 = arith.mulf %468, %449 : vector<2x128xf32>
    %470 = vector.extract_strided_slice %465 {offsets = [0, 0], sizes = [2, 128], strides = [1, 1]} : vector<2x384xf32> to vector<2x128xf32>
    %471 = arith.mulf %470, %467 : vector<2x128xf32>
    %472 = arith.addf %469, %471 : vector<2x128xf32>
    %473 = vector.extract_strided_slice %465 {offsets = [0, 256], sizes = [2, 128], strides = [1, 1]} : vector<2x384xf32> to vector<2x128xf32>
    %474 = math.tanh %472 : vector<2x128xf32>
    %475 = arith.mulf %473, %474 : vector<2x128xf32>
    %476 = arith.truncf %475 : vector<2x128xf32> to vector<2x128xbf16>
    %c0_106 = arith.constant 0 : index
    %c0_107 = arith.constant 0 : index
    %477 = vector.load %arg11[%c0_106, %c0_107] : memref<128x1024xbf16, #tpu.memory_space<vmem>>, vector<128x1024xbf16>
    %cst_108 = arith.constant dense<0.000000e+00> : vector<2x1024xf32>
    %478 = tpu.matmul %476, %477, %cst_108 {dimension_numbers = #tpu.dot_dimension_numbers<[1], [0], [0], [1], [0, 0, 1, 1], [], []>} : vector<2x128xbf16>, vector<128x1024xbf16>, vector<2x1024xf32> -> vector<2x1024xf32>
    %479 = vector.extract_strided_slice %478 {offsets = [0, 0], sizes = [2, 512], strides = [1, 1]} : vector<2x1024xf32> to vector<2x512xf32>
    %480 = vector.extract_strided_slice %478 {offsets = [0, 512], sizes = [2, 512], strides = [1, 1]} : vector<2x1024xf32> to vector<2x512xf32>
    %481 = arith.select %62, %479, %480 : vector<2x512xi1>, vector<2x512xf32>
    %482 = arith.addf %320, %481 : vector<2x512xf32>
    %483 = vector.extract_strided_slice %482 {offsets = [0, 0], sizes = [2, 384], strides = [1, 1]} : vector<2x512xf32> to vector<2x384xf32>
    %484 = arith.negf %483 : vector<2x384xf32>
    %485 = math.exp %484 : vector<2x384xf32>
    %cst_109 = arith.constant 1.000000e+00 : f32
    %486 = vector.broadcast %cst_109 : f32 to vector<2x384xf32>
    %487 = arith.addf %486, %485 : vector<2x384xf32>
    %488 = arith.divf %486, %487 : vector<2x384xf32>
    %489 = vector.extract_strided_slice %482 {offsets = [0, 384], sizes = [2, 128], strides = [1, 1]} : vector<2x512xf32> to vector<2x128xf32>
    %490 = math.tanh %489 : vector<2x128xf32>
    %491 = vector.extract_strided_slice %488 {offsets = [0, 128], sizes = [2, 128], strides = [1, 1]} : vector<2x384xf32> to vector<2x128xf32>
    %492 = arith.mulf %491, %472 : vector<2x128xf32>
    %493 = vector.extract_strided_slice %488 {offsets = [0, 0], sizes = [2, 128], strides = [1, 1]} : vector<2x384xf32> to vector<2x128xf32>
    %494 = arith.mulf %493, %490 : vector<2x128xf32>
    %495 = arith.addf %492, %494 : vector<2x128xf32>
    %496 = vector.extract_strided_slice %488 {offsets = [0, 256], sizes = [2, 128], strides = [1, 1]} : vector<2x384xf32> to vector<2x128xf32>
    %497 = math.tanh %495 : vector<2x128xf32>
    %498 = arith.mulf %496, %497 : vector<2x128xf32>
    %c0_110 = arith.constant 0 : index
    %499 = memref.load %arg9[%c0_110] : memref<2xf32, #tpu.memory_space<smem>>
    %500 = vector.broadcast %499 : f32 to vector<2x128xf32>
    %501 = arith.mulf %500, %310 : vector<2x128xf32>
    %c1 = arith.constant 1 : index
    %502 = memref.load %arg9[%c1] : memref<2xf32, #tpu.memory_space<smem>>
    %503 = vector.broadcast %502 : f32 to vector<2x128xf32>
    %504 = arith.mulf %503, %498 : vector<2x128xf32>
    %505 = arith.addf %501, %504 : vector<2x128xf32>
    %c0_111 = arith.constant 0 : index
    %c0_112 = arith.constant 0 : index
    %506 = vector.load %arg10[%c0_111, %c0_112] : memref<2x128xf32, #tpu.memory_space<vmem>>, vector<2x128xf32>
    tpu.vector_store %arg10[%c0_111, %c0_112], %505 {strides = array<i32>} : memref<2x128xf32, #tpu.memory_space<vmem>>, vector<2x128xf32>,
    return
  }
}

</mosaic_0001>

<llo_original>
// kernel: tpu_custom_call.1
$region0: #{tpu_custom_call.1}
  #allocation0 [shape = 'u32[]', space=smem, size = 0x4, offset = 0x4, fixed_abs, tag = 'smem constant byte address 0x4 - core index']
  #allocation1 [shape = 'u32[144,128]{1,0:T(1,128)}', space=vmem, size = 0x12000, scoped, tag = 'internal scratch']
  #allocation2 [shape = 'bf16[128,1024]{1,0:T(8,128)(2,1)}', space=vmem, size = 0x40000, scoped, tag = 'scratch operand']
  #allocation3 [shape = 's32[1]{0}', space=sflag, size = 0x4, scoped, tag = 'scratch operand']
  #allocation18 [shape = 's32[]', space=sflag, size = 0x4, offset = 0, fixed_abs, tag = 'sflag constant byte address 0x0 - dummy sync flag']
  #allocation19 [shape = 's32[]', space=sflag, size = 0x4, offset = 0, fixed_abs, tag = 'sflag constant byte address 0x0 - dummy sync flag']
  #allocation20 [shape = 'u32[]', space=smem, size = 0x4, offset = 0x44, fixed_abs, tag = 'smem constant byte address 0x44 - assertion arg 0']
  #allocation21 [shape = 'u32[]', space=smem, size = 0x4, offset = 0x48, fixed_abs, tag = 'smem constant byte address 0x48 - assertion arg 1']
  %s0 = inlined_call_operand.hbm [shape: bf16[8,32], index: 0, kind: input, shape index: {}]
  %s1 = inlined_call_operand.hbm [shape: bf16[32,128], index: 1, kind: input, shape index: {}]
  %s2 = inlined_call_operand.vmem [shape: f32[1,128], index: 2, kind: input, shape index: {}]
  %s3 = inlined_call_operand.hbm [shape: bf16[128,1024], index: 3, kind: input, shape index: {}]
  %s4 = inlined_call_operand.hbm [shape: f32[1,1024], index: 4, kind: input, shape index: {}]
  %s5 = inlined_call_operand.hbm [shape: bf16[128,1024], index: 5, kind: input, shape index: {}]
  %s6 = inlined_call_operand.hbm [shape: bf16[128,1024], index: 6, kind: input, shape index: {}]
  %s7 = inlined_call_operand.vmem [shape: f32[1,1024], index: 7, kind: input, shape index: {}]
  %s8 = inlined_call_operand.hbm [shape: bf16[128,1024], index: 8, kind: input, shape index: {}]
  %s9 = inlined_call_operand.vmem [shape: f32[2], index: 9, kind: input, shape index: {}]
  %s10 = inlined_call_operand.hbm [shape: f32[2,128], index: 10, kind: output, shape index: {}]
  %s11 = sld [smem:[#allocation0]]
  $region78: #{tpu_custom_call.1} parent=0
    _
  %s13 = ssub.s32 1, %s11
  %s14 = scalar_select 0, %s13, %s11
  $region1: #{tpu_custom_call.1} parent=0
    #allocation4 [shape = 'u8[2048]{0}', space=vmem, size = 0x800, scoped, tag = 'input window, operand 0, single buffered']
    #allocation5 [shape = 's32[1]{0}', space=sflag, size = 0x4, scoped, tag = 'scoped memory for tpu_custom_call.1']
    #allocation6 [shape = 's32[1]{0}', space=sflag, size = 0x4, scoped, tag = 'scoped memory for tpu_custom_call.1']
    #allocation7 [shape = 's32[1]{0}', space=sflag, size = 0x4, scoped, tag = 'scoped memory for tpu_custom_call.1']
    #allocation8 [shape = 'u8[8192]{0}', space=vmem, size = 0x2000, scoped, tag = 'input window, operand 1, single buffered']
    #allocation9 [shape = 's32[1]{0}', space=sflag, size = 0x4, scoped, tag = 'scoped memory for tpu_custom_call.1']
    #allocation10 [shape = 'u8[262144]{0}', space=vmem, size = 0x40000, scoped, tag = 'input window, operand 3, single buffered']
    #allocation11 [shape = 'u8[4096]{0}', space=vmem, size = 0x1000, scoped, tag = 'input window, operand 4, single buffered']
    #allocation12 [shape = 's32[1]{0}', space=sflag, size = 0x4, scoped, tag = 'scoped memory for tpu_custom_call.1']
    #allocation13 [shape = 'u8[262144]{0}', space=vmem, size = 0x40000, scoped, tag = 'input window, operand 5, single buffered']
    #allocation14 [shape = 'u8[262144]{0}', space=vmem, size = 0x40000, scoped, tag = 'input window, operand 6, single buffered']
    #allocation15 [shape = 's32[1]{0}', space=sflag, size = 0x4, scoped, tag = 'scoped memory for tpu_custom_call.1']
    #allocation16 [shape = 'u8[512]{0}', space=smem, size = 0x200, scoped, tag = 'input window, operand 9, single buffered']
    #allocation17 [shape = 'u8[1024]{0}', space=vmem, size = 0x400, scoped, tag = 'output window, operand 0, single buffered']
    %15 = vsyncpa [#allocation5], 0
    %16 = vsyncpa [#allocation9], 0
    %17 = vsyncpa [#allocation12], 0
    %18 = vsyncpa [#allocation15], 0
    %19 = vsyncpa [#allocation7], 0
    %20 = vsyncpa [#allocation6], 0
    // Predicated region
    $region2: #{tpu_custom_call.1} parent=1 // pred_check
      _
    $region3: #{tpu_custom_call.1} parent=1 // pred_check_branch
      %22 = sbr.rel (0) target = $region5
    $region4: #{tpu_custom_call.1} parent=1 // pred_region
      %s24 = ssub.s32 64, 64
      %25 = vsyncadd [#allocation5], %s24
      %s27 = sshll.u32 [#allocation4], 4
      %s28 = int_to_ptr.vmem [resolvable:$true] %s27
      %30 = dma.hbm_to_vmem [thread:$0]  %s0, 64, %s28, [#allocation5]
    $region5: #{tpu_custom_call.1} parent=1 // pred_fallthru
      _
    // Predicated region
    $region6: #{tpu_custom_call.1} parent=1 // pred_check
      _
    $region7: #{tpu_custom_call.1} parent=1 // pred_check_branch
      %32 = sbr.rel (0) target = $region9
    $region8: #{tpu_custom_call.1} parent=1 // pred_region
      %s34 = ssub.s32 256, 256
      %35 = vsyncadd [#allocation9], %s34
      %s36 = sshll.u32 [#allocation8], 4
      %s37 = int_to_ptr.vmem [resolvable:$true] %s36
      %42 = dma.hbm_to_vmem [thread:$0]  %s1, 256, %s37, [#allocation9], 64, 64, 4
    $region9: #{tpu_custom_call.1} parent=1 // pred_fallthru
      _
    // Predicated region
    $region10: #{tpu_custom_call.1} parent=1 // pred_check
      _
    $region11: #{tpu_custom_call.1} parent=1 // pred_check_branch
      %44 = sbr.rel (0) target = $region13
    $region12: #{tpu_custom_call.1} parent=1 // pred_region
      _
    $region13: #{tpu_custom_call.1} parent=1 // pred_fallthru
      _
    // Predicated region
    $region14: #{tpu_custom_call.1} parent=1 // pred_check
      _
    $region15: #{tpu_custom_call.1} parent=1 // pred_check_branch
      %46 = sbr.rel (0) target = $region17
    $region16: #{tpu_custom_call.1} parent=1 // pred_region
      %s48 = ssub.s32 8192, 8192
      %49 = vsyncadd [#allocation9], %s48
      %s50 = sshll.u32 [#allocation10], 4
      %s51 = int_to_ptr.vmem [resolvable:$true] %s50
      %56 = dma.hbm_to_vmem [thread:$0]  %s3, 8192, %s51, [#allocation9], 512, 512, 32
    $region17: #{tpu_custom_call.1} parent=1 // pred_fallthru
      _
    // Predicated region
    $region18: #{tpu_custom_call.1} parent=1 // pred_check
      _
    $region19: #{tpu_custom_call.1} parent=1 // pred_check_branch
      %58 = sbr.rel (0) target = $region21
    $region20: #{tpu_custom_call.1} parent=1 // pred_region
      %s60 = ssub.s32 128, 128
      %61 = vsyncadd [#allocation12], %s60
      %s63 = sshll.u32 [#allocation11], 4
      %s64 = int_to_ptr.vmem [resolvable:$true] %s63
      %66 = dma.hbm_to_vmem [thread:$0]  %s4, 128, %s64, [#allocation12]
    $region21: #{tpu_custom_call.1} parent=1 // pred_fallthru
      _
    // Predicated region
    $region22: #{tpu_custom_call.1} parent=1 // pred_check
      _
    $region23: #{tpu_custom_call.1} parent=1 // pred_check_branch
      %68 = sbr.rel (0) target = $region25
    $region24: #{tpu_custom_call.1} parent=1 // pred_region
      %s70 = ssub.s32 8192, 8192
      %71 = vsyncadd [#allocation12], %s70
      %s72 = sshll.u32 [#allocation13], 4
      %s73 = int_to_ptr.vmem [resolvable:$true] %s72
      %78 = dma.hbm_to_vmem [thread:$0]  %s5, 8192, %s73, [#allocation12], 512, 512, 32
    $region25: #{tpu_custom_call.1} parent=1 // pred_fallthru
      _
    // Predicated region
    $region26: #{tpu_custom_call.1} parent=1 // pred_check
      _
    $region27: #{tpu_custom_call.1} parent=1 // pred_check_branch
      %80 = sbr.rel (0) target = $region29
    $region28: #{tpu_custom_call.1} parent=1 // pred_region
      %s82 = ssub.s32 8192, 8192
      %83 = vsyncadd [#allocation15], %s82
      %s84 = sshll.u32 [#allocation14], 4
      %s85 = int_to_ptr.vmem [resolvable:$true] %s84
      %90 = dma.hbm_to_vmem [thread:$0]  %s6, 8192, %s85, [#allocation15], 512, 512, 32
    $region29: #{tpu_custom_call.1} parent=1 // pred_fallthru
      _
    // Predicated region
    $region30: #{tpu_custom_call.1} parent=1 // pred_check
      _
    $region31: #{tpu_custom_call.1} parent=1 // pred_check_branch
      %92 = sbr.rel (0) target = $region33
    $region32: #{tpu_custom_call.1} parent=1 // pred_region
      _
    $region33: #{tpu_custom_call.1} parent=1 // pred_fallthru
      _
    // Predicated region
    $region34: #{tpu_custom_call.1} parent=1 // pred_check
      _
    $region35: #{tpu_custom_call.1} parent=1 // pred_check_branch
      %94 = sbr.rel (0) target = $region37
    $region36: #{tpu_custom_call.1} parent=1 // pred_region
      %s96 = ssub.s32 16, 16
      %97 = vsyncadd [#allocation7], %s96
      %s99 = sshll.u32 %s9, 4
      %s100 = int_to_ptr.vmem [resolvable:$true] %s99
      %102 = dma.vmem_to_smem %s100, 16, [#allocation16], [#allocation7]
    $region37: #{tpu_custom_call.1} parent=1 // pred_fallthru
      _
    // Predicated region
    $region38: #{tpu_custom_call.1} parent=1 // pred_check
      _
    $region39: #{tpu_custom_call.1} parent=1 // pred_check_branch
      %104 = sbr.rel (0) target = $region41
    $region40: #{tpu_custom_call.1} parent=1 // pred_region
      %105 = dma.done [#allocation5], 64
    $region41: #{tpu_custom_call.1} parent=1 // pred_fallthru
      _
    // Predicated region
    $region42: #{tpu_custom_call.1} parent=1 // pred_check
      _
    $region43: #{tpu_custom_call.1} parent=1 // pred_check_branch
      %107 = sbr.rel (0) target = $region45
    $region44: #{tpu_custom_call.1} parent=1 // pred_region
      %108 = dma.done [#allocation9], 256
    $region45: #{tpu_custom_call.1} parent=1 // pred_fallthru
      _
    // Predicated region
    $region46: #{tpu_custom_call.1} parent=1 // pred_check
      _
    $region47: #{tpu_custom_call.1} parent=1 // pred_check_branch
      %110 = sbr.rel (0) target = $region49
    $region48: #{tpu_custom_call.1} parent=1 // pred_region
      %111 = dma.done [#allocation9], 8192
    $region49: #{tpu_custom_call.1} parent=1 // pred_fallthru
      _
    // Predicated region
    $region50: #{tpu_custom_call.1} parent=1 // pred_check
      _
    $region51: #{tpu_custom_call.1} parent=1 // pred_check_branch
      %113 = sbr.rel (0) target = $region53
    $region52: #{tpu_custom_call.1} parent=1 // pred_region
      %114 = dma.done [#allocation12], 128
    $region53: #{tpu_custom_call.1} parent=1 // pred_fallthru
      _
    // Predicated region
    $region54: #{tpu_custom_call.1} parent=1 // pred_check
      _
    $region55: #{tpu_custom_call.1} parent=1 // pred_check_branch
      %116 = sbr.rel (0) target = $region57
    $region56: #{tpu_custom_call.1} parent=1 // pred_region
      %117 = dma.done [#allocation12], 8192
    $region57: #{tpu_custom_call.1} parent=1 // pred_fallthru
      _
    // Predicated region
    $region58: #{tpu_custom_call.1} parent=1 // pred_check
      _
    $region59: #{tpu_custom_call.1} parent=1 // pred_check_branch
      %119 = sbr.rel (0) target = $region61
    $region60: #{tpu_custom_call.1} parent=1 // pred_region
      %120 = dma.done [#allocation15], 8192
    $region61: #{tpu_custom_call.1} parent=1 // pred_fallthru
      _
    // Predicated region
    $region62: #{tpu_custom_call.1} parent=1 // pred_check
      _
    $region63: #{tpu_custom_call.1} parent=1 // pred_check_branch
      %122 = sbr.rel (0) target = $region65
    $region64: #{tpu_custom_call.1} parent=1 // pred_region
      %123 = dma.done [#allocation7], 16
    $region65: #{tpu_custom_call.1} parent=1 // pred_fallthru
      _
    %124 = sfence
    // Predicated region
    $region66: #{tpu_custom_call.1} parent=1 // pred_check
      _
    $region67: #{tpu_custom_call.1} parent=1 // pred_check_branch
      %127 = sbr.rel target = $region69
    $region68: #{tpu_custom_call.1} parent=1 // pred_region
      %128 = sst [smem:[#allocation20]] [#allocation19]
      %129 = sst [smem:[#allocation21]] [#allocation18]
    $region69: #{tpu_custom_call.1} parent=1 // pred_fallthru
      _
    %131 = shalt.err (0)
    %s133 = sshll.u32 [#allocation2], 4
    %s134 = int_to_ptr.vmem [resolvable:$true] %s133
    %136 = dma.hbm_to_vmem [thread:$0]  %s8, 8192, %s134, [#allocation3]
    %v137 = vld [vmem:[#allocation4] sm:$0xf]
    %v138 = vld [vmem:[#allocation8] sm:$0xf]
    %v139 = vld [vmem:[#allocation8 + $0x4] sm:$0xf]
    %v140 = vld [vmem:[#allocation8 + $0x8] sm:$0xf]
    %v141 = vld [vmem:[#allocation8 + $0xc] sm:$0xf]
    %v142 = vld [vmem:[%s2] sm:$0x1]
    %v144 = vlaneseq
    %v145 = vshrl.u32 %v144, 7
    %v146 = vsub.s32 0, %v145
    %v147 = vrot.slane %v142, %v146
    %v153 = vunpack.c.l.b16 %v138
    %v154 = vunpack.c.l.b16 %v139
    %v155 = vunpack.c.l.b16 %v140
    %v156 = vunpack.c.l.b16 %v141
    %v157 = vpack.c.b16 %v154, %v153
    %v158 = vpack.c.b16 %v156, %v155
    %vm161 = vcmask 261120
    %v163 = vsel %vm161, %v137, 0
    %165 = vmatprep.subr.bf16.mxu0 0
    %166 = vmatpush1.bf16.msra.mxu0 0
    %167 = vmatprep.subr.bf16.mxu0 0
    %168 = vmatpush1.bf16.msra.mxu0 0
    %169 = vmatprep.subr.bf16.mxu0 0
    %170 = vmatpush1.bf16.msra.mxu0 0
    %171 = vmatprep.subr.bf16.mxu0 0
    %172 = vmatpush1.bf16.msra.mxu0 0
    %173 = vmatprep.subr.bf16.mxu0 0
    %174 = vmatpush1.bf16.msra.mxu0 0
    %175 = vmatprep.subr.bf16.mxu0 0
    %176 = vmatpush1.bf16.msra.mxu0 0
    %177 = vmatprep.subr.bf16.mxu0 0
    %178 = vmatpush1.bf16.msra.mxu0 %v158
    %179 = vmatprep.subr.bf16.mxu0 0
    %180 = vmatpush1.bf16.msra.mxu0 %v157
    %181 = vmatprep.subr.bf16.mxu0 0
    %182 = vmatpush2.bf16.msra.mxu0 0
    %183 = vmatprep.subr.bf16.mxu0 0
    %184 = vmatpush2.bf16.msra.mxu0 0
    %185 = vmatprep.subr.bf16.mxu0 0
    %186 = vmatpush2.bf16.msra.mxu0 0
    %187 = vmatprep.subr.bf16.mxu0 0
    %188 = vmatpush2.bf16.msra.mxu0 0
    %189 = vmatprep.subr.bf16.mxu0 0
    %190 = vmatpush2.bf16.msra.mxu0 0
    %191 = vmatprep.subr.bf16.mxu0 0
    %192 = vmatpush2.bf16.msra.mxu0 0
    %193 = vmatprep.subr.bf16.mxu0 0
    %194 = vmatpush2.bf16.msra.mxu0 0
    %195 = vmatprep.subr.bf16.mxu0 0
    %196 = vmatpush2.bf16.msra.mxu0 0
    %197 = vmatprep.mubr.bf16.mxu0 0
    %198 = vmatmul.mubr.bf16.gmra.mxu0 %v163
    %v199 = vpop.f32.mrf.mxu0
    %v200 = vadd.f32 %v147, %v199
    %v201 = vpop.f32.mrf.mxu0
    %v202 = vpop.f32.mrf.mxu0
    %v203 = vpop.f32.mrf.mxu0
    %204 = vdwg.mxu0
    %v205 = vpack.c.bf16 %v200, %v200
    %v206 = vld [vmem:[#allocation10] sm:$0xff]
    %v207 = vld [vmem:[#allocation10 + $0x8] sm:$0xff]
    %v208 = vld [vmem:[#allocation10 + $0x10] sm:$0xff]
    %v209 = vld [vmem:[#allocation10 + $0x18] sm:$0xff]
    %v210 = vld [vmem:[#allocation10 + $0x20] sm:$0xff]
    %v211 = vld [vmem:[#allocation10 + $0x28] sm:$0xff]
    %v212 = vld [vmem:[#allocation10 + $0x30] sm:$0xff]
    %v213 = vld [vmem:[#allocation10 + $0x38] sm:$0xff]
    %v214 = vld [vmem:[#allocation10 + $0x40] sm:$0xff]
    %v215 = vld [vmem:[#allocation10 + $0x48] sm:$0xff]
    %v216 = vld [vmem:[#allocation10 + $0x50] sm:$0xff]
    %v217 = vld [vmem:[#allocation10 + $0x58] sm:$0xff]
    %v218 = vld [vmem:[#allocation10 + $0x60] sm:$0xff]
    %v219 = vld [vmem:[#allocation10 + $0x68] sm:$0xff]
    %v220 = vld [vmem:[#allocation10 + $0x70] sm:$0xff]
    %v221 = vld [vmem:[#allocation10 + $0x78] sm:$0xff]
    %v222 = vld [vmem:[#allocation10 + $0x80] sm:$0xff]
    %v223 = vld [vmem:[#allocation10 + $0x88] sm:$0xff]
    %v224 = vld [vmem:[#allocation10 + $0x90] sm:$0xff]
    %v225 = vld [vmem:[#allocation10 + $0x98] sm:$0xff]
    %v226 = vld [vmem:[#allocation10 + $0xa0] sm:$0xff]
    %v227 = vld [vmem:[#allocation10 + $0xa8] sm:$0xff]
    %v228 = vld [vmem:[#allocation10 + $0xb0] sm:$0xff]
    %v229 = vld [vmem:[#allocation10 + $0xb8] sm:$0xff]
    %v230 = vld [vmem:[#allocation10 + $0xc0] sm:$0xff]
    %v231 = vld [vmem:[#allocation10 + $0xc8] sm:$0xff]
    %v232 = vld [vmem:[#allocation10 + $0xd0] sm:$0xff]
    %v233 = vld [vmem:[#allocation10 + $0xd8] sm:$0xff]
    %v234 = vld [vmem:[#allocation10 + $0xe0] sm:$0xff]
    %v235 = vld [vmem:[#allocation10 + $0xe8] sm:$0xff]
    %v236 = vld [vmem:[#allocation10 + $0xf0] sm:$0xff]
    %v237 = vld [vmem:[#allocation10 + $0xf8] sm:$0xff]
    %v238 = vld [vmem:[#allocation10 + $0x100] sm:$0xff]
    %v239 = vld [vmem:[#allocation10 + $0x108] sm:$0xff]
    %v240 = vld [vmem:[#allocation10 + $0x110] sm:$0xff]
    %v241 = vld [vmem:[#allocation10 + $0x118] sm:$0xff]
    %v242 = vld [vmem:[#allocation10 + $0x120] sm:$0xff]
    %v243 = vld [vmem:[#allocation10 + $0x128] sm:$0xff]
    %v244 = vld [vmem:[#allocation10 + $0x130] sm:$0xff]
    %v245 = vld [vmem:[#allocation10 + $0x138] sm:$0xff]
    %v246 = vld [vmem:[#allocation10 + $0x140] sm:$0xff]
    %v247 = vld [vmem:[#allocation10 + $0x148] sm:$0xff]
    %v248 = vld [vmem:[#allocation10 + $0x150] sm:$0xff]
    %v249 = vld [vmem:[#allocation10 + $0x158] sm:$0xff]
    %v250 = vld [vmem:[#allocation10 + $0x160] sm:$0xff]
    %v251 = vld [vmem:[#allocation10 + $0x168] sm:$0xff]
    %v252 = vld [vmem:[#allocation10 + $0x170] sm:$0xff]
    %v253 = vld [vmem:[#allocation10 + $0x178] sm:$0xff]
    %v254 = vld [vmem:[#allocation10 + $0x180] sm:$0xff]
    %v255 = vld [vmem:[#allocation10 + $0x188] sm:$0xff]
    %v256 = vld [vmem:[#allocation10 + $0x190] sm:$0xff]
    %v257 = vld [vmem:[#allocation10 + $0x198] sm:$0xff]
    %v258 = vld [vmem:[#allocation10 + $0x1a0] sm:$0xff]
    %v259 = vld [vmem:[#allocation10 + $0x1a8] sm:$0xff]
    %v260 = vld [vmem:[#allocation10 + $0x1b0] sm:$0xff]
    %v261 = vld [vmem:[#allocation10 + $0x1b8] sm:$0xff]
    %v262 = vld [vmem:[#allocation10 + $0x1c0] sm:$0xff]
    %v263 = vld [vmem:[#allocation10 + $0x1c8] sm:$0xff]
    %v264 = vld [vmem:[#allocation10 + $0x1d0] sm:$0xff]
    %v265 = vld [vmem:[#allocation10 + $0x1d8] sm:$0xff]
    %v266 = vld [vmem:[#allocation10 + $0x1e0] sm:$0xff]
    %v267 = vld [vmem:[#allocation10 + $0x1e8] sm:$0xff]
    %v268 = vld [vmem:[#allocation10 + $0x1f0] sm:$0xff]
    %v269 = vld [vmem:[#allocation10 + $0x1f8] sm:$0xff]
    %v270 = vld [vmem:[#allocation11] sm:$0xff]
    %v272 = vlaneseq
    %v273 = vshrl.u32 %v272, 7
    %v274 = vsub.s32 0, %v273
    %v275 = vrot.slane %v270, %v274
    %v276 = vlaneseq
    %v277 = vshrl.u32 %v276, 7
    %v278 = vsub.s32 1, %v277
    %v279 = vrot.slane %v270, %v278
    %v280 = vlaneseq
    %v281 = vshrl.u32 %v280, 7
    %v282 = vsub.s32 2, %v281
    %v283 = vrot.slane %v270, %v282
    %v284 = vlaneseq
    %v285 = vshrl.u32 %v284, 7
    %v286 = vsub.s32 3, %v285
    %v287 = vrot.slane %v270, %v286
    %v288 = vlaneseq
    %v289 = vshrl.u32 %v288, 7
    %v290 = vsub.s32 4, %v289
    %v291 = vrot.slane %v270, %v290
    %v292 = vlaneseq
    %v293 = vshrl.u32 %v292, 7
    %v294 = vsub.s32 5, %v293
    %v295 = vrot.slane %v270, %v294
    %v296 = vlaneseq
    %v297 = vshrl.u32 %v296, 7
    %v298 = vsub.s32 6, %v297
    %v299 = vrot.slane %v270, %v298
    %v300 = vlaneseq
    %v301 = vshrl.u32 %v300, 7
    %v302 = vsub.s32 7, %v301
    %v303 = vrot.slane %v270, %v302
    %v376 = vunpack.c.l.b16 %v206
    %v377 = vunpack.c.h.b16 %v206
    %v378 = vunpack.c.l.b16 %v207
    %v379 = vunpack.c.h.b16 %v207
    %v380 = vunpack.c.l.b16 %v208
    %v381 = vunpack.c.h.b16 %v208
    %v382 = vunpack.c.l.b16 %v209
    %v383 = vunpack.c.h.b16 %v209
    %v384 = vunpack.c.l.b16 %v210
    %v385 = vunpack.c.h.b16 %v210
    %v386 = vunpack.c.l.b16 %v211
    %v387 = vunpack.c.h.b16 %v211
    %v388 = vunpack.c.l.b16 %v212
    %v389 = vunpack.c.h.b16 %v212
    %v390 = vunpack.c.l.b16 %v213
    %v391 = vunpack.c.h.b16 %v213
    %v392 = vunpack.c.l.b16 %v214
    %v393 = vunpack.c.h.b16 %v214
    %v394 = vunpack.c.l.b16 %v215
    %v395 = vunpack.c.h.b16 %v215
    %v396 = vunpack.c.l.b16 %v216
    %v397 = vunpack.c.h.b16 %v216
    %v398 = vunpack.c.l.b16 %v217
    %v399 = vunpack.c.h.b16 %v217
    %v400 = vunpack.c.l.b16 %v218
    %v401 = vunpack.c.h.b16 %v218
    %v402 = vunpack.c.l.b16 %v219
    %v403 = vunpack.c.h.b16 %v219
    %v404 = vunpack.c.l.b16 %v220
    %v405 = vunpack.c.h.b16 %v220
    %v406 = vunpack.c.l.b16 %v221
    %v407 = vunpack.c.h.b16 %v221
    %v408 = vunpack.c.l.b16 %v222
    %v409 = vunpack.c.h.b16 %v222
    %v410 = vunpack.c.l.b16 %v223
    %v411 = vunpack.c.h.b16 %v223
    %v412 = vunpack.c.l.b16 %v224
    %v413 = vunpack.c.h.b16 %v224
    %v414 = vunpack.c.l.b16 %v225
    %v415 = vunpack.c.h.b16 %v225
    %v416 = vunpack.c.l.b16 %v226
    %v417 = vunpack.c.h.b16 %v226
    %v418 = vunpack.c.l.b16 %v227
    %v419 = vunpack.c.h.b16 %v227
    %v420 = vunpack.c.l.b16 %v228
    %v421 = vunpack.c.h.b16 %v228
    %v422 = vunpack.c.l.b16 %v229
    %v423 = vunpack.c.h.b16 %v229
    %v424 = vunpack.c.l.b16 %v230
    %v425 = vunpack.c.h.b16 %v230
    %v426 = vunpack.c.l.b16 %v231
    %v427 = vunpack.c.h.b16 %v231
    %v428 = vunpack.c.l.b16 %v232
    %v429 = vunpack.c.h.b16 %v232
    %v430 = vunpack.c.l.b16 %v233
    %v431 = vunpack.c.h.b16 %v233
    %v432 = vunpack.c.l.b16 %v234
    %v433 = vunpack.c.h.b16 %v234
    %v434 = vunpack.c.l.b16 %v235
    %v435 = vunpack.c.h.b16 %v235
    %v436 = vunpack.c.l.b16 %v236
    %v437 = vunpack.c.h.b16 %v236
    %v438 = vunpack.c.l.b16 %v237
    %v439 = vunpack.c.h.b16 %v237
    %v440 = vunpack.c.l.b16 %v238
    %v441 = vunpack.c.h.b16 %v238
    %v442 = vunpack.c.l.b16 %v239
    %v443 = vunpack.c.h.b16 %v239
    %v444 = vunpack.c.l.b16 %v240
    %v445 = vunpack.c.h.b16 %v240
    %v446 = vunpack.c.l.b16 %v241
    %v447 = vunpack.c.h.b16 %v241
    %v448 = vunpack.c.l.b16 %v242
    %v449 = vunpack.c.h.b16 %v242
    %v450 = vunpack.c.l.b16 %v243
    %v451 = vunpack.c.h.b16 %v243
    %v452 = vunpack.c.l.b16 %v244
    %v453 = vunpack.c.h.b16 %v244
    %v454 = vunpack.c.l.b16 %v245
    %v455 = vunpack.c.h.b16 %v245
    %v456 = vunpack.c.l.b16 %v246
    %v457 = vunpack.c.h.b16 %v246
    %v458 = vunpack.c.l.b16 %v247
    %v459 = vunpack.c.h.b16 %v247
    %v460 = vunpack.c.l.b16 %v248
    %v461 = vunpack.c.h.b16 %v248
    %v462 = vunpack.c.l.b16 %v249
    %v463 = vunpack.c.h.b16 %v249
    %v464 = vunpack.c.l.b16 %v250
    %v465 = vunpack.c.h.b16 %v250
    %v466 = vunpack.c.l.b16 %v251
    %v467 = vunpack.c.h.b16 %v251
    %v468 = vunpack.c.l.b16 %v252
    %v469 = vunpack.c.h.b16 %v252
    %v470 = vunpack.c.l.b16 %v253
    %v471 = vunpack.c.h.b16 %v253
    %v472 = vunpack.c.l.b16 %v254
    %v473 = vunpack.c.h.b16 %v254
    %v474 = vunpack.c.l.b16 %v255
    %v475 = vunpack.c.h.b16 %v255
    %v476 = vunpack.c.l.b16 %v256
    %v477 = vunpack.c.h.b16 %v256
    %v478 = vunpack.c.l.b16 %v257
    %v479 = vunpack.c.h.b16 %v257
    %v480 = vunpack.c.l.b16 %v258
    %v481 = vunpack.c.h.b16 %v258
    %v482 = vunpack.c.l.b16 %v259
    %v483 = vunpack.c.h.b16 %v259
    %v484 = vunpack.c.l.b16 %v260
    %v485 = vunpack.c.h.b16 %v260
    %v486 = vunpack.c.l.b16 %v261
    %v487 = vunpack.c.h.b16 %v261
    %v488 = vunpack.c.l.b16 %v262
    %v489 = vunpack.c.h.b16 %v262
    %v490 = vunpack.c.l.b16 %v263
    %v491 = vunpack.c.h.b16 %v263
    %v492 = vunpack.c.l.b16 %v264
    %v493 = vunpack.c.h.b16 %v264
    %v494 = vunpack.c.l.b16 %v265
    %v495 = vunpack.c.h.b16 %v265
    %v496 = vunpack.c.l.b16 %v266
    %v497 = vunpack.c.h.b16 %v266
    %v498 = vunpack.c.l.b16 %v267
    %v499 = vunpack.c.h.b16 %v267
    %v500 = vunpack.c.l.b16 %v268
    %v501 = vunpack.c.h.b16 %v268
    %v502 = vunpack.c.l.b16 %v269
    %v503 = vunpack.c.h.b16 %v269
    %v504 = vpack.c.b16 %v384, %v376
    %v505 = vpack.c.b16 %v385, %v377
    %v506 = vpack.c.b16 %v386, %v378
    %v507 = vpack.c.b16 %v387, %v379
    %v508 = vpack.c.b16 %v388, %v380
    %v509 = vpack.c.b16 %v389, %v381
    %v510 = vpack.c.b16 %v390, %v382
    %v511 = vpack.c.b16 %v391, %v383
    %v512 = vpack.c.b16 %v400, %v392
    %v513 = vpack.c.b16 %v401, %v393
    %v514 = vpack.c.b16 %v402, %v394
    %v515 = vpack.c.b16 %v403, %v395
    %v516 = vpack.c.b16 %v404, %v396
    %v517 = vpack.c.b16 %v405, %v397
    %v518 = vpack.c.b16 %v406, %v398
    %v519 = vpack.c.b16 %v407, %v399
    %v520 = vpack.c.b16 %v416, %v408
    %v521 = vpack.c.b16 %v417, %v409
    %v522 = vpack.c.b16 %v418, %v410
    %v523 = vpack.c.b16 %v419, %v411
    %v524 = vpack.c.b16 %v420, %v412
    %v525 = vpack.c.b16 %v421, %v413
    %v526 = vpack.c.b16 %v422, %v414
    %v527 = vpack.c.b16 %v423, %v415
    %v528 = vpack.c.b16 %v432, %v424
    %v529 = vpack.c.b16 %v433, %v425
    %v530 = vpack.c.b16 %v434, %v426
    %v531 = vpack.c.b16 %v435, %v427
    %v532 = vpack.c.b16 %v436, %v428
    %v533 = vpack.c.b16 %v437, %v429
    %v534 = vpack.c.b16 %v438, %v430
    %v535 = vpack.c.b16 %v439, %v431
    %v536 = vpack.c.b16 %v448, %v440
    %v537 = vpack.c.b16 %v449, %v441
    %v538 = vpack.c.b16 %v450, %v442
    %v539 = vpack.c.b16 %v451, %v443
    %v540 = vpack.c.b16 %v452, %v444
    %v541 = vpack.c.b16 %v453, %v445
    %v542 = vpack.c.b16 %v454, %v446
    %v543 = vpack.c.b16 %v455, %v447
    %v544 = vpack.c.b16 %v464, %v456
    %v545 = vpack.c.b16 %v465, %v457
    %v546 = vpack.c.b16 %v466, %v458
    %v547 = vpack.c.b16 %v467, %v459
    %v548 = vpack.c.b16 %v468, %v460
    %v549 = vpack.c.b16 %v469, %v461
    %v550 = vpack.c.b16 %v470, %v462
    %v551 = vpack.c.b16 %v471, %v463
    %v552 = vpack.c.b16 %v480, %v472
    %v553 = vpack.c.b16 %v481, %v473
    %v554 = vpack.c.b16 %v482, %v474
    %v555 = vpack.c.b16 %v483, %v475
    %v556 = vpack.c.b16 %v484, %v476
    %v557 = vpack.c.b16 %v485, %v477
    %v558 = vpack.c.b16 %v486, %v478
    %v559 = vpack.c.b16 %v487, %v479
    %v560 = vpack.c.b16 %v496, %v488
    %v561 = vpack.c.b16 %v497, %v489
    %v562 = vpack.c.b16 %v498, %v490
    %v563 = vpack.c.b16 %v499, %v491
    %v564 = vpack.c.b16 %v500, %v492
    %v565 = vpack.c.b16 %v501, %v493
    %v566 = vpack.c.b16 %v502, %v494
    %v567 = vpack.c.b16 %v503, %v495
    %632 = vmatprep.subr.bf16.mxu0 %v561
    %633 = vmatpush1.bf16.msra.mxu0 %v560
    %634 = vmatprep.subr.bf16.mxu0 %v553
    %635 = vmatpush1.bf16.msra.mxu0 %v552
    %636 = vmatprep.subr.bf16.mxu0 %v545
    %637 = vmatpush1.bf16.msra.mxu0 %v544
    %638 = vmatprep.subr.bf16.mxu0 %v537
    %639 = vmatpush1.bf16.msra.mxu0 %v536
    %640 = vmatprep.subr.bf16.mxu0 %v529
    %641 = vmatpush1.bf16.msra.mxu0 %v528
    %642 = vmatprep.subr.bf16.mxu0 %v521
    %643 = vmatpush1.bf16.msra.mxu0 %v520
    %644 = vmatprep.subr.bf16.mxu0 %v513
    %645 = vmatpush1.bf16.msra.mxu0 %v512
    %646 = vmatprep.subr.bf16.mxu0 %v505
    %647 = vmatpush1.bf16.msra.mxu0 %v504
    %648 = vmatprep.subr.bf16.mxu0 0
    %649 = vmatpush2.bf16.msra.mxu0 0
    %650 = vmatprep.subr.bf16.mxu0 0
    %651 = vmatpush2.bf16.msra.mxu0 0
    %652 = vmatprep.subr.bf16.mxu0 0
    %653 = vmatpush2.bf16.msra.mxu0 0
    %654 = vmatprep.subr.bf16.mxu0 0
    %655 = vmatpush2.bf16.msra.mxu0 0
    %656 = vmatprep.subr.bf16.mxu0 0
    %657 = vmatpush2.bf16.msra.mxu0 0
    %658 = vmatprep.subr.bf16.mxu0 0
    %659 = vmatpush2.bf16.msra.mxu0 0
    %660 = vmatprep.subr.bf16.mxu0 0
    %661 = vmatpush2.bf16.msra.mxu0 0
    %662 = vmatprep.subr.bf16.mxu0 0
    %663 = vmatpush2.bf16.msra.mxu0 0
    %664 = vmatprep.mubr.bf16.mxu0 0
    %665 = vmatmul.mubr.bf16.gmra.mxu0 %v205
    %v666 = vpop.f32.mrf.mxu0
    %v667 = vadd.f32 %v275, %v666
    %v668 = vpop.f32.mrf.mxu0
    %v669 = vadd.f32 %v279, %v668
    %v670 = vpop.f32.mrf.mxu0
    %v671 = vpop.f32.mrf.mxu0
    %672 = vdwg.mxu0
    %673 = vmatprep.subr.bf16.mxu0 %v563
    %674 = vmatpush1.bf16.msra.mxu0 %v562
    %675 = vmatprep.subr.bf16.mxu0 %v555
    %676 = vmatpush1.bf16.msra.mxu0 %v554
    %677 = vmatprep.subr.bf16.mxu0 %v547
    %678 = vmatpush1.bf16.msra.mxu0 %v546
    %679 = vmatprep.subr.bf16.mxu0 %v539
    %680 = vmatpush1.bf16.msra.mxu0 %v538
    %681 = vmatprep.subr.bf16.mxu0 %v531
    %682 = vmatpush1.bf16.msra.mxu0 %v530
    %683 = vmatprep.subr.bf16.mxu0 %v523
    %684 = vmatpush1.bf16.msra.mxu0 %v522
    %685 = vmatprep.subr.bf16.mxu0 %v515
    %686 = vmatpush1.bf16.msra.mxu0 %v514
    %687 = vmatprep.subr.bf16.mxu0 %v507
    %688 = vmatpush1.bf16.msra.mxu0 %v506
    %689 = vmatprep.subr.bf16.mxu0 0
    %690 = vmatpush2.bf16.msra.mxu0 0
    %691 = vmatprep.subr.bf16.mxu0 0
    %692 = vmatpush2.bf16.msra.mxu0 0
    %693 = vmatprep.subr.bf16.mxu0 0
    %694 = vmatpush2.bf16.msra.mxu0 0
    %695 = vmatprep.subr.bf16.mxu0 0
    %696 = vmatpush2.bf16.msra.mxu0 0
    %697 = vmatprep.subr.bf16.mxu0 0
    %698 = vmatpush2.bf16.msra.mxu0 0
    %699 = vmatprep.subr.bf16.mxu0 0
    %700 = vmatpush2.bf16.msra.mxu0 0
    %701 = vmatprep.subr.bf16.mxu0 0
    %702 = vmatpush2.bf16.msra.mxu0 0
    %703 = vmatprep.subr.bf16.mxu0 0
    %704 = vmatpush2.bf16.msra.mxu0 0
    %705 = vmatprep.mubr.bf16.mxu0 0
    %706 = vmatmul.mubr.bf16.gmra.mxu0 %v205
    %v707 = vpop.f32.mrf.mxu0
    %v708 = vadd.f32 %v283, %v707
    %v709 = vpop.f32.mrf.mxu0
    %v710 = vadd.f32 %v287, %v709
    %v711 = vpop.f32.mrf.mxu0
    %v712 = vpop.f32.mrf.mxu0
    %713 = vdwg.mxu0
    %714 = vmatprep.subr.bf16.mxu0 %v565
    %715 = vmatpush1.bf16.msra.mxu0 %v564
    %716 = vmatprep.subr.bf16.mxu0 %v557
    %717 = vmatpush1.bf16.msra.mxu0 %v556
    %718 = vmatprep.subr.bf16.mxu0 %v549
    %719 = vmatpush1.bf16.msra.mxu0 %v548
    %720 = vmatprep.subr.bf16.mxu0 %v541
    %721 = vmatpush1.bf16.msra.mxu0 %v540
    %722 = vmatprep.subr.bf16.mxu0 %v533
    %723 = vmatpush1.bf16.msra.mxu0 %v532
    %724 = vmatprep.subr.bf16.mxu0 %v525
    %725 = vmatpush1.bf16.msra.mxu0 %v524
    %726 = vmatprep.subr.bf16.mxu0 %v517
    %727 = vmatpush1.bf16.msra.mxu0 %v516
    %728 = vmatprep.subr.bf16.mxu0 %v509
    %729 = vmatpush1.bf16.msra.mxu0 %v508
    %730 = vmatprep.subr.bf16.mxu0 0
    %731 = vmatpush2.bf16.msra.mxu0 0
    %732 = vmatprep.subr.bf16.mxu0 0
    %733 = vmatpush2.bf16.msra.mxu0 0
    %734 = vmatprep.subr.bf16.mxu0 0
    %735 = vmatpush2.bf16.msra.mxu0 0
    %736 = vmatprep.subr.bf16.mxu0 0
    %737 = vmatpush2.bf16.msra.mxu0 0
    %738 = vmatprep.subr.bf16.mxu0 0
    %739 = vmatpush2.bf16.msra.mxu0 0
    %740 = vmatprep.subr.bf16.mxu0 0
    %741 = vmatpush2.bf16.msra.mxu0 0
    %742 = vmatprep.subr.bf16.mxu0 0
    %743 = vmatpush2.bf16.msra.mxu0 0
    %744 = vmatprep.subr.bf16.mxu0 0
    %745 = vmatpush2.bf16.msra.mxu0 0
    %746 = vmatprep.mubr.bf16.mxu0 0
    %747 = vmatmul.mubr.bf16.gmra.mxu0 %v205
    %v748 = vpop.f32.mrf.mxu0
    %v749 = vadd.f32 %v291, %v748
    %v750 = vpop.f32.mrf.mxu0
    %v751 = vadd.f32 %v295, %v750
    %v752 = vpop.f32.mrf.mxu0
    %v753 = vpop.f32.mrf.mxu0
    %754 = vdwg.mxu0
    %755 = vmatprep.subr.bf16.mxu0 %v567
    %756 = vmatpush1.bf16.msra.mxu0 %v566
    %757 = vmatprep.subr.bf16.mxu0 %v559
    %758 = vmatpush1.bf16.msra.mxu0 %v558
    %759 = vmatprep.subr.bf16.mxu0 %v551
    %760 = vmatpush1.bf16.msra.mxu0 %v550
    %761 = vmatprep.subr.bf16.mxu0 %v543
    %762 = vmatpush1.bf16.msra.mxu0 %v542
    %763 = vmatprep.subr.bf16.mxu0 %v535
    %764 = vmatpush1.bf16.msra.mxu0 %v534
    %765 = vmatprep.subr.bf16.mxu0 %v527
    %766 = vmatpush1.bf16.msra.mxu0 %v526
    %767 = vmatprep.subr.bf16.mxu0 %v519
    %768 = vmatpush1.bf16.msra.mxu0 %v518
    %769 = vmatprep.subr.bf16.mxu0 %v511
    %770 = vmatpush1.bf16.msra.mxu0 %v510
    %771 = vmatprep.subr.bf16.mxu0 0
    %772 = vmatpush2.bf16.msra.mxu0 0
    %773 = vmatprep.subr.bf16.mxu0 0
    %774 = vmatpush2.bf16.msra.mxu0 0
    %775 = vmatprep.subr.bf16.mxu0 0
    %776 = vmatpush2.bf16.msra.mxu0 0
    %777 = vmatprep.subr.bf16.mxu0 0
    %778 = vmatpush2.bf16.msra.mxu0 0
    %779 = vmatprep.subr.bf16.mxu0 0
    %780 = vmatpush2.bf16.msra.mxu0 0
    %781 = vmatprep.subr.bf16.mxu0 0
    %782 = vmatpush2.bf16.msra.mxu0 0
    %783 = vmatprep.subr.bf16.mxu0 0
    %784 = vmatpush2.bf16.msra.mxu0 0
    %785 = vmatprep.subr.bf16.mxu0 0
    %786 = vmatpush2.bf16.msra.mxu0 0
    %787 = vmatprep.mubr.bf16.mxu0 0
    %788 = vmatmul.mubr.bf16.gmra.mxu0 %v205
    %v789 = vpop.f32.mrf.mxu0
    %v790 = vadd.f32 %v299, %v789
    %v791 = vpop.f32.mrf.mxu0
    %v792 = vadd.f32 %v303, %v791
    %v793 = vpop.f32.mrf.mxu0
    %v794 = vpop.f32.mrf.mxu0
    %795 = vdwg.mxu0
    %v800 = vrot.slane %v749, 6
    %v801 = vrot.slane %v751, 6
    %v802 = vrot.slane %v790, 6
    %v803 = vrot.slane %v792, 6
    %vm808 = vcmask 1040384
    %v809 = vsel %vm808, %v667, %v800
    %v810 = vsel %vm808, %v669, %v801
    %v811 = vsel %vm808, %v708, %v802
    %v812 = vsel %vm808, %v710, %v803
    %v817 = vrot.slane %v667, 1
    %v818 = vrot.slane %v669, 1
    %v819 = vrot.slane %v708, 1
    %v820 = vrot.slane %v710, 1
    %v825 = vrot.slane %v749, 5
    %v826 = vrot.slane %v751, 5
    %v827 = vrot.slane %v790, 5
    %v828 = vrot.slane %v792, 5
    %v833 = vsel %vm808, %v817, %v825
    %v834 = vsel %vm808, %v818, %v826
    %v835 = vsel %vm808, %v819, %v827
    %v836 = vsel %vm808, %v820, %v828
    %v837 = vrot.slane %v667, 2
    %v838 = vrot.slane %v669, 2
    %v839 = vrot.slane %v708, 2
    %v840 = vrot.slane %v710, 2
    %v845 = vrot.slane %v749, 4
    %v846 = vrot.slane %v751, 4
    %v847 = vrot.slane %v790, 4
    %v848 = vrot.slane %v792, 4
    %v853 = vsel %vm808, %v837, %v845
    %v854 = vsel %vm808, %v838, %v846
    %v855 = vsel %vm808, %v839, %v847
    %v856 = vsel %vm808, %v840, %v848
    %v857 = vrot.slane %v667, 3
    %v858 = vrot.slane %v669, 3
    %v859 = vrot.slane %v708, 3
    %v860 = vrot.slane %v710, 3
    %v865 = vrot.slane %v749, 3
    %v866 = vrot.slane %v751, 3
    %v867 = vrot.slane %v790, 3
    %v868 = vrot.slane %v792, 3
    %v873 = vsel %vm808, %v857, %v865
    %v874 = vsel %vm808, %v858, %v866
    %v875 = vsel %vm808, %v859, %v867
    %v876 = vsel %vm808, %v860, %v868
    %v877 = vrot.slane %v667, 4
    %v878 = vrot.slane %v669, 4
    %v879 = vrot.slane %v708, 4
    %v880 = vrot.slane %v710, 4
    %v885 = vrot.slane %v749, 2
    %v886 = vrot.slane %v751, 2
    %v887 = vrot.slane %v790, 2
    %v888 = vrot.slane %v792, 2
    %v893 = vsel %vm808, %v877, %v885
    %v894 = vsel %vm808, %v878, %v886
    %v895 = vsel %vm808, %v879, %v887
    %v896 = vsel %vm808, %v880, %v888
    %v897 = vrot.slane %v667, 5
    %v898 = vrot.slane %v669, 5
    %v899 = vrot.slane %v708, 5
    %v900 = vrot.slane %v710, 5
    %v905 = vrot.slane %v749, 1
    %v906 = vrot.slane %v751, 1
    %v907 = vrot.slane %v790, 1
    %v908 = vrot.slane %v792, 1
    %v913 = vsel %vm808, %v897, %v905
    %v914 = vsel %vm808, %v898, %v906
    %v915 = vsel %vm808, %v899, %v907
    %v916 = vsel %vm808, %v900, %v908
    %v917 = vrot.slane %v667, 6
    %v918 = vrot.slane %v669, 6
    %v919 = vrot.slane %v708, 6
    %v920 = vrot.slane %v710, 6
    %v925 = vsel %vm808, %v917, %v749
    %v926 = vsel %vm808, %v918, %v751
    %v927 = vsel %vm808, %v919, %v790
    %v928 = vsel %vm808, %v920, %v792
    %v929 = vrot.slane %v667, 7
    %v930 = vrot.slane %v669, 7
    %v931 = vrot.slane %v708, 7
    %v932 = vrot.slane %v710, 7
    %v937 = vrot.slane %v749, 7
    %v938 = vrot.slane %v751, 7
    %v939 = vrot.slane %v790, 7
    %v940 = vrot.slane %v792, 7
    %v945 = vsel %vm808, %v929, %v937
    %v946 = vsel %vm808, %v930, %v938
    %v947 = vsel %vm808, %v931, %v939
    %v948 = vsel %vm808, %v932, %v940
    %v950 = vrot.slane %v200, 6
    %v952 = vsel %vm808, %v200, %v950
    %v953 = vrot.slane %v200, 1
    %v955 = vrot.slane %v200, 5
    %v957 = vsel %vm808, %v953, %v955
    %v958 = vrot.slane %v200, 2
    %v960 = vrot.slane %v200, 4
    %v962 = vsel %vm808, %v958, %v960
    %v963 = vrot.slane %v200, 3
    %v965 = vsel %vm808, %v960, %v958
    %v966 = vsel %vm808, %v955, %v953
    %v967 = vsel %vm808, %v950, %v200
    %v968 = vrot.slane %v200, 7
    %v970 = vsel %vm808, %v968, %v968
    %v971 = vlaneseq
    %v972 = vshrl.u32 %v971, 7
    %vm973 = vcmp.eq.s32.totalorder %v972, 0
    %v974 = vxor.u32 %v809, 2147483648
    %v975 = vxor.u32 %v810, 2147483648
    %v976 = vxor.u32 %v811, 2147483648
    %v977 = vmul.f32 %v974, 1.442695
    %v978 = vpow.pop %v977
    %v979 = vmul.f32 %v975, 1.442695
    %v980 = vpow.pop %v979
    %v981 = vmul.f32 %v976, 1.442695
    %v982 = vpow.pop %v981
    %v983 = vadd.f32 %v978, 1.0
    %v984 = vadd.f32 %v980, 1.0
    %v985 = vadd.f32 %v982, 1.0
    %v986 = vrcp.pop %v983
    %v987 = vmul.f32 1.0, %v986
    %v988 = vrcp.pop %v984
    %v989 = vmul.f32 1.0, %v988
    %v990 = vrcp.pop %v985
    %v991 = vmul.f32 1.0, %v990
    %v992 = vtanh.pop %v812
    %v993 = vmul.f32 %v989, 0.0
    %v994 = vmul.f32 %v987, %v992
    %v995 = vadd.f32 %v993, %v994
    %v996 = vtanh.pop %v995
    %v997 = vmul.f32 %v991, %v996
    %v998 = vadd.f32 %v997, %v952
    %v999 = vpack.c.bf16 %v998, %v998
    %v1000 = vld [vmem:[#allocation14] sm:$0xff]
    %v1001 = vld [vmem:[#allocation14 + $0x8] sm:$0xff]
    %v1002 = vld [vmem:[#allocation14 + $0x10] sm:$0xff]
    %v1003 = vld [vmem:[#allocation14 + $0x18] sm:$0xff]
    %v1004 = vld [vmem:[#allocation14 + $0x20] sm:$0xff]
    %v1005 = vld [vmem:[#allocation14 + $0x28] sm:$0xff]
    %v1006 = vld [vmem:[#allocation14 + $0x30] sm:$0xff]
    %v1007 = vld [vmem:[#allocation14 + $0x38] sm:$0xff]
    %v1008 = vld [vmem:[#allocation14 + $0x40] sm:$0xff]
    %v1009 = vld [vmem:[#allocation14 + $0x48] sm:$0xff]
    %v1010 = vld [vmem:[#allocation14 + $0x50] sm:$0xff]
    %v1011 = vld [vmem:[#allocation14 + $0x58] sm:$0xff]
    %v1012 = vld [vmem:[#allocation14 + $0x60] sm:$0xff]
    %v1013 = vld [vmem:[#allocation14 + $0x68] sm:$0xff]
    %v1014 = vld [vmem:[#allocation14 + $0x70] sm:$0xff]
    %v1015 = vld [vmem:[#allocation14 + $0x78] sm:$0xff]
    %v1016 = vld [vmem:[#allocation14 + $0x80] sm:$0xff]
    %v1017 = vld [vmem:[#allocation14 + $0x88] sm:$0xff]
    %v1018 = vld [vmem:[#allocation14 + $0x90] sm:$0xff]
    %v1019 = vld [vmem:[#allocation14 + $0x98] sm:$0xff]
    %v1020 = vld [vmem:[#allocation14 + $0xa0] sm:$0xff]
    %v1021 = vld [vmem:[#allocation14 + $0xa8] sm:$0xff]
    %v1022 = vld [vmem:[#allocation14 + $0xb0] sm:$0xff]
    %v1023 = vld [vmem:[#allocation14 + $0xb8] sm:$0xff]
    %v1024 = vld [vmem:[#allocation14 + $0xc0] sm:$0xff]
    %v1025 = vld [vmem:[#allocation14 + $0xc8] sm:$0xff]
    %v1026 = vld [vmem:[#allocation14 + $0xd0] sm:$0xff]
    %v1027 = vld [vmem:[#allocation14 + $0xd8] sm:$0xff]
    %v1028 = vld [vmem:[#allocation14 + $0xe0] sm:$0xff]
    %v1029 = vld [vmem:[#allocation14 + $0xe8] sm:$0xff]
    %v1030 = vld [vmem:[#allocation14 + $0xf0] sm:$0xff]
    %v1031 = vld [vmem:[#allocation14 + $0xf8] sm:$0xff]
    %v1032 = vld [vmem:[#allocation14 + $0x100] sm:$0xff]
    %v1033 = vld [vmem:[#allocation14 + $0x108] sm:$0xff]
    %v1034 = vld [vmem:[#allocation14 + $0x110] sm:$0xff]
    %v1035 = vld [vmem:[#allocation14 + $0x118] sm:$0xff]
    %v1036 = vld [vmem:[#allocation14 + $0x120] sm:$0xff]
    %v1037 = vld [vmem:[#allocation14 + $0x128] sm:$0xff]
    %v1038 = vld [vmem:[#allocation14 + $0x130] sm:$0xff]
    %v1039 = vld [vmem:[#allocation14 + $0x138] sm:$0xff]
    %v1040 = vld [vmem:[#allocation14 + $0x140] sm:$0xff]
    %v1041 = vld [vmem:[#allocation14 + $0x148] sm:$0xff]
    %v1042 = vld [vmem:[#allocation14 + $0x150] sm:$0xff]
    %v1043 = vld [vmem:[#allocation14 + $0x158] sm:$0xff]
    %v1044 = vld [vmem:[#allocation14 + $0x160] sm:$0xff]
    %v1045 = vld [vmem:[#allocation14 + $0x168] sm:$0xff]
    %v1046 = vld [vmem:[#allocation14 + $0x170] sm:$0xff]
    %v1047 = vld [vmem:[#allocation14 + $0x178] sm:$0xff]
    %v1048 = vld [vmem:[#allocation14 + $0x180] sm:$0xff]
    %v1049 = vld [vmem:[#allocation14 + $0x188] sm:$0xff]
    %v1050 = vld [vmem:[#allocation14 + $0x190] sm:$0xff]
    %v1051 = vld [vmem:[#allocation14 + $0x198] sm:$0xff]
    %v1052 = vld [vmem:[#allocation14 + $0x1a0] sm:$0xff]
    %v1053 = vld [vmem:[#allocation14 + $0x1a8] sm:$0xff]
    %v1054 = vld [vmem:[#allocation14 + $0x1b0] sm:$0xff]
    %v1055 = vld [vmem:[#allocation14 + $0x1b8] sm:$0xff]
    %v1056 = vld [vmem:[#allocation14 + $0x1c0] sm:$0xff]
    %v1057 = vld [vmem:[#allocation14 + $0x1c8] sm:$0xff]
    %v1058 = vld [vmem:[#allocation14 + $0x1d0] sm:$0xff]
    %v1059 = vld [vmem:[#allocation14 + $0x1d8] sm:$0xff]
    %v1060 = vld [vmem:[#allocation14 + $0x1e0] sm:$0xff]
    %v1061 = vld [vmem:[#allocation14 + $0x1e8] sm:$0xff]
    %v1062 = vld [vmem:[#allocation14 + $0x1f0] sm:$0xff]
    %v1063 = vld [vmem:[#allocation14 + $0x1f8] sm:$0xff]
    %v1064 = vld [vmem:[%s7] sm:$0xff]
    %v1066 = vlaneseq
    %v1067 = vshrl.u32 %v1066, 7
    %v1068 = vsub.s32 0, %v1067
    %v1069 = vrot.slane %v1064, %v1068
    %v1070 = vlaneseq
    %v1071 = vshrl.u32 %v1070, 7
    %v1072 = vsub.s32 1, %v1071
    %v1073 = vrot.slane %v1064, %v1072
    %v1074 = vlaneseq
    %v1075 = vshrl.u32 %v1074, 7
    %v1076 = vsub.s32 2, %v1075
    %v1077 = vrot.slane %v1064, %v1076
    %v1078 = vlaneseq
    %v1079 = vshrl.u32 %v1078, 7
    %v1080 = vsub.s32 3, %v1079
    %v1081 = vrot.slane %v1064, %v1080
    %v1082 = vlaneseq
    %v1083 = vshrl.u32 %v1082, 7
    %v1084 = vsub.s32 4, %v1083
    %v1085 = vrot.slane %v1064, %v1084
    %v1086 = vlaneseq
    %v1087 = vshrl.u32 %v1086, 7
    %v1088 = vsub.s32 5, %v1087
    %v1089 = vrot.slane %v1064, %v1088
    %v1090 = vlaneseq
    %v1091 = vshrl.u32 %v1090, 7
    %v1092 = vsub.s32 6, %v1091
    %v1093 = vrot.slane %v1064, %v1092
    %v1094 = vlaneseq
    %v1095 = vshrl.u32 %v1094, 7
    %v1096 = vsub.s32 7, %v1095
    %v1097 = vrot.slane %v1064, %v1096
    %v1170 = vunpack.c.l.b16 %v1000
    %v1171 = vunpack.c.h.b16 %v1000
    %v1172 = vunpack.c.l.b16 %v1001
    %v1173 = vunpack.c.h.b16 %v1001
    %v1174 = vunpack.c.l.b16 %v1002
    %v1175 = vunpack.c.h.b16 %v1002
    %v1176 = vunpack.c.l.b16 %v1003
    %v1177 = vunpack.c.h.b16 %v1003
    %v1178 = vunpack.c.l.b16 %v1004
    %v1179 = vunpack.c.h.b16 %v1004
    %v1180 = vunpack.c.l.b16 %v1005
    %v1181 = vunpack.c.h.b16 %v1005
    %v1182 = vunpack.c.l.b16 %v1006
    %v1183 = vunpack.c.h.b16 %v1006
    %v1184 = vunpack.c.l.b16 %v1007
    %v1185 = vunpack.c.h.b16 %v1007
    %v1186 = vunpack.c.l.b16 %v1008
    %v1187 = vunpack.c.h.b16 %v1008
    %v1188 = vunpack.c.l.b16 %v1009
    %v1189 = vunpack.c.h.b16 %v1009
    %v1190 = vunpack.c.l.b16 %v1010
    %v1191 = vunpack.c.h.b16 %v1010
    %v1192 = vunpack.c.l.b16 %v1011
    %v1193 = vunpack.c.h.b16 %v1011
    %v1194 = vunpack.c.l.b16 %v1012
    %v1195 = vunpack.c.h.b16 %v1012
    %v1196 = vunpack.c.l.b16 %v1013
    %v1197 = vunpack.c.h.b16 %v1013
    %v1198 = vunpack.c.l.b16 %v1014
    %v1199 = vunpack.c.h.b16 %v1014
    %v1200 = vunpack.c.l.b16 %v1015
    %v1201 = vunpack.c.h.b16 %v1015
    %v1202 = vunpack.c.l.b16 %v1016
    %v1203 = vunpack.c.h.b16 %v1016
    %v1204 = vunpack.c.l.b16 %v1017
    %v1205 = vunpack.c.h.b16 %v1017
    %v1206 = vunpack.c.l.b16 %v1018
    %v1207 = vunpack.c.h.b16 %v1018
    %v1208 = vunpack.c.l.b16 %v1019
    %v1209 = vunpack.c.h.b16 %v1019
    %v1210 = vunpack.c.l.b16 %v1020
    %v1211 = vunpack.c.h.b16 %v1020
    %v1212 = vunpack.c.l.b16 %v1021
    %v1213 = vunpack.c.h.b16 %v1021
    %v1214 = vunpack.c.l.b16 %v1022
    %v1215 = vunpack.c.h.b16 %v1022
    %v1216 = vunpack.c.l.b16 %v1023
    %v1217 = vunpack.c.h.b16 %v1023
    %v1218 = vunpack.c.l.b16 %v1024
    %v1219 = vunpack.c.h.b16 %v1024
    %v1220 = vunpack.c.l.b16 %v1025
    %v1221 = vunpack.c.h.b16 %v1025
    %v1222 = vunpack.c.l.b16 %v1026
    %v1223 = vunpack.c.h.b16 %v1026
    %v1224 = vunpack.c.l.b16 %v1027
    %v1225 = vunpack.c.h.b16 %v1027
    %v1226 = vunpack.c.l.b16 %v1028
    %v1227 = vunpack.c.h.b16 %v1028
    %v1228 = vunpack.c.l.b16 %v1029
    %v1229 = vunpack.c.h.b16 %v1029
    %v1230 = vunpack.c.l.b16 %v1030
    %v1231 = vunpack.c.h.b16 %v1030
    %v1232 = vunpack.c.l.b16 %v1031
    %v1233 = vunpack.c.h.b16 %v1031
    %v1234 = vunpack.c.l.b16 %v1032
    %v1235 = vunpack.c.h.b16 %v1032
    %v1236 = vunpack.c.l.b16 %v1033
    %v1237 = vunpack.c.h.b16 %v1033
    %v1238 = vunpack.c.l.b16 %v1034
    %v1239 = vunpack.c.h.b16 %v1034
    %v1240 = vunpack.c.l.b16 %v1035
    %v1241 = vunpack.c.h.b16 %v1035
    %v1242 = vunpack.c.l.b16 %v1036
    %v1243 = vunpack.c.h.b16 %v1036
    %v1244 = vunpack.c.l.b16 %v1037
    %v1245 = vunpack.c.h.b16 %v1037
    %v1246 = vunpack.c.l.b16 %v1038
    %v1247 = vunpack.c.h.b16 %v1038
    %v1248 = vunpack.c.l.b16 %v1039
    %v1249 = vunpack.c.h.b16 %v1039
    %v1250 = vunpack.c.l.b16 %v1040
    %v1251 = vunpack.c.h.b16 %v1040
    %v1252 = vunpack.c.l.b16 %v1041
    %v1253 = vunpack.c.h.b16 %v1041
    %v1254 = vunpack.c.l.b16 %v1042
    %v1255 = vunpack.c.h.b16 %v1042
    %v1256 = vunpack.c.l.b16 %v1043
    %v1257 = vunpack.c.h.b16 %v1043
    %v1258 = vunpack.c.l.b16 %v1044
    %v1259 = vunpack.c.h.b16 %v1044
    %v1260 = vunpack.c.l.b16 %v1045
    %v1261 = vunpack.c.h.b16 %v1045
    %v1262 = vunpack.c.l.b16 %v1046
    %v1263 = vunpack.c.h.b16 %v1046
    %v1264 = vunpack.c.l.b16 %v1047
    %v1265 = vunpack.c.h.b16 %v1047
    %v1266 = vunpack.c.l.b16 %v1048
    %v1267 = vunpack.c.h.b16 %v1048
    %v1268 = vunpack.c.l.b16 %v1049
    %v1269 = vunpack.c.h.b16 %v1049
    %v1270 = vunpack.c.l.b16 %v1050
    %v1271 = vunpack.c.h.b16 %v1050
    %v1272 = vunpack.c.l.b16 %v1051
    %v1273 = vunpack.c.h.b16 %v1051
    %v1274 = vunpack.c.l.b16 %v1052
    %v1275 = vunpack.c.h.b16 %v1052
    %v1276 = vunpack.c.l.b16 %v1053
    %v1277 = vunpack.c.h.b16 %v1053
    %v1278 = vunpack.c.l.b16 %v1054
    %v1279 = vunpack.c.h.b16 %v1054
    %v1280 = vunpack.c.l.b16 %v1055
    %v1281 = vunpack.c.h.b16 %v1055
    %v1282 = vunpack.c.l.b16 %v1056
    %v1283 = vunpack.c.h.b16 %v1056
    %v1284 = vunpack.c.l.b16 %v1057
    %v1285 = vunpack.c.h.b16 %v1057
    %v1286 = vunpack.c.l.b16 %v1058
    %v1287 = vunpack.c.h.b16 %v1058
    %v1288 = vunpack.c.l.b16 %v1059
    %v1289 = vunpack.c.h.b16 %v1059
    %v1290 = vunpack.c.l.b16 %v1060
    %v1291 = vunpack.c.h.b16 %v1060
    %v1292 = vunpack.c.l.b16 %v1061
    %v1293 = vunpack.c.h.b16 %v1061
    %v1294 = vunpack.c.l.b16 %v1062
    %v1295 = vunpack.c.h.b16 %v1062
    %v1296 = vunpack.c.l.b16 %v1063
    %v1297 = vunpack.c.h.b16 %v1063
    %v1298 = vpack.c.b16 %v1178, %v1170
    %v1299 = vpack.c.b16 %v1179, %v1171
    %v1300 = vpack.c.b16 %v1180, %v1172
    %v1301 = vpack.c.b16 %v1181, %v1173
    %v1302 = vpack.c.b16 %v1182, %v1174
    %v1303 = vpack.c.b16 %v1183, %v1175
    %v1304 = vpack.c.b16 %v1184, %v1176
    %v1305 = vpack.c.b16 %v1185, %v1177
    %v1306 = vpack.c.b16 %v1194, %v1186
    %v1307 = vpack.c.b16 %v1195, %v1187
    %v1308 = vpack.c.b16 %v1196, %v1188
    %v1309 = vpack.c.b16 %v1197, %v1189
    %v1310 = vpack.c.b16 %v1198, %v1190
    %v1311 = vpack.c.b16 %v1199, %v1191
    %v1312 = vpack.c.b16 %v1200, %v1192
    %v1313 = vpack.c.b16 %v1201, %v1193
    %v1314 = vpack.c.b16 %v1210, %v1202
    %v1315 = vpack.c.b16 %v1211, %v1203
    %v1316 = vpack.c.b16 %v1212, %v1204
    %v1317 = vpack.c.b16 %v1213, %v1205
    %v1318 = vpack.c.b16 %v1214, %v1206
    %v1319 = vpack.c.b16 %v1215, %v1207
    %v1320 = vpack.c.b16 %v1216, %v1208
    %v1321 = vpack.c.b16 %v1217, %v1209
    %v1322 = vpack.c.b16 %v1226, %v1218
    %v1323 = vpack.c.b16 %v1227, %v1219
    %v1324 = vpack.c.b16 %v1228, %v1220
    %v1325 = vpack.c.b16 %v1229, %v1221
    %v1326 = vpack.c.b16 %v1230, %v1222
    %v1327 = vpack.c.b16 %v1231, %v1223
    %v1328 = vpack.c.b16 %v1232, %v1224
    %v1329 = vpack.c.b16 %v1233, %v1225
    %v1330 = vpack.c.b16 %v1242, %v1234
    %v1331 = vpack.c.b16 %v1243, %v1235
    %v1332 = vpack.c.b16 %v1244, %v1236
    %v1333 = vpack.c.b16 %v1245, %v1237
    %v1334 = vpack.c.b16 %v1246, %v1238
    %v1335 = vpack.c.b16 %v1247, %v1239
    %v1336 = vpack.c.b16 %v1248, %v1240
    %v1337 = vpack.c.b16 %v1249, %v1241
    %v1338 = vpack.c.b16 %v1258, %v1250
    %v1339 = vpack.c.b16 %v1259, %v1251
    %v1340 = vpack.c.b16 %v1260, %v1252
    %v1341 = vpack.c.b16 %v1261, %v1253
    %v1342 = vpack.c.b16 %v1262, %v1254
    %v1343 = vpack.c.b16 %v1263, %v1255
    %v1344 = vpack.c.b16 %v1264, %v1256
    %v1345 = vpack.c.b16 %v1265, %v1257
    %v1346 = vpack.c.b16 %v1274, %v1266
    %v1347 = vpack.c.b16 %v1275, %v1267
    %v1348 = vpack.c.b16 %v1276, %v1268
    %v1349 = vpack.c.b16 %v1277, %v1269
    %v1350 = vpack.c.b16 %v1278, %v1270
    %v1351 = vpack.c.b16 %v1279, %v1271
    %v1352 = vpack.c.b16 %v1280, %v1272
    %v1353 = vpack.c.b16 %v1281, %v1273
    %v1354 = vpack.c.b16 %v1290, %v1282
    %v1355 = vpack.c.b16 %v1291, %v1283
    %v1356 = vpack.c.b16 %v1292, %v1284
    %v1357 = vpack.c.b16 %v1293, %v1285
    %v1358 = vpack.c.b16 %v1294, %v1286
    %v1359 = vpack.c.b16 %v1295, %v1287
    %v1360 = vpack.c.b16 %v1296, %v1288
    %v1361 = vpack.c.b16 %v1297, %v1289
    %1426 = vmatprep.subr.bf16.mxu0 %v1355
    %1427 = vmatpush1.bf16.msra.mxu0 %v1354
    %1428 = vmatprep.subr.bf16.mxu0 %v1347
    %1429 = vmatpush1.bf16.msra.mxu0 %v1346
    %1430 = vmatprep.subr.bf16.mxu0 %v1339
    %1431 = vmatpush1.bf16.msra.mxu0 %v1338
    %1432 = vmatprep.subr.bf16.mxu0 %v1331
    %1433 = vmatpush1.bf16.msra.mxu0 %v1330
    %1434 = vmatprep.subr.bf16.mxu0 %v1323
    %1435 = vmatpush1.bf16.msra.mxu0 %v1322
    %1436 = vmatprep.subr.bf16.mxu0 %v1315
    %1437 = vmatpush1.bf16.msra.mxu0 %v1314
    %1438 = vmatprep.subr.bf16.mxu0 %v1307
    %1439 = vmatpush1.bf16.msra.mxu0 %v1306
    %1440 = vmatprep.subr.bf16.mxu0 %v1299
    %1441 = vmatpush1.bf16.msra.mxu0 %v1298
    %1442 = vmatprep.subr.bf16.mxu0 0
    %1443 = vmatpush2.bf16.msra.mxu0 0
    %1444 = vmatprep.subr.bf16.mxu0 0
    %1445 = vmatpush2.bf16.msra.mxu0 0
    %1446 = vmatprep.subr.bf16.mxu0 0
    %1447 = vmatpush2.bf16.msra.mxu0 0
    %1448 = vmatprep.subr.bf16.mxu0 0
    %1449 = vmatpush2.bf16.msra.mxu0 0
    %1450 = vmatprep.subr.bf16.mxu0 0
    %1451 = vmatpush2.bf16.msra.mxu0 0
    %1452 = vmatprep.subr.bf16.mxu0 0
    %1453 = vmatpush2.bf16.msra.mxu0 0
    %1454 = vmatprep.subr.bf16.mxu0 0
    %1455 = vmatpush2.bf16.msra.mxu0 0
    %1456 = vmatprep.subr.bf16.mxu0 0
    %1457 = vmatpush2.bf16.msra.mxu0 0
    %1458 = vmatprep.mubr.bf16.mxu0 0
    %1459 = vmatmul.mubr.bf16.gmra.mxu0 %v999
    %v1460 = vpop.f32.mrf.mxu0
    %v1461 = vadd.f32 %v1069, %v1460
    %v1462 = vpop.f32.mrf.mxu0
    %v1463 = vadd.f32 %v1073, %v1462
    %v1464 = vpop.f32.mrf.mxu0
    %v1465 = vpop.f32.mrf.mxu0
    %1466 = vdwg.mxu0
    %1467 = vmatprep.subr.bf16.mxu0 %v1357
    %1468 = vmatpush1.bf16.msra.mxu0 %v1356
    %1469 = vmatprep.subr.bf16.mxu0 %v1349
    %1470 = vmatpush1.bf16.msra.mxu0 %v1348
    %1471 = vmatprep.subr.bf16.mxu0 %v1341
    %1472 = vmatpush1.bf16.msra.mxu0 %v1340
    %1473 = vmatprep.subr.bf16.mxu0 %v1333
    %1474 = vmatpush1.bf16.msra.mxu0 %v1332
    %1475 = vmatprep.subr.bf16.mxu0 %v1325
    %1476 = vmatpush1.bf16.msra.mxu0 %v1324
    %1477 = vmatprep.subr.bf16.mxu0 %v1317
    %1478 = vmatpush1.bf16.msra.mxu0 %v1316
    %1479 = vmatprep.subr.bf16.mxu0 %v1309
    %1480 = vmatpush1.bf16.msra.mxu0 %v1308
    %1481 = vmatprep.subr.bf16.mxu0 %v1301
    %1482 = vmatpush1.bf16.msra.mxu0 %v1300
    %1483 = vmatprep.subr.bf16.mxu0 0
    %1484 = vmatpush2.bf16.msra.mxu0 0
    %1485 = vmatprep.subr.bf16.mxu0 0
    %1486 = vmatpush2.bf16.msra.mxu0 0
    %1487 = vmatprep.subr.bf16.mxu0 0
    %1488 = vmatpush2.bf16.msra.mxu0 0
    %1489 = vmatprep.subr.bf16.mxu0 0
    %1490 = vmatpush2.bf16.msra.mxu0 0
    %1491 = vmatprep.subr.bf16.mxu0 0
    %1492 = vmatpush2.bf16.msra.mxu0 0
    %1493 = vmatprep.subr.bf16.mxu0 0
    %1494 = vmatpush2.bf16.msra.mxu0 0
    %1495 = vmatprep.subr.bf16.mxu0 0
    %1496 = vmatpush2.bf16.msra.mxu0 0
    %1497 = vmatprep.subr.bf16.mxu0 0
    %1498 = vmatpush2.bf16.msra.mxu0 0
    %1499 = vmatprep.mubr.bf16.mxu0 0
    %1500 = vmatmul.mubr.bf16.gmra.mxu0 %v999
    %v1501 = vpop.f32.mrf.mxu0
    %v1502 = vadd.f32 %v1077, %v1501
    %v1503 = vpop.f32.mrf.mxu0
    %v1504 = vadd.f32 %v1081, %v1503
    %v1505 = vpop.f32.mrf.mxu0
    %v1506 = vpop.f32.mrf.mxu0
    %1507 = vdwg.mxu0
    %1508 = vmatprep.subr.bf16.mxu0 %v1359
    %1509 = vmatpush1.bf16.msra.mxu0 %v1358
    %1510 = vmatprep.subr.bf16.mxu0 %v1351
    %1511 = vmatpush1.bf16.msra.mxu0 %v1350
    %1512 = vmatprep.subr.bf16.mxu0 %v1343
    %1513 = vmatpush1.bf16.msra.mxu0 %v1342
    %1514 = vmatprep.subr.bf16.mxu0 %v1335
    %1515 = vmatpush1.bf16.msra.mxu0 %v1334
    %1516 = vmatprep.subr.bf16.mxu0 %v1327
    %1517 = vmatpush1.bf16.msra.mxu0 %v1326
    %1518 = vmatprep.subr.bf16.mxu0 %v1319
    %1519 = vmatpush1.bf16.msra.mxu0 %v1318
    %1520 = vmatprep.subr.bf16.mxu0 %v1311
    %1521 = vmatpush1.bf16.msra.mxu0 %v1310
    %1522 = vmatprep.subr.bf16.mxu0 %v1303
    %1523 = vmatpush1.bf16.msra.mxu0 %v1302
    %1524 = vmatprep.subr.bf16.mxu0 0
    %1525 = vmatpush2.bf16.msra.mxu0 0
    %1526 = vmatprep.subr.bf16.mxu0 0
    %1527 = vmatpush2.bf16.msra.mxu0 0
    %1528 = vmatprep.subr.bf16.mxu0 0
    %1529 = vmatpush2.bf16.msra.mxu0 0
    %1530 = vmatprep.subr.bf16.mxu0 0
    %1531 = vmatpush2.bf16.msra.mxu0 0
    %1532 = vmatprep.subr.bf16.mxu0 0
    %1533 = vmatpush2.bf16.msra.mxu0 0
    %1534 = vmatprep.subr.bf16.mxu0 0
    %1535 = vmatpush2.bf16.msra.mxu0 0
    %1536 = vmatprep.subr.bf16.mxu0 0
    %1537 = vmatpush2.bf16.msra.mxu0 0
    %1538 = vmatprep.subr.bf16.mxu0 0
    %1539 = vmatpush2.bf16.msra.mxu0 0
    %1540 = vmatprep.mubr.bf16.mxu0 0
    %1541 = vmatmul.mubr.bf16.gmra.mxu0 %v999
    %v1542 = vpop.f32.mrf.mxu0
    %v1543 = vadd.f32 %v1085, %v1542
    %v1544 = vpop.f32.mrf.mxu0
    %v1545 = vadd.f32 %v1089, %v1544
    %v1546 = vpop.f32.mrf.mxu0
    %v1547 = vpop.f32.mrf.mxu0
    %1548 = vdwg.mxu0
    %1549 = vmatprep.subr.bf16.mxu0 %v1361
    %1550 = vmatpush1.bf16.msra.mxu0 %v1360
    %1551 = vmatprep.subr.bf16.mxu0 %v1353
    %1552 = vmatpush1.bf16.msra.mxu0 %v1352
    %1553 = vmatprep.subr.bf16.mxu0 %v1345
    %1554 = vmatpush1.bf16.msra.mxu0 %v1344
    %1555 = vmatprep.subr.bf16.mxu0 %v1337
    %1556 = vmatpush1.bf16.msra.mxu0 %v1336
    %1557 = vmatprep.subr.bf16.mxu0 %v1329
    %1558 = vmatpush1.bf16.msra.mxu0 %v1328
    %1559 = vmatprep.subr.bf16.mxu0 %v1321
    %1560 = vmatpush1.bf16.msra.mxu0 %v1320
    %1561 = vmatprep.subr.bf16.mxu0 %v1313
    %1562 = vmatpush1.bf16.msra.mxu0 %v1312
    %1563 = vmatprep.subr.bf16.mxu0 %v1305
    %1564 = vmatpush1.bf16.msra.mxu0 %v1304
    %1565 = vmatprep.subr.bf16.mxu0 0
    %1566 = vmatpush2.bf16.msra.mxu0 0
    %1567 = vmatprep.subr.bf16.mxu0 0
    %1568 = vmatpush2.bf16.msra.mxu0 0
    %1569 = vmatprep.subr.bf16.mxu0 0
    %1570 = vmatpush2.bf16.msra.mxu0 0
    %1571 = vmatprep.subr.bf16.mxu0 0
    %1572 = vmatpush2.bf16.msra.mxu0 0
    %1573 = vmatprep.subr.bf16.mxu0 0
    %1574 = vmatpush2.bf16.msra.mxu0 0
    %1575 = vmatprep.subr.bf16.mxu0 0
    %1576 = vmatpush2.bf16.msra.mxu0 0
    %1577 = vmatprep.subr.bf16.mxu0 0
    %1578 = vmatpush2.bf16.msra.mxu0 0
    %1579 = vmatprep.subr.bf16.mxu0 0
    %1580 = vmatpush2.bf16.msra.mxu0 0
    %1581 = vmatprep.mubr.bf16.mxu0 0
    %1582 = vmatmul.mubr.bf16.gmra.mxu0 %v999
    %v1583 = vpop.f32.mrf.mxu0
    %v1584 = vadd.f32 %v1093, %v1583
    %v1585 = vpop.f32.mrf.mxu0
    %v1586 = vadd.f32 %v1097, %v1585
    %v1587 = vpop.f32.mrf.mxu0
    %v1588 = vpop.f32.mrf.mxu0
    %1589 = vdwg.mxu0
    %v1590 = vsel %vm973, %v1461, %v1543
    %v1591 = vsel %vm973, %v1463, %v1545
    %v1592 = vsel %vm973, %v1502, %v1584
    %v1593 = vsel %vm973, %v1504, %v1586
    %v1594 = vpack.c.bf16 %v997, %v997
    %v1595 = vld [vmem:[#allocation13] sm:$0xff]
    %v1596 = vld [vmem:[#allocation13 + $0x8] sm:$0xff]
    %v1597 = vld [vmem:[#allocation13 + $0x10] sm:$0xff]
    %v1598 = vld [vmem:[#allocation13 + $0x18] sm:$0xff]
    %v1599 = vld [vmem:[#allocation13 + $0x20] sm:$0xff]
    %v1600 = vld [vmem:[#allocation13 + $0x28] sm:$0xff]
    %v1601 = vld [vmem:[#allocation13 + $0x30] sm:$0xff]
    %v1602 = vld [vmem:[#allocation13 + $0x38] sm:$0xff]
    %v1603 = vld [vmem:[#allocation13 + $0x40] sm:$0xff]
    %v1604 = vld [vmem:[#allocation13 + $0x48] sm:$0xff]
    %v1605 = vld [vmem:[#allocation13 + $0x50] sm:$0xff]
    %v1606 = vld [vmem:[#allocation13 + $0x58] sm:$0xff]
    %v1607 = vld [vmem:[#allocation13 + $0x60] sm:$0xff]
    %v1608 = vld [vmem:[#allocation13 + $0x68] sm:$0xff]
    %v1609 = vld [vmem:[#allocation13 + $0x70] sm:$0xff]
    %v1610 = vld [vmem:[#allocation13 + $0x78] sm:$0xff]
    %v1611 = vld [vmem:[#allocation13 + $0x80] sm:$0xff]
    %v1612 = vld [vmem:[#allocation13 + $0x88] sm:$0xff]
    %v1613 = vld [vmem:[#allocation13 + $0x90] sm:$0xff]
    %v1614 = vld [vmem:[#allocation13 + $0x98] sm:$0xff]
    %v1615 = vld [vmem:[#allocation13 + $0xa0] sm:$0xff]
    %v1616 = vld [vmem:[#allocation13 + $0xa8] sm:$0xff]
    %v1617 = vld [vmem:[#allocation13 + $0xb0] sm:$0xff]
    %v1618 = vld [vmem:[#allocation13 + $0xb8] sm:$0xff]
    %v1619 = vld [vmem:[#allocation13 + $0xc0] sm:$0xff]
    %v1620 = vld [vmem:[#allocation13 + $0xc8] sm:$0xff]
    %v1621 = vld [vmem:[#allocation13 + $0xd0] sm:$0xff]
    %v1622 = vld [vmem:[#allocation13 + $0xd8] sm:$0xff]
    %v1623 = vld [vmem:[#allocation13 + $0xe0] sm:$0xff]
    %v1624 = vld [vmem:[#allocation13 + $0xe8] sm:$0xff]
    %v1625 = vld [vmem:[#allocation13 + $0xf0] sm:$0xff]
    %v1626 = vld [vmem:[#allocation13 + $0xf8] sm:$0xff]
    %v1627 = vld [vmem:[#allocation13 + $0x100] sm:$0xff]
    %v1628 = vld [vmem:[#allocation13 + $0x108] sm:$0xff]
    %v1629 = vld [vmem:[#allocation13 + $0x110] sm:$0xff]
    %v1630 = vld [vmem:[#allocation13 + $0x118] sm:$0xff]
    %v1631 = vld [vmem:[#allocation13 + $0x120] sm:$0xff]
    %v1632 = vld [vmem:[#allocation13 + $0x128] sm:$0xff]
    %v1633 = vld [vmem:[#allocation13 + $0x130] sm:$0xff]
    %v1634 = vld [vmem:[#allocation13 + $0x138] sm:$0xff]
    %v1635 = vld [vmem:[#allocation13 + $0x140] sm:$0xff]
    %v1636 = vld [vmem:[#allocation13 + $0x148] sm:$0xff]
    %v1637 = vld [vmem:[#allocation13 + $0x150] sm:$0xff]
    %v1638 = vld [vmem:[#allocation13 + $0x158] sm:$0xff]
    %v1639 = vld [vmem:[#allocation13 + $0x160] sm:$0xff]
    %v1640 = vld [vmem:[#allocation13 + $0x168] sm:$0xff]
    %v1641 = vld [vmem:[#allocation13 + $0x170] sm:$0xff]
    %v1642 = vld [vmem:[#allocation13 + $0x178] sm:$0xff]
    %v1643 = vld [vmem:[#allocation13 + $0x180] sm:$0xff]
    %v1644 = vld [vmem:[#allocation13 + $0x188] sm:$0xff]
    %v1645 = vld [vmem:[#allocation13 + $0x190] sm:$0xff]
    %v1646 = vld [vmem:[#allocation13 + $0x198] sm:$0xff]
    %v1647 = vld [vmem:[#allocation13 + $0x1a0] sm:$0xff]
    %v1648 = vld [vmem:[#allocation13 + $0x1a8] sm:$0xff]
    %v1649 = vld [vmem:[#allocation13 + $0x1b0] sm:$0xff]
    %v1650 = vld [vmem:[#allocation13 + $0x1b8] sm:$0xff]
    %v1651 = vld [vmem:[#allocation13 + $0x1c0] sm:$0xff]
    %v1652 = vld [vmem:[#allocation13 + $0x1c8] sm:$0xff]
    %v1653 = vld [vmem:[#allocation13 + $0x1d0] sm:$0xff]
    %v1654 = vld [vmem:[#allocation13 + $0x1d8] sm:$0xff]
    %v1655 = vld [vmem:[#allocation13 + $0x1e0] sm:$0xff]
    %v1656 = vld [vmem:[#allocation13 + $0x1e8] sm:$0xff]
    %v1657 = vld [vmem:[#allocation13 + $0x1f0] sm:$0xff]
    %v1658 = vld [vmem:[#allocation13 + $0x1f8] sm:$0xff]
    %v1723 = vunpack.c.l.b16 %v1595
    %v1724 = vunpack.c.h.b16 %v1595
    %v1725 = vunpack.c.l.b16 %v1596
    %v1726 = vunpack.c.h.b16 %v1596
    %v1727 = vunpack.c.l.b16 %v1597
    %v1728 = vunpack.c.h.b16 %v1597
    %v1729 = vunpack.c.l.b16 %v1598
    %v1730 = vunpack.c.h.b16 %v1598
    %v1731 = vunpack.c.l.b16 %v1599
    %v1732 = vunpack.c.h.b16 %v1599
    %v1733 = vunpack.c.l.b16 %v1600
    %v1734 = vunpack.c.h.b16 %v1600
    %v1735 = vunpack.c.l.b16 %v1601
    %v1736 = vunpack.c.h.b16 %v1601
    %v1737 = vunpack.c.l.b16 %v1602
    %v1738 = vunpack.c.h.b16 %v1602
    %v1739 = vunpack.c.l.b16 %v1603
    %v1740 = vunpack.c.h.b16 %v1603
    %v1741 = vunpack.c.l.b16 %v1604
    %v1742 = vunpack.c.h.b16 %v1604
    %v1743 = vunpack.c.l.b16 %v1605
    %v1744 = vunpack.c.h.b16 %v1605
    %v1745 = vunpack.c.l.b16 %v1606
    %v1746 = vunpack.c.h.b16 %v1606
    %v1747 = vunpack.c.l.b16 %v1607
    %v1748 = vunpack.c.h.b16 %v1607
    %v1749 = vunpack.c.l.b16 %v1608
    %v1750 = vunpack.c.h.b16 %v1608
    %v1751 = vunpack.c.l.b16 %v1609
    %v1752 = vunpack.c.h.b16 %v1609
    %v1753 = vunpack.c.l.b16 %v1610
    %v1754 = vunpack.c.h.b16 %v1610
    %v1755 = vunpack.c.l.b16 %v1611
    %v1756 = vunpack.c.h.b16 %v1611
    %v1757 = vunpack.c.l.b16 %v1612
    %v1758 = vunpack.c.h.b16 %v1612
    %v1759 = vunpack.c.l.b16 %v1613
    %v1760 = vunpack.c.h.b16 %v1613
    %v1761 = vunpack.c.l.b16 %v1614
    %v1762 = vunpack.c.h.b16 %v1614
    %v1763 = vunpack.c.l.b16 %v1615
    %v1764 = vunpack.c.h.b16 %v1615
    %v1765 = vunpack.c.l.b16 %v1616
    %v1766 = vunpack.c.h.b16 %v1616
    %v1767 = vunpack.c.l.b16 %v1617
    %v1768 = vunpack.c.h.b16 %v1617
    %v1769 = vunpack.c.l.b16 %v1618
    %v1770 = vunpack.c.h.b16 %v1618
    %v1771 = vunpack.c.l.b16 %v1619
    %v1772 = vunpack.c.h.b16 %v1619
    %v1773 = vunpack.c.l.b16 %v1620
    %v1774 = vunpack.c.h.b16 %v1620
    %v1775 = vunpack.c.l.b16 %v1621
    %v1776 = vunpack.c.h.b16 %v1621
    %v1777 = vunpack.c.l.b16 %v1622
    %v1778 = vunpack.c.h.b16 %v1622
    %v1779 = vunpack.c.l.b16 %v1623
    %v1780 = vunpack.c.h.b16 %v1623
    %v1781 = vunpack.c.l.b16 %v1624
    %v1782 = vunpack.c.h.b16 %v1624
    %v1783 = vunpack.c.l.b16 %v1625
    %v1784 = vunpack.c.h.b16 %v1625
    %v1785 = vunpack.c.l.b16 %v1626
    %v1786 = vunpack.c.h.b16 %v1626
    %v1787 = vunpack.c.l.b16 %v1627
    %v1788 = vunpack.c.h.b16 %v1627
    %v1789 = vunpack.c.l.b16 %v1628
    %v1790 = vunpack.c.h.b16 %v1628
    %v1791 = vunpack.c.l.b16 %v1629
    %v1792 = vunpack.c.h.b16 %v1629
    %v1793 = vunpack.c.l.b16 %v1630
    %v1794 = vunpack.c.h.b16 %v1630
    %v1795 = vunpack.c.l.b16 %v1631
    %v1796 = vunpack.c.h.b16 %v1631
    %v1797 = vunpack.c.l.b16 %v1632
    %v1798 = vunpack.c.h.b16 %v1632
    %v1799 = vunpack.c.l.b16 %v1633
    %v1800 = vunpack.c.h.b16 %v1633
    %v1801 = vunpack.c.l.b16 %v1634
    %v1802 = vunpack.c.h.b16 %v1634
    %v1803 = vunpack.c.l.b16 %v1635
    %v1804 = vunpack.c.h.b16 %v1635
    %v1805 = vunpack.c.l.b16 %v1636
    %v1806 = vunpack.c.h.b16 %v1636
    %v1807 = vunpack.c.l.b16 %v1637
    %v1808 = vunpack.c.h.b16 %v1637
    %v1809 = vunpack.c.l.b16 %v1638
    %v1810 = vunpack.c.h.b16 %v1638
    %v1811 = vunpack.c.l.b16 %v1639
    %v1812 = vunpack.c.h.b16 %v1639
    %v1813 = vunpack.c.l.b16 %v1640
    %v1814 = vunpack.c.h.b16 %v1640
    %v1815 = vunpack.c.l.b16 %v1641
    %v1816 = vunpack.c.h.b16 %v1641
    %v1817 = vunpack.c.l.b16 %v1642
    %v1818 = vunpack.c.h.b16 %v1642
    %v1819 = vunpack.c.l.b16 %v1643
    %v1820 = vunpack.c.h.b16 %v1643
    %v1821 = vunpack.c.l.b16 %v1644
    %v1822 = vunpack.c.h.b16 %v1644
    %v1823 = vunpack.c.l.b16 %v1645
    %v1824 = vunpack.c.h.b16 %v1645
    %v1825 = vunpack.c.l.b16 %v1646
    %v1826 = vunpack.c.h.b16 %v1646
    %v1827 = vunpack.c.l.b16 %v1647
    %v1828 = vunpack.c.h.b16 %v1647
    %v1829 = vunpack.c.l.b16 %v1648
    %v1830 = vunpack.c.h.b16 %v1648
    %v1831 = vunpack.c.l.b16 %v1649
    %v1832 = vunpack.c.h.b16 %v1649
    %v1833 = vunpack.c.l.b16 %v1650
    %v1834 = vunpack.c.h.b16 %v1650
    %v1835 = vunpack.c.l.b16 %v1651
    %v1836 = vunpack.c.h.b16 %v1651
    %v1837 = vunpack.c.l.b16 %v1652
    %v1838 = vunpack.c.h.b16 %v1652
    %v1839 = vunpack.c.l.b16 %v1653
    %v1840 = vunpack.c.h.b16 %v1653
    %v1841 = vunpack.c.l.b16 %v1654
    %v1842 = vunpack.c.h.b16 %v1654
    %v1843 = vunpack.c.l.b16 %v1655
    %v1844 = vunpack.c.h.b16 %v1655
    %v1845 = vunpack.c.l.b16 %v1656
    %v1846 = vunpack.c.h.b16 %v1656
    %v1847 = vunpack.c.l.b16 %v1657
    %v1848 = vunpack.c.h.b16 %v1657
    %v1849 = vunpack.c.l.b16 %v1658
    %v1850 = vunpack.c.h.b16 %v1658
    %v1851 = vpack.c.b16 %v1731, %v1723
    %v1852 = vpack.c.b16 %v1732, %v1724
    %v1853 = vpack.c.b16 %v1733, %v1725
    %v1854 = vpack.c.b16 %v1734, %v1726
    %v1855 = vpack.c.b16 %v1735, %v1727
    %v1856 = vpack.c.b16 %v1736, %v1728
    %v1857 = vpack.c.b16 %v1737, %v1729
    %v1858 = vpack.c.b16 %v1738, %v1730
    %v1859 = vpack.c.b16 %v1747, %v1739
    %v1860 = vpack.c.b16 %v1748, %v1740
    %v1861 = vpack.c.b16 %v1749, %v1741
    %v1862 = vpack.c.b16 %v1750, %v1742
    %v1863 = vpack.c.b16 %v1751, %v1743
    %v1864 = vpack.c.b16 %v1752, %v1744
    %v1865 = vpack.c.b16 %v1753, %v1745
    %v1866 = vpack.c.b16 %v1754, %v1746
    %v1867 = vpack.c.b16 %v1763, %v1755
    %v1868 = vpack.c.b16 %v1764, %v1756
    %v1869 = vpack.c.b16 %v1765, %v1757
    %v1870 = vpack.c.b16 %v1766, %v1758
    %v1871 = vpack.c.b16 %v1767, %v1759
    %v1872 = vpack.c.b16 %v1768, %v1760
    %v1873 = vpack.c.b16 %v1769, %v1761
    %v1874 = vpack.c.b16 %v1770, %v1762
    %v1875 = vpack.c.b16 %v1779, %v1771
    %v1876 = vpack.c.b16 %v1780, %v1772
    %v1877 = vpack.c.b16 %v1781, %v1773
    %v1878 = vpack.c.b16 %v1782, %v1774
    %v1879 = vpack.c.b16 %v1783, %v1775
    %v1880 = vpack.c.b16 %v1784, %v1776
    %v1881 = vpack.c.b16 %v1785, %v1777
    %v1882 = vpack.c.b16 %v1786, %v1778
    %v1883 = vpack.c.b16 %v1795, %v1787
    %v1884 = vpack.c.b16 %v1796, %v1788
    %v1885 = vpack.c.b16 %v1797, %v1789
    %v1886 = vpack.c.b16 %v1798, %v1790
    %v1887 = vpack.c.b16 %v1799, %v1791
    %v1888 = vpack.c.b16 %v1800, %v1792
    %v1889 = vpack.c.b16 %v1801, %v1793
    %v1890 = vpack.c.b16 %v1802, %v1794
    %v1891 = vpack.c.b16 %v1811, %v1803
    %v1892 = vpack.c.b16 %v1812, %v1804
    %v1893 = vpack.c.b16 %v1813, %v1805
    %v1894 = vpack.c.b16 %v1814, %v1806
    %v1895 = vpack.c.b16 %v1815, %v1807
    %v1896 = vpack.c.b16 %v1816, %v1808
    %v1897 = vpack.c.b16 %v1817, %v1809
    %v1898 = vpack.c.b16 %v1818, %v1810
    %v1899 = vpack.c.b16 %v1827, %v1819
    %v1900 = vpack.c.b16 %v1828, %v1820
    %v1901 = vpack.c.b16 %v1829, %v1821
    %v1902 = vpack.c.b16 %v1830, %v1822
    %v1903 = vpack.c.b16 %v1831, %v1823
    %v1904 = vpack.c.b16 %v1832, %v1824
    %v1905 = vpack.c.b16 %v1833, %v1825
    %v1906 = vpack.c.b16 %v1834, %v1826
    %v1907 = vpack.c.b16 %v1843, %v1835
    %v1908 = vpack.c.b16 %v1844, %v1836
    %v1909 = vpack.c.b16 %v1845, %v1837
    %v1910 = vpack.c.b16 %v1846, %v1838
    %v1911 = vpack.c.b16 %v1847, %v1839
    %v1912 = vpack.c.b16 %v1848, %v1840
    %v1913 = vpack.c.b16 %v1849, %v1841
    %v1914 = vpack.c.b16 %v1850, %v1842
    %1979 = vmatprep.subr.bf16.mxu0 %v1908
    %1980 = vmatpush1.bf16.msra.mxu0 %v1907
    %1981 = vmatprep.subr.bf16.mxu0 %v1900
    %1982 = vmatpush1.bf16.msra.mxu0 %v1899
    %1983 = vmatprep.subr.bf16.mxu0 %v1892
    %1984 = vmatpush1.bf16.msra.mxu0 %v1891
    %1985 = vmatprep.subr.bf16.mxu0 %v1884
    %1986 = vmatpush1.bf16.msra.mxu0 %v1883
    %1987 = vmatprep.subr.bf16.mxu0 %v1876
    %1988 = vmatpush1.bf16.msra.mxu0 %v1875
    %1989 = vmatprep.subr.bf16.mxu0 %v1868
    %1990 = vmatpush1.bf16.msra.mxu0 %v1867
    %1991 = vmatprep.subr.bf16.mxu0 %v1860
    %1992 = vmatpush1.bf16.msra.mxu0 %v1859
    %1993 = vmatprep.subr.bf16.mxu0 %v1852
    %1994 = vmatpush1.bf16.msra.mxu0 %v1851
    %1995 = vmatprep.subr.bf16.mxu0 0
    %1996 = vmatpush2.bf16.msra.mxu0 0
    %1997 = vmatprep.subr.bf16.mxu0 0
    %1998 = vmatpush2.bf16.msra.mxu0 0
    %1999 = vmatprep.subr.bf16.mxu0 0
    %2000 = vmatpush2.bf16.msra.mxu0 0
    %2001 = vmatprep.subr.bf16.mxu0 0
    %2002 = vmatpush2.bf16.msra.mxu0 0
    %2003 = vmatprep.subr.bf16.mxu0 0
    %2004 = vmatpush2.bf16.msra.mxu0 0
    %2005 = vmatprep.subr.bf16.mxu0 0
    %2006 = vmatpush2.bf16.msra.mxu0 0
    %2007 = vmatprep.subr.bf16.mxu0 0
    %2008 = vmatpush2.bf16.msra.mxu0 0
    %2009 = vmatprep.subr.bf16.mxu0 0
    %2010 = vmatpush2.bf16.msra.mxu0 0
    %2011 = vmatprep.mubr.bf16.mxu0 0
    %2012 = vmatmul.mubr.bf16.gmra.mxu0 %v1594
    %v2013 = vpop.f32.mrf.mxu0
    %v2014 = vadd.f32 0.0, %v2013
    %v2015 = vpop.f32.mrf.mxu0
    %v2016 = vadd.f32 0.0, %v2015
    %v2017 = vpop.f32.mrf.mxu0
    %v2018 = vpop.f32.mrf.mxu0
    %2019 = vdwg.mxu0
    %2020 = vmatprep.subr.bf16.mxu0 %v1910
    %2021 = vmatpush1.bf16.msra.mxu0 %v1909
    %2022 = vmatprep.subr.bf16.mxu0 %v1902
    %2023 = vmatpush1.bf16.msra.mxu0 %v1901
    %2024 = vmatprep.subr.bf16.mxu0 %v1894
    %2025 = vmatpush1.bf16.msra.mxu0 %v1893
    %2026 = vmatprep.subr.bf16.mxu0 %v1886
    %2027 = vmatpush1.bf16.msra.mxu0 %v1885
    %2028 = vmatprep.subr.bf16.mxu0 %v1878
    %2029 = vmatpush1.bf16.msra.mxu0 %v1877
    %2030 = vmatprep.subr.bf16.mxu0 %v1870
    %2031 = vmatpush1.bf16.msra.mxu0 %v1869
    %2032 = vmatprep.subr.bf16.mxu0 %v1862
    %2033 = vmatpush1.bf16.msra.mxu0 %v1861
    %2034 = vmatprep.subr.bf16.mxu0 %v1854
    %2035 = vmatpush1.bf16.msra.mxu0 %v1853
    %2036 = vmatprep.subr.bf16.mxu0 0
    %2037 = vmatpush2.bf16.msra.mxu0 0
    %2038 = vmatprep.subr.bf16.mxu0 0
    %2039 = vmatpush2.bf16.msra.mxu0 0
    %2040 = vmatprep.subr.bf16.mxu0 0
    %2041 = vmatpush2.bf16.msra.mxu0 0
    %2042 = vmatprep.subr.bf16.mxu0 0
    %2043 = vmatpush2.bf16.msra.mxu0 0
    %2044 = vmatprep.subr.bf16.mxu0 0
    %2045 = vmatpush2.bf16.msra.mxu0 0
    %2046 = vmatprep.subr.bf16.mxu0 0
    %2047 = vmatpush2.bf16.msra.mxu0 0
    %2048 = vmatprep.subr.bf16.mxu0 0
    %2049 = vmatpush2.bf16.msra.mxu0 0
    %2050 = vmatprep.subr.bf16.mxu0 0
    %2051 = vmatpush2.bf16.msra.mxu0 0
    %2052 = vmatprep.mubr.bf16.mxu0 0
    %2053 = vmatmul.mubr.bf16.gmra.mxu0 %v1594
    %v2054 = vpop.f32.mrf.mxu0
    %v2055 = vadd.f32 0.0, %v2054
    %v2056 = vpop.f32.mrf.mxu0
    %v2057 = vadd.f32 0.0, %v2056
    %v2058 = vpop.f32.mrf.mxu0
    %v2059 = vpop.f32.mrf.mxu0
    %2060 = vdwg.mxu0
    %2061 = vmatprep.subr.bf16.mxu0 %v1912
    %2062 = vmatpush1.bf16.msra.mxu0 %v1911
    %2063 = vmatprep.subr.bf16.mxu0 %v1904
    %2064 = vmatpush1.bf16.msra.mxu0 %v1903
    %2065 = vmatprep.subr.bf16.mxu0 %v1896
    %2066 = vmatpush1.bf16.msra.mxu0 %v1895
    %2067 = vmatprep.subr.bf16.mxu0 %v1888
    %2068 = vmatpush1.bf16.msra.mxu0 %v1887
    %2069 = vmatprep.subr.bf16.mxu0 %v1880
    %2070 = vmatpush1.bf16.msra.mxu0 %v1879
    %2071 = vmatprep.subr.bf16.mxu0 %v1872
    %2072 = vmatpush1.bf16.msra.mxu0 %v1871
    %2073 = vmatprep.subr.bf16.mxu0 %v1864
    %2074 = vmatpush1.bf16.msra.mxu0 %v1863
    %2075 = vmatprep.subr.bf16.mxu0 %v1856
    %2076 = vmatpush1.bf16.msra.mxu0 %v1855
    %2077 = vmatprep.subr.bf16.mxu0 0
    %2078 = vmatpush2.bf16.msra.mxu0 0
    %2079 = vmatprep.subr.bf16.mxu0 0
    %2080 = vmatpush2.bf16.msra.mxu0 0
    %2081 = vmatprep.subr.bf16.mxu0 0
    %2082 = vmatpush2.bf16.msra.mxu0 0
    %2083 = vmatprep.subr.bf16.mxu0 0
    %2084 = vmatpush2.bf16.msra.mxu0 0
    %2085 = vmatprep.subr.bf16.mxu0 0
    %2086 = vmatpush2.bf16.msra.mxu0 0
    %2087 = vmatprep.subr.bf16.mxu0 0
    %2088 = vmatpush2.bf16.msra.mxu0 0
    %2089 = vmatprep.subr.bf16.mxu0 0
    %2090 = vmatpush2.bf16.msra.mxu0 0
    %2091 = vmatprep.subr.bf16.mxu0 0
    %2092 = vmatpush2.bf16.msra.mxu0 0
    %2093 = vmatprep.mubr.bf16.mxu0 0
    %2094 = vmatmul.mubr.bf16.gmra.mxu0 %v1594
    %v2095 = vpop.f32.mrf.mxu0
    %v2096 = vadd.f32 0.0, %v2095
    %v2097 = vpop.f32.mrf.mxu0
    %v2098 = vadd.f32 0.0, %v2097
    %v2099 = vpop.f32.mrf.mxu0
    %v2100 = vpop.f32.mrf.mxu0
    %2101 = vdwg.mxu0
    %2102 = vmatprep.subr.bf16.mxu0 %v1914
    %2103 = vmatpush1.bf16.msra.mxu0 %v1913
    %2104 = vmatprep.subr.bf16.mxu0 %v1906
    %2105 = vmatpush1.bf16.msra.mxu0 %v1905
    %2106 = vmatprep.subr.bf16.mxu0 %v1898
    %2107 = vmatpush1.bf16.msra.mxu0 %v1897
    %2108 = vmatprep.subr.bf16.mxu0 %v1890
    %2109 = vmatpush1.bf16.msra.mxu0 %v1889
    %2110 = vmatprep.subr.bf16.mxu0 %v1882
    %2111 = vmatpush1.bf16.msra.mxu0 %v1881
    %2112 = vmatprep.subr.bf16.mxu0 %v1874
    %2113 = vmatpush1.bf16.msra.mxu0 %v1873
    %2114 = vmatprep.subr.bf16.mxu0 %v1866
    %2115 = vmatpush1.bf16.msra.mxu0 %v1865
    %2116 = vmatprep.subr.bf16.mxu0 %v1858
    %2117 = vmatpush1.bf16.msra.mxu0 %v1857
    %2118 = vmatprep.subr.bf16.mxu0 0
    %2119 = vmatpush2.bf16.msra.mxu0 0
    %2120 = vmatprep.subr.bf16.mxu0 0
    %2121 = vmatpush2.bf16.msra.mxu0 0
    %2122 = vmatprep.subr.bf16.mxu0 0
    %2123 = vmatpush2.bf16.msra.mxu0 0
    %2124 = vmatprep.subr.bf16.mxu0 0
    %2125 = vmatpush2.bf16.msra.mxu0 0
    %2126 = vmatprep.subr.bf16.mxu0 0
    %2127 = vmatpush2.bf16.msra.mxu0 0
    %2128 = vmatprep.subr.bf16.mxu0 0
    %2129 = vmatpush2.bf16.msra.mxu0 0
    %2130 = vmatprep.subr.bf16.mxu0 0
    %2131 = vmatpush2.bf16.msra.mxu0 0
    %2132 = vmatprep.subr.bf16.mxu0 0
    %2133 = vmatpush2.bf16.msra.mxu0 0
    %2134 = vmatprep.mubr.bf16.mxu0 0
    %2135 = vmatmul.mubr.bf16.gmra.mxu0 %v1594
    %v2136 = vpop.f32.mrf.mxu0
    %v2137 = vadd.f32 0.0, %v2136
    %v2138 = vpop.f32.mrf.mxu0
    %v2139 = vadd.f32 0.0, %v2138
    %v2140 = vpop.f32.mrf.mxu0
    %v2141 = vpop.f32.mrf.mxu0
    %2142 = vdwg.mxu0
    %v2143 = vsel %vm973, %v2014, %v2096
    %v2144 = vsel %vm973, %v2016, %v2098
    %v2145 = vsel %vm973, %v2055, %v2137
    %v2146 = vsel %vm973, %v2057, %v2139
    %v2147 = vadd.f32 %v833, %v2143
    %v2148 = vadd.f32 %v834, %v2144
    %v2149 = vadd.f32 %v835, %v2145
    %v2150 = vadd.f32 %v836, %v2146
    %v2151 = vxor.u32 %v2147, 2147483648
    %v2152 = vxor.u32 %v2148, 2147483648
    %v2153 = vxor.u32 %v2149, 2147483648
    %v2154 = vmul.f32 %v2151, 1.442695
    %v2155 = vpow.pop %v2154
    %v2156 = vmul.f32 %v2152, 1.442695
    %v2157 = vpow.pop %v2156
    %v2158 = vmul.f32 %v2153, 1.442695
    %v2159 = vpow.pop %v2158
    %v2160 = vadd.f32 %v2155, 1.0
    %v2161 = vadd.f32 %v2157, 1.0
    %v2162 = vadd.f32 %v2159, 1.0
    %v2163 = vrcp.pop %v2160
    %v2164 = vmul.f32 1.0, %v2163
    %v2165 = vrcp.pop %v2161
    %v2166 = vmul.f32 1.0, %v2165
    %v2167 = vrcp.pop %v2162
    %v2168 = vmul.f32 1.0, %v2167
    %v2169 = vtanh.pop %v2150
    %v2170 = vmul.f32 %v2166, %v995
    %v2171 = vmul.f32 %v2164, %v2169
    %v2172 = vadd.f32 %v2170, %v2171
    %v2173 = vtanh.pop %v2172
    %v2174 = vmul.f32 %v2168, %v2173
    %v2175 = vadd.f32 %v2174, %v957
    %v2176 = vpack.c.bf16 %v2175, %v2175
    %2177 = vmatprep.subr.bf16.mxu0 %v1355
    %2178 = vmatpush1.bf16.msra.mxu0 %v1354
    %2179 = vmatprep.subr.bf16.mxu0 %v1347
    %2180 = vmatpush1.bf16.msra.mxu0 %v1346
    %2181 = vmatprep.subr.bf16.mxu0 %v1339
    %2182 = vmatpush1.bf16.msra.mxu0 %v1338
    %2183 = vmatprep.subr.bf16.mxu0 %v1331
    %2184 = vmatpush1.bf16.msra.mxu0 %v1330
    %2185 = vmatprep.subr.bf16.mxu0 %v1323
    %2186 = vmatpush1.bf16.msra.mxu0 %v1322
    %2187 = vmatprep.subr.bf16.mxu0 %v1315
    %2188 = vmatpush1.bf16.msra.mxu0 %v1314
    %2189 = vmatprep.subr.bf16.mxu0 %v1307
    %2190 = vmatpush1.bf16.msra.mxu0 %v1306
    %2191 = vmatprep.subr.bf16.mxu0 %v1299
    %2192 = vmatpush1.bf16.msra.mxu0 %v1298
    %2193 = vmatprep.subr.bf16.mxu0 0
    %2194 = vmatpush2.bf16.msra.mxu0 0
    %2195 = vmatprep.subr.bf16.mxu0 0
    %2196 = vmatpush2.bf16.msra.mxu0 0
    %2197 = vmatprep.subr.bf16.mxu0 0
    %2198 = vmatpush2.bf16.msra.mxu0 0
    %2199 = vmatprep.subr.bf16.mxu0 0
    %2200 = vmatpush2.bf16.msra.mxu0 0
    %2201 = vmatprep.subr.bf16.mxu0 0
    %2202 = vmatpush2.bf16.msra.mxu0 0
    %2203 = vmatprep.subr.bf16.mxu0 0
    %2204 = vmatpush2.bf16.msra.mxu0 0
    %2205 = vmatprep.subr.bf16.mxu0 0
    %2206 = vmatpush2.bf16.msra.mxu0 0
    %2207 = vmatprep.subr.bf16.mxu0 0
    %2208 = vmatpush2.bf16.msra.mxu0 0
    %2209 = vmatprep.mubr.bf16.mxu0 0
    %2210 = vmatmul.mubr.bf16.gmra.mxu0 %v2176
    %v2211 = vpop.f32.mrf.mxu0
    %v2212 = vadd.f32 %v1069, %v2211
    %v2213 = vpop.f32.mrf.mxu0
    %v2214 = vadd.f32 %v1073, %v2213
    %v2215 = vpop.f32.mrf.mxu0
    %v2216 = vpop.f32.mrf.mxu0
    %2217 = vdwg.mxu0
    %2218 = vmatprep.subr.bf16.mxu0 %v1357
    %2219 = vmatpush1.bf16.msra.mxu0 %v1356
    %2220 = vmatprep.subr.bf16.mxu0 %v1349
    %2221 = vmatpush1.bf16.msra.mxu0 %v1348
    %2222 = vmatprep.subr.bf16.mxu0 %v1341
    %2223 = vmatpush1.bf16.msra.mxu0 %v1340
    %2224 = vmatprep.subr.bf16.mxu0 %v1333
    %2225 = vmatpush1.bf16.msra.mxu0 %v1332
    %2226 = vmatprep.subr.bf16.mxu0 %v1325
    %2227 = vmatpush1.bf16.msra.mxu0 %v1324
    %2228 = vmatprep.subr.bf16.mxu0 %v1317
    %2229 = vmatpush1.bf16.msra.mxu0 %v1316
    %2230 = vmatprep.subr.bf16.mxu0 %v1309
    %2231 = vmatpush1.bf16.msra.mxu0 %v1308
    %2232 = vmatprep.subr.bf16.mxu0 %v1301
    %2233 = vmatpush1.bf16.msra.mxu0 %v1300
    %2234 = vmatprep.subr.bf16.mxu0 0
    %2235 = vmatpush2.bf16.msra.mxu0 0
    %2236 = vmatprep.subr.bf16.mxu0 0
    %2237 = vmatpush2.bf16.msra.mxu0 0
    %2238 = vmatprep.subr.bf16.mxu0 0
    %2239 = vmatpush2.bf16.msra.mxu0 0
    %2240 = vmatprep.subr.bf16.mxu0 0
    %2241 = vmatpush2.bf16.msra.mxu0 0
    %2242 = vmatprep.subr.bf16.mxu0 0
    %2243 = vmatpush2.bf16.msra.mxu0 0
    %2244 = vmatprep.subr.bf16.mxu0 0
    %2245 = vmatpush2.bf16.msra.mxu0 0
    %2246 = vmatprep.subr.bf16.mxu0 0
    %2247 = vmatpush2.bf16.msra.mxu0 0
    %2248 = vmatprep.subr.bf16.mxu0 0
    %2249 = vmatpush2.bf16.msra.mxu0 0
    %2250 = vmatprep.mubr.bf16.mxu0 0
    %2251 = vmatmul.mubr.bf16.gmra.mxu0 %v2176
    %v2252 = vpop.f32.mrf.mxu0
    %v2253 = vadd.f32 %v1077, %v2252
    %v2254 = vpop.f32.mrf.mxu0
    %v2255 = vadd.f32 %v1081, %v2254
    %v2256 = vpop.f32.mrf.mxu0
    %v2257 = vpop.f32.mrf.mxu0
    %2258 = vdwg.mxu0
    %2259 = vmatprep.subr.bf16.mxu0 %v1359
    %2260 = vmatpush1.bf16.msra.mxu0 %v1358
    %2261 = vmatprep.subr.bf16.mxu0 %v1351
    %2262 = vmatpush1.bf16.msra.mxu0 %v1350
    %2263 = vmatprep.subr.bf16.mxu0 %v1343
    %2264 = vmatpush1.bf16.msra.mxu0 %v1342
    %2265 = vmatprep.subr.bf16.mxu0 %v1335
    %2266 = vmatpush1.bf16.msra.mxu0 %v1334
    %2267 = vmatprep.subr.bf16.mxu0 %v1327
    %2268 = vmatpush1.bf16.msra.mxu0 %v1326
    %2269 = vmatprep.subr.bf16.mxu0 %v1319
    %2270 = vmatpush1.bf16.msra.mxu0 %v1318
    %2271 = vmatprep.subr.bf16.mxu0 %v1311
    %2272 = vmatpush1.bf16.msra.mxu0 %v1310
    %2273 = vmatprep.subr.bf16.mxu0 %v1303
    %2274 = vmatpush1.bf16.msra.mxu0 %v1302
    %2275 = vmatprep.subr.bf16.mxu0 0
    %2276 = vmatpush2.bf16.msra.mxu0 0
    %2277 = vmatprep.subr.bf16.mxu0 0
    %2278 = vmatpush2.bf16.msra.mxu0 0
    %2279 = vmatprep.subr.bf16.mxu0 0
    %2280 = vmatpush2.bf16.msra.mxu0 0
    %2281 = vmatprep.subr.bf16.mxu0 0
    %2282 = vmatpush2.bf16.msra.mxu0 0
    %2283 = vmatprep.subr.bf16.mxu0 0
    %2284 = vmatpush2.bf16.msra.mxu0 0
    %2285 = vmatprep.subr.bf16.mxu0 0
    %2286 = vmatpush2.bf16.msra.mxu0 0
    %2287 = vmatprep.subr.bf16.mxu0 0
    %2288 = vmatpush2.bf16.msra.mxu0 0
    %2289 = vmatprep.subr.bf16.mxu0 0
    %2290 = vmatpush2.bf16.msra.mxu0 0
    %2291 = vmatprep.mubr.bf16.mxu0 0
    %2292 = vmatmul.mubr.bf16.gmra.mxu0 %v2176
    %v2293 = vpop.f32.mrf.mxu0
    %v2294 = vadd.f32 %v1085, %v2293
    %v2295 = vpop.f32.mrf.mxu0
    %v2296 = vadd.f32 %v1089, %v2295
    %v2297 = vpop.f32.mrf.mxu0
    %v2298 = vpop.f32.mrf.mxu0
    %2299 = vdwg.mxu0
    %2300 = vmatprep.subr.bf16.mxu0 %v1361
    %2301 = vmatpush1.bf16.msra.mxu0 %v1360
    %2302 = vmatprep.subr.bf16.mxu0 %v1353
    %2303 = vmatpush1.bf16.msra.mxu0 %v1352
    %2304 = vmatprep.subr.bf16.mxu0 %v1345
    %2305 = vmatpush1.bf16.msra.mxu0 %v1344
    %2306 = vmatprep.subr.bf16.mxu0 %v1337
    %2307 = vmatpush1.bf16.msra.mxu0 %v1336
    %2308 = vmatprep.subr.bf16.mxu0 %v1329
    %2309 = vmatpush1.bf16.msra.mxu0 %v1328
    %2310 = vmatprep.subr.bf16.mxu0 %v1321
    %2311 = vmatpush1.bf16.msra.mxu0 %v1320
    %2312 = vmatprep.subr.bf16.mxu0 %v1313
    %2313 = vmatpush1.bf16.msra.mxu0 %v1312
    %2314 = vmatprep.subr.bf16.mxu0 %v1305
    %2315 = vmatpush1.bf16.msra.mxu0 %v1304
    %2316 = vmatprep.subr.bf16.mxu0 0
    %2317 = vmatpush2.bf16.msra.mxu0 0
    %2318 = vmatprep.subr.bf16.mxu0 0
    %2319 = vmatpush2.bf16.msra.mxu0 0
    %2320 = vmatprep.subr.bf16.mxu0 0
    %2321 = vmatpush2.bf16.msra.mxu0 0
    %2322 = vmatprep.subr.bf16.mxu0 0
    %2323 = vmatpush2.bf16.msra.mxu0 0
    %2324 = vmatprep.subr.bf16.mxu0 0
    %2325 = vmatpush2.bf16.msra.mxu0 0
    %2326 = vmatprep.subr.bf16.mxu0 0
    %2327 = vmatpush2.bf16.msra.mxu0 0
    %2328 = vmatprep.subr.bf16.mxu0 0
    %2329 = vmatpush2.bf16.msra.mxu0 0
    %2330 = vmatprep.subr.bf16.mxu0 0
    %2331 = vmatpush2.bf16.msra.mxu0 0
    %2332 = vmatprep.mubr.bf16.mxu0 0
    %2333 = vmatmul.mubr.bf16.gmra.mxu0 %v2176
    %v2334 = vpop.f32.mrf.mxu0
    %v2335 = vadd.f32 %v1093, %v2334
    %v2336 = vpop.f32.mrf.mxu0
    %v2337 = vadd.f32 %v1097, %v2336
    %v2338 = vpop.f32.mrf.mxu0
    %v2339 = vpop.f32.mrf.mxu0
    %2340 = vdwg.mxu0
    %v2341 = vsel %vm973, %v2212, %v2294
    %v2342 = vsel %vm973, %v2214, %v2296
    %v2343 = vsel %vm973, %v2253, %v2335
    %v2344 = vsel %vm973, %v2255, %v2337
    %v2345 = vpack.c.bf16 %v2174, %v2174
    %2346 = vmatprep.subr.bf16.mxu0 %v1908
    %2347 = vmatpush1.bf16.msra.mxu0 %v1907
    %2348 = vmatprep.subr.bf16.mxu0 %v1900
    %2349 = vmatpush1.bf16.msra.mxu0 %v1899
    %2350 = vmatprep.subr.bf16.mxu0 %v1892
    %2351 = vmatpush1.bf16.msra.mxu0 %v1891
    %2352 = vmatprep.subr.bf16.mxu0 %v1884
    %2353 = vmatpush1.bf16.msra.mxu0 %v1883
    %2354 = vmatprep.subr.bf16.mxu0 %v1876
    %2355 = vmatpush1.bf16.msra.mxu0 %v1875
    %2356 = vmatprep.subr.bf16.mxu0 %v1868
    %2357 = vmatpush1.bf16.msra.mxu0 %v1867
    %2358 = vmatprep.subr.bf16.mxu0 %v1860
    %2359 = vmatpush1.bf16.msra.mxu0 %v1859
    %2360 = vmatprep.subr.bf16.mxu0 %v1852
    %2361 = vmatpush1.bf16.msra.mxu0 %v1851
    %2362 = vmatprep.subr.bf16.mxu0 0
    %2363 = vmatpush2.bf16.msra.mxu0 0
    %2364 = vmatprep.subr.bf16.mxu0 0
    %2365 = vmatpush2.bf16.msra.mxu0 0
    %2366 = vmatprep.subr.bf16.mxu0 0
    %2367 = vmatpush2.bf16.msra.mxu0 0
    %2368 = vmatprep.subr.bf16.mxu0 0
    %2369 = vmatpush2.bf16.msra.mxu0 0
    %2370 = vmatprep.subr.bf16.mxu0 0
    %2371 = vmatpush2.bf16.msra.mxu0 0
    %2372 = vmatprep.subr.bf16.mxu0 0
    %2373 = vmatpush2.bf16.msra.mxu0 0
    %2374 = vmatprep.subr.bf16.mxu0 0
    %2375 = vmatpush2.bf16.msra.mxu0 0
    %2376 = vmatprep.subr.bf16.mxu0 0
    %2377 = vmatpush2.bf16.msra.mxu0 0
    %2378 = vmatprep.mubr.bf16.mxu0 0
    %2379 = vmatmul.mubr.bf16.gmra.mxu0 %v2345
    %v2380 = vpop.f32.mrf.mxu0
    %v2381 = vadd.f32 0.0, %v2380
    %v2382 = vpop.f32.mrf.mxu0
    %v2383 = vadd.f32 0.0, %v2382
    %v2384 = vpop.f32.mrf.mxu0
    %v2385 = vpop.f32.mrf.mxu0
    %2386 = vdwg.mxu0
    %2387 = vmatprep.subr.bf16.mxu0 %v1910
    %2388 = vmatpush1.bf16.msra.mxu0 %v1909
    %2389 = vmatprep.subr.bf16.mxu0 %v1902
    %2390 = vmatpush1.bf16.msra.mxu0 %v1901
    %2391 = vmatprep.subr.bf16.mxu0 %v1894
    %2392 = vmatpush1.bf16.msra.mxu0 %v1893
    %2393 = vmatprep.subr.bf16.mxu0 %v1886
    %2394 = vmatpush1.bf16.msra.mxu0 %v1885
    %2395 = vmatprep.subr.bf16.mxu0 %v1878
    %2396 = vmatpush1.bf16.msra.mxu0 %v1877
    %2397 = vmatprep.subr.bf16.mxu0 %v1870
    %2398 = vmatpush1.bf16.msra.mxu0 %v1869
    %2399 = vmatprep.subr.bf16.mxu0 %v1862
    %2400 = vmatpush1.bf16.msra.mxu0 %v1861
    %2401 = vmatprep.subr.bf16.mxu0 %v1854
    %2402 = vmatpush1.bf16.msra.mxu0 %v1853
    %2403 = vmatprep.subr.bf16.mxu0 0
    %2404 = vmatpush2.bf16.msra.mxu0 0
    %2405 = vmatprep.subr.bf16.mxu0 0
    %2406 = vmatpush2.bf16.msra.mxu0 0
    %2407 = vmatprep.subr.bf16.mxu0 0
    %2408 = vmatpush2.bf16.msra.mxu0 0
    %2409 = vmatprep.subr.bf16.mxu0 0
    %2410 = vmatpush2.bf16.msra.mxu0 0
    %2411 = vmatprep.subr.bf16.mxu0 0
    %2412 = vmatpush2.bf16.msra.mxu0 0
    %2413 = vmatprep.subr.bf16.mxu0 0
    %2414 = vmatpush2.bf16.msra.mxu0 0
    %2415 = vmatprep.subr.bf16.mxu0 0
    %2416 = vmatpush2.bf16.msra.mxu0 0
    %2417 = vmatprep.subr.bf16.mxu0 0
    %2418 = vmatpush2.bf16.msra.mxu0 0
    %2419 = vmatprep.mubr.bf16.mxu0 0
    %2420 = vmatmul.mubr.bf16.gmra.mxu0 %v2345
    %v2421 = vpop.f32.mrf.mxu0
    %v2422 = vadd.f32 0.0, %v2421
    %v2423 = vpop.f32.mrf.mxu0
    %v2424 = vadd.f32 0.0, %v2423
    %v2425 = vpop.f32.mrf.mxu0
    %v2426 = vpop.f32.mrf.mxu0
    %2427 = vdwg.mxu0
    %2428 = vmatprep.subr.bf16.mxu0 %v1912
    %2429 = vmatpush1.bf16.msra.mxu0 %v1911
    %2430 = vmatprep.subr.bf16.mxu0 %v1904
    %2431 = vmatpush1.bf16.msra.mxu0 %v1903
    %2432 = vmatprep.subr.bf16.mxu0 %v1896
    %2433 = vmatpush1.bf16.msra.mxu0 %v1895
    %2434 = vmatprep.subr.bf16.mxu0 %v1888
    %2435 = vmatpush1.bf16.msra.mxu0 %v1887
    %2436 = vmatprep.subr.bf16.mxu0 %v1880
    %2437 = vmatpush1.bf16.msra.mxu0 %v1879
    %2438 = vmatprep.subr.bf16.mxu0 %v1872
    %2439 = vmatpush1.bf16.msra.mxu0 %v1871
    %2440 = vmatprep.subr.bf16.mxu0 %v1864
    %2441 = vmatpush1.bf16.msra.mxu0 %v1863
    %2442 = vmatprep.subr.bf16.mxu0 %v1856
    %2443 = vmatpush1.bf16.msra.mxu0 %v1855
    %2444 = vmatprep.subr.bf16.mxu0 0
    %2445 = vmatpush2.bf16.msra.mxu0 0
    %2446 = vmatprep.subr.bf16.mxu0 0
    %2447 = vmatpush2.bf16.msra.mxu0 0
    %2448 = vmatprep.subr.bf16.mxu0 0
    %2449 = vmatpush2.bf16.msra.mxu0 0
    %2450 = vmatprep.subr.bf16.mxu0 0
    %2451 = vmatpush2.bf16.msra.mxu0 0
    %2452 = vmatprep.subr.bf16.mxu0 0
    %2453 = vmatpush2.bf16.msra.mxu0 0
    %2454 = vmatprep.subr.bf16.mxu0 0
    %2455 = vmatpush2.bf16.msra.mxu0 0
    %2456 = vmatprep.subr.bf16.mxu0 0
    %2457 = vmatpush2.bf16.msra.mxu0 0
    %2458 = vmatprep.subr.bf16.mxu0 0
    %2459 = vmatpush2.bf16.msra.mxu0 0
    %2460 = vmatprep.mubr.bf16.mxu0 0
    %2461 = vmatmul.mubr.bf16.gmra.mxu0 %v2345
    %v2462 = vpop.f32.mrf.mxu0
    %v2463 = vadd.f32 0.0, %v2462
    %v2464 = vpop.f32.mrf.mxu0
    %v2465 = vadd.f32 0.0, %v2464
    %v2466 = vpop.f32.mrf.mxu0
    %v2467 = vpop.f32.mrf.mxu0
    %2468 = vdwg.mxu0
    %2469 = vmatprep.subr.bf16.mxu0 %v1914
    %2470 = vmatpush1.bf16.msra.mxu0 %v1913
    %2471 = vmatprep.subr.bf16.mxu0 %v1906
    %2472 = vmatpush1.bf16.msra.mxu0 %v1905
    %2473 = vmatprep.subr.bf16.mxu0 %v1898
    %2474 = vmatpush1.bf16.msra.mxu0 %v1897
    %2475 = vmatprep.subr.bf16.mxu0 %v1890
    %2476 = vmatpush1.bf16.msra.mxu0 %v1889
    %2477 = vmatprep.subr.bf16.mxu0 %v1882
    %2478 = vmatpush1.bf16.msra.mxu0 %v1881
    %2479 = vmatprep.subr.bf16.mxu0 %v1874
    %2480 = vmatpush1.bf16.msra.mxu0 %v1873
    %2481 = vmatprep.subr.bf16.mxu0 %v1866
    %2482 = vmatpush1.bf16.msra.mxu0 %v1865
    %2483 = vmatprep.subr.bf16.mxu0 %v1858
    %2484 = vmatpush1.bf16.msra.mxu0 %v1857
    %2485 = vmatprep.subr.bf16.mxu0 0
    %2486 = vmatpush2.bf16.msra.mxu0 0
    %2487 = vmatprep.subr.bf16.mxu0 0
    %2488 = vmatpush2.bf16.msra.mxu0 0
    %2489 = vmatprep.subr.bf16.mxu0 0
    %2490 = vmatpush2.bf16.msra.mxu0 0
    %2491 = vmatprep.subr.bf16.mxu0 0
    %2492 = vmatpush2.bf16.msra.mxu0 0
    %2493 = vmatprep.subr.bf16.mxu0 0
    %2494 = vmatpush2.bf16.msra.mxu0 0
    %2495 = vmatprep.subr.bf16.mxu0 0
    %2496 = vmatpush2.bf16.msra.mxu0 0
    %2497 = vmatprep.subr.bf16.mxu0 0
    %2498 = vmatpush2.bf16.msra.mxu0 0
    %2499 = vmatprep.subr.bf16.mxu0 0
    %2500 = vmatpush2.bf16.msra.mxu0 0
    %2501 = vmatprep.mubr.bf16.mxu0 0
    %2502 = vmatmul.mubr.bf16.gmra.mxu0 %v2345
    %v2503 = vpop.f32.mrf.mxu0
    %v2504 = vadd.f32 0.0, %v2503
    %v2505 = vpop.f32.mrf.mxu0
    %v2506 = vadd.f32 0.0, %v2505
    %v2507 = vpop.f32.mrf.mxu0
    %v2508 = vpop.f32.mrf.mxu0
    %2509 = vdwg.mxu0
    %v2510 = vsel %vm973, %v2381, %v2463
    %v2511 = vsel %vm973, %v2383, %v2465
    %v2512 = vsel %vm973, %v2422, %v2504
    %v2513 = vsel %vm973, %v2424, %v2506
    %v2514 = vadd.f32 %v853, %v2510
    %v2515 = vadd.f32 %v854, %v2511
    %v2516 = vadd.f32 %v855, %v2512
    %v2517 = vadd.f32 %v856, %v2513
    %v2518 = vxor.u32 %v2514, 2147483648
    %v2519 = vxor.u32 %v2515, 2147483648
    %v2520 = vxor.u32 %v2516, 2147483648
    %v2521 = vmul.f32 %v2518, 1.442695
    %v2522 = vpow.pop %v2521
    %v2523 = vmul.f32 %v2519, 1.442695
    %v2524 = vpow.pop %v2523
    %v2525 = vmul.f32 %v2520, 1.442695
    %v2526 = vpow.pop %v2525
    %v2527 = vadd.f32 %v2522, 1.0
    %v2528 = vadd.f32 %v2524, 1.0
    %v2529 = vadd.f32 %v2526, 1.0
    %v2530 = vrcp.pop %v2527
    %v2531 = vmul.f32 1.0, %v2530
    %v2532 = vrcp.pop %v2528
    %v2533 = vmul.f32 1.0, %v2532
    %v2534 = vrcp.pop %v2529
    %v2535 = vmul.f32 1.0, %v2534
    %v2536 = vtanh.pop %v2517
    %v2537 = vmul.f32 %v2533, %v2172
    %v2538 = vmul.f32 %v2531, %v2536
    %v2539 = vadd.f32 %v2537, %v2538
    %v2540 = vtanh.pop %v2539
    %v2541 = vmul.f32 %v2535, %v2540
    %v2542 = vadd.f32 %v2541, %v962
    %v2543 = vpack.c.bf16 %v2542, %v2542
    %2544 = vmatprep.subr.bf16.mxu0 %v1355
    %2545 = vmatpush1.bf16.msra.mxu0 %v1354
    %2546 = vmatprep.subr.bf16.mxu0 %v1347
    %2547 = vmatpush1.bf16.msra.mxu0 %v1346
    %2548 = vmatprep.subr.bf16.mxu0 %v1339
    %2549 = vmatpush1.bf16.msra.mxu0 %v1338
    %2550 = vmatprep.subr.bf16.mxu0 %v1331
    %2551 = vmatpush1.bf16.msra.mxu0 %v1330
    %2552 = vmatprep.subr.bf16.mxu0 %v1323
    %2553 = vmatpush1.bf16.msra.mxu0 %v1322
    %2554 = vmatprep.subr.bf16.mxu0 %v1315
    %2555 = vmatpush1.bf16.msra.mxu0 %v1314
    %2556 = vmatprep.subr.bf16.mxu0 %v1307
    %2557 = vmatpush1.bf16.msra.mxu0 %v1306
    %2558 = vmatprep.subr.bf16.mxu0 %v1299
    %2559 = vmatpush1.bf16.msra.mxu0 %v1298
    %2560 = vmatprep.subr.bf16.mxu0 0
    %2561 = vmatpush2.bf16.msra.mxu0 0
    %2562 = vmatprep.subr.bf16.mxu0 0
    %2563 = vmatpush2.bf16.msra.mxu0 0
    %2564 = vmatprep.subr.bf16.mxu0 0
    %2565 = vmatpush2.bf16.msra.mxu0 0
    %2566 = vmatprep.subr.bf16.mxu0 0
    %2567 = vmatpush2.bf16.msra.mxu0 0
    %2568 = vmatprep.subr.bf16.mxu0 0
    %2569 = vmatpush2.bf16.msra.mxu0 0
    %2570 = vmatprep.subr.bf16.mxu0 0
    %2571 = vmatpush2.bf16.msra.mxu0 0
    %2572 = vmatprep.subr.bf16.mxu0 0
    %2573 = vmatpush2.bf16.msra.mxu0 0
    %2574 = vmatprep.subr.bf16.mxu0 0
    %2575 = vmatpush2.bf16.msra.mxu0 0
    %2576 = vmatprep.mubr.bf16.mxu0 0
    %2577 = vmatmul.mubr.bf16.gmra.mxu0 %v2543
    %v2578 = vpop.f32.mrf.mxu0
    %v2579 = vadd.f32 %v1069, %v2578
    %v2580 = vpop.f32.mrf.mxu0
    %v2581 = vadd.f32 %v1073, %v2580
    %v2582 = vpop.f32.mrf.mxu0
    %v2583 = vpop.f32.mrf.mxu0
    %2584 = vdwg.mxu0
    %2585 = vmatprep.subr.bf16.mxu0 %v1357
    %2586 = vmatpush1.bf16.msra.mxu0 %v1356
    %2587 = vmatprep.subr.bf16.mxu0 %v1349
    %2588 = vmatpush1.bf16.msra.mxu0 %v1348
    %2589 = vmatprep.subr.bf16.mxu0 %v1341
    %2590 = vmatpush1.bf16.msra.mxu0 %v1340
    %2591 = vmatprep.subr.bf16.mxu0 %v1333
    %2592 = vmatpush1.bf16.msra.mxu0 %v1332
    %2593 = vmatprep.subr.bf16.mxu0 %v1325
    %2594 = vmatpush1.bf16.msra.mxu0 %v1324
    %2595 = vmatprep.subr.bf16.mxu0 %v1317
    %2596 = vmatpush1.bf16.msra.mxu0 %v1316
    %2597 = vmatprep.subr.bf16.mxu0 %v1309
    %2598 = vmatpush1.bf16.msra.mxu0 %v1308
    %2599 = vmatprep.subr.bf16.mxu0 %v1301
    %2600 = vmatpush1.bf16.msra.mxu0 %v1300
    %2601 = vmatprep.subr.bf16.mxu0 0
    %2602 = vmatpush2.bf16.msra.mxu0 0
    %2603 = vmatprep.subr.bf16.mxu0 0
    %2604 = vmatpush2.bf16.msra.mxu0 0
    %2605 = vmatprep.subr.bf16.mxu0 0
    %2606 = vmatpush2.bf16.msra.mxu0 0
    %2607 = vmatprep.subr.bf16.mxu0 0
    %2608 = vmatpush2.bf16.msra.mxu0 0
    %2609 = vmatprep.subr.bf16.mxu0 0
    %2610 = vmatpush2.bf16.msra.mxu0 0
    %2611 = vmatprep.subr.bf16.mxu0 0
    %2612 = vmatpush2.bf16.msra.mxu0 0
    %2613 = vmatprep.subr.bf16.mxu0 0
    %2614 = vmatpush2.bf16.msra.mxu0 0
    %2615 = vmatprep.subr.bf16.mxu0 0
    %2616 = vmatpush2.bf16.msra.mxu0 0
    %2617 = vmatprep.mubr.bf16.mxu0 0
    %2618 = vmatmul.mubr.bf16.gmra.mxu0 %v2543
    %v2619 = vpop.f32.mrf.mxu0
    %v2620 = vadd.f32 %v1077, %v2619
    %v2621 = vpop.f32.mrf.mxu0
    %v2622 = vadd.f32 %v1081, %v2621
    %v2623 = vpop.f32.mrf.mxu0
    %v2624 = vpop.f32.mrf.mxu0
    %2625 = vdwg.mxu0
    %2626 = vmatprep.subr.bf16.mxu0 %v1359
    %2627 = vmatpush1.bf16.msra.mxu0 %v1358
    %2628 = vmatprep.subr.bf16.mxu0 %v1351
    %2629 = vmatpush1.bf16.msra.mxu0 %v1350
    %2630 = vmatprep.subr.bf16.mxu0 %v1343
    %2631 = vmatpush1.bf16.msra.mxu0 %v1342
    %2632 = vmatprep.subr.bf16.mxu0 %v1335
    %2633 = vmatpush1.bf16.msra.mxu0 %v1334
    %2634 = vmatprep.subr.bf16.mxu0 %v1327
    %2635 = vmatpush1.bf16.msra.mxu0 %v1326
    %2636 = vmatprep.subr.bf16.mxu0 %v1319
    %2637 = vmatpush1.bf16.msra.mxu0 %v1318
    %2638 = vmatprep.subr.bf16.mxu0 %v1311
    %2639 = vmatpush1.bf16.msra.mxu0 %v1310
    %2640 = vmatprep.subr.bf16.mxu0 %v1303
    %2641 = vmatpush1.bf16.msra.mxu0 %v1302
    %2642 = vmatprep.subr.bf16.mxu0 0
    %2643 = vmatpush2.bf16.msra.mxu0 0
    %2644 = vmatprep.subr.bf16.mxu0 0
    %2645 = vmatpush2.bf16.msra.mxu0 0
    %2646 = vmatprep.subr.bf16.mxu0 0
    %2647 = vmatpush2.bf16.msra.mxu0 0
    %2648 = vmatprep.subr.bf16.mxu0 0
    %2649 = vmatpush2.bf16.msra.mxu0 0
    %2650 = vmatprep.subr.bf16.mxu0 0
    %2651 = vmatpush2.bf16.msra.mxu0 0
    %2652 = vmatprep.subr.bf16.mxu0 0
    %2653 = vmatpush2.bf16.msra.mxu0 0
    %2654 = vmatprep.subr.bf16.mxu0 0
    %2655 = vmatpush2.bf16.msra.mxu0 0
    %2656 = vmatprep.subr.bf16.mxu0 0
    %2657 = vmatpush2.bf16.msra.mxu0 0
    %2658 = vmatprep.mubr.bf16.mxu0 0
    %2659 = vmatmul.mubr.bf16.gmra.mxu0 %v2543
    %v2660 = vpop.f32.mrf.mxu0
    %v2661 = vadd.f32 %v1085, %v2660
    %v2662 = vpop.f32.mrf.mxu0
    %v2663 = vadd.f32 %v1089, %v2662
    %v2664 = vpop.f32.mrf.mxu0
    %v2665 = vpop.f32.mrf.mxu0
    %2666 = vdwg.mxu0
    %2667 = vmatprep.subr.bf16.mxu0 %v1361
    %2668 = vmatpush1.bf16.msra.mxu0 %v1360
    %2669 = vmatprep.subr.bf16.mxu0 %v1353
    %2670 = vmatpush1.bf16.msra.mxu0 %v1352
    %2671 = vmatprep.subr.bf16.mxu0 %v1345
    %2672 = vmatpush1.bf16.msra.mxu0 %v1344
    %2673 = vmatprep.subr.bf16.mxu0 %v1337
    %2674 = vmatpush1.bf16.msra.mxu0 %v1336
    %2675 = vmatprep.subr.bf16.mxu0 %v1329
    %2676 = vmatpush1.bf16.msra.mxu0 %v1328
    %2677 = vmatprep.subr.bf16.mxu0 %v1321
    %2678 = vmatpush1.bf16.msra.mxu0 %v1320
    %2679 = vmatprep.subr.bf16.mxu0 %v1313
    %2680 = vmatpush1.bf16.msra.mxu0 %v1312
    %2681 = vmatprep.subr.bf16.mxu0 %v1305
    %2682 = vmatpush1.bf16.msra.mxu0 %v1304
    %2683 = vmatprep.subr.bf16.mxu0 0
    %2684 = vmatpush2.bf16.msra.mxu0 0
    %2685 = vmatprep.subr.bf16.mxu0 0
    %2686 = vmatpush2.bf16.msra.mxu0 0
    %2687 = vmatprep.subr.bf16.mxu0 0
    %2688 = vmatpush2.bf16.msra.mxu0 0
    %2689 = vmatprep.subr.bf16.mxu0 0
    %2690 = vmatpush2.bf16.msra.mxu0 0
    %2691 = vmatprep.subr.bf16.mxu0 0
    %2692 = vmatpush2.bf16.msra.mxu0 0
    %2693 = vmatprep.subr.bf16.mxu0 0
    %2694 = vmatpush2.bf16.msra.mxu0 0
    %2695 = vmatprep.subr.bf16.mxu0 0
    %2696 = vmatpush2.bf16.msra.mxu0 0
    %2697 = vmatprep.subr.bf16.mxu0 0
    %2698 = vmatpush2.bf16.msra.mxu0 0
    %2699 = vmatprep.mubr.bf16.mxu0 0
    %2700 = vmatmul.mubr.bf16.gmra.mxu0 %v2543
    %v2701 = vpop.f32.mrf.mxu0
    %v2702 = vadd.f32 %v1093, %v2701
    %v2703 = vpop.f32.mrf.mxu0
    %v2704 = vadd.f32 %v1097, %v2703
    %v2705 = vpop.f32.mrf.mxu0
    %v2706 = vpop.f32.mrf.mxu0
    %2707 = vdwg.mxu0
    %v2708 = vsel %vm973, %v2579, %v2661
    %v2709 = vsel %vm973, %v2581, %v2663
    %v2710 = vsel %vm973, %v2620, %v2702
    %v2711 = vsel %vm973, %v2622, %v2704
    %v2712 = vpack.c.bf16 %v2541, %v2541
    %2713 = vmatprep.subr.bf16.mxu0 %v1908
    %2714 = vmatpush1.bf16.msra.mxu0 %v1907
    %2715 = vmatprep.subr.bf16.mxu0 %v1900
    %2716 = vmatpush1.bf16.msra.mxu0 %v1899
    %2717 = vmatprep.subr.bf16.mxu0 %v1892
    %2718 = vmatpush1.bf16.msra.mxu0 %v1891
    %2719 = vmatprep.subr.bf16.mxu0 %v1884
    %2720 = vmatpush1.bf16.msra.mxu0 %v1883
    %2721 = vmatprep.subr.bf16.mxu0 %v1876
    %2722 = vmatpush1.bf16.msra.mxu0 %v1875
    %2723 = vmatprep.subr.bf16.mxu0 %v1868
    %2724 = vmatpush1.bf16.msra.mxu0 %v1867
    %2725 = vmatprep.subr.bf16.mxu0 %v1860
    %2726 = vmatpush1.bf16.msra.mxu0 %v1859
    %2727 = vmatprep.subr.bf16.mxu0 %v1852
    %2728 = vmatpush1.bf16.msra.mxu0 %v1851
    %2729 = vmatprep.subr.bf16.mxu0 0
    %2730 = vmatpush2.bf16.msra.mxu0 0
    %2731 = vmatprep.subr.bf16.mxu0 0
    %2732 = vmatpush2.bf16.msra.mxu0 0
    %2733 = vmatprep.subr.bf16.mxu0 0
    %2734 = vmatpush2.bf16.msra.mxu0 0
    %2735 = vmatprep.subr.bf16.mxu0 0
    %2736 = vmatpush2.bf16.msra.mxu0 0
    %2737 = vmatprep.subr.bf16.mxu0 0
    %2738 = vmatpush2.bf16.msra.mxu0 0
    %2739 = vmatprep.subr.bf16.mxu0 0
    %2740 = vmatpush2.bf16.msra.mxu0 0
    %2741 = vmatprep.subr.bf16.mxu0 0
    %2742 = vmatpush2.bf16.msra.mxu0 0
    %2743 = vmatprep.subr.bf16.mxu0 0
    %2744 = vmatpush2.bf16.msra.mxu0 0
    %2745 = vmatprep.mubr.bf16.mxu0 0
    %2746 = vmatmul.mubr.bf16.gmra.mxu0 %v2712
    %v2747 = vpop.f32.mrf.mxu0
    %v2748 = vadd.f32 0.0, %v2747
    %v2749 = vpop.f32.mrf.mxu0
    %v2750 = vadd.f32 0.0, %v2749
    %v2751 = vpop.f32.mrf.mxu0
    %v2752 = vpop.f32.mrf.mxu0
    %2753 = vdwg.mxu0
    %2754 = vmatprep.subr.bf16.mxu0 %v1910
    %2755 = vmatpush1.bf16.msra.mxu0 %v1909
    %2756 = vmatprep.subr.bf16.mxu0 %v1902
    %2757 = vmatpush1.bf16.msra.mxu0 %v1901
    %2758 = vmatprep.subr.bf16.mxu0 %v1894
    %2759 = vmatpush1.bf16.msra.mxu0 %v1893
    %2760 = vmatprep.subr.bf16.mxu0 %v1886
    %2761 = vmatpush1.bf16.msra.mxu0 %v1885
    %2762 = vmatprep.subr.bf16.mxu0 %v1878
    %2763 = vmatpush1.bf16.msra.mxu0 %v1877
    %2764 = vmatprep.subr.bf16.mxu0 %v1870
    %2765 = vmatpush1.bf16.msra.mxu0 %v1869
    %2766 = vmatprep.subr.bf16.mxu0 %v1862
    %2767 = vmatpush1.bf16.msra.mxu0 %v1861
    %2768 = vmatprep.subr.bf16.mxu0 %v1854
    %2769 = vmatpush1.bf16.msra.mxu0 %v1853
    %2770 = vmatprep.subr.bf16.mxu0 0
    %2771 = vmatpush2.bf16.msra.mxu0 0
    %2772 = vmatprep.subr.bf16.mxu0 0
    %2773 = vmatpush2.bf16.msra.mxu0 0
    %2774 = vmatprep.subr.bf16.mxu0 0
    %2775 = vmatpush2.bf16.msra.mxu0 0
    %2776 = vmatprep.subr.bf16.mxu0 0
    %2777 = vmatpush2.bf16.msra.mxu0 0
    %2778 = vmatprep.subr.bf16.mxu0 0
    %2779 = vmatpush2.bf16.msra.mxu0 0
    %2780 = vmatprep.subr.bf16.mxu0 0
    %2781 = vmatpush2.bf16.msra.mxu0 0
    %2782 = vmatprep.subr.bf16.mxu0 0
    %2783 = vmatpush2.bf16.msra.mxu0 0
    %2784 = vmatprep.subr.bf16.mxu0 0
    %2785 = vmatpush2.bf16.msra.mxu0 0
    %2786 = vmatprep.mubr.bf16.mxu0 0
    %2787 = vmatmul.mubr.bf16.gmra.mxu0 %v2712
    %v2788 = vpop.f32.mrf.mxu0
    %v2789 = vadd.f32 0.0, %v2788
    %v2790 = vpop.f32.mrf.mxu0
    %v2791 = vadd.f32 0.0, %v2790
    %v2792 = vpop.f32.mrf.mxu0
    %v2793 = vpop.f32.mrf.mxu0
    %2794 = vdwg.mxu0
    %2795 = vmatprep.subr.bf16.mxu0 %v1912
    %2796 = vmatpush1.bf16.msra.mxu0 %v1911
    %2797 = vmatprep.subr.bf16.mxu0 %v1904
    %2798 = vmatpush1.bf16.msra.mxu0 %v1903
    %2799 = vmatprep.subr.bf16.mxu0 %v1896
    %2800 = vmatpush1.bf16.msra.mxu0 %v1895
    %2801 = vmatprep.subr.bf16.mxu0 %v1888
    %2802 = vmatpush1.bf16.msra.mxu0 %v1887
    %2803 = vmatprep.subr.bf16.mxu0 %v1880
    %2804 = vmatpush1.bf16.msra.mxu0 %v1879
    %2805 = vmatprep.subr.bf16.mxu0 %v1872
    %2806 = vmatpush1.bf16.msra.mxu0 %v1871
    %2807 = vmatprep.subr.bf16.mxu0 %v1864
    %2808 = vmatpush1.bf16.msra.mxu0 %v1863
    %2809 = vmatprep.subr.bf16.mxu0 %v1856
    %2810 = vmatpush1.bf16.msra.mxu0 %v1855
    %2811 = vmatprep.subr.bf16.mxu0 0
    %2812 = vmatpush2.bf16.msra.mxu0 0
    %2813 = vmatprep.subr.bf16.mxu0 0
    %2814 = vmatpush2.bf16.msra.mxu0 0
    %2815 = vmatprep.subr.bf16.mxu0 0
    %2816 = vmatpush2.bf16.msra.mxu0 0
    %2817 = vmatprep.subr.bf16.mxu0 0
    %2818 = vmatpush2.bf16.msra.mxu0 0
    %2819 = vmatprep.subr.bf16.mxu0 0
    %2820 = vmatpush2.bf16.msra.mxu0 0
    %2821 = vmatprep.subr.bf16.mxu0 0
    %2822 = vmatpush2.bf16.msra.mxu0 0
    %2823 = vmatprep.subr.bf16.mxu0 0
    %2824 = vmatpush2.bf16.msra.mxu0 0
    %2825 = vmatprep.subr.bf16.mxu0 0
    %2826 = vmatpush2.bf16.msra.mxu0 0
    %2827 = vmatprep.mubr.bf16.mxu0 0
    %2828 = vmatmul.mubr.bf16.gmra.mxu0 %v2712
    %v2829 = vpop.f32.mrf.mxu0
    %v2830 = vadd.f32 0.0, %v2829
    %v2831 = vpop.f32.mrf.mxu0
    %v2832 = vadd.f32 0.0, %v2831
    %v2833 = vpop.f32.mrf.mxu0
    %v2834 = vpop.f32.mrf.mxu0
    %2835 = vdwg.mxu0
    %2836 = vmatprep.subr.bf16.mxu0 %v1914
    %2837 = vmatpush1.bf16.msra.mxu0 %v1913
    %2838 = vmatprep.subr.bf16.mxu0 %v1906
    %2839 = vmatpush1.bf16.msra.mxu0 %v1905
    %2840 = vmatprep.subr.bf16.mxu0 %v1898
    %2841 = vmatpush1.bf16.msra.mxu0 %v1897
    %2842 = vmatprep.subr.bf16.mxu0 %v1890
    %2843 = vmatpush1.bf16.msra.mxu0 %v1889
    %2844 = vmatprep.subr.bf16.mxu0 %v1882
    %2845 = vmatpush1.bf16.msra.mxu0 %v1881
    %2846 = vmatprep.subr.bf16.mxu0 %v1874
    %2847 = vmatpush1.bf16.msra.mxu0 %v1873
    %2848 = vmatprep.subr.bf16.mxu0 %v1866
    %2849 = vmatpush1.bf16.msra.mxu0 %v1865
    %2850 = vmatprep.subr.bf16.mxu0 %v1858
    %2851 = vmatpush1.bf16.msra.mxu0 %v1857
    %2852 = vmatprep.subr.bf16.mxu0 0
    %2853 = vmatpush2.bf16.msra.mxu0 0
    %2854 = vmatprep.subr.bf16.mxu0 0
    %2855 = vmatpush2.bf16.msra.mxu0 0
    %2856 = vmatprep.subr.bf16.mxu0 0
    %2857 = vmatpush2.bf16.msra.mxu0 0
    %2858 = vmatprep.subr.bf16.mxu0 0
    %2859 = vmatpush2.bf16.msra.mxu0 0
    %2860 = vmatprep.subr.bf16.mxu0 0
    %2861 = vmatpush2.bf16.msra.mxu0 0
    %2862 = vmatprep.subr.bf16.mxu0 0
    %2863 = vmatpush2.bf16.msra.mxu0 0
    %2864 = vmatprep.subr.bf16.mxu0 0
    %2865 = vmatpush2.bf16.msra.mxu0 0
    %2866 = vmatprep.subr.bf16.mxu0 0
    %2867 = vmatpush2.bf16.msra.mxu0 0
    %2868 = vmatprep.mubr.bf16.mxu0 0
    %2869 = vmatmul.mubr.bf16.gmra.mxu0 %v2712
    %v2870 = vpop.f32.mrf.mxu0
    %v2871 = vadd.f32 0.0, %v2870
    %v2872 = vpop.f32.mrf.mxu0
    %v2873 = vadd.f32 0.0, %v2872
    %v2874 = vpop.f32.mrf.mxu0
    %v2875 = vpop.f32.mrf.mxu0
    %2876 = vdwg.mxu0
    %v2877 = vsel %vm973, %v2748, %v2830
    %v2878 = vsel %vm973, %v2750, %v2832
    %v2879 = vsel %vm973, %v2789, %v2871
    %v2880 = vsel %vm973, %v2791, %v2873
    %v2881 = vadd.f32 %v873, %v2877
    %v2882 = vadd.f32 %v874, %v2878
    %v2883 = vadd.f32 %v875, %v2879
    %v2884 = vadd.f32 %v876, %v2880
    %v2885 = vxor.u32 %v2881, 2147483648
    %v2886 = vxor.u32 %v2882, 2147483648
    %v2887 = vxor.u32 %v2883, 2147483648
    %v2888 = vmul.f32 %v2885, 1.442695
    %v2889 = vpow.pop %v2888
    %v2890 = vmul.f32 %v2886, 1.442695
    %v2891 = vpow.pop %v2890
    %v2892 = vmul.f32 %v2887, 1.442695
    %v2893 = vpow.pop %v2892
    %v2894 = vadd.f32 %v2889, 1.0
    %v2895 = vadd.f32 %v2891, 1.0
    %v2896 = vadd.f32 %v2893, 1.0
    %v2897 = vrcp.pop %v2894
    %v2898 = vmul.f32 1.0, %v2897
    %v2899 = vrcp.pop %v2895
    %v2900 = vmul.f32 1.0, %v2899
    %v2901 = vrcp.pop %v2896
    %v2902 = vmul.f32 1.0, %v2901
    %v2903 = vtanh.pop %v2884
    %v2904 = vmul.f32 %v2900, %v2539
    %v2905 = vmul.f32 %v2898, %v2903
    %v2906 = vadd.f32 %v2904, %v2905
    %v2907 = vtanh.pop %v2906
    %v2908 = vmul.f32 %v2902, %v2907
    %v2909 = vadd.f32 %v2908, %v963
    %v2910 = vpack.c.bf16 %v2909, %v2909
    %2911 = vmatprep.subr.bf16.mxu0 %v1355
    %2912 = vmatpush1.bf16.msra.mxu0 %v1354
    %2913 = vmatprep.subr.bf16.mxu0 %v1347
    %2914 = vmatpush1.bf16.msra.mxu0 %v1346
    %2915 = vmatprep.subr.bf16.mxu0 %v1339
    %2916 = vmatpush1.bf16.msra.mxu0 %v1338
    %2917 = vmatprep.subr.bf16.mxu0 %v1331
    %2918 = vmatpush1.bf16.msra.mxu0 %v1330
    %2919 = vmatprep.subr.bf16.mxu0 %v1323
    %2920 = vmatpush1.bf16.msra.mxu0 %v1322
    %2921 = vmatprep.subr.bf16.mxu0 %v1315
    %2922 = vmatpush1.bf16.msra.mxu0 %v1314
    %2923 = vmatprep.subr.bf16.mxu0 %v1307
    %2924 = vmatpush1.bf16.msra.mxu0 %v1306
    %2925 = vmatprep.subr.bf16.mxu0 %v1299
    %2926 = vmatpush1.bf16.msra.mxu0 %v1298
    %2927 = vmatprep.subr.bf16.mxu0 0
    %2928 = vmatpush2.bf16.msra.mxu0 0
    %2929 = vmatprep.subr.bf16.mxu0 0
    %2930 = vmatpush2.bf16.msra.mxu0 0
    %2931 = vmatprep.subr.bf16.mxu0 0
    %2932 = vmatpush2.bf16.msra.mxu0 0
    %2933 = vmatprep.subr.bf16.mxu0 0
    %2934 = vmatpush2.bf16.msra.mxu0 0
    %2935 = vmatprep.subr.bf16.mxu0 0
    %2936 = vmatpush2.bf16.msra.mxu0 0
    %2937 = vmatprep.subr.bf16.mxu0 0
    %2938 = vmatpush2.bf16.msra.mxu0 0
    %2939 = vmatprep.subr.bf16.mxu0 0
    %2940 = vmatpush2.bf16.msra.mxu0 0
    %2941 = vmatprep.subr.bf16.mxu0 0
    %2942 = vmatpush2.bf16.msra.mxu0 0
    %2943 = vmatprep.mubr.bf16.mxu0 0
    %2944 = vmatmul.mubr.bf16.gmra.mxu0 %v2910
    %v2945 = vpop.f32.mrf.mxu0
    %v2946 = vadd.f32 %v1069, %v2945
    %v2947 = vpop.f32.mrf.mxu0
    %v2948 = vadd.f32 %v1073, %v2947
    %v2949 = vpop.f32.mrf.mxu0
    %v2950 = vpop.f32.mrf.mxu0
    %2951 = vdwg.mxu0
    %2952 = vmatprep.subr.bf16.mxu0 %v1357
    %2953 = vmatpush1.bf16.msra.mxu0 %v1356
    %2954 = vmatprep.subr.bf16.mxu0 %v1349
    %2955 = vmatpush1.bf16.msra.mxu0 %v1348
    %2956 = vmatprep.subr.bf16.mxu0 %v1341
    %2957 = vmatpush1.bf16.msra.mxu0 %v1340
    %2958 = vmatprep.subr.bf16.mxu0 %v1333
    %2959 = vmatpush1.bf16.msra.mxu0 %v1332
    %2960 = vmatprep.subr.bf16.mxu0 %v1325
    %2961 = vmatpush1.bf16.msra.mxu0 %v1324
    %2962 = vmatprep.subr.bf16.mxu0 %v1317
    %2963 = vmatpush1.bf16.msra.mxu0 %v1316
    %2964 = vmatprep.subr.bf16.mxu0 %v1309
    %2965 = vmatpush1.bf16.msra.mxu0 %v1308
    %2966 = vmatprep.subr.bf16.mxu0 %v1301
    %2967 = vmatpush1.bf16.msra.mxu0 %v1300
    %2968 = vmatprep.subr.bf16.mxu0 0
    %2969 = vmatpush2.bf16.msra.mxu0 0
    %2970 = vmatprep.subr.bf16.mxu0 0
    %2971 = vmatpush2.bf16.msra.mxu0 0
    %2972 = vmatprep.subr.bf16.mxu0 0
    %2973 = vmatpush2.bf16.msra.mxu0 0
    %2974 = vmatprep.subr.bf16.mxu0 0
    %2975 = vmatpush2.bf16.msra.mxu0 0
    %2976 = vmatprep.subr.bf16.mxu0 0
    %2977 = vmatpush2.bf16.msra.mxu0 0
    %2978 = vmatprep.subr.bf16.mxu0 0
    %2979 = vmatpush2.bf16.msra.mxu0 0
    %2980 = vmatprep.subr.bf16.mxu0 0
    %2981 = vmatpush2.bf16.msra.mxu0 0
    %2982 = vmatprep.subr.bf16.mxu0 0
    %2983 = vmatpush2.bf16.msra.mxu0 0
    %2984 = vmatprep.mubr.bf16.mxu0 0
    %2985 = vmatmul.mubr.bf16.gmra.mxu0 %v2910
    %v2986 = vpop.f32.mrf.mxu0
    %v2987 = vadd.f32 %v1077, %v2986
    %v2988 = vpop.f32.mrf.mxu0
    %v2989 = vadd.f32 %v1081, %v2988
    %v2990 = vpop.f32.mrf.mxu0
    %v2991 = vpop.f32.mrf.mxu0
    %2992 = vdwg.mxu0
    %2993 = vmatprep.subr.bf16.mxu0 %v1359
    %2994 = vmatpush1.bf16.msra.mxu0 %v1358
    %2995 = vmatprep.subr.bf16.mxu0 %v1351
    %2996 = vmatpush1.bf16.msra.mxu0 %v1350
    %2997 = vmatprep.subr.bf16.mxu0 %v1343
    %2998 = vmatpush1.bf16.msra.mxu0 %v1342
    %2999 = vmatprep.subr.bf16.mxu0 %v1335
    %3000 = vmatpush1.bf16.msra.mxu0 %v1334
    %3001 = vmatprep.subr.bf16.mxu0 %v1327
    %3002 = vmatpush1.bf16.msra.mxu0 %v1326
    %3003 = vmatprep.subr.bf16.mxu0 %v1319
    %3004 = vmatpush1.bf16.msra.mxu0 %v1318
    %3005 = vmatprep.subr.bf16.mxu0 %v1311
    %3006 = vmatpush1.bf16.msra.mxu0 %v1310
    %3007 = vmatprep.subr.bf16.mxu0 %v1303
    %3008 = vmatpush1.bf16.msra.mxu0 %v1302
    %3009 = vmatprep.subr.bf16.mxu0 0
    %3010 = vmatpush2.bf16.msra.mxu0 0
    %3011 = vmatprep.subr.bf16.mxu0 0
    %3012 = vmatpush2.bf16.msra.mxu0 0
    %3013 = vmatprep.subr.bf16.mxu0 0
    %3014 = vmatpush2.bf16.msra.mxu0 0
    %3015 = vmatprep.subr.bf16.mxu0 0
    %3016 = vmatpush2.bf16.msra.mxu0 0
    %3017 = vmatprep.subr.bf16.mxu0 0
    %3018 = vmatpush2.bf16.msra.mxu0 0
    %3019 = vmatprep.subr.bf16.mxu0 0
    %3020 = vmatpush2.bf16.msra.mxu0 0
    %3021 = vmatprep.subr.bf16.mxu0 0
    %3022 = vmatpush2.bf16.msra.mxu0 0
    %3023 = vmatprep.subr.bf16.mxu0 0
    %3024 = vmatpush2.bf16.msra.mxu0 0
    %3025 = vmatprep.mubr.bf16.mxu0 0
    %3026 = vmatmul.mubr.bf16.gmra.mxu0 %v2910
    %v3027 = vpop.f32.mrf.mxu0
    %v3028 = vadd.f32 %v1085, %v3027
    %v3029 = vpop.f32.mrf.mxu0
    %v3030 = vadd.f32 %v1089, %v3029
    %v3031 = vpop.f32.mrf.mxu0
    %v3032 = vpop.f32.mrf.mxu0
    %3033 = vdwg.mxu0
    %3034 = vmatprep.subr.bf16.mxu0 %v1361
    %3035 = vmatpush1.bf16.msra.mxu0 %v1360
    %3036 = vmatprep.subr.bf16.mxu0 %v1353
    %3037 = vmatpush1.bf16.msra.mxu0 %v1352
    %3038 = vmatprep.subr.bf16.mxu0 %v1345
    %3039 = vmatpush1.bf16.msra.mxu0 %v1344
    %3040 = vmatprep.subr.bf16.mxu0 %v1337
    %3041 = vmatpush1.bf16.msra.mxu0 %v1336
    %3042 = vmatprep.subr.bf16.mxu0 %v1329
    %3043 = vmatpush1.bf16.msra.mxu0 %v1328
    %3044 = vmatprep.subr.bf16.mxu0 %v1321
    %3045 = vmatpush1.bf16.msra.mxu0 %v1320
    %3046 = vmatprep.subr.bf16.mxu0 %v1313
    %3047 = vmatpush1.bf16.msra.mxu0 %v1312
    %3048 = vmatprep.subr.bf16.mxu0 %v1305
    %3049 = vmatpush1.bf16.msra.mxu0 %v1304
    %3050 = vmatprep.subr.bf16.mxu0 0
    %3051 = vmatpush2.bf16.msra.mxu0 0
    %3052 = vmatprep.subr.bf16.mxu0 0
    %3053 = vmatpush2.bf16.msra.mxu0 0
    %3054 = vmatprep.subr.bf16.mxu0 0
    %3055 = vmatpush2.bf16.msra.mxu0 0
    %3056 = vmatprep.subr.bf16.mxu0 0
    %3057 = vmatpush2.bf16.msra.mxu0 0
    %3058 = vmatprep.subr.bf16.mxu0 0
    %3059 = vmatpush2.bf16.msra.mxu0 0
    %3060 = vmatprep.subr.bf16.mxu0 0
    %3061 = vmatpush2.bf16.msra.mxu0 0
    %3062 = vmatprep.subr.bf16.mxu0 0
    %3063 = vmatpush2.bf16.msra.mxu0 0
    %3064 = vmatprep.subr.bf16.mxu0 0
    %3065 = vmatpush2.bf16.msra.mxu0 0
    %3066 = vmatprep.mubr.bf16.mxu0 0
    %3067 = vmatmul.mubr.bf16.gmra.mxu0 %v2910
    %v3068 = vpop.f32.mrf.mxu0
    %v3069 = vadd.f32 %v1093, %v3068
    %v3070 = vpop.f32.mrf.mxu0
    %v3071 = vadd.f32 %v1097, %v3070
    %v3072 = vpop.f32.mrf.mxu0
    %v3073 = vpop.f32.mrf.mxu0
    %3074 = vdwg.mxu0
    %v3075 = vsel %vm973, %v2946, %v3028
    %v3076 = vsel %vm973, %v2948, %v3030
    %v3077 = vsel %vm973, %v2987, %v3069
    %v3078 = vsel %vm973, %v2989, %v3071
    %v3079 = vpack.c.bf16 %v2908, %v2908
    %3080 = vmatprep.subr.bf16.mxu0 %v1908
    %3081 = vmatpush1.bf16.msra.mxu0 %v1907
    %3082 = vmatprep.subr.bf16.mxu0 %v1900
    %3083 = vmatpush1.bf16.msra.mxu0 %v1899
    %3084 = vmatprep.subr.bf16.mxu0 %v1892
    %3085 = vmatpush1.bf16.msra.mxu0 %v1891
    %3086 = vmatprep.subr.bf16.mxu0 %v1884
    %3087 = vmatpush1.bf16.msra.mxu0 %v1883
    %3088 = vmatprep.subr.bf16.mxu0 %v1876
    %3089 = vmatpush1.bf16.msra.mxu0 %v1875
    %3090 = vmatprep.subr.bf16.mxu0 %v1868
    %3091 = vmatpush1.bf16.msra.mxu0 %v1867
    %3092 = vmatprep.subr.bf16.mxu0 %v1860
    %3093 = vmatpush1.bf16.msra.mxu0 %v1859
    %3094 = vmatprep.subr.bf16.mxu0 %v1852
    %3095 = vmatpush1.bf16.msra.mxu0 %v1851
    %3096 = vmatprep.subr.bf16.mxu0 0
    %3097 = vmatpush2.bf16.msra.mxu0 0
    %3098 = vmatprep.subr.bf16.mxu0 0
    %3099 = vmatpush2.bf16.msra.mxu0 0
    %3100 = vmatprep.subr.bf16.mxu0 0
    %3101 = vmatpush2.bf16.msra.mxu0 0
    %3102 = vmatprep.subr.bf16.mxu0 0
    %3103 = vmatpush2.bf16.msra.mxu0 0
    %3104 = vmatprep.subr.bf16.mxu0 0
    %3105 = vmatpush2.bf16.msra.mxu0 0
    %3106 = vmatprep.subr.bf16.mxu0 0
    %3107 = vmatpush2.bf16.msra.mxu0 0
    %3108 = vmatprep.subr.bf16.mxu0 0
    %3109 = vmatpush2.bf16.msra.mxu0 0
    %3110 = vmatprep.subr.bf16.mxu0 0
    %3111 = vmatpush2.bf16.msra.mxu0 0
    %3112 = vmatprep.mubr.bf16.mxu0 0
    %3113 = vmatmul.mubr.bf16.gmra.mxu0 %v3079
    %v3114 = vpop.f32.mrf.mxu0
    %v3115 = vadd.f32 0.0, %v3114
    %v3116 = vpop.f32.mrf.mxu0
    %v3117 = vadd.f32 0.0, %v3116
    %v3118 = vpop.f32.mrf.mxu0
    %v3119 = vpop.f32.mrf.mxu0
    %3120 = vdwg.mxu0
    %3121 = vmatprep.subr.bf16.mxu0 %v1910
    %3122 = vmatpush1.bf16.msra.mxu0 %v1909
    %3123 = vmatprep.subr.bf16.mxu0 %v1902
    %3124 = vmatpush1.bf16.msra.mxu0 %v1901
    %3125 = vmatprep.subr.bf16.mxu0 %v1894
    %3126 = vmatpush1.bf16.msra.mxu0 %v1893
    %3127 = vmatprep.subr.bf16.mxu0 %v1886
    %3128 = vmatpush1.bf16.msra.mxu0 %v1885
    %3129 = vmatprep.subr.bf16.mxu0 %v1878
    %3130 = vmatpush1.bf16.msra.mxu0 %v1877
    %3131 = vmatprep.subr.bf16.mxu0 %v1870
    %3132 = vmatpush1.bf16.msra.mxu0 %v1869
    %3133 = vmatprep.subr.bf16.mxu0 %v1862
    %3134 = vmatpush1.bf16.msra.mxu0 %v1861
    %3135 = vmatprep.subr.bf16.mxu0 %v1854
    %3136 = vmatpush1.bf16.msra.mxu0 %v1853
    %3137 = vmatprep.subr.bf16.mxu0 0
    %3138 = vmatpush2.bf16.msra.mxu0 0
    %3139 = vmatprep.subr.bf16.mxu0 0
    %3140 = vmatpush2.bf16.msra.mxu0 0
    %3141 = vmatprep.subr.bf16.mxu0 0
    %3142 = vmatpush2.bf16.msra.mxu0 0
    %3143 = vmatprep.subr.bf16.mxu0 0
    %3144 = vmatpush2.bf16.msra.mxu0 0
    %3145 = vmatprep.subr.bf16.mxu0 0
    %3146 = vmatpush2.bf16.msra.mxu0 0
    %3147 = vmatprep.subr.bf16.mxu0 0
    %3148 = vmatpush2.bf16.msra.mxu0 0
    %3149 = vmatprep.subr.bf16.mxu0 0
    %3150 = vmatpush2.bf16.msra.mxu0 0
    %3151 = vmatprep.subr.bf16.mxu0 0
    %3152 = vmatpush2.bf16.msra.mxu0 0
    %3153 = vmatprep.mubr.bf16.mxu0 0
    %3154 = vmatmul.mubr.bf16.gmra.mxu0 %v3079
    %v3155 = vpop.f32.mrf.mxu0
    %v3156 = vadd.f32 0.0, %v3155
    %v3157 = vpop.f32.mrf.mxu0
    %v3158 = vadd.f32 0.0, %v3157
    %v3159 = vpop.f32.mrf.mxu0
    %v3160 = vpop.f32.mrf.mxu0
    %3161 = vdwg.mxu0
    %3162 = vmatprep.subr.bf16.mxu0 %v1912
    %3163 = vmatpush1.bf16.msra.mxu0 %v1911
    %3164 = vmatprep.subr.bf16.mxu0 %v1904
    %3165 = vmatpush1.bf16.msra.mxu0 %v1903
    %3166 = vmatprep.subr.bf16.mxu0 %v1896
    %3167 = vmatpush1.bf16.msra.mxu0 %v1895
    %3168 = vmatprep.subr.bf16.mxu0 %v1888
    %3169 = vmatpush1.bf16.msra.mxu0 %v1887
    %3170 = vmatprep.subr.bf16.mxu0 %v1880
    %3171 = vmatpush1.bf16.msra.mxu0 %v1879
    %3172 = vmatprep.subr.bf16.mxu0 %v1872
    %3173 = vmatpush1.bf16.msra.mxu0 %v1871
    %3174 = vmatprep.subr.bf16.mxu0 %v1864
    %3175 = vmatpush1.bf16.msra.mxu0 %v1863
    %3176 = vmatprep.subr.bf16.mxu0 %v1856
    %3177 = vmatpush1.bf16.msra.mxu0 %v1855
    %3178 = vmatprep.subr.bf16.mxu0 0
    %3179 = vmatpush2.bf16.msra.mxu0 0
    %3180 = vmatprep.subr.bf16.mxu0 0
    %3181 = vmatpush2.bf16.msra.mxu0 0
    %3182 = vmatprep.subr.bf16.mxu0 0
    %3183 = vmatpush2.bf16.msra.mxu0 0
    %3184 = vmatprep.subr.bf16.mxu0 0
    %3185 = vmatpush2.bf16.msra.mxu0 0
    %3186 = vmatprep.subr.bf16.mxu0 0
    %3187 = vmatpush2.bf16.msra.mxu0 0
    %3188 = vmatprep.subr.bf16.mxu0 0
    %3189 = vmatpush2.bf16.msra.mxu0 0
    %3190 = vmatprep.subr.bf16.mxu0 0
    %3191 = vmatpush2.bf16.msra.mxu0 0
    %3192 = vmatprep.subr.bf16.mxu0 0
    %3193 = vmatpush2.bf16.msra.mxu0 0
    %3194 = vmatprep.mubr.bf16.mxu0 0
    %3195 = vmatmul.mubr.bf16.gmra.mxu0 %v3079
    %v3196 = vpop.f32.mrf.mxu0
    %v3197 = vadd.f32 0.0, %v3196
    %v3198 = vpop.f32.mrf.mxu0
    %v3199 = vadd.f32 0.0, %v3198
    %v3200 = vpop.f32.mrf.mxu0
    %v3201 = vpop.f32.mrf.mxu0
    %3202 = vdwg.mxu0
    %3203 = vmatprep.subr.bf16.mxu0 %v1914
    %3204 = vmatpush1.bf16.msra.mxu0 %v1913
    %3205 = vmatprep.subr.bf16.mxu0 %v1906
    %3206 = vmatpush1.bf16.msra.mxu0 %v1905
    %3207 = vmatprep.subr.bf16.mxu0 %v1898
    %3208 = vmatpush1.bf16.msra.mxu0 %v1897
    %3209 = vmatprep.subr.bf16.mxu0 %v1890
    %3210 = vmatpush1.bf16.msra.mxu0 %v1889
    %3211 = vmatprep.subr.bf16.mxu0 %v1882
    %3212 = vmatpush1.bf16.msra.mxu0 %v1881
    %3213 = vmatprep.subr.bf16.mxu0 %v1874
    %3214 = vmatpush1.bf16.msra.mxu0 %v1873
    %3215 = vmatprep.subr.bf16.mxu0 %v1866
    %3216 = vmatpush1.bf16.msra.mxu0 %v1865
    %3217 = vmatprep.subr.bf16.mxu0 %v1858
    %3218 = vmatpush1.bf16.msra.mxu0 %v1857
    %3219 = vmatprep.subr.bf16.mxu0 0
    %3220 = vmatpush2.bf16.msra.mxu0 0
    %3221 = vmatprep.subr.bf16.mxu0 0
    %3222 = vmatpush2.bf16.msra.mxu0 0
    %3223 = vmatprep.subr.bf16.mxu0 0
    %3224 = vmatpush2.bf16.msra.mxu0 0
    %3225 = vmatprep.subr.bf16.mxu0 0
    %3226 = vmatpush2.bf16.msra.mxu0 0
    %3227 = vmatprep.subr.bf16.mxu0 0
    %3228 = vmatpush2.bf16.msra.mxu0 0
    %3229 = vmatprep.subr.bf16.mxu0 0
    %3230 = vmatpush2.bf16.msra.mxu0 0
    %3231 = vmatprep.subr.bf16.mxu0 0
    %3232 = vmatpush2.bf16.msra.mxu0 0
    %3233 = vmatprep.subr.bf16.mxu0 0
    %3234 = vmatpush2.bf16.msra.mxu0 0
    %3235 = vmatprep.mubr.bf16.mxu0 0
    %3236 = vmatmul.mubr.bf16.gmra.mxu0 %v3079
    %v3237 = vpop.f32.mrf.mxu0
    %v3238 = vadd.f32 0.0, %v3237
    %v3239 = vpop.f32.mrf.mxu0
    %v3240 = vadd.f32 0.0, %v3239
    %v3241 = vpop.f32.mrf.mxu0
    %v3242 = vpop.f32.mrf.mxu0
    %3243 = vdwg.mxu0
    %v3244 = vsel %vm973, %v3115, %v3197
    %v3245 = vsel %vm973, %v3117, %v3199
    %v3246 = vsel %vm973, %v3156, %v3238
    %v3247 = vsel %vm973, %v3158, %v3240
    %v3248 = vadd.f32 %v893, %v3244
    %v3249 = vadd.f32 %v894, %v3245
    %v3250 = vadd.f32 %v895, %v3246
    %v3251 = vadd.f32 %v896, %v3247
    %v3252 = vxor.u32 %v3248, 2147483648
    %v3253 = vxor.u32 %v3249, 2147483648
    %v3254 = vxor.u32 %v3250, 2147483648
    %v3255 = vmul.f32 %v3252, 1.442695
    %v3256 = vpow.pop %v3255
    %v3257 = vmul.f32 %v3253, 1.442695
    %v3258 = vpow.pop %v3257
    %v3259 = vmul.f32 %v3254, 1.442695
    %v3260 = vpow.pop %v3259
    %v3261 = vadd.f32 %v3256, 1.0
    %v3262 = vadd.f32 %v3258, 1.0
    %v3263 = vadd.f32 %v3260, 1.0
    %v3264 = vrcp.pop %v3261
    %v3265 = vmul.f32 1.0, %v3264
    %v3266 = vrcp.pop %v3262
    %v3267 = vmul.f32 1.0, %v3266
    %v3268 = vrcp.pop %v3263
    %v3269 = vmul.f32 1.0, %v3268
    %v3270 = vtanh.pop %v3251
    %v3271 = vmul.f32 %v3267, %v2906
    %v3272 = vmul.f32 %v3265, %v3270
    %v3273 = vadd.f32 %v3271, %v3272
    %v3274 = vtanh.pop %v3273
    %v3275 = vmul.f32 %v3269, %v3274
    %v3276 = vadd.f32 %v3275, %v965
    %v3277 = vpack.c.bf16 %v3276, %v3276
    %3278 = vmatprep.subr.bf16.mxu0 %v1355
    %3279 = vmatpush1.bf16.msra.mxu0 %v1354
    %3280 = vmatprep.subr.bf16.mxu0 %v1347
    %3281 = vmatpush1.bf16.msra.mxu0 %v1346
    %3282 = vmatprep.subr.bf16.mxu0 %v1339
    %3283 = vmatpush1.bf16.msra.mxu0 %v1338
    %3284 = vmatprep.subr.bf16.mxu0 %v1331
    %3285 = vmatpush1.bf16.msra.mxu0 %v1330
    %3286 = vmatprep.subr.bf16.mxu0 %v1323
    %3287 = vmatpush1.bf16.msra.mxu0 %v1322
    %3288 = vmatprep.subr.bf16.mxu0 %v1315
    %3289 = vmatpush1.bf16.msra.mxu0 %v1314
    %3290 = vmatprep.subr.bf16.mxu0 %v1307
    %3291 = vmatpush1.bf16.msra.mxu0 %v1306
    %3292 = vmatprep.subr.bf16.mxu0 %v1299
    %3293 = vmatpush1.bf16.msra.mxu0 %v1298
    %3294 = vmatprep.subr.bf16.mxu0 0
    %3295 = vmatpush2.bf16.msra.mxu0 0
    %3296 = vmatprep.subr.bf16.mxu0 0
    %3297 = vmatpush2.bf16.msra.mxu0 0
    %3298 = vmatprep.subr.bf16.mxu0 0
    %3299 = vmatpush2.bf16.msra.mxu0 0
    %3300 = vmatprep.subr.bf16.mxu0 0
    %3301 = vmatpush2.bf16.msra.mxu0 0
    %3302 = vmatprep.subr.bf16.mxu0 0
    %3303 = vmatpush2.bf16.msra.mxu0 0
    %3304 = vmatprep.subr.bf16.mxu0 0
    %3305 = vmatpush2.bf16.msra.mxu0 0
    %3306 = vmatprep.subr.bf16.mxu0 0
    %3307 = vmatpush2.bf16.msra.mxu0 0
    %3308 = vmatprep.subr.bf16.mxu0 0
    %3309 = vmatpush2.bf16.msra.mxu0 0
    %3310 = vmatprep.mubr.bf16.mxu0 0
    %3311 = vmatmul.mubr.bf16.gmra.mxu0 %v3277
    %v3312 = vpop.f32.mrf.mxu0
    %v3313 = vadd.f32 %v1069, %v3312
    %v3314 = vpop.f32.mrf.mxu0
    %v3315 = vadd.f32 %v1073, %v3314
    %v3316 = vpop.f32.mrf.mxu0
    %v3317 = vpop.f32.mrf.mxu0
    %3318 = vdwg.mxu0
    %3319 = vmatprep.subr.bf16.mxu0 %v1357
    %3320 = vmatpush1.bf16.msra.mxu0 %v1356
    %3321 = vmatprep.subr.bf16.mxu0 %v1349
    %3322 = vmatpush1.bf16.msra.mxu0 %v1348
    %3323 = vmatprep.subr.bf16.mxu0 %v1341
    %3324 = vmatpush1.bf16.msra.mxu0 %v1340
    %3325 = vmatprep.subr.bf16.mxu0 %v1333
    %3326 = vmatpush1.bf16.msra.mxu0 %v1332
    %3327 = vmatprep.subr.bf16.mxu0 %v1325
    %3328 = vmatpush1.bf16.msra.mxu0 %v1324
    %3329 = vmatprep.subr.bf16.mxu0 %v1317
    %3330 = vmatpush1.bf16.msra.mxu0 %v1316
    %3331 = vmatprep.subr.bf16.mxu0 %v1309
    %3332 = vmatpush1.bf16.msra.mxu0 %v1308
    %3333 = vmatprep.subr.bf16.mxu0 %v1301
    %3334 = vmatpush1.bf16.msra.mxu0 %v1300
    %3335 = vmatprep.subr.bf16.mxu0 0
    %3336 = vmatpush2.bf16.msra.mxu0 0
    %3337 = vmatprep.subr.bf16.mxu0 0
    %3338 = vmatpush2.bf16.msra.mxu0 0
    %3339 = vmatprep.subr.bf16.mxu0 0
    %3340 = vmatpush2.bf16.msra.mxu0 0
    %3341 = vmatprep.subr.bf16.mxu0 0
    %3342 = vmatpush2.bf16.msra.mxu0 0
    %3343 = vmatprep.subr.bf16.mxu0 0
    %3344 = vmatpush2.bf16.msra.mxu0 0
    %3345 = vmatprep.subr.bf16.mxu0 0
    %3346 = vmatpush2.bf16.msra.mxu0 0
    %3347 = vmatprep.subr.bf16.mxu0 0
    %3348 = vmatpush2.bf16.msra.mxu0 0
    %3349 = vmatprep.subr.bf16.mxu0 0
    %3350 = vmatpush2.bf16.msra.mxu0 0
    %3351 = vmatprep.mubr.bf16.mxu0 0
    %3352 = vmatmul.mubr.bf16.gmra.mxu0 %v3277
    %v3353 = vpop.f32.mrf.mxu0
    %v3354 = vadd.f32 %v1077, %v3353
    %v3355 = vpop.f32.mrf.mxu0
    %v3356 = vadd.f32 %v1081, %v3355
    %v3357 = vpop.f32.mrf.mxu0
    %v3358 = vpop.f32.mrf.mxu0
    %3359 = vdwg.mxu0
    %3360 = vmatprep.subr.bf16.mxu0 %v1359
    %3361 = vmatpush1.bf16.msra.mxu0 %v1358
    %3362 = vmatprep.subr.bf16.mxu0 %v1351
    %3363 = vmatpush1.bf16.msra.mxu0 %v1350
    %3364 = vmatprep.subr.bf16.mxu0 %v1343
    %3365 = vmatpush1.bf16.msra.mxu0 %v1342
    %3366 = vmatprep.subr.bf16.mxu0 %v1335
    %3367 = vmatpush1.bf16.msra.mxu0 %v1334
    %3368 = vmatprep.subr.bf16.mxu0 %v1327
    %3369 = vmatpush1.bf16.msra.mxu0 %v1326
    %3370 = vmatprep.subr.bf16.mxu0 %v1319
    %3371 = vmatpush1.bf16.msra.mxu0 %v1318
    %3372 = vmatprep.subr.bf16.mxu0 %v1311
    %3373 = vmatpush1.bf16.msra.mxu0 %v1310
    %3374 = vmatprep.subr.bf16.mxu0 %v1303
    %3375 = vmatpush1.bf16.msra.mxu0 %v1302
    %3376 = vmatprep.subr.bf16.mxu0 0
    %3377 = vmatpush2.bf16.msra.mxu0 0
    %3378 = vmatprep.subr.bf16.mxu0 0
    %3379 = vmatpush2.bf16.msra.mxu0 0
    %3380 = vmatprep.subr.bf16.mxu0 0
    %3381 = vmatpush2.bf16.msra.mxu0 0
    %3382 = vmatprep.subr.bf16.mxu0 0
    %3383 = vmatpush2.bf16.msra.mxu0 0
    %3384 = vmatprep.subr.bf16.mxu0 0
    %3385 = vmatpush2.bf16.msra.mxu0 0
    %3386 = vmatprep.subr.bf16.mxu0 0
    %3387 = vmatpush2.bf16.msra.mxu0 0
    %3388 = vmatprep.subr.bf16.mxu0 0
    %3389 = vmatpush2.bf16.msra.mxu0 0
    %3390 = vmatprep.subr.bf16.mxu0 0
    %3391 = vmatpush2.bf16.msra.mxu0 0
    %3392 = vmatprep.mubr.bf16.mxu0 0
    %3393 = vmatmul.mubr.bf16.gmra.mxu0 %v3277
    %v3394 = vpop.f32.mrf.mxu0
    %v3395 = vadd.f32 %v1085, %v3394
    %v3396 = vpop.f32.mrf.mxu0
    %v3397 = vadd.f32 %v1089, %v3396
    %v3398 = vpop.f32.mrf.mxu0
    %v3399 = vpop.f32.mrf.mxu0
    %3400 = vdwg.mxu0
    %3401 = vmatprep.subr.bf16.mxu0 %v1361
    %3402 = vmatpush1.bf16.msra.mxu0 %v1360
    %3403 = vmatprep.subr.bf16.mxu0 %v1353
    %3404 = vmatpush1.bf16.msra.mxu0 %v1352
    %3405 = vmatprep.subr.bf16.mxu0 %v1345
    %3406 = vmatpush1.bf16.msra.mxu0 %v1344
    %3407 = vmatprep.subr.bf16.mxu0 %v1337
    %3408 = vmatpush1.bf16.msra.mxu0 %v1336
    %3409 = vmatprep.subr.bf16.mxu0 %v1329
    %3410 = vmatpush1.bf16.msra.mxu0 %v1328
    %3411 = vmatprep.subr.bf16.mxu0 %v1321
    %3412 = vmatpush1.bf16.msra.mxu0 %v1320
    %3413 = vmatprep.subr.bf16.mxu0 %v1313
    %3414 = vmatpush1.bf16.msra.mxu0 %v1312
    %3415 = vmatprep.subr.bf16.mxu0 %v1305
    %3416 = vmatpush1.bf16.msra.mxu0 %v1304
    %3417 = vmatprep.subr.bf16.mxu0 0
    %3418 = vmatpush2.bf16.msra.mxu0 0
    %3419 = vmatprep.subr.bf16.mxu0 0
    %3420 = vmatpush2.bf16.msra.mxu0 0
    %3421 = vmatprep.subr.bf16.mxu0 0
    %3422 = vmatpush2.bf16.msra.mxu0 0
    %3423 = vmatprep.subr.bf16.mxu0 0
    %3424 = vmatpush2.bf16.msra.mxu0 0
    %3425 = vmatprep.subr.bf16.mxu0 0
    %3426 = vmatpush2.bf16.msra.mxu0 0
    %3427 = vmatprep.subr.bf16.mxu0 0
    %3428 = vmatpush2.bf16.msra.mxu0 0
    %3429 = vmatprep.subr.bf16.mxu0 0
    %3430 = vmatpush2.bf16.msra.mxu0 0
    %3431 = vmatprep.subr.bf16.mxu0 0
    %3432 = vmatpush2.bf16.msra.mxu0 0
    %3433 = vmatprep.mubr.bf16.mxu0 0
    %3434 = vmatmul.mubr.bf16.gmra.mxu0 %v3277
    %v3435 = vpop.f32.mrf.mxu0
    %v3436 = vadd.f32 %v1093, %v3435
    %v3437 = vpop.f32.mrf.mxu0
    %v3438 = vadd.f32 %v1097, %v3437
    %v3439 = vpop.f32.mrf.mxu0
    %v3440 = vpop.f32.mrf.mxu0
    %3441 = vdwg.mxu0
    %v3442 = vsel %vm973, %v3313, %v3395
    %v3443 = vsel %vm973, %v3315, %v3397
    %v3444 = vsel %vm973, %v3354, %v3436
    %v3445 = vsel %vm973, %v3356, %v3438
    %v3446 = vpack.c.bf16 %v3275, %v3275
    %3447 = vmatprep.subr.bf16.mxu0 %v1908
    %3448 = vmatpush1.bf16.msra.mxu0 %v1907
    %3449 = vmatprep.subr.bf16.mxu0 %v1900
    %3450 = vmatpush1.bf16.msra.mxu0 %v1899
    %3451 = vmatprep.subr.bf16.mxu0 %v1892
    %3452 = vmatpush1.bf16.msra.mxu0 %v1891
    %3453 = vmatprep.subr.bf16.mxu0 %v1884
    %3454 = vmatpush1.bf16.msra.mxu0 %v1883
    %3455 = vmatprep.subr.bf16.mxu0 %v1876
    %3456 = vmatpush1.bf16.msra.mxu0 %v1875
    %3457 = vmatprep.subr.bf16.mxu0 %v1868
    %3458 = vmatpush1.bf16.msra.mxu0 %v1867
    %3459 = vmatprep.subr.bf16.mxu0 %v1860
    %3460 = vmatpush1.bf16.msra.mxu0 %v1859
    %3461 = vmatprep.subr.bf16.mxu0 %v1852
    %3462 = vmatpush1.bf16.msra.mxu0 %v1851
    %3463 = vmatprep.subr.bf16.mxu0 0
    %3464 = vmatpush2.bf16.msra.mxu0 0
    %3465 = vmatprep.subr.bf16.mxu0 0
    %3466 = vmatpush2.bf16.msra.mxu0 0
    %3467 = vmatprep.subr.bf16.mxu0 0
    %3468 = vmatpush2.bf16.msra.mxu0 0
    %3469 = vmatprep.subr.bf16.mxu0 0
    %3470 = vmatpush2.bf16.msra.mxu0 0
    %3471 = vmatprep.subr.bf16.mxu0 0
    %3472 = vmatpush2.bf16.msra.mxu0 0
    %3473 = vmatprep.subr.bf16.mxu0 0
    %3474 = vmatpush2.bf16.msra.mxu0 0
    %3475 = vmatprep.subr.bf16.mxu0 0
    %3476 = vmatpush2.bf16.msra.mxu0 0
    %3477 = vmatprep.subr.bf16.mxu0 0
    %3478 = vmatpush2.bf16.msra.mxu0 0
    %3479 = vmatprep.mubr.bf16.mxu0 0
    %3480 = vmatmul.mubr.bf16.gmra.mxu0 %v3446
    %v3481 = vpop.f32.mrf.mxu0
    %v3482 = vadd.f32 0.0, %v3481
    %v3483 = vpop.f32.mrf.mxu0
    %v3484 = vadd.f32 0.0, %v3483
    %v3485 = vpop.f32.mrf.mxu0
    %v3486 = vpop.f32.mrf.mxu0
    %3487 = vdwg.mxu0
    %3488 = vmatprep.subr.bf16.mxu0 %v1910
    %3489 = vmatpush1.bf16.msra.mxu0 %v1909
    %3490 = vmatprep.subr.bf16.mxu0 %v1902
    %3491 = vmatpush1.bf16.msra.mxu0 %v1901
    %3492 = vmatprep.subr.bf16.mxu0 %v1894
    %3493 = vmatpush1.bf16.msra.mxu0 %v1893
    %3494 = vmatprep.subr.bf16.mxu0 %v1886
    %3495 = vmatpush1.bf16.msra.mxu0 %v1885
    %3496 = vmatprep.subr.bf16.mxu0 %v1878
    %3497 = vmatpush1.bf16.msra.mxu0 %v1877
    %3498 = vmatprep.subr.bf16.mxu0 %v1870
    %3499 = vmatpush1.bf16.msra.mxu0 %v1869
    %3500 = vmatprep.subr.bf16.mxu0 %v1862
    %3501 = vmatpush1.bf16.msra.mxu0 %v1861
    %3502 = vmatprep.subr.bf16.mxu0 %v1854
    %3503 = vmatpush1.bf16.msra.mxu0 %v1853
    %3504 = vmatprep.subr.bf16.mxu0 0
    %3505 = vmatpush2.bf16.msra.mxu0 0
    %3506 = vmatprep.subr.bf16.mxu0 0
    %3507 = vmatpush2.bf16.msra.mxu0 0
    %3508 = vmatprep.subr.bf16.mxu0 0
    %3509 = vmatpush2.bf16.msra.mxu0 0
    %3510 = vmatprep.subr.bf16.mxu0 0
    %3511 = vmatpush2.bf16.msra.mxu0 0
    %3512 = vmatprep.subr.bf16.mxu0 0
    %3513 = vmatpush2.bf16.msra.mxu0 0
    %3514 = vmatprep.subr.bf16.mxu0 0
    %3515 = vmatpush2.bf16.msra.mxu0 0
    %3516 = vmatprep.subr.bf16.mxu0 0
    %3517 = vmatpush2.bf16.msra.mxu0 0
    %3518 = vmatprep.subr.bf16.mxu0 0
    %3519 = vmatpush2.bf16.msra.mxu0 0
    %3520 = vmatprep.mubr.bf16.mxu0 0
    %3521 = vmatmul.mubr.bf16.gmra.mxu0 %v3446
    %v3522 = vpop.f32.mrf.mxu0
    %v3523 = vadd.f32 0.0, %v3522
    %v3524 = vpop.f32.mrf.mxu0
    %v3525 = vadd.f32 0.0, %v3524
    %v3526 = vpop.f32.mrf.mxu0
    %v3527 = vpop.f32.mrf.mxu0
    %3528 = vdwg.mxu0
    %3529 = vmatprep.subr.bf16.mxu0 %v1912
    %3530 = vmatpush1.bf16.msra.mxu0 %v1911
    %3531 = vmatprep.subr.bf16.mxu0 %v1904
    %3532 = vmatpush1.bf16.msra.mxu0 %v1903
    %3533 = vmatprep.subr.bf16.mxu0 %v1896
    %3534 = vmatpush1.bf16.msra.mxu0 %v1895
    %3535 = vmatprep.subr.bf16.mxu0 %v1888
    %3536 = vmatpush1.bf16.msra.mxu0 %v1887
    %3537 = vmatprep.subr.bf16.mxu0 %v1880
    %3538 = vmatpush1.bf16.msra.mxu0 %v1879
    %3539 = vmatprep.subr.bf16.mxu0 %v1872
    %3540 = vmatpush1.bf16.msra.mxu0 %v1871
    %3541 = vmatprep.subr.bf16.mxu0 %v1864
    %3542 = vmatpush1.bf16.msra.mxu0 %v1863
    %3543 = vmatprep.subr.bf16.mxu0 %v1856
    %3544 = vmatpush1.bf16.msra.mxu0 %v1855
    %3545 = vmatprep.subr.bf16.mxu0 0
    %3546 = vmatpush2.bf16.msra.mxu0 0
    %3547 = vmatprep.subr.bf16.mxu0 0
    %3548 = vmatpush2.bf16.msra.mxu0 0
    %3549 = vmatprep.subr.bf16.mxu0 0
    %3550 = vmatpush2.bf16.msra.mxu0 0
    %3551 = vmatprep.subr.bf16.mxu0 0
    %3552 = vmatpush2.bf16.msra.mxu0 0
    %3553 = vmatprep.subr.bf16.mxu0 0
    %3554 = vmatpush2.bf16.msra.mxu0 0
    %3555 = vmatprep.subr.bf16.mxu0 0
    %3556 = vmatpush2.bf16.msra.mxu0 0
    %3557 = vmatprep.subr.bf16.mxu0 0
    %3558 = vmatpush2.bf16.msra.mxu0 0
    %3559 = vmatprep.subr.bf16.mxu0 0
    %3560 = vmatpush2.bf16.msra.mxu0 0
    %3561 = vmatprep.mubr.bf16.mxu0 0
    %3562 = vmatmul.mubr.bf16.gmra.mxu0 %v3446
    %v3563 = vpop.f32.mrf.mxu0
    %v3564 = vadd.f32 0.0, %v3563
    %v3565 = vpop.f32.mrf.mxu0
    %v3566 = vadd.f32 0.0, %v3565
    %v3567 = vpop.f32.mrf.mxu0
    %v3568 = vpop.f32.mrf.mxu0
    %3569 = vdwg.mxu0
    %3570 = vmatprep.subr.bf16.mxu0 %v1914
    %3571 = vmatpush1.bf16.msra.mxu0 %v1913
    %3572 = vmatprep.subr.bf16.mxu0 %v1906
    %3573 = vmatpush1.bf16.msra.mxu0 %v1905
    %3574 = vmatprep.subr.bf16.mxu0 %v1898
    %3575 = vmatpush1.bf16.msra.mxu0 %v1897
    %3576 = vmatprep.subr.bf16.mxu0 %v1890
    %3577 = vmatpush1.bf16.msra.mxu0 %v1889
    %3578 = vmatprep.subr.bf16.mxu0 %v1882
    %3579 = vmatpush1.bf16.msra.mxu0 %v1881
    %3580 = vmatprep.subr.bf16.mxu0 %v1874
    %3581 = vmatpush1.bf16.msra.mxu0 %v1873
    %3582 = vmatprep.subr.bf16.mxu0 %v1866
    %3583 = vmatpush1.bf16.msra.mxu0 %v1865
    %3584 = vmatprep.subr.bf16.mxu0 %v1858
    %3585 = vmatpush1.bf16.msra.mxu0 %v1857
    %3586 = vmatprep.subr.bf16.mxu0 0
    %3587 = vmatpush2.bf16.msra.mxu0 0
    %3588 = vmatprep.subr.bf16.mxu0 0
    %3589 = vmatpush2.bf16.msra.mxu0 0
    %3590 = vmatprep.subr.bf16.mxu0 0
    %3591 = vmatpush2.bf16.msra.mxu0 0
    %3592 = vmatprep.subr.bf16.mxu0 0
    %3593 = vmatpush2.bf16.msra.mxu0 0
    %3594 = vmatprep.subr.bf16.mxu0 0
    %3595 = vmatpush2.bf16.msra.mxu0 0
    %3596 = vmatprep.subr.bf16.mxu0 0
    %3597 = vmatpush2.bf16.msra.mxu0 0
    %3598 = vmatprep.subr.bf16.mxu0 0
    %3599 = vmatpush2.bf16.msra.mxu0 0
    %3600 = vmatprep.subr.bf16.mxu0 0
    %3601 = vmatpush2.bf16.msra.mxu0 0
    %3602 = vmatprep.mubr.bf16.mxu0 0
    %3603 = vmatmul.mubr.bf16.gmra.mxu0 %v3446
    %v3604 = vpop.f32.mrf.mxu0
    %v3605 = vadd.f32 0.0, %v3604
    %v3606 = vpop.f32.mrf.mxu0
    %v3607 = vadd.f32 0.0, %v3606
    %v3608 = vpop.f32.mrf.mxu0
    %v3609 = vpop.f32.mrf.mxu0
    %3610 = vdwg.mxu0
    %v3611 = vsel %vm973, %v3482, %v3564
    %v3612 = vsel %vm973, %v3484, %v3566
    %v3613 = vsel %vm973, %v3523, %v3605
    %v3614 = vsel %vm973, %v3525, %v3607
    %v3615 = vadd.f32 %v913, %v3611
    %v3616 = vadd.f32 %v914, %v3612
    %v3617 = vadd.f32 %v915, %v3613
    %v3618 = vadd.f32 %v916, %v3614
    %v3619 = vxor.u32 %v3615, 2147483648
    %v3620 = vxor.u32 %v3616, 2147483648
    %v3621 = vxor.u32 %v3617, 2147483648
    %v3622 = vmul.f32 %v3619, 1.442695
    %v3623 = vpow.pop %v3622
    %v3624 = vmul.f32 %v3620, 1.442695
    %v3625 = vpow.pop %v3624
    %v3626 = vmul.f32 %v3621, 1.442695
    %v3627 = vpow.pop %v3626
    %v3628 = vadd.f32 %v3623, 1.0
    %v3629 = vadd.f32 %v3625, 1.0
    %v3630 = vadd.f32 %v3627, 1.0
    %v3631 = vrcp.pop %v3628
    %v3632 = vmul.f32 1.0, %v3631
    %v3633 = vrcp.pop %v3629
    %v3634 = vmul.f32 1.0, %v3633
    %v3635 = vrcp.pop %v3630
    %v3636 = vmul.f32 1.0, %v3635
    %v3637 = vtanh.pop %v3618
    %v3638 = vmul.f32 %v3634, %v3273
    %v3639 = vmul.f32 %v3632, %v3637
    %v3640 = vadd.f32 %v3638, %v3639
    %v3641 = vtanh.pop %v3640
    %v3642 = vmul.f32 %v3636, %v3641
    %v3643 = vadd.f32 %v3642, %v966
    %v3644 = vpack.c.bf16 %v3643, %v3643
    %3645 = vmatprep.subr.bf16.mxu0 %v1355
    %3646 = vmatpush1.bf16.msra.mxu0 %v1354
    %3647 = vmatprep.subr.bf16.mxu0 %v1347
    %3648 = vmatpush1.bf16.msra.mxu0 %v1346
    %3649 = vmatprep.subr.bf16.mxu0 %v1339
    %3650 = vmatpush1.bf16.msra.mxu0 %v1338
    %3651 = vmatprep.subr.bf16.mxu0 %v1331
    %3652 = vmatpush1.bf16.msra.mxu0 %v1330
    %3653 = vmatprep.subr.bf16.mxu0 %v1323
    %3654 = vmatpush1.bf16.msra.mxu0 %v1322
    %3655 = vmatprep.subr.bf16.mxu0 %v1315
    %3656 = vmatpush1.bf16.msra.mxu0 %v1314
    %3657 = vmatprep.subr.bf16.mxu0 %v1307
    %3658 = vmatpush1.bf16.msra.mxu0 %v1306
    %3659 = vmatprep.subr.bf16.mxu0 %v1299
    %3660 = vmatpush1.bf16.msra.mxu0 %v1298
    %3661 = vmatprep.subr.bf16.mxu0 0
    %3662 = vmatpush2.bf16.msra.mxu0 0
    %3663 = vmatprep.subr.bf16.mxu0 0
    %3664 = vmatpush2.bf16.msra.mxu0 0
    %3665 = vmatprep.subr.bf16.mxu0 0
    %3666 = vmatpush2.bf16.msra.mxu0 0
    %3667 = vmatprep.subr.bf16.mxu0 0
    %3668 = vmatpush2.bf16.msra.mxu0 0
    %3669 = vmatprep.subr.bf16.mxu0 0
    %3670 = vmatpush2.bf16.msra.mxu0 0
    %3671 = vmatprep.subr.bf16.mxu0 0
    %3672 = vmatpush2.bf16.msra.mxu0 0
    %3673 = vmatprep.subr.bf16.mxu0 0
    %3674 = vmatpush2.bf16.msra.mxu0 0
    %3675 = vmatprep.subr.bf16.mxu0 0
    %3676 = vmatpush2.bf16.msra.mxu0 0
    %3677 = vmatprep.mubr.bf16.mxu0 0
    %3678 = vmatmul.mubr.bf16.gmra.mxu0 %v3644
    %v3679 = vpop.f32.mrf.mxu0
    %v3680 = vadd.f32 %v1069, %v3679
    %v3681 = vpop.f32.mrf.mxu0
    %v3682 = vadd.f32 %v1073, %v3681
    %v3683 = vpop.f32.mrf.mxu0
    %v3684 = vpop.f32.mrf.mxu0
    %3685 = vdwg.mxu0
    %3686 = vmatprep.subr.bf16.mxu0 %v1357
    %3687 = vmatpush1.bf16.msra.mxu0 %v1356
    %3688 = vmatprep.subr.bf16.mxu0 %v1349
    %3689 = vmatpush1.bf16.msra.mxu0 %v1348
    %3690 = vmatprep.subr.bf16.mxu0 %v1341
    %3691 = vmatpush1.bf16.msra.mxu0 %v1340
    %3692 = vmatprep.subr.bf16.mxu0 %v1333
    %3693 = vmatpush1.bf16.msra.mxu0 %v1332
    %3694 = vmatprep.subr.bf16.mxu0 %v1325
    %3695 = vmatpush1.bf16.msra.mxu0 %v1324
    %3696 = vmatprep.subr.bf16.mxu0 %v1317
    %3697 = vmatpush1.bf16.msra.mxu0 %v1316
    %3698 = vmatprep.subr.bf16.mxu0 %v1309
    %3699 = vmatpush1.bf16.msra.mxu0 %v1308
    %3700 = vmatprep.subr.bf16.mxu0 %v1301
    %3701 = vmatpush1.bf16.msra.mxu0 %v1300
    %3702 = vmatprep.subr.bf16.mxu0 0
    %3703 = vmatpush2.bf16.msra.mxu0 0
    %3704 = vmatprep.subr.bf16.mxu0 0
    %3705 = vmatpush2.bf16.msra.mxu0 0
    %3706 = vmatprep.subr.bf16.mxu0 0
    %3707 = vmatpush2.bf16.msra.mxu0 0
    %3708 = vmatprep.subr.bf16.mxu0 0
    %3709 = vmatpush2.bf16.msra.mxu0 0
    %3710 = vmatprep.subr.bf16.mxu0 0
    %3711 = vmatpush2.bf16.msra.mxu0 0
    %3712 = vmatprep.subr.bf16.mxu0 0
    %3713 = vmatpush2.bf16.msra.mxu0 0
    %3714 = vmatprep.subr.bf16.mxu0 0
    %3715 = vmatpush2.bf16.msra.mxu0 0
    %3716 = vmatprep.subr.bf16.mxu0 0
    %3717 = vmatpush2.bf16.msra.mxu0 0
    %3718 = vmatprep.mubr.bf16.mxu0 0
    %3719 = vmatmul.mubr.bf16.gmra.mxu0 %v3644
    %v3720 = vpop.f32.mrf.mxu0
    %v3721 = vadd.f32 %v1077, %v3720
    %v3722 = vpop.f32.mrf.mxu0
    %v3723 = vadd.f32 %v1081, %v3722
    %v3724 = vpop.f32.mrf.mxu0
    %v3725 = vpop.f32.mrf.mxu0
    %3726 = vdwg.mxu0
    %3727 = vmatprep.subr.bf16.mxu0 %v1359
    %3728 = vmatpush1.bf16.msra.mxu0 %v1358
    %3729 = vmatprep.subr.bf16.mxu0 %v1351
    %3730 = vmatpush1.bf16.msra.mxu0 %v1350
    %3731 = vmatprep.subr.bf16.mxu0 %v1343
    %3732 = vmatpush1.bf16.msra.mxu0 %v1342
    %3733 = vmatprep.subr.bf16.mxu0 %v1335
    %3734 = vmatpush1.bf16.msra.mxu0 %v1334
    %3735 = vmatprep.subr.bf16.mxu0 %v1327
    %3736 = vmatpush1.bf16.msra.mxu0 %v1326
    %3737 = vmatprep.subr.bf16.mxu0 %v1319
    %3738 = vmatpush1.bf16.msra.mxu0 %v1318
    %3739 = vmatprep.subr.bf16.mxu0 %v1311
    %3740 = vmatpush1.bf16.msra.mxu0 %v1310
    %3741 = vmatprep.subr.bf16.mxu0 %v1303
    %3742 = vmatpush1.bf16.msra.mxu0 %v1302
    %3743 = vmatprep.subr.bf16.mxu0 0
    %3744 = vmatpush2.bf16.msra.mxu0 0
    %3745 = vmatprep.subr.bf16.mxu0 0
    %3746 = vmatpush2.bf16.msra.mxu0 0
    %3747 = vmatprep.subr.bf16.mxu0 0
    %3748 = vmatpush2.bf16.msra.mxu0 0
    %3749 = vmatprep.subr.bf16.mxu0 0
    %3750 = vmatpush2.bf16.msra.mxu0 0
    %3751 = vmatprep.subr.bf16.mxu0 0
    %3752 = vmatpush2.bf16.msra.mxu0 0
    %3753 = vmatprep.subr.bf16.mxu0 0
    %3754 = vmatpush2.bf16.msra.mxu0 0
    %3755 = vmatprep.subr.bf16.mxu0 0
    %3756 = vmatpush2.bf16.msra.mxu0 0
    %3757 = vmatprep.subr.bf16.mxu0 0
    %3758 = vmatpush2.bf16.msra.mxu0 0
    %3759 = vmatprep.mubr.bf16.mxu0 0
    %3760 = vmatmul.mubr.bf16.gmra.mxu0 %v3644
    %v3761 = vpop.f32.mrf.mxu0
    %v3762 = vadd.f32 %v1085, %v3761
    %v3763 = vpop.f32.mrf.mxu0
    %v3764 = vadd.f32 %v1089, %v3763
    %v3765 = vpop.f32.mrf.mxu0
    %v3766 = vpop.f32.mrf.mxu0
    %3767 = vdwg.mxu0
    %3768 = vmatprep.subr.bf16.mxu0 %v1361
    %3769 = vmatpush1.bf16.msra.mxu0 %v1360
    %3770 = vmatprep.subr.bf16.mxu0 %v1353
    %3771 = vmatpush1.bf16.msra.mxu0 %v1352
    %3772 = vmatprep.subr.bf16.mxu0 %v1345
    %3773 = vmatpush1.bf16.msra.mxu0 %v1344
    %3774 = vmatprep.subr.bf16.mxu0 %v1337
    %3775 = vmatpush1.bf16.msra.mxu0 %v1336
    %3776 = vmatprep.subr.bf16.mxu0 %v1329
    %3777 = vmatpush1.bf16.msra.mxu0 %v1328
    %3778 = vmatprep.subr.bf16.mxu0 %v1321
    %3779 = vmatpush1.bf16.msra.mxu0 %v1320
    %3780 = vmatprep.subr.bf16.mxu0 %v1313
    %3781 = vmatpush1.bf16.msra.mxu0 %v1312
    %3782 = vmatprep.subr.bf16.mxu0 %v1305
    %3783 = vmatpush1.bf16.msra.mxu0 %v1304
    %3784 = vmatprep.subr.bf16.mxu0 0
    %3785 = vmatpush2.bf16.msra.mxu0 0
    %3786 = vmatprep.subr.bf16.mxu0 0
    %3787 = vmatpush2.bf16.msra.mxu0 0
    %3788 = vmatprep.subr.bf16.mxu0 0
    %3789 = vmatpush2.bf16.msra.mxu0 0
    %3790 = vmatprep.subr.bf16.mxu0 0
    %3791 = vmatpush2.bf16.msra.mxu0 0
    %3792 = vmatprep.subr.bf16.mxu0 0
    %3793 = vmatpush2.bf16.msra.mxu0 0
    %3794 = vmatprep.subr.bf16.mxu0 0
    %3795 = vmatpush2.bf16.msra.mxu0 0
    %3796 = vmatprep.subr.bf16.mxu0 0
    %3797 = vmatpush2.bf16.msra.mxu0 0
    %3798 = vmatprep.subr.bf16.mxu0 0
    %3799 = vmatpush2.bf16.msra.mxu0 0
    %3800 = vmatprep.mubr.bf16.mxu0 0
    %3801 = vmatmul.mubr.bf16.gmra.mxu0 %v3644
    %v3802 = vpop.f32.mrf.mxu0
    %v3803 = vadd.f32 %v1093, %v3802
    %v3804 = vpop.f32.mrf.mxu0
    %v3805 = vadd.f32 %v1097, %v3804
    %v3806 = vpop.f32.mrf.mxu0
    %v3807 = vpop.f32.mrf.mxu0
    %3808 = vdwg.mxu0
    %v3809 = vsel %vm973, %v3680, %v3762
    %v3810 = vsel %vm973, %v3682, %v3764
    %v3811 = vsel %vm973, %v3721, %v3803
    %v3812 = vsel %vm973, %v3723, %v3805
    %v3813 = vpack.c.bf16 %v3642, %v3642
    %3814 = vmatprep.subr.bf16.mxu0 %v1908
    %3815 = vmatpush1.bf16.msra.mxu0 %v1907
    %3816 = vmatprep.subr.bf16.mxu0 %v1900
    %3817 = vmatpush1.bf16.msra.mxu0 %v1899
    %3818 = vmatprep.subr.bf16.mxu0 %v1892
    %3819 = vmatpush1.bf16.msra.mxu0 %v1891
    %3820 = vmatprep.subr.bf16.mxu0 %v1884
    %3821 = vmatpush1.bf16.msra.mxu0 %v1883
    %3822 = vmatprep.subr.bf16.mxu0 %v1876
    %3823 = vmatpush1.bf16.msra.mxu0 %v1875
    %3824 = vmatprep.subr.bf16.mxu0 %v1868
    %3825 = vmatpush1.bf16.msra.mxu0 %v1867
    %3826 = vmatprep.subr.bf16.mxu0 %v1860
    %3827 = vmatpush1.bf16.msra.mxu0 %v1859
    %3828 = vmatprep.subr.bf16.mxu0 %v1852
    %3829 = vmatpush1.bf16.msra.mxu0 %v1851
    %3830 = vmatprep.subr.bf16.mxu0 0
    %3831 = vmatpush2.bf16.msra.mxu0 0
    %3832 = vmatprep.subr.bf16.mxu0 0
    %3833 = vmatpush2.bf16.msra.mxu0 0
    %3834 = vmatprep.subr.bf16.mxu0 0
    %3835 = vmatpush2.bf16.msra.mxu0 0
    %3836 = vmatprep.subr.bf16.mxu0 0
    %3837 = vmatpush2.bf16.msra.mxu0 0
    %3838 = vmatprep.subr.bf16.mxu0 0
    %3839 = vmatpush2.bf16.msra.mxu0 0
    %3840 = vmatprep.subr.bf16.mxu0 0
    %3841 = vmatpush2.bf16.msra.mxu0 0
    %3842 = vmatprep.subr.bf16.mxu0 0
    %3843 = vmatpush2.bf16.msra.mxu0 0
    %3844 = vmatprep.subr.bf16.mxu0 0
    %3845 = vmatpush2.bf16.msra.mxu0 0
    %3846 = vmatprep.mubr.bf16.mxu0 0
    %3847 = vmatmul.mubr.bf16.gmra.mxu0 %v3813
    %v3848 = vpop.f32.mrf.mxu0
    %v3849 = vadd.f32 0.0, %v3848
    %v3850 = vpop.f32.mrf.mxu0
    %v3851 = vadd.f32 0.0, %v3850
    %v3852 = vpop.f32.mrf.mxu0
    %v3853 = vpop.f32.mrf.mxu0
    %3854 = vdwg.mxu0
    %3855 = vmatprep.subr.bf16.mxu0 %v1910
    %3856 = vmatpush1.bf16.msra.mxu0 %v1909
    %3857 = vmatprep.subr.bf16.mxu0 %v1902
    %3858 = vmatpush1.bf16.msra.mxu0 %v1901
    %3859 = vmatprep.subr.bf16.mxu0 %v1894
    %3860 = vmatpush1.bf16.msra.mxu0 %v1893
    %3861 = vmatprep.subr.bf16.mxu0 %v1886
    %3862 = vmatpush1.bf16.msra.mxu0 %v1885
    %3863 = vmatprep.subr.bf16.mxu0 %v1878
    %3864 = vmatpush1.bf16.msra.mxu0 %v1877
    %3865 = vmatprep.subr.bf16.mxu0 %v1870
    %3866 = vmatpush1.bf16.msra.mxu0 %v1869
    %3867 = vmatprep.subr.bf16.mxu0 %v1862
    %3868 = vmatpush1.bf16.msra.mxu0 %v1861
    %3869 = vmatprep.subr.bf16.mxu0 %v1854
    %3870 = vmatpush1.bf16.msra.mxu0 %v1853
    %3871 = vmatprep.subr.bf16.mxu0 0
    %3872 = vmatpush2.bf16.msra.mxu0 0
    %3873 = vmatprep.subr.bf16.mxu0 0
    %3874 = vmatpush2.bf16.msra.mxu0 0
    %3875 = vmatprep.subr.bf16.mxu0 0
    %3876 = vmatpush2.bf16.msra.mxu0 0
    %3877 = vmatprep.subr.bf16.mxu0 0
    %3878 = vmatpush2.bf16.msra.mxu0 0
    %3879 = vmatprep.subr.bf16.mxu0 0
    %3880 = vmatpush2.bf16.msra.mxu0 0
    %3881 = vmatprep.subr.bf16.mxu0 0
    %3882 = vmatpush2.bf16.msra.mxu0 0
    %3883 = vmatprep.subr.bf16.mxu0 0
    %3884 = vmatpush2.bf16.msra.mxu0 0
    %3885 = vmatprep.subr.bf16.mxu0 0
    %3886 = vmatpush2.bf16.msra.mxu0 0
    %3887 = vmatprep.mubr.bf16.mxu0 0
    %3888 = vmatmul.mubr.bf16.gmra.mxu0 %v3813
    %v3889 = vpop.f32.mrf.mxu0
    %v3890 = vadd.f32 0.0, %v3889
    %v3891 = vpop.f32.mrf.mxu0
    %v3892 = vadd.f32 0.0, %v3891
    %v3893 = vpop.f32.mrf.mxu0
    %v3894 = vpop.f32.mrf.mxu0
    %3895 = vdwg.mxu0
    %3896 = vmatprep.subr.bf16.mxu0 %v1912
    %3897 = vmatpush1.bf16.msra.mxu0 %v1911
    %3898 = vmatprep.subr.bf16.mxu0 %v1904
    %3899 = vmatpush1.bf16.msra.mxu0 %v1903
    %3900 = vmatprep.subr.bf16.mxu0 %v1896
    %3901 = vmatpush1.bf16.msra.mxu0 %v1895
    %3902 = vmatprep.subr.bf16.mxu0 %v1888
    %3903 = vmatpush1.bf16.msra.mxu0 %v1887
    %3904 = vmatprep.subr.bf16.mxu0 %v1880
    %3905 = vmatpush1.bf16.msra.mxu0 %v1879
    %3906 = vmatprep.subr.bf16.mxu0 %v1872
    %3907 = vmatpush1.bf16.msra.mxu0 %v1871
    %3908 = vmatprep.subr.bf16.mxu0 %v1864
    %3909 = vmatpush1.bf16.msra.mxu0 %v1863
    %3910 = vmatprep.subr.bf16.mxu0 %v1856
    %3911 = vmatpush1.bf16.msra.mxu0 %v1855
    %3912 = vmatprep.subr.bf16.mxu0 0
    %3913 = vmatpush2.bf16.msra.mxu0 0
    %3914 = vmatprep.subr.bf16.mxu0 0
    %3915 = vmatpush2.bf16.msra.mxu0 0
    %3916 = vmatprep.subr.bf16.mxu0 0
    %3917 = vmatpush2.bf16.msra.mxu0 0
    %3918 = vmatprep.subr.bf16.mxu0 0
    %3919 = vmatpush2.bf16.msra.mxu0 0
    %3920 = vmatprep.subr.bf16.mxu0 0
    %3921 = vmatpush2.bf16.msra.mxu0 0
    %3922 = vmatprep.subr.bf16.mxu0 0
    %3923 = vmatpush2.bf16.msra.mxu0 0
    %3924 = vmatprep.subr.bf16.mxu0 0
    %3925 = vmatpush2.bf16.msra.mxu0 0
    %3926 = vmatprep.subr.bf16.mxu0 0
    %3927 = vmatpush2.bf16.msra.mxu0 0
    %3928 = vmatprep.mubr.bf16.mxu0 0
    %3929 = vmatmul.mubr.bf16.gmra.mxu0 %v3813
    %v3930 = vpop.f32.mrf.mxu0
    %v3931 = vadd.f32 0.0, %v3930
    %v3932 = vpop.f32.mrf.mxu0
    %v3933 = vadd.f32 0.0, %v3932
    %v3934 = vpop.f32.mrf.mxu0
    %v3935 = vpop.f32.mrf.mxu0
    %3936 = vdwg.mxu0
    %3937 = vmatprep.subr.bf16.mxu0 %v1914
    %3938 = vmatpush1.bf16.msra.mxu0 %v1913
    %3939 = vmatprep.subr.bf16.mxu0 %v1906
    %3940 = vmatpush1.bf16.msra.mxu0 %v1905
    %3941 = vmatprep.subr.bf16.mxu0 %v1898
    %3942 = vmatpush1.bf16.msra.mxu0 %v1897
    %3943 = vmatprep.subr.bf16.mxu0 %v1890
    %3944 = vmatpush1.bf16.msra.mxu0 %v1889
    %3945 = vmatprep.subr.bf16.mxu0 %v1882
    %3946 = vmatpush1.bf16.msra.mxu0 %v1881
    %3947 = vmatprep.subr.bf16.mxu0 %v1874
    %3948 = vmatpush1.bf16.msra.mxu0 %v1873
    %3949 = vmatprep.subr.bf16.mxu0 %v1866
    %3950 = vmatpush1.bf16.msra.mxu0 %v1865
    %3951 = vmatprep.subr.bf16.mxu0 %v1858
    %3952 = vmatpush1.bf16.msra.mxu0 %v1857
    %3953 = vmatprep.subr.bf16.mxu0 0
    %3954 = vmatpush2.bf16.msra.mxu0 0
    %3955 = vmatprep.subr.bf16.mxu0 0
    %3956 = vmatpush2.bf16.msra.mxu0 0
    %3957 = vmatprep.subr.bf16.mxu0 0
    %3958 = vmatpush2.bf16.msra.mxu0 0
    %3959 = vmatprep.subr.bf16.mxu0 0
    %3960 = vmatpush2.bf16.msra.mxu0 0
    %3961 = vmatprep.subr.bf16.mxu0 0
    %3962 = vmatpush2.bf16.msra.mxu0 0
    %3963 = vmatprep.subr.bf16.mxu0 0
    %3964 = vmatpush2.bf16.msra.mxu0 0
    %3965 = vmatprep.subr.bf16.mxu0 0
    %3966 = vmatpush2.bf16.msra.mxu0 0
    %3967 = vmatprep.subr.bf16.mxu0 0
    %3968 = vmatpush2.bf16.msra.mxu0 0
    %3969 = vmatprep.mubr.bf16.mxu0 0
    %3970 = vmatmul.mubr.bf16.gmra.mxu0 %v3813
    %v3971 = vpop.f32.mrf.mxu0
    %v3972 = vadd.f32 0.0, %v3971
    %v3973 = vpop.f32.mrf.mxu0
    %v3974 = vadd.f32 0.0, %v3973
    %v3975 = vpop.f32.mrf.mxu0
    %v3976 = vpop.f32.mrf.mxu0
    %3977 = vdwg.mxu0
    %v3978 = vsel %vm973, %v3849, %v3931
    %v3979 = vsel %vm973, %v3851, %v3933
    %v3980 = vsel %vm973, %v3890, %v3972
    %v3981 = vsel %vm973, %v3892, %v3974
    %v3982 = vadd.f32 %v925, %v3978
    %v3983 = vadd.f32 %v926, %v3979
    %v3984 = vadd.f32 %v927, %v3980
    %v3985 = vadd.f32 %v928, %v3981
    %v3986 = vxor.u32 %v3982, 2147483648
    %v3987 = vxor.u32 %v3983, 2147483648
    %v3988 = vxor.u32 %v3984, 2147483648
    %v3989 = vmul.f32 %v3986, 1.442695
    %v3990 = vpow.pop %v3989
    %v3991 = vmul.f32 %v3987, 1.442695
    %v3992 = vpow.pop %v3991
    %v3993 = vmul.f32 %v3988, 1.442695
    %v3994 = vpow.pop %v3993
    %v3995 = vadd.f32 %v3990, 1.0
    %v3996 = vadd.f32 %v3992, 1.0
    %v3997 = vadd.f32 %v3994, 1.0
    %v3998 = vrcp.pop %v3995
    %v3999 = vmul.f32 1.0, %v3998
    %v4000 = vrcp.pop %v3996
    %v4001 = vmul.f32 1.0, %v4000
    %v4002 = vrcp.pop %v3997
    %v4003 = vmul.f32 1.0, %v4002
    %v4004 = vtanh.pop %v3985
    %v4005 = vmul.f32 %v4001, %v3640
    %v4006 = vmul.f32 %v3999, %v4004
    %v4007 = vadd.f32 %v4005, %v4006
    %v4008 = vtanh.pop %v4007
    %v4009 = vmul.f32 %v4003, %v4008
    %v4010 = vadd.f32 %v4009, %v967
    %v4011 = vpack.c.bf16 %v4010, %v4010
    %4012 = vmatprep.subr.bf16.mxu0 %v1355
    %4013 = vmatpush1.bf16.msra.mxu0 %v1354
    %4014 = vmatprep.subr.bf16.mxu0 %v1347
    %4015 = vmatpush1.bf16.msra.mxu0 %v1346
    %4016 = vmatprep.subr.bf16.mxu0 %v1339
    %4017 = vmatpush1.bf16.msra.mxu0 %v1338
    %4018 = vmatprep.subr.bf16.mxu0 %v1331
    %4019 = vmatpush1.bf16.msra.mxu0 %v1330
    %4020 = vmatprep.subr.bf16.mxu0 %v1323
    %4021 = vmatpush1.bf16.msra.mxu0 %v1322
    %4022 = vmatprep.subr.bf16.mxu0 %v1315
    %4023 = vmatpush1.bf16.msra.mxu0 %v1314
    %4024 = vmatprep.subr.bf16.mxu0 %v1307
    %4025 = vmatpush1.bf16.msra.mxu0 %v1306
    %4026 = vmatprep.subr.bf16.mxu0 %v1299
    %4027 = vmatpush1.bf16.msra.mxu0 %v1298
    %4028 = vmatprep.subr.bf16.mxu0 0
    %4029 = vmatpush2.bf16.msra.mxu0 0
    %4030 = vmatprep.subr.bf16.mxu0 0
    %4031 = vmatpush2.bf16.msra.mxu0 0
    %4032 = vmatprep.subr.bf16.mxu0 0
    %4033 = vmatpush2.bf16.msra.mxu0 0
    %4034 = vmatprep.subr.bf16.mxu0 0
    %4035 = vmatpush2.bf16.msra.mxu0 0
    %4036 = vmatprep.subr.bf16.mxu0 0
    %4037 = vmatpush2.bf16.msra.mxu0 0
    %4038 = vmatprep.subr.bf16.mxu0 0
    %4039 = vmatpush2.bf16.msra.mxu0 0
    %4040 = vmatprep.subr.bf16.mxu0 0
    %4041 = vmatpush2.bf16.msra.mxu0 0
    %4042 = vmatprep.subr.bf16.mxu0 0
    %4043 = vmatpush2.bf16.msra.mxu0 0
    %4044 = vmatprep.mubr.bf16.mxu0 0
    %4045 = vmatmul.mubr.bf16.gmra.mxu0 %v4011
    %v4046 = vpop.f32.mrf.mxu0
    %v4047 = vadd.f32 %v1069, %v4046
    %v4048 = vpop.f32.mrf.mxu0
    %v4049 = vadd.f32 %v1073, %v4048
    %v4050 = vpop.f32.mrf.mxu0
    %v4051 = vpop.f32.mrf.mxu0
    %4052 = vdwg.mxu0
    %4053 = vmatprep.subr.bf16.mxu0 %v1357
    %4054 = vmatpush1.bf16.msra.mxu0 %v1356
    %4055 = vmatprep.subr.bf16.mxu0 %v1349
    %4056 = vmatpush1.bf16.msra.mxu0 %v1348
    %4057 = vmatprep.subr.bf16.mxu0 %v1341
    %4058 = vmatpush1.bf16.msra.mxu0 %v1340
    %4059 = vmatprep.subr.bf16.mxu0 %v1333
    %4060 = vmatpush1.bf16.msra.mxu0 %v1332
    %4061 = vmatprep.subr.bf16.mxu0 %v1325
    %4062 = vmatpush1.bf16.msra.mxu0 %v1324
    %4063 = vmatprep.subr.bf16.mxu0 %v1317
    %4064 = vmatpush1.bf16.msra.mxu0 %v1316
    %4065 = vmatprep.subr.bf16.mxu0 %v1309
    %4066 = vmatpush1.bf16.msra.mxu0 %v1308
    %4067 = vmatprep.subr.bf16.mxu0 %v1301
    %4068 = vmatpush1.bf16.msra.mxu0 %v1300
    %4069 = vmatprep.subr.bf16.mxu0 0
    %4070 = vmatpush2.bf16.msra.mxu0 0
    %4071 = vmatprep.subr.bf16.mxu0 0
    %4072 = vmatpush2.bf16.msra.mxu0 0
    %4073 = vmatprep.subr.bf16.mxu0 0
    %4074 = vmatpush2.bf16.msra.mxu0 0
    %4075 = vmatprep.subr.bf16.mxu0 0
    %4076 = vmatpush2.bf16.msra.mxu0 0
    %4077 = vmatprep.subr.bf16.mxu0 0
    %4078 = vmatpush2.bf16.msra.mxu0 0
    %4079 = vmatprep.subr.bf16.mxu0 0
    %4080 = vmatpush2.bf16.msra.mxu0 0
    %4081 = vmatprep.subr.bf16.mxu0 0
    %4082 = vmatpush2.bf16.msra.mxu0 0
    %4083 = vmatprep.subr.bf16.mxu0 0
    %4084 = vmatpush2.bf16.msra.mxu0 0
    %4085 = vmatprep.mubr.bf16.mxu0 0
    %4086 = vmatmul.mubr.bf16.gmra.mxu0 %v4011
    %v4087 = vpop.f32.mrf.mxu0
    %v4088 = vadd.f32 %v1077, %v4087
    %v4089 = vpop.f32.mrf.mxu0
    %v4090 = vadd.f32 %v1081, %v4089
    %v4091 = vpop.f32.mrf.mxu0
    %v4092 = vpop.f32.mrf.mxu0
    %4093 = vdwg.mxu0
    %4094 = vmatprep.subr.bf16.mxu0 %v1359
    %4095 = vmatpush1.bf16.msra.mxu0 %v1358
    %4096 = vmatprep.subr.bf16.mxu0 %v1351
    %4097 = vmatpush1.bf16.msra.mxu0 %v1350
    %4098 = vmatprep.subr.bf16.mxu0 %v1343
    %4099 = vmatpush1.bf16.msra.mxu0 %v1342
    %4100 = vmatprep.subr.bf16.mxu0 %v1335
    %4101 = vmatpush1.bf16.msra.mxu0 %v1334
    %4102 = vmatprep.subr.bf16.mxu0 %v1327
    %4103 = vmatpush1.bf16.msra.mxu0 %v1326
    %4104 = vmatprep.subr.bf16.mxu0 %v1319
    %4105 = vmatpush1.bf16.msra.mxu0 %v1318
    %4106 = vmatprep.subr.bf16.mxu0 %v1311
    %4107 = vmatpush1.bf16.msra.mxu0 %v1310
    %4108 = vmatprep.subr.bf16.mxu0 %v1303
    %4109 = vmatpush1.bf16.msra.mxu0 %v1302
    %4110 = vmatprep.subr.bf16.mxu0 0
    %4111 = vmatpush2.bf16.msra.mxu0 0
    %4112 = vmatprep.subr.bf16.mxu0 0
    %4113 = vmatpush2.bf16.msra.mxu0 0
    %4114 = vmatprep.subr.bf16.mxu0 0
    %4115 = vmatpush2.bf16.msra.mxu0 0
    %4116 = vmatprep.subr.bf16.mxu0 0
    %4117 = vmatpush2.bf16.msra.mxu0 0
    %4118 = vmatprep.subr.bf16.mxu0 0
    %4119 = vmatpush2.bf16.msra.mxu0 0
    %4120 = vmatprep.subr.bf16.mxu0 0
    %4121 = vmatpush2.bf16.msra.mxu0 0
    %4122 = vmatprep.subr.bf16.mxu0 0
    %4123 = vmatpush2.bf16.msra.mxu0 0
    %4124 = vmatprep.subr.bf16.mxu0 0
    %4125 = vmatpush2.bf16.msra.mxu0 0
    %4126 = vmatprep.mubr.bf16.mxu0 0
    %4127 = vmatmul.mubr.bf16.gmra.mxu0 %v4011
    %v4128 = vpop.f32.mrf.mxu0
    %v4129 = vadd.f32 %v1085, %v4128
    %v4130 = vpop.f32.mrf.mxu0
    %v4131 = vadd.f32 %v1089, %v4130
    %v4132 = vpop.f32.mrf.mxu0
    %v4133 = vpop.f32.mrf.mxu0
    %4134 = vdwg.mxu0
    %4135 = vmatprep.subr.bf16.mxu0 %v1361
    %4136 = vmatpush1.bf16.msra.mxu0 %v1360
    %4137 = vmatprep.subr.bf16.mxu0 %v1353
    %4138 = vmatpush1.bf16.msra.mxu0 %v1352
    %4139 = vmatprep.subr.bf16.mxu0 %v1345
    %4140 = vmatpush1.bf16.msra.mxu0 %v1344
    %4141 = vmatprep.subr.bf16.mxu0 %v1337
    %4142 = vmatpush1.bf16.msra.mxu0 %v1336
    %4143 = vmatprep.subr.bf16.mxu0 %v1329
    %4144 = vmatpush1.bf16.msra.mxu0 %v1328
    %4145 = vmatprep.subr.bf16.mxu0 %v1321
    %4146 = vmatpush1.bf16.msra.mxu0 %v1320
    %4147 = vmatprep.subr.bf16.mxu0 %v1313
    %4148 = vmatpush1.bf16.msra.mxu0 %v1312
    %4149 = vmatprep.subr.bf16.mxu0 %v1305
    %4150 = vmatpush1.bf16.msra.mxu0 %v1304
    %4151 = vmatprep.subr.bf16.mxu0 0
    %4152 = vmatpush2.bf16.msra.mxu0 0
    %4153 = vmatprep.subr.bf16.mxu0 0
    %4154 = vmatpush2.bf16.msra.mxu0 0
    %4155 = vmatprep.subr.bf16.mxu0 0
    %4156 = vmatpush2.bf16.msra.mxu0 0
    %4157 = vmatprep.subr.bf16.mxu0 0
    %4158 = vmatpush2.bf16.msra.mxu0 0
    %4159 = vmatprep.subr.bf16.mxu0 0
    %4160 = vmatpush2.bf16.msra.mxu0 0
    %4161 = vmatprep.subr.bf16.mxu0 0
    %4162 = vmatpush2.bf16.msra.mxu0 0
    %4163 = vmatprep.subr.bf16.mxu0 0
    %4164 = vmatpush2.bf16.msra.mxu0 0
    %4165 = vmatprep.subr.bf16.mxu0 0
    %4166 = vmatpush2.bf16.msra.mxu0 0
    %4167 = vmatprep.mubr.bf16.mxu0 0
    %4168 = vmatmul.mubr.bf16.gmra.mxu0 %v4011
    %v4169 = vpop.f32.mrf.mxu0
    %v4170 = vadd.f32 %v1093, %v4169
    %v4171 = vpop.f32.mrf.mxu0
    %v4172 = vadd.f32 %v1097, %v4171
    %v4173 = vpop.f32.mrf.mxu0
    %v4174 = vpop.f32.mrf.mxu0
    %4175 = vdwg.mxu0
    %v4176 = vsel %vm973, %v4047, %v4129
    %v4177 = vsel %vm973, %v4049, %v4131
    %v4178 = vsel %vm973, %v4088, %v4170
    %v4179 = vsel %vm973, %v4090, %v4172
    %v4180 = vpack.c.bf16 %v4009, %v4009
    %4181 = vmatprep.subr.bf16.mxu0 %v1908
    %4182 = vmatpush1.bf16.msra.mxu0 %v1907
    %4183 = vmatprep.subr.bf16.mxu0 %v1900
    %4184 = vmatpush1.bf16.msra.mxu0 %v1899
    %4185 = vmatprep.subr.bf16.mxu0 %v1892
    %4186 = vmatpush1.bf16.msra.mxu0 %v1891
    %4187 = vmatprep.subr.bf16.mxu0 %v1884
    %4188 = vmatpush1.bf16.msra.mxu0 %v1883
    %4189 = vmatprep.subr.bf16.mxu0 %v1876
    %4190 = vmatpush1.bf16.msra.mxu0 %v1875
    %4191 = vmatprep.subr.bf16.mxu0 %v1868
    %4192 = vmatpush1.bf16.msra.mxu0 %v1867
    %4193 = vmatprep.subr.bf16.mxu0 %v1860
    %4194 = vmatpush1.bf16.msra.mxu0 %v1859
    %4195 = vmatprep.subr.bf16.mxu0 %v1852
    %4196 = vmatpush1.bf16.msra.mxu0 %v1851
    %4197 = vmatprep.subr.bf16.mxu0 0
    %4198 = vmatpush2.bf16.msra.mxu0 0
    %4199 = vmatprep.subr.bf16.mxu0 0
    %4200 = vmatpush2.bf16.msra.mxu0 0
    %4201 = vmatprep.subr.bf16.mxu0 0
    %4202 = vmatpush2.bf16.msra.mxu0 0
    %4203 = vmatprep.subr.bf16.mxu0 0
    %4204 = vmatpush2.bf16.msra.mxu0 0
    %4205 = vmatprep.subr.bf16.mxu0 0
    %4206 = vmatpush2.bf16.msra.mxu0 0
    %4207 = vmatprep.subr.bf16.mxu0 0
    %4208 = vmatpush2.bf16.msra.mxu0 0
    %4209 = vmatprep.subr.bf16.mxu0 0
    %4210 = vmatpush2.bf16.msra.mxu0 0
    %4211 = vmatprep.subr.bf16.mxu0 0
    %4212 = vmatpush2.bf16.msra.mxu0 0
    %4213 = vmatprep.mubr.bf16.mxu0 0
    %4214 = vmatmul.mubr.bf16.gmra.mxu0 %v4180
    %v4215 = vpop.f32.mrf.mxu0
    %v4216 = vadd.f32 0.0, %v4215
    %v4217 = vpop.f32.mrf.mxu0
    %v4218 = vadd.f32 0.0, %v4217
    %v4219 = vpop.f32.mrf.mxu0
    %v4220 = vpop.f32.mrf.mxu0
    %4221 = vdwg.mxu0
    %4222 = vmatprep.subr.bf16.mxu0 %v1910
    %4223 = vmatpush1.bf16.msra.mxu0 %v1909
    %4224 = vmatprep.subr.bf16.mxu0 %v1902
    %4225 = vmatpush1.bf16.msra.mxu0 %v1901
    %4226 = vmatprep.subr.bf16.mxu0 %v1894
    %4227 = vmatpush1.bf16.msra.mxu0 %v1893
    %4228 = vmatprep.subr.bf16.mxu0 %v1886
    %4229 = vmatpush1.bf16.msra.mxu0 %v1885
    %4230 = vmatprep.subr.bf16.mxu0 %v1878
    %4231 = vmatpush1.bf16.msra.mxu0 %v1877
    %4232 = vmatprep.subr.bf16.mxu0 %v1870
    %4233 = vmatpush1.bf16.msra.mxu0 %v1869
    %4234 = vmatprep.subr.bf16.mxu0 %v1862
    %4235 = vmatpush1.bf16.msra.mxu0 %v1861
    %4236 = vmatprep.subr.bf16.mxu0 %v1854
    %4237 = vmatpush1.bf16.msra.mxu0 %v1853
    %4238 = vmatprep.subr.bf16.mxu0 0
    %4239 = vmatpush2.bf16.msra.mxu0 0
    %4240 = vmatprep.subr.bf16.mxu0 0
    %4241 = vmatpush2.bf16.msra.mxu0 0
    %4242 = vmatprep.subr.bf16.mxu0 0
    %4243 = vmatpush2.bf16.msra.mxu0 0
    %4244 = vmatprep.subr.bf16.mxu0 0
    %4245 = vmatpush2.bf16.msra.mxu0 0
    %4246 = vmatprep.subr.bf16.mxu0 0
    %4247 = vmatpush2.bf16.msra.mxu0 0
    %4248 = vmatprep.subr.bf16.mxu0 0
    %4249 = vmatpush2.bf16.msra.mxu0 0
    %4250 = vmatprep.subr.bf16.mxu0 0
    %4251 = vmatpush2.bf16.msra.mxu0 0
    %4252 = vmatprep.subr.bf16.mxu0 0
    %4253 = vmatpush2.bf16.msra.mxu0 0
    %4254 = vmatprep.mubr.bf16.mxu0 0
    %4255 = vmatmul.mubr.bf16.gmra.mxu0 %v4180
    %v4256 = vpop.f32.mrf.mxu0
    %v4257 = vadd.f32 0.0, %v4256
    %v4258 = vpop.f32.mrf.mxu0
    %v4259 = vadd.f32 0.0, %v4258
    %v4260 = vpop.f32.mrf.mxu0
    %v4261 = vpop.f32.mrf.mxu0
    %4262 = vdwg.mxu0
    %4263 = vmatprep.subr.bf16.mxu0 %v1912
    %4264 = vmatpush1.bf16.msra.mxu0 %v1911
    %4265 = vmatprep.subr.bf16.mxu0 %v1904
    %4266 = vmatpush1.bf16.msra.mxu0 %v1903
    %4267 = vmatprep.subr.bf16.mxu0 %v1896
    %4268 = vmatpush1.bf16.msra.mxu0 %v1895
    %4269 = vmatprep.subr.bf16.mxu0 %v1888
    %4270 = vmatpush1.bf16.msra.mxu0 %v1887
    %4271 = vmatprep.subr.bf16.mxu0 %v1880
    %4272 = vmatpush1.bf16.msra.mxu0 %v1879
    %4273 = vmatprep.subr.bf16.mxu0 %v1872
    %4274 = vmatpush1.bf16.msra.mxu0 %v1871
    %4275 = vmatprep.subr.bf16.mxu0 %v1864
    %4276 = vmatpush1.bf16.msra.mxu0 %v1863
    %4277 = vmatprep.subr.bf16.mxu0 %v1856
    %4278 = vmatpush1.bf16.msra.mxu0 %v1855
    %4279 = vmatprep.subr.bf16.mxu0 0
    %4280 = vmatpush2.bf16.msra.mxu0 0
    %4281 = vmatprep.subr.bf16.mxu0 0
    %4282 = vmatpush2.bf16.msra.mxu0 0
    %4283 = vmatprep.subr.bf16.mxu0 0
    %4284 = vmatpush2.bf16.msra.mxu0 0
    %4285 = vmatprep.subr.bf16.mxu0 0
    %4286 = vmatpush2.bf16.msra.mxu0 0
    %4287 = vmatprep.subr.bf16.mxu0 0
    %4288 = vmatpush2.bf16.msra.mxu0 0
    %4289 = vmatprep.subr.bf16.mxu0 0
    %4290 = vmatpush2.bf16.msra.mxu0 0
    %4291 = vmatprep.subr.bf16.mxu0 0
    %4292 = vmatpush2.bf16.msra.mxu0 0
    %4293 = vmatprep.subr.bf16.mxu0 0
    %4294 = vmatpush2.bf16.msra.mxu0 0
    %4295 = vmatprep.mubr.bf16.mxu0 0
    %4296 = vmatmul.mubr.bf16.gmra.mxu0 %v4180
    %v4297 = vpop.f32.mrf.mxu0
    %v4298 = vadd.f32 0.0, %v4297
    %v4299 = vpop.f32.mrf.mxu0
    %v4300 = vadd.f32 0.0, %v4299
    %v4301 = vpop.f32.mrf.mxu0
    %v4302 = vpop.f32.mrf.mxu0
    %4303 = vdwg.mxu0
    %4304 = vmatprep.subr.bf16.mxu0 %v1914
    %4305 = vmatpush1.bf16.msra.mxu0 %v1913
    %4306 = vmatprep.subr.bf16.mxu0 %v1906
    %4307 = vmatpush1.bf16.msra.mxu0 %v1905
    %4308 = vmatprep.subr.bf16.mxu0 %v1898
    %4309 = vmatpush1.bf16.msra.mxu0 %v1897
    %4310 = vmatprep.subr.bf16.mxu0 %v1890
    %4311 = vmatpush1.bf16.msra.mxu0 %v1889
    %4312 = vmatprep.subr.bf16.mxu0 %v1882
    %4313 = vmatpush1.bf16.msra.mxu0 %v1881
    %4314 = vmatprep.subr.bf16.mxu0 %v1874
    %4315 = vmatpush1.bf16.msra.mxu0 %v1873
    %4316 = vmatprep.subr.bf16.mxu0 %v1866
    %4317 = vmatpush1.bf16.msra.mxu0 %v1865
    %4318 = vmatprep.subr.bf16.mxu0 %v1858
    %4319 = vmatpush1.bf16.msra.mxu0 %v1857
    %4320 = vmatprep.subr.bf16.mxu0 0
    %4321 = vmatpush2.bf16.msra.mxu0 0
    %4322 = vmatprep.subr.bf16.mxu0 0
    %4323 = vmatpush2.bf16.msra.mxu0 0
    %4324 = vmatprep.subr.bf16.mxu0 0
    %4325 = vmatpush2.bf16.msra.mxu0 0
    %4326 = vmatprep.subr.bf16.mxu0 0
    %4327 = vmatpush2.bf16.msra.mxu0 0
    %4328 = vmatprep.subr.bf16.mxu0 0
    %4329 = vmatpush2.bf16.msra.mxu0 0
    %4330 = vmatprep.subr.bf16.mxu0 0
    %4331 = vmatpush2.bf16.msra.mxu0 0
    %4332 = vmatprep.subr.bf16.mxu0 0
    %4333 = vmatpush2.bf16.msra.mxu0 0
    %4334 = vmatprep.subr.bf16.mxu0 0
    %4335 = vmatpush2.bf16.msra.mxu0 0
    %4336 = vmatprep.mubr.bf16.mxu0 0
    %4337 = vmatmul.mubr.bf16.gmra.mxu0 %v4180
    %v4338 = vpop.f32.mrf.mxu0
    %v4339 = vadd.f32 0.0, %v4338
    %v4340 = vpop.f32.mrf.mxu0
    %v4341 = vadd.f32 0.0, %v4340
    %v4342 = vpop.f32.mrf.mxu0
    %v4343 = vpop.f32.mrf.mxu0
    %4344 = vdwg.mxu0
    %v4345 = vsel %vm973, %v4216, %v4298
    %v4346 = vsel %vm973, %v4218, %v4300
    %v4347 = vsel %vm973, %v4257, %v4339
    %v4348 = vsel %vm973, %v4259, %v4341
    %v4349 = vadd.f32 %v945, %v4345
    %v4350 = vadd.f32 %v946, %v4346
    %v4351 = vadd.f32 %v947, %v4347
    %v4352 = vadd.f32 %v948, %v4348
    %v4353 = vxor.u32 %v4349, 2147483648
    %v4354 = vxor.u32 %v4350, 2147483648
    %v4355 = vxor.u32 %v4351, 2147483648
    %v4356 = vmul.f32 %v4353, 1.442695
    %v4357 = vpow.pop %v4356
    %v4358 = vmul.f32 %v4354, 1.442695
    %v4359 = vpow.pop %v4358
    %v4360 = vmul.f32 %v4355, 1.442695
    %v4361 = vpow.pop %v4360
    %v4362 = vadd.f32 %v4357, 1.0
    %v4363 = vadd.f32 %v4359, 1.0
    %v4364 = vadd.f32 %v4361, 1.0
    %v4365 = vrcp.pop %v4362
    %v4366 = vmul.f32 1.0, %v4365
    %v4367 = vrcp.pop %v4363
    %v4368 = vmul.f32 1.0, %v4367
    %v4369 = vrcp.pop %v4364
    %v4370 = vmul.f32 1.0, %v4369
    %v4371 = vtanh.pop %v4352
    %v4372 = vmul.f32 %v4368, %v4007
    %v4373 = vmul.f32 %v4366, %v4371
    %v4374 = vadd.f32 %v4372, %v4373
    %v4375 = vtanh.pop %v4374
    %v4376 = vmul.f32 %v4370, %v4375
    %v4377 = vadd.f32 %v4376, %v970
    %v4378 = vpack.c.bf16 %v4377, %v4377
    %4379 = vmatprep.subr.bf16.mxu0 %v1355
    %4380 = vmatpush1.bf16.msra.mxu0 %v1354
    %4381 = vmatprep.subr.bf16.mxu0 %v1347
    %4382 = vmatpush1.bf16.msra.mxu0 %v1346
    %4383 = vmatprep.subr.bf16.mxu0 %v1339
    %4384 = vmatpush1.bf16.msra.mxu0 %v1338
    %4385 = vmatprep.subr.bf16.mxu0 %v1331
    %4386 = vmatpush1.bf16.msra.mxu0 %v1330
    %4387 = vmatprep.subr.bf16.mxu0 %v1323
    %4388 = vmatpush1.bf16.msra.mxu0 %v1322
    %4389 = vmatprep.subr.bf16.mxu0 %v1315
    %4390 = vmatpush1.bf16.msra.mxu0 %v1314
    %4391 = vmatprep.subr.bf16.mxu0 %v1307
    %4392 = vmatpush1.bf16.msra.mxu0 %v1306
    %4393 = vmatprep.subr.bf16.mxu0 %v1299
    %4394 = vmatpush1.bf16.msra.mxu0 %v1298
    %4395 = vmatprep.subr.bf16.mxu0 0
    %4396 = vmatpush2.bf16.msra.mxu0 0
    %4397 = vmatprep.subr.bf16.mxu0 0
    %4398 = vmatpush2.bf16.msra.mxu0 0
    %4399 = vmatprep.subr.bf16.mxu0 0
    %4400 = vmatpush2.bf16.msra.mxu0 0
    %4401 = vmatprep.subr.bf16.mxu0 0
    %4402 = vmatpush2.bf16.msra.mxu0 0
    %4403 = vmatprep.subr.bf16.mxu0 0
    %4404 = vmatpush2.bf16.msra.mxu0 0
    %4405 = vmatprep.subr.bf16.mxu0 0
    %4406 = vmatpush2.bf16.msra.mxu0 0
    %4407 = vmatprep.subr.bf16.mxu0 0
    %4408 = vmatpush2.bf16.msra.mxu0 0
    %4409 = vmatprep.subr.bf16.mxu0 0
    %4410 = vmatpush2.bf16.msra.mxu0 0
    %4411 = vmatprep.mubr.bf16.mxu0 0
    %4412 = vmatmul.mubr.bf16.gmra.mxu0 %v4378
    %v4413 = vpop.f32.mrf.mxu0
    %v4414 = vadd.f32 %v1069, %v4413
    %v4415 = vpop.f32.mrf.mxu0
    %v4416 = vadd.f32 %v1073, %v4415
    %v4417 = vpop.f32.mrf.mxu0
    %v4418 = vpop.f32.mrf.mxu0
    %4419 = vdwg.mxu0
    %4420 = vmatprep.subr.bf16.mxu0 %v1357
    %4421 = vmatpush1.bf16.msra.mxu0 %v1356
    %4422 = vmatprep.subr.bf16.mxu0 %v1349
    %4423 = vmatpush1.bf16.msra.mxu0 %v1348
    %4424 = vmatprep.subr.bf16.mxu0 %v1341
    %4425 = vmatpush1.bf16.msra.mxu0 %v1340
    %4426 = vmatprep.subr.bf16.mxu0 %v1333
    %4427 = vmatpush1.bf16.msra.mxu0 %v1332
    %4428 = vmatprep.subr.bf16.mxu0 %v1325
    %4429 = vmatpush1.bf16.msra.mxu0 %v1324
    %4430 = vmatprep.subr.bf16.mxu0 %v1317
    %4431 = vmatpush1.bf16.msra.mxu0 %v1316
    %4432 = vmatprep.subr.bf16.mxu0 %v1309
    %4433 = vmatpush1.bf16.msra.mxu0 %v1308
    %4434 = vmatprep.subr.bf16.mxu0 %v1301
    %4435 = vmatpush1.bf16.msra.mxu0 %v1300
    %4436 = vmatprep.subr.bf16.mxu0 0
    %4437 = vmatpush2.bf16.msra.mxu0 0
    %4438 = vmatprep.subr.bf16.mxu0 0
    %4439 = vmatpush2.bf16.msra.mxu0 0
    %4440 = vmatprep.subr.bf16.mxu0 0
    %4441 = vmatpush2.bf16.msra.mxu0 0
    %4442 = vmatprep.subr.bf16.mxu0 0
    %4443 = vmatpush2.bf16.msra.mxu0 0
    %4444 = vmatprep.subr.bf16.mxu0 0
    %4445 = vmatpush2.bf16.msra.mxu0 0
    %4446 = vmatprep.subr.bf16.mxu0 0
    %4447 = vmatpush2.bf16.msra.mxu0 0
    %4448 = vmatprep.subr.bf16.mxu0 0
    %4449 = vmatpush2.bf16.msra.mxu0 0
    %4450 = vmatprep.subr.bf16.mxu0 0
    %4451 = vmatpush2.bf16.msra.mxu0 0
    %4452 = vmatprep.mubr.bf16.mxu0 0
    %4453 = vmatmul.mubr.bf16.gmra.mxu0 %v4378
    %v4454 = vpop.f32.mrf.mxu0
    %v4455 = vadd.f32 %v1077, %v4454
    %v4456 = vpop.f32.mrf.mxu0
    %v4457 = vadd.f32 %v1081, %v4456
    %v4458 = vpop.f32.mrf.mxu0
    %v4459 = vpop.f32.mrf.mxu0
    %4460 = vdwg.mxu0
    %4461 = vmatprep.subr.bf16.mxu0 %v1359
    %4462 = vmatpush1.bf16.msra.mxu0 %v1358
    %4463 = vmatprep.subr.bf16.mxu0 %v1351
    %4464 = vmatpush1.bf16.msra.mxu0 %v1350
    %4465 = vmatprep.subr.bf16.mxu0 %v1343
    %4466 = vmatpush1.bf16.msra.mxu0 %v1342
    %4467 = vmatprep.subr.bf16.mxu0 %v1335
    %4468 = vmatpush1.bf16.msra.mxu0 %v1334
    %4469 = vmatprep.subr.bf16.mxu0 %v1327
    %4470 = vmatpush1.bf16.msra.mxu0 %v1326
    %4471 = vmatprep.subr.bf16.mxu0 %v1319
    %4472 = vmatpush1.bf16.msra.mxu0 %v1318
    %4473 = vmatprep.subr.bf16.mxu0 %v1311
    %4474 = vmatpush1.bf16.msra.mxu0 %v1310
    %4475 = vmatprep.subr.bf16.mxu0 %v1303
    %4476 = vmatpush1.bf16.msra.mxu0 %v1302
    %4477 = vmatprep.subr.bf16.mxu0 0
    %4478 = vmatpush2.bf16.msra.mxu0 0
    %4479 = vmatprep.subr.bf16.mxu0 0
    %4480 = vmatpush2.bf16.msra.mxu0 0
    %4481 = vmatprep.subr.bf16.mxu0 0
    %4482 = vmatpush2.bf16.msra.mxu0 0
    %4483 = vmatprep.subr.bf16.mxu0 0
    %4484 = vmatpush2.bf16.msra.mxu0 0
    %4485 = vmatprep.subr.bf16.mxu0 0
    %4486 = vmatpush2.bf16.msra.mxu0 0
    %4487 = vmatprep.subr.bf16.mxu0 0
    %4488 = vmatpush2.bf16.msra.mxu0 0
    %4489 = vmatprep.subr.bf16.mxu0 0
    %4490 = vmatpush2.bf16.msra.mxu0 0
    %4491 = vmatprep.subr.bf16.mxu0 0
    %4492 = vmatpush2.bf16.msra.mxu0 0
    %4493 = vmatprep.mubr.bf16.mxu0 0
    %4494 = vmatmul.mubr.bf16.gmra.mxu0 %v4378
    %v4495 = vpop.f32.mrf.mxu0
    %v4496 = vadd.f32 %v1085, %v4495
    %v4497 = vpop.f32.mrf.mxu0
    %v4498 = vadd.f32 %v1089, %v4497
    %v4499 = vpop.f32.mrf.mxu0
    %v4500 = vpop.f32.mrf.mxu0
    %4501 = vdwg.mxu0
    %4502 = vmatprep.subr.bf16.mxu0 %v1361
    %4503 = vmatpush1.bf16.msra.mxu0 %v1360
    %4504 = vmatprep.subr.bf16.mxu0 %v1353
    %4505 = vmatpush1.bf16.msra.mxu0 %v1352
    %4506 = vmatprep.subr.bf16.mxu0 %v1345
    %4507 = vmatpush1.bf16.msra.mxu0 %v1344
    %4508 = vmatprep.subr.bf16.mxu0 %v1337
    %4509 = vmatpush1.bf16.msra.mxu0 %v1336
    %4510 = vmatprep.subr.bf16.mxu0 %v1329
    %4511 = vmatpush1.bf16.msra.mxu0 %v1328
    %4512 = vmatprep.subr.bf16.mxu0 %v1321
    %4513 = vmatpush1.bf16.msra.mxu0 %v1320
    %4514 = vmatprep.subr.bf16.mxu0 %v1313
    %4515 = vmatpush1.bf16.msra.mxu0 %v1312
    %4516 = vmatprep.subr.bf16.mxu0 %v1305
    %4517 = vmatpush1.bf16.msra.mxu0 %v1304
    %4518 = vmatprep.subr.bf16.mxu0 0
    %4519 = vmatpush2.bf16.msra.mxu0 0
    %4520 = vmatprep.subr.bf16.mxu0 0
    %4521 = vmatpush2.bf16.msra.mxu0 0
    %4522 = vmatprep.subr.bf16.mxu0 0
    %4523 = vmatpush2.bf16.msra.mxu0 0
    %4524 = vmatprep.subr.bf16.mxu0 0
    %4525 = vmatpush2.bf16.msra.mxu0 0
    %4526 = vmatprep.subr.bf16.mxu0 0
    %4527 = vmatpush2.bf16.msra.mxu0 0
    %4528 = vmatprep.subr.bf16.mxu0 0
    %4529 = vmatpush2.bf16.msra.mxu0 0
    %4530 = vmatprep.subr.bf16.mxu0 0
    %4531 = vmatpush2.bf16.msra.mxu0 0
    %4532 = vmatprep.subr.bf16.mxu0 0
    %4533 = vmatpush2.bf16.msra.mxu0 0
    %4534 = vmatprep.mubr.bf16.mxu0 0
    %4535 = vmatmul.mubr.bf16.gmra.mxu0 %v4378
    %v4536 = vpop.f32.mrf.mxu0
    %v4537 = vadd.f32 %v1093, %v4536
    %v4538 = vpop.f32.mrf.mxu0
    %v4539 = vadd.f32 %v1097, %v4538
    %v4540 = vpop.f32.mrf.mxu0
    %v4541 = vpop.f32.mrf.mxu0
    %4542 = vdwg.mxu0
    %v4543 = vsel %vm973, %v4414, %v4496
    %v4544 = vsel %vm973, %v4416, %v4498
    %v4545 = vsel %vm973, %v4455, %v4537
    %v4546 = vsel %vm973, %v4457, %v4539
    %s4547 = smul.u32 4, 16
    %s4548 = smul.u32 %s4547, 8
    %s4549 = sshll.u32 %s4548, 4
    %4550 = dma.done [#allocation3], %s4549
    %v4551 = vxor.u32 %v1590, 2147483648
    %v4552 = vxor.u32 %v1591, 2147483648
    %v4553 = vxor.u32 %v1592, 2147483648
    %v4554 = vmul.f32 %v4551, 1.442695
    %v4555 = vpow.pop %v4554
    %v4556 = vmul.f32 %v4552, 1.442695
    %v4557 = vpow.pop %v4556
    %v4558 = vmul.f32 %v4553, 1.442695
    %v4559 = vpow.pop %v4558
    %v4560 = vadd.f32 %v4555, 1.0
    %v4561 = vadd.f32 %v4557, 1.0
    %v4562 = vadd.f32 %v4559, 1.0
    %v4563 = vrcp.pop %v4560
    %v4564 = vmul.f32 1.0, %v4563
    %v4565 = vrcp.pop %v4561
    %v4566 = vmul.f32 1.0, %v4565
    %v4567 = vrcp.pop %v4562
    %v4568 = vmul.f32 1.0, %v4567
    %v4569 = vtanh.pop %v1593
    %v4570 = vmul.f32 %v4566, 0.0
    %v4571 = vmul.f32 %v4564, %v4569
    %v4572 = vadd.f32 %v4570, %v4571
    %v4573 = vtanh.pop %v4572
    %v4574 = vmul.f32 %v4568, %v4573
    %v4575 = vpack.c.bf16 %v4574, %v4574
    %v4576 = vld [vmem:[#allocation2] sm:$0xff]
    %v4577 = vld [vmem:[#allocation2 + $0x8] sm:$0xff]
    %v4578 = vld [vmem:[#allocation2 + $0x10] sm:$0xff]
    %v4579 = vld [vmem:[#allocation2 + $0x18] sm:$0xff]
    %v4580 = vld [vmem:[#allocation2 + $0x20] sm:$0xff]
    %v4581 = vld [vmem:[#allocation2 + $0x28] sm:$0xff]
    %v4582 = vld [vmem:[#allocation2 + $0x30] sm:$0xff]
    %v4583 = vld [vmem:[#allocation2 + $0x38] sm:$0xff]
    %v4584 = vld [vmem:[#allocation2 + $0x40] sm:$0xff]
    %v4585 = vld [vmem:[#allocation2 + $0x48] sm:$0xff]
    %v4586 = vld [vmem:[#allocation2 + $0x50] sm:$0xff]
    %v4587 = vld [vmem:[#allocation2 + $0x58] sm:$0xff]
    %v4588 = vld [vmem:[#allocation2 + $0x60] sm:$0xff]
    %v4589 = vld [vmem:[#allocation2 + $0x68] sm:$0xff]
    %v4590 = vld [vmem:[#allocation2 + $0x70] sm:$0xff]
    %v4591 = vld [vmem:[#allocation2 + $0x78] sm:$0xff]
    %v4592 = vld [vmem:[#allocation2 + $0x80] sm:$0xff]
    %v4593 = vld [vmem:[#allocation2 + $0x88] sm:$0xff]
    %v4594 = vld [vmem:[#allocation2 + $0x90] sm:$0xff]
    %v4595 = vld [vmem:[#allocation2 + $0x98] sm:$0xff]
    %v4596 = vld [vmem:[#allocation2 + $0xa0] sm:$0xff]
    %v4597 = vld [vmem:[#allocation2 + $0xa8] sm:$0xff]
    %v4598 = vld [vmem:[#allocation2 + $0xb0] sm:$0xff]
    %v4599 = vld [vmem:[#allocation2 + $0xb8] sm:$0xff]
    %v4600 = vld [vmem:[#allocation2 + $0xc0] sm:$0xff]
    %v4601 = vld [vmem:[#allocation2 + $0xc8] sm:$0xff]
    %v4602 = vld [vmem:[#allocation2 + $0xd0] sm:$0xff]
    %v4603 = vld [vmem:[#allocation2 + $0xd8] sm:$0xff]
    %v4604 = vld [vmem:[#allocation2 + $0xe0] sm:$0xff]
    %v4605 = vld [vmem:[#allocation2 + $0xe8] sm:$0xff]
    %v4606 = vld [vmem:[#allocation2 + $0xf0] sm:$0xff]
    %v4607 = vld [vmem:[#allocation2 + $0xf8] sm:$0xff]
    %v4608 = vld [vmem:[#allocation2 + $0x100] sm:$0xff]
    %v4609 = vld [vmem:[#allocation2 + $0x108] sm:$0xff]
    %v4610 = vld [vmem:[#allocation2 + $0x110] sm:$0xff]
    %v4611 = vld [vmem:[#allocation2 + $0x118] sm:$0xff]
    %v4612 = vld [vmem:[#allocation2 + $0x120] sm:$0xff]
    %v4613 = vld [vmem:[#allocation2 + $0x128] sm:$0xff]
    %v4614 = vld [vmem:[#allocation2 + $0x130] sm:$0xff]
    %v4615 = vld [vmem:[#allocation2 + $0x138] sm:$0xff]
    %v4616 = vld [vmem:[#allocation2 + $0x140] sm:$0xff]
    %v4617 = vld [vmem:[#allocation2 + $0x148] sm:$0xff]
    %v4618 = vld [vmem:[#allocation2 + $0x150] sm:$0xff]
    %v4619 = vld [vmem:[#allocation2 + $0x158] sm:$0xff]
    %v4620 = vld [vmem:[#allocation2 + $0x160] sm:$0xff]
    %v4621 = vld [vmem:[#allocation2 + $0x168] sm:$0xff]
    %v4622 = vld [vmem:[#allocation2 + $0x170] sm:$0xff]
    %v4623 = vld [vmem:[#allocation2 + $0x178] sm:$0xff]
    %v4624 = vld [vmem:[#allocation2 + $0x180] sm:$0xff]
    %v4625 = vld [vmem:[#allocation2 + $0x188] sm:$0xff]
    %v4626 = vld [vmem:[#allocation2 + $0x190] sm:$0xff]
    %v4627 = vld [vmem:[#allocation2 + $0x198] sm:$0xff]
    %v4628 = vld [vmem:[#allocation2 + $0x1a0] sm:$0xff]
    %v4629 = vld [vmem:[#allocation2 + $0x1a8] sm:$0xff]
    %v4630 = vld [vmem:[#allocation2 + $0x1b0] sm:$0xff]
    %v4631 = vld [vmem:[#allocation2 + $0x1b8] sm:$0xff]
    %v4632 = vld [vmem:[#allocation2 + $0x1c0] sm:$0xff]
    %v4633 = vld [vmem:[#allocation2 + $0x1c8] sm:$0xff]
    %v4634 = vld [vmem:[#allocation2 + $0x1d0] sm:$0xff]
    %v4635 = vld [vmem:[#allocation2 + $0x1d8] sm:$0xff]
    %v4636 = vld [vmem:[#allocation2 + $0x1e0] sm:$0xff]
    %v4637 = vld [vmem:[#allocation2 + $0x1e8] sm:$0xff]
    %v4638 = vld [vmem:[#allocation2 + $0x1f0] sm:$0xff]
    %v4639 = vld [vmem:[#allocation2 + $0x1f8] sm:$0xff]
    %v4704 = vunpack.c.l.b16 %v4576
    %v4705 = vunpack.c.h.b16 %v4576
    %v4706 = vunpack.c.l.b16 %v4577
    %v4707 = vunpack.c.h.b16 %v4577
    %v4708 = vunpack.c.l.b16 %v4578
    %v4709 = vunpack.c.h.b16 %v4578
    %v4710 = vunpack.c.l.b16 %v4579
    %v4711 = vunpack.c.h.b16 %v4579
    %v4712 = vunpack.c.l.b16 %v4580
    %v4713 = vunpack.c.h.b16 %v4580
    %v4714 = vunpack.c.l.b16 %v4581
    %v4715 = vunpack.c.h.b16 %v4581
    %v4716 = vunpack.c.l.b16 %v4582
    %v4717 = vunpack.c.h.b16 %v4582
    %v4718 = vunpack.c.l.b16 %v4583
    %v4719 = vunpack.c.h.b16 %v4583
    %v4720 = vunpack.c.l.b16 %v4584
    %v4721 = vunpack.c.h.b16 %v4584
    %v4722 = vunpack.c.l.b16 %v4585
    %v4723 = vunpack.c.h.b16 %v4585
    %v4724 = vunpack.c.l.b16 %v4586
    %v4725 = vunpack.c.h.b16 %v4586
    %v4726 = vunpack.c.l.b16 %v4587
    %v4727 = vunpack.c.h.b16 %v4587
    %v4728 = vunpack.c.l.b16 %v4588
    %v4729 = vunpack.c.h.b16 %v4588
    %v4730 = vunpack.c.l.b16 %v4589
    %v4731 = vunpack.c.h.b16 %v4589
    %v4732 = vunpack.c.l.b16 %v4590
    %v4733 = vunpack.c.h.b16 %v4590
    %v4734 = vunpack.c.l.b16 %v4591
    %v4735 = vunpack.c.h.b16 %v4591
    %v4736 = vunpack.c.l.b16 %v4592
    %v4737 = vunpack.c.h.b16 %v4592
    %v4738 = vunpack.c.l.b16 %v4593
    %v4739 = vunpack.c.h.b16 %v4593
    %v4740 = vunpack.c.l.b16 %v4594
    %v4741 = vunpack.c.h.b16 %v4594
    %v4742 = vunpack.c.l.b16 %v4595
    %v4743 = vunpack.c.h.b16 %v4595
    %v4744 = vunpack.c.l.b16 %v4596
    %v4745 = vunpack.c.h.b16 %v4596
    %v4746 = vunpack.c.l.b16 %v4597
    %v4747 = vunpack.c.h.b16 %v4597
    %v4748 = vunpack.c.l.b16 %v4598
    %v4749 = vunpack.c.h.b16 %v4598
    %v4750 = vunpack.c.l.b16 %v4599
    %v4751 = vunpack.c.h.b16 %v4599
    %v4752 = vunpack.c.l.b16 %v4600
    %v4753 = vunpack.c.h.b16 %v4600
    %v4754 = vunpack.c.l.b16 %v4601
    %v4755 = vunpack.c.h.b16 %v4601
    %v4756 = vunpack.c.l.b16 %v4602
    %v4757 = vunpack.c.h.b16 %v4602
    %v4758 = vunpack.c.l.b16 %v4603
    %v4759 = vunpack.c.h.b16 %v4603
    %v4760 = vunpack.c.l.b16 %v4604
    %v4761 = vunpack.c.h.b16 %v4604
    %v4762 = vunpack.c.l.b16 %v4605
    %v4763 = vunpack.c.h.b16 %v4605
    %v4764 = vunpack.c.l.b16 %v4606
    %v4765 = vunpack.c.h.b16 %v4606
    %v4766 = vunpack.c.l.b16 %v4607
    %v4767 = vunpack.c.h.b16 %v4607
    %v4768 = vunpack.c.l.b16 %v4608
    %v4769 = vunpack.c.h.b16 %v4608
    %v4770 = vunpack.c.l.b16 %v4609
    %v4771 = vunpack.c.h.b16 %v4609
    %v4772 = vunpack.c.l.b16 %v4610
    %v4773 = vunpack.c.h.b16 %v4610
    %v4774 = vunpack.c.l.b16 %v4611
    %v4775 = vunpack.c.h.b16 %v4611
    %v4776 = vunpack.c.l.b16 %v4612
    %v4777 = vunpack.c.h.b16 %v4612
    %v4778 = vunpack.c.l.b16 %v4613
    %v4779 = vunpack.c.h.b16 %v4613
    %v4780 = vunpack.c.l.b16 %v4614
    %v4781 = vunpack.c.h.b16 %v4614
    %v4782 = vunpack.c.l.b16 %v4615
    %v4783 = vunpack.c.h.b16 %v4615
    %v4784 = vunpack.c.l.b16 %v4616
    %v4785 = vunpack.c.h.b16 %v4616
    %v4786 = vunpack.c.l.b16 %v4617
    %v4787 = vunpack.c.h.b16 %v4617
    %v4788 = vunpack.c.l.b16 %v4618
    %v4789 = vunpack.c.h.b16 %v4618
    %v4790 = vunpack.c.l.b16 %v4619
    %v4791 = vunpack.c.h.b16 %v4619
    %v4792 = vunpack.c.l.b16 %v4620
    %v4793 = vunpack.c.h.b16 %v4620
    %v4794 = vunpack.c.l.b16 %v4621
    %v4795 = vunpack.c.h.b16 %v4621
    %v4796 = vunpack.c.l.b16 %v4622
    %v4797 = vunpack.c.h.b16 %v4622
    %v4798 = vunpack.c.l.b16 %v4623
    %v4799 = vunpack.c.h.b16 %v4623
    %v4800 = vunpack.c.l.b16 %v4624
    %v4801 = vunpack.c.h.b16 %v4624
    %v4802 = vunpack.c.l.b16 %v4625
    %v4803 = vunpack.c.h.b16 %v4625
    %v4804 = vunpack.c.l.b16 %v4626
    %v4805 = vunpack.c.h.b16 %v4626
    %v4806 = vunpack.c.l.b16 %v4627
    %v4807 = vunpack.c.h.b16 %v4627
    %v4808 = vunpack.c.l.b16 %v4628
    %v4809 = vunpack.c.h.b16 %v4628
    %v4810 = vunpack.c.l.b16 %v4629
    %v4811 = vunpack.c.h.b16 %v4629
    %v4812 = vunpack.c.l.b16 %v4630
    %v4813 = vunpack.c.h.b16 %v4630
    %v4814 = vunpack.c.l.b16 %v4631
    %v4815 = vunpack.c.h.b16 %v4631
    %v4816 = vunpack.c.l.b16 %v4632
    %v4817 = vunpack.c.h.b16 %v4632
    %v4818 = vunpack.c.l.b16 %v4633
    %v4819 = vunpack.c.h.b16 %v4633
    %v4820 = vunpack.c.l.b16 %v4634
    %v4821 = vunpack.c.h.b16 %v4634
    %v4822 = vunpack.c.l.b16 %v4635
    %v4823 = vunpack.c.h.b16 %v4635
    %v4824 = vunpack.c.l.b16 %v4636
    %v4825 = vunpack.c.h.b16 %v4636
    %v4826 = vunpack.c.l.b16 %v4637
    %v4827 = vunpack.c.h.b16 %v4637
    %v4828 = vunpack.c.l.b16 %v4638
    %v4829 = vunpack.c.h.b16 %v4638
    %v4830 = vunpack.c.l.b16 %v4639
    %v4831 = vunpack.c.h.b16 %v4639
    %v4832 = vpack.c.b16 %v4712, %v4704
    %v4833 = vpack.c.b16 %v4713, %v4705
    %v4834 = vpack.c.b16 %v4714, %v4706
    %v4835 = vpack.c.b16 %v4715, %v4707
    %v4836 = vpack.c.b16 %v4716, %v4708
    %v4837 = vpack.c.b16 %v4717, %v4709
    %v4838 = vpack.c.b16 %v4718, %v4710
    %v4839 = vpack.c.b16 %v4719, %v4711
    %v4840 = vpack.c.b16 %v4728, %v4720
    %v4841 = vpack.c.b16 %v4729, %v4721
    %v4842 = vpack.c.b16 %v4730, %v4722
    %v4843 = vpack.c.b16 %v4731, %v4723
    %v4844 = vpack.c.b16 %v4732, %v4724
    %v4845 = vpack.c.b16 %v4733, %v4725
    %v4846 = vpack.c.b16 %v4734, %v4726
    %v4847 = vpack.c.b16 %v4735, %v4727
    %v4848 = vpack.c.b16 %v4744, %v4736
    %v4849 = vpack.c.b16 %v4745, %v4737
    %v4850 = vpack.c.b16 %v4746, %v4738
    %v4851 = vpack.c.b16 %v4747, %v4739
    %v4852 = vpack.c.b16 %v4748, %v4740
    %v4853 = vpack.c.b16 %v4749, %v4741
    %v4854 = vpack.c.b16 %v4750, %v4742
    %v4855 = vpack.c.b16 %v4751, %v4743
    %v4856 = vpack.c.b16 %v4760, %v4752
    %v4857 = vpack.c.b16 %v4761, %v4753
    %v4858 = vpack.c.b16 %v4762, %v4754
    %v4859 = vpack.c.b16 %v4763, %v4755
    %v4860 = vpack.c.b16 %v4764, %v4756
    %v4861 = vpack.c.b16 %v4765, %v4757
    %v4862 = vpack.c.b16 %v4766, %v4758
    %v4863 = vpack.c.b16 %v4767, %v4759
    %v4864 = vpack.c.b16 %v4776, %v4768
    %v4865 = vpack.c.b16 %v4777, %v4769
    %v4866 = vpack.c.b16 %v4778, %v4770
    %v4867 = vpack.c.b16 %v4779, %v4771
    %v4868 = vpack.c.b16 %v4780, %v4772
    %v4869 = vpack.c.b16 %v4781, %v4773
    %v4870 = vpack.c.b16 %v4782, %v4774
    %v4871 = vpack.c.b16 %v4783, %v4775
    %v4872 = vpack.c.b16 %v4792, %v4784
    %v4873 = vpack.c.b16 %v4793, %v4785
    %v4874 = vpack.c.b16 %v4794, %v4786
    %v4875 = vpack.c.b16 %v4795, %v4787
    %v4876 = vpack.c.b16 %v4796, %v4788
    %v4877 = vpack.c.b16 %v4797, %v4789
    %v4878 = vpack.c.b16 %v4798, %v4790
    %v4879 = vpack.c.b16 %v4799, %v4791
    %v4880 = vpack.c.b16 %v4808, %v4800
    %v4881 = vpack.c.b16 %v4809, %v4801
    %v4882 = vpack.c.b16 %v4810, %v4802
    %v4883 = vpack.c.b16 %v4811, %v4803
    %v4884 = vpack.c.b16 %v4812, %v4804
    %v4885 = vpack.c.b16 %v4813, %v4805
    %v4886 = vpack.c.b16 %v4814, %v4806
    %v4887 = vpack.c.b16 %v4815, %v4807
    %v4888 = vpack.c.b16 %v4824, %v4816
    %v4889 = vpack.c.b16 %v4825, %v4817
    %v4890 = vpack.c.b16 %v4826, %v4818
    %v4891 = vpack.c.b16 %v4827, %v4819
    %v4892 = vpack.c.b16 %v4828, %v4820
    %v4893 = vpack.c.b16 %v4829, %v4821
    %v4894 = vpack.c.b16 %v4830, %v4822
    %v4895 = vpack.c.b16 %v4831, %v4823
    %4960 = vmatprep.subr.bf16.mxu0 %v4889
    %4961 = vmatpush1.bf16.msra.mxu0 %v4888
    %4962 = vmatprep.subr.bf16.mxu0 %v4881
    %4963 = vmatpush1.bf16.msra.mxu0 %v4880
    %4964 = vmatprep.subr.bf16.mxu0 %v4873
    %4965 = vmatpush1.bf16.msra.mxu0 %v4872
    %4966 = vmatprep.subr.bf16.mxu0 %v4865
    %4967 = vmatpush1.bf16.msra.mxu0 %v4864
    %4968 = vmatprep.subr.bf16.mxu0 %v4857
    %4969 = vmatpush1.bf16.msra.mxu0 %v4856
    %4970 = vmatprep.subr.bf16.mxu0 %v4849
    %4971 = vmatpush1.bf16.msra.mxu0 %v4848
    %4972 = vmatprep.subr.bf16.mxu0 %v4841
    %4973 = vmatpush1.bf16.msra.mxu0 %v4840
    %4974 = vmatprep.subr.bf16.mxu0 %v4833
    %4975 = vmatpush1.bf16.msra.mxu0 %v4832
    %4976 = vmatprep.subr.bf16.mxu0 0
    %4977 = vmatpush2.bf16.msra.mxu0 0
    %4978 = vmatprep.subr.bf16.mxu0 0
    %4979 = vmatpush2.bf16.msra.mxu0 0
    %4980 = vmatprep.subr.bf16.mxu0 0
    %4981 = vmatpush2.bf16.msra.mxu0 0
    %4982 = vmatprep.subr.bf16.mxu0 0
    %4983 = vmatpush2.bf16.msra.mxu0 0
    %4984 = vmatprep.subr.bf16.mxu0 0
    %4985 = vmatpush2.bf16.msra.mxu0 0
    %4986 = vmatprep.subr.bf16.mxu0 0
    %4987 = vmatpush2.bf16.msra.mxu0 0
    %4988 = vmatprep.subr.bf16.mxu0 0
    %4989 = vmatpush2.bf16.msra.mxu0 0
    %4990 = vmatprep.subr.bf16.mxu0 0
    %4991 = vmatpush2.bf16.msra.mxu0 0
    %4992 = vmatprep.mubr.bf16.mxu0 0
    %4993 = vmatmul.mubr.bf16.gmra.mxu0 %v4575
    %v4994 = vpop.f32.mrf.mxu0
    %v4995 = vadd.f32 0.0, %v4994
    %v4996 = vpop.f32.mrf.mxu0
    %v4997 = vadd.f32 0.0, %v4996
    %v4998 = vpop.f32.mrf.mxu0
    %v4999 = vpop.f32.mrf.mxu0
    %5000 = vdwg.mxu0
    %5001 = vmatprep.subr.bf16.mxu0 %v4891
    %5002 = vmatpush1.bf16.msra.mxu0 %v4890
    %5003 = vmatprep.subr.bf16.mxu0 %v4883
    %5004 = vmatpush1.bf16.msra.mxu0 %v4882
    %5005 = vmatprep.subr.bf16.mxu0 %v4875
    %5006 = vmatpush1.bf16.msra.mxu0 %v4874
    %5007 = vmatprep.subr.bf16.mxu0 %v4867
    %5008 = vmatpush1.bf16.msra.mxu0 %v4866
    %5009 = vmatprep.subr.bf16.mxu0 %v4859
    %5010 = vmatpush1.bf16.msra.mxu0 %v4858
    %5011 = vmatprep.subr.bf16.mxu0 %v4851
    %5012 = vmatpush1.bf16.msra.mxu0 %v4850
    %5013 = vmatprep.subr.bf16.mxu0 %v4843
    %5014 = vmatpush1.bf16.msra.mxu0 %v4842
    %5015 = vmatprep.subr.bf16.mxu0 %v4835
    %5016 = vmatpush1.bf16.msra.mxu0 %v4834
    %5017 = vmatprep.subr.bf16.mxu0 0
    %5018 = vmatpush2.bf16.msra.mxu0 0
    %5019 = vmatprep.subr.bf16.mxu0 0
    %5020 = vmatpush2.bf16.msra.mxu0 0
    %5021 = vmatprep.subr.bf16.mxu0 0
    %5022 = vmatpush2.bf16.msra.mxu0 0
    %5023 = vmatprep.subr.bf16.mxu0 0
    %5024 = vmatpush2.bf16.msra.mxu0 0
    %5025 = vmatprep.subr.bf16.mxu0 0
    %5026 = vmatpush2.bf16.msra.mxu0 0
    %5027 = vmatprep.subr.bf16.mxu0 0
    %5028 = vmatpush2.bf16.msra.mxu0 0
    %5029 = vmatprep.subr.bf16.mxu0 0
    %5030 = vmatpush2.bf16.msra.mxu0 0
    %5031 = vmatprep.subr.bf16.mxu0 0
    %5032 = vmatpush2.bf16.msra.mxu0 0
    %5033 = vmatprep.mubr.bf16.mxu0 0
    %5034 = vmatmul.mubr.bf16.gmra.mxu0 %v4575
    %v5035 = vpop.f32.mrf.mxu0
    %v5036 = vadd.f32 0.0, %v5035
    %v5037 = vpop.f32.mrf.mxu0
    %v5038 = vadd.f32 0.0, %v5037
    %v5039 = vpop.f32.mrf.mxu0
    %v5040 = vpop.f32.mrf.mxu0
    %5041 = vdwg.mxu0
    %5042 = vmatprep.subr.bf16.mxu0 %v4893
    %5043 = vmatpush1.bf16.msra.mxu0 %v4892
    %5044 = vmatprep.subr.bf16.mxu0 %v4885
    %5045 = vmatpush1.bf16.msra.mxu0 %v4884
    %5046 = vmatprep.subr.bf16.mxu0 %v4877
    %5047 = vmatpush1.bf16.msra.mxu0 %v4876
    %5048 = vmatprep.subr.bf16.mxu0 %v4869
    %5049 = vmatpush1.bf16.msra.mxu0 %v4868
    %5050 = vmatprep.subr.bf16.mxu0 %v4861
    %5051 = vmatpush1.bf16.msra.mxu0 %v4860
    %5052 = vmatprep.subr.bf16.mxu0 %v4853
    %5053 = vmatpush1.bf16.msra.mxu0 %v4852
    %5054 = vmatprep.subr.bf16.mxu0 %v4845
    %5055 = vmatpush1.bf16.msra.mxu0 %v4844
    %5056 = vmatprep.subr.bf16.mxu0 %v4837
    %5057 = vmatpush1.bf16.msra.mxu0 %v4836
    %5058 = vmatprep.subr.bf16.mxu0 0
    %5059 = vmatpush2.bf16.msra.mxu0 0
    %5060 = vmatprep.subr.bf16.mxu0 0
    %5061 = vmatpush2.bf16.msra.mxu0 0
    %5062 = vmatprep.subr.bf16.mxu0 0
    %5063 = vmatpush2.bf16.msra.mxu0 0
    %5064 = vmatprep.subr.bf16.mxu0 0
    %5065 = vmatpush2.bf16.msra.mxu0 0
    %5066 = vmatprep.subr.bf16.mxu0 0
    %5067 = vmatpush2.bf16.msra.mxu0 0
    %5068 = vmatprep.subr.bf16.mxu0 0
    %5069 = vmatpush2.bf16.msra.mxu0 0
    %5070 = vmatprep.subr.bf16.mxu0 0
    %5071 = vmatpush2.bf16.msra.mxu0 0
    %5072 = vmatprep.subr.bf16.mxu0 0
    %5073 = vmatpush2.bf16.msra.mxu0 0
    %5074 = vmatprep.mubr.bf16.mxu0 0
    %5075 = vmatmul.mubr.bf16.gmra.mxu0 %v4575
    %v5076 = vpop.f32.mrf.mxu0
    %v5077 = vadd.f32 0.0, %v5076
    %v5078 = vpop.f32.mrf.mxu0
    %v5079 = vadd.f32 0.0, %v5078
    %v5080 = vpop.f32.mrf.mxu0
    %v5081 = vpop.f32.mrf.mxu0
    %5082 = vdwg.mxu0
    %5083 = vmatprep.subr.bf16.mxu0 %v4895
    %5084 = vmatpush1.bf16.msra.mxu0 %v4894
    %5085 = vmatprep.subr.bf16.mxu0 %v4887
    %5086 = vmatpush1.bf16.msra.mxu0 %v4886
    %5087 = vmatprep.subr.bf16.mxu0 %v4879
    %5088 = vmatpush1.bf16.msra.mxu0 %v4878
    %5089 = vmatprep.subr.bf16.mxu0 %v4871
    %5090 = vmatpush1.bf16.msra.mxu0 %v4870
    %5091 = vmatprep.subr.bf16.mxu0 %v4863
    %5092 = vmatpush1.bf16.msra.mxu0 %v4862
    %5093 = vmatprep.subr.bf16.mxu0 %v4855
    %5094 = vmatpush1.bf16.msra.mxu0 %v4854
    %5095 = vmatprep.subr.bf16.mxu0 %v4847
    %5096 = vmatpush1.bf16.msra.mxu0 %v4846
    %5097 = vmatprep.subr.bf16.mxu0 %v4839
    %5098 = vmatpush1.bf16.msra.mxu0 %v4838
    %5099 = vmatprep.subr.bf16.mxu0 0
    %5100 = vmatpush2.bf16.msra.mxu0 0
    %5101 = vmatprep.subr.bf16.mxu0 0
    %5102 = vmatpush2.bf16.msra.mxu0 0
    %5103 = vmatprep.subr.bf16.mxu0 0
    %5104 = vmatpush2.bf16.msra.mxu0 0
    %5105 = vmatprep.subr.bf16.mxu0 0
    %5106 = vmatpush2.bf16.msra.mxu0 0
    %5107 = vmatprep.subr.bf16.mxu0 0
    %5108 = vmatpush2.bf16.msra.mxu0 0
    %5109 = vmatprep.subr.bf16.mxu0 0
    %5110 = vmatpush2.bf16.msra.mxu0 0
    %5111 = vmatprep.subr.bf16.mxu0 0
    %5112 = vmatpush2.bf16.msra.mxu0 0
    %5113 = vmatprep.subr.bf16.mxu0 0
    %5114 = vmatpush2.bf16.msra.mxu0 0
    %5115 = vmatprep.mubr.bf16.mxu0 0
    %5116 = vmatmul.mubr.bf16.gmra.mxu0 %v4575
    %v5117 = vpop.f32.mrf.mxu0
    %v5118 = vadd.f32 0.0, %v5117
    %v5119 = vpop.f32.mrf.mxu0
    %v5120 = vadd.f32 0.0, %v5119
    %v5121 = vpop.f32.mrf.mxu0
    %v5122 = vpop.f32.mrf.mxu0
    %5123 = vdwg.mxu0
    %v5124 = vsel %vm973, %v4995, %v5077
    %v5125 = vsel %vm973, %v4997, %v5079
    %v5126 = vsel %vm973, %v5036, %v5118
    %v5127 = vsel %vm973, %v5038, %v5120
    %v5128 = vadd.f32 %v2341, %v5124
    %v5129 = vadd.f32 %v2342, %v5125
    %v5130 = vadd.f32 %v2343, %v5126
    %v5131 = vadd.f32 %v2344, %v5127
    %v5132 = vxor.u32 %v5128, 2147483648
    %v5133 = vxor.u32 %v5129, 2147483648
    %v5134 = vxor.u32 %v5130, 2147483648
    %v5135 = vmul.f32 %v5132, 1.442695
    %v5136 = vpow.pop %v5135
    %v5137 = vmul.f32 %v5133, 1.442695
    %v5138 = vpow.pop %v5137
    %v5139 = vmul.f32 %v5134, 1.442695
    %v5140 = vpow.pop %v5139
    %v5141 = vadd.f32 %v5136, 1.0
    %v5142 = vadd.f32 %v5138, 1.0
    %v5143 = vadd.f32 %v5140, 1.0
    %v5144 = vrcp.pop %v5141
    %v5145 = vmul.f32 1.0, %v5144
    %v5146 = vrcp.pop %v5142
    %v5147 = vmul.f32 1.0, %v5146
    %v5148 = vrcp.pop %v5143
    %v5149 = vmul.f32 1.0, %v5148
    %v5150 = vtanh.pop %v5131
    %v5151 = vmul.f32 %v5147, %v4572
    %v5152 = vmul.f32 %v5145, %v5150
    %v5153 = vadd.f32 %v5151, %v5152
    %v5154 = vtanh.pop %v5153
    %v5155 = vmul.f32 %v5149, %v5154
    %v5156 = vpack.c.bf16 %v5155, %v5155
    %5157 = vmatprep.subr.bf16.mxu0 %v4889
    %5158 = vmatpush1.bf16.msra.mxu0 %v4888
    %5159 = vmatprep.subr.bf16.mxu0 %v4881
    %5160 = vmatpush1.bf16.msra.mxu0 %v4880
    %5161 = vmatprep.subr.bf16.mxu0 %v4873
    %5162 = vmatpush1.bf16.msra.mxu0 %v4872
    %5163 = vmatprep.subr.bf16.mxu0 %v4865
    %5164 = vmatpush1.bf16.msra.mxu0 %v4864
    %5165 = vmatprep.subr.bf16.mxu0 %v4857
    %5166 = vmatpush1.bf16.msra.mxu0 %v4856
    %5167 = vmatprep.subr.bf16.mxu0 %v4849
    %5168 = vmatpush1.bf16.msra.mxu0 %v4848
    %5169 = vmatprep.subr.bf16.mxu0 %v4841
    %5170 = vmatpush1.bf16.msra.mxu0 %v4840
    %5171 = vmatprep.subr.bf16.mxu0 %v4833
    %5172 = vmatpush1.bf16.msra.mxu0 %v4832
    %5173 = vmatprep.subr.bf16.mxu0 0
    %5174 = vmatpush2.bf16.msra.mxu0 0
    %5175 = vmatprep.subr.bf16.mxu0 0
    %5176 = vmatpush2.bf16.msra.mxu0 0
    %5177 = vmatprep.subr.bf16.mxu0 0
    %5178 = vmatpush2.bf16.msra.mxu0 0
    %5179 = vmatprep.subr.bf16.mxu0 0
    %5180 = vmatpush2.bf16.msra.mxu0 0
    %5181 = vmatprep.subr.bf16.mxu0 0
    %5182 = vmatpush2.bf16.msra.mxu0 0
    %5183 = vmatprep.subr.bf16.mxu0 0
    %5184 = vmatpush2.bf16.msra.mxu0 0
    %5185 = vmatprep.subr.bf16.mxu0 0
    %5186 = vmatpush2.bf16.msra.mxu0 0
    %5187 = vmatprep.subr.bf16.mxu0 0
    %5188 = vmatpush2.bf16.msra.mxu0 0
    %5189 = vmatprep.mubr.bf16.mxu0 0
    %5190 = vmatmul.mubr.bf16.gmra.mxu0 %v5156
    %v5191 = vpop.f32.mrf.mxu0
    %v5192 = vadd.f32 0.0, %v5191
    %v5193 = vpop.f32.mrf.mxu0
    %v5194 = vadd.f32 0.0, %v5193
    %v5195 = vpop.f32.mrf.mxu0
    %v5196 = vpop.f32.mrf.mxu0
    %5197 = vdwg.mxu0
    %5198 = vmatprep.subr.bf16.mxu0 %v4891
    %5199 = vmatpush1.bf16.msra.mxu0 %v4890
    %5200 = vmatprep.subr.bf16.mxu0 %v4883
    %5201 = vmatpush1.bf16.msra.mxu0 %v4882
    %5202 = vmatprep.subr.bf16.mxu0 %v4875
    %5203 = vmatpush1.bf16.msra.mxu0 %v4874
    %5204 = vmatprep.subr.bf16.mxu0 %v4867
    %5205 = vmatpush1.bf16.msra.mxu0 %v4866
    %5206 = vmatprep.subr.bf16.mxu0 %v4859
    %5207 = vmatpush1.bf16.msra.mxu0 %v4858
    %5208 = vmatprep.subr.bf16.mxu0 %v4851
    %5209 = vmatpush1.bf16.msra.mxu0 %v4850
    %5210 = vmatprep.subr.bf16.mxu0 %v4843
    %5211 = vmatpush1.bf16.msra.mxu0 %v4842
    %5212 = vmatprep.subr.bf16.mxu0 %v4835
    %5213 = vmatpush1.bf16.msra.mxu0 %v4834
    %5214 = vmatprep.subr.bf16.mxu0 0
    %5215 = vmatpush2.bf16.msra.mxu0 0
    %5216 = vmatprep.subr.bf16.mxu0 0
    %5217 = vmatpush2.bf16.msra.mxu0 0
    %5218 = vmatprep.subr.bf16.mxu0 0
    %5219 = vmatpush2.bf16.msra.mxu0 0
    %5220 = vmatprep.subr.bf16.mxu0 0
    %5221 = vmatpush2.bf16.msra.mxu0 0
    %5222 = vmatprep.subr.bf16.mxu0 0
    %5223 = vmatpush2.bf16.msra.mxu0 0
    %5224 = vmatprep.subr.bf16.mxu0 0
    %5225 = vmatpush2.bf16.msra.mxu0 0
    %5226 = vmatprep.subr.bf16.mxu0 0
    %5227 = vmatpush2.bf16.msra.mxu0 0
    %5228 = vmatprep.subr.bf16.mxu0 0
    %5229 = vmatpush2.bf16.msra.mxu0 0
    %5230 = vmatprep.mubr.bf16.mxu0 0
    %5231 = vmatmul.mubr.bf16.gmra.mxu0 %v5156
    %v5232 = vpop.f32.mrf.mxu0
    %v5233 = vadd.f32 0.0, %v5232
    %v5234 = vpop.f32.mrf.mxu0
    %v5235 = vadd.f32 0.0, %v5234
    %v5236 = vpop.f32.mrf.mxu0
    %v5237 = vpop.f32.mrf.mxu0
    %5238 = vdwg.mxu0
    %5239 = vmatprep.subr.bf16.mxu0 %v4893
    %5240 = vmatpush1.bf16.msra.mxu0 %v4892
    %5241 = vmatprep.subr.bf16.mxu0 %v4885
    %5242 = vmatpush1.bf16.msra.mxu0 %v4884
    %5243 = vmatprep.subr.bf16.mxu0 %v4877
    %5244 = vmatpush1.bf16.msra.mxu0 %v4876
    %5245 = vmatprep.subr.bf16.mxu0 %v4869
    %5246 = vmatpush1.bf16.msra.mxu0 %v4868
    %5247 = vmatprep.subr.bf16.mxu0 %v4861
    %5248 = vmatpush1.bf16.msra.mxu0 %v4860
    %5249 = vmatprep.subr.bf16.mxu0 %v4853
    %5250 = vmatpush1.bf16.msra.mxu0 %v4852
    %5251 = vmatprep.subr.bf16.mxu0 %v4845
    %5252 = vmatpush1.bf16.msra.mxu0 %v4844
    %5253 = vmatprep.subr.bf16.mxu0 %v4837
    %5254 = vmatpush1.bf16.msra.mxu0 %v4836
    %5255 = vmatprep.subr.bf16.mxu0 0
    %5256 = vmatpush2.bf16.msra.mxu0 0
    %5257 = vmatprep.subr.bf16.mxu0 0
    %5258 = vmatpush2.bf16.msra.mxu0 0
    %5259 = vmatprep.subr.bf16.mxu0 0
    %5260 = vmatpush2.bf16.msra.mxu0 0
    %5261 = vmatprep.subr.bf16.mxu0 0
    %5262 = vmatpush2.bf16.msra.mxu0 0
    %5263 = vmatprep.subr.bf16.mxu0 0
    %5264 = vmatpush2.bf16.msra.mxu0 0
    %5265 = vmatprep.subr.bf16.mxu0 0
    %5266 = vmatpush2.bf16.msra.mxu0 0
    %5267 = vmatprep.subr.bf16.mxu0 0
    %5268 = vmatpush2.bf16.msra.mxu0 0
    %5269 = vmatprep.subr.bf16.mxu0 0
    %5270 = vmatpush2.bf16.msra.mxu0 0
    %5271 = vmatprep.mubr.bf16.mxu0 0
    %5272 = vmatmul.mubr.bf16.gmra.mxu0 %v5156
    %v5273 = vpop.f32.mrf.mxu0
    %v5274 = vadd.f32 0.0, %v5273
    %v5275 = vpop.f32.mrf.mxu0
    %v5276 = vadd.f32 0.0, %v5275
    %v5277 = vpop.f32.mrf.mxu0
    %v5278 = vpop.f32.mrf.mxu0
    %5279 = vdwg.mxu0
    %5280 = vmatprep.subr.bf16.mxu0 %v4895
    %5281 = vmatpush1.bf16.msra.mxu0 %v4894
    %5282 = vmatprep.subr.bf16.mxu0 %v4887
    %5283 = vmatpush1.bf16.msra.mxu0 %v4886
    %5284 = vmatprep.subr.bf16.mxu0 %v4879
    %5285 = vmatpush1.bf16.msra.mxu0 %v4878
    %5286 = vmatprep.subr.bf16.mxu0 %v4871
    %5287 = vmatpush1.bf16.msra.mxu0 %v4870
    %5288 = vmatprep.subr.bf16.mxu0 %v4863
    %5289 = vmatpush1.bf16.msra.mxu0 %v4862
    %5290 = vmatprep.subr.bf16.mxu0 %v4855
    %5291 = vmatpush1.bf16.msra.mxu0 %v4854
    %5292 = vmatprep.subr.bf16.mxu0 %v4847
    %5293 = vmatpush1.bf16.msra.mxu0 %v4846
    %5294 = vmatprep.subr.bf16.mxu0 %v4839
    %5295 = vmatpush1.bf16.msra.mxu0 %v4838
    %5296 = vmatprep.subr.bf16.mxu0 0
    %5297 = vmatpush2.bf16.msra.mxu0 0
    %5298 = vmatprep.subr.bf16.mxu0 0
    %5299 = vmatpush2.bf16.msra.mxu0 0
    %5300 = vmatprep.subr.bf16.mxu0 0
    %5301 = vmatpush2.bf16.msra.mxu0 0
    %5302 = vmatprep.subr.bf16.mxu0 0
    %5303 = vmatpush2.bf16.msra.mxu0 0
    %5304 = vmatprep.subr.bf16.mxu0 0
    %5305 = vmatpush2.bf16.msra.mxu0 0
    %5306 = vmatprep.subr.bf16.mxu0 0
    %5307 = vmatpush2.bf16.msra.mxu0 0
    %5308 = vmatprep.subr.bf16.mxu0 0
    %5309 = vmatpush2.bf16.msra.mxu0 0
    %5310 = vmatprep.subr.bf16.mxu0 0
    %5311 = vmatpush2.bf16.msra.mxu0 0
    %5312 = vmatprep.mubr.bf16.mxu0 0
    %5313 = vmatmul.mubr.bf16.gmra.mxu0 %v5156
    %v5314 = vpop.f32.mrf.mxu0
    %v5315 = vadd.f32 0.0, %v5314
    %v5316 = vpop.f32.mrf.mxu0
    %v5317 = vadd.f32 0.0, %v5316
    %v5318 = vpop.f32.mrf.mxu0
    %v5319 = vpop.f32.mrf.mxu0
    %5320 = vdwg.mxu0
    %v5321 = vsel %vm973, %v5192, %v5274
    %v5322 = vsel %vm973, %v5194, %v5276
    %v5323 = vsel %vm973, %v5233, %v5315
    %v5324 = vsel %vm973, %v5235, %v5317
    %v5325 = vadd.f32 %v2708, %v5321
    %v5326 = vadd.f32 %v2709, %v5322
    %v5327 = vadd.f32 %v2710, %v5323
    %v5328 = vadd.f32 %v2711, %v5324
    %v5329 = vxor.u32 %v5325, 2147483648
    %v5330 = vxor.u32 %v5326, 2147483648
    %v5331 = vxor.u32 %v5327, 2147483648
    %v5332 = vmul.f32 %v5329, 1.442695
    %v5333 = vpow.pop %v5332
    %v5334 = vmul.f32 %v5330, 1.442695
    %v5335 = vpow.pop %v5334
    %v5336 = vmul.f32 %v5331, 1.442695
    %v5337 = vpow.pop %v5336
    %v5338 = vadd.f32 %v5333, 1.0
    %v5339 = vadd.f32 %v5335, 1.0
    %v5340 = vadd.f32 %v5337, 1.0
    %v5341 = vrcp.pop %v5338
    %v5342 = vmul.f32 1.0, %v5341
    %v5343 = vrcp.pop %v5339
    %v5344 = vmul.f32 1.0, %v5343
    %v5345 = vrcp.pop %v5340
    %v5346 = vmul.f32 1.0, %v5345
    %v5347 = vtanh.pop %v5328
    %v5348 = vmul.f32 %v5344, %v5153
    %v5349 = vmul.f32 %v5342, %v5347
    %v5350 = vadd.f32 %v5348, %v5349
    %v5351 = vtanh.pop %v5350
    %v5352 = vmul.f32 %v5346, %v5351
    %v5353 = vpack.c.bf16 %v5352, %v5352
    %5354 = vmatprep.subr.bf16.mxu0 %v4889
    %5355 = vmatpush1.bf16.msra.mxu0 %v4888
    %5356 = vmatprep.subr.bf16.mxu0 %v4881
    %5357 = vmatpush1.bf16.msra.mxu0 %v4880
    %5358 = vmatprep.subr.bf16.mxu0 %v4873
    %5359 = vmatpush1.bf16.msra.mxu0 %v4872
    %5360 = vmatprep.subr.bf16.mxu0 %v4865
    %5361 = vmatpush1.bf16.msra.mxu0 %v4864
    %5362 = vmatprep.subr.bf16.mxu0 %v4857
    %5363 = vmatpush1.bf16.msra.mxu0 %v4856
    %5364 = vmatprep.subr.bf16.mxu0 %v4849
    %5365 = vmatpush1.bf16.msra.mxu0 %v4848
    %5366 = vmatprep.subr.bf16.mxu0 %v4841
    %5367 = vmatpush1.bf16.msra.mxu0 %v4840
    %5368 = vmatprep.subr.bf16.mxu0 %v4833
    %5369 = vmatpush1.bf16.msra.mxu0 %v4832
    %5370 = vmatprep.subr.bf16.mxu0 0
    %5371 = vmatpush2.bf16.msra.mxu0 0
    %5372 = vmatprep.subr.bf16.mxu0 0
    %5373 = vmatpush2.bf16.msra.mxu0 0
    %5374 = vmatprep.subr.bf16.mxu0 0
    %5375 = vmatpush2.bf16.msra.mxu0 0
    %5376 = vmatprep.subr.bf16.mxu0 0
    %5377 = vmatpush2.bf16.msra.mxu0 0
    %5378 = vmatprep.subr.bf16.mxu0 0
    %5379 = vmatpush2.bf16.msra.mxu0 0
    %5380 = vmatprep.subr.bf16.mxu0 0
    %5381 = vmatpush2.bf16.msra.mxu0 0
    %5382 = vmatprep.subr.bf16.mxu0 0
    %5383 = vmatpush2.bf16.msra.mxu0 0
    %5384 = vmatprep.subr.bf16.mxu0 0
    %5385 = vmatpush2.bf16.msra.mxu0 0
    %5386 = vmatprep.mubr.bf16.mxu0 0
    %5387 = vmatmul.mubr.bf16.gmra.mxu0 %v5353
    %v5388 = vpop.f32.mrf.mxu0
    %v5389 = vadd.f32 0.0, %v5388
    %v5390 = vpop.f32.mrf.mxu0
    %v5391 = vadd.f32 0.0, %v5390
    %v5392 = vpop.f32.mrf.mxu0
    %v5393 = vpop.f32.mrf.mxu0
    %5394 = vdwg.mxu0
    %5395 = vmatprep.subr.bf16.mxu0 %v4891
    %5396 = vmatpush1.bf16.msra.mxu0 %v4890
    %5397 = vmatprep.subr.bf16.mxu0 %v4883
    %5398 = vmatpush1.bf16.msra.mxu0 %v4882
    %5399 = vmatprep.subr.bf16.mxu0 %v4875
    %5400 = vmatpush1.bf16.msra.mxu0 %v4874
    %5401 = vmatprep.subr.bf16.mxu0 %v4867
    %5402 = vmatpush1.bf16.msra.mxu0 %v4866
    %5403 = vmatprep.subr.bf16.mxu0 %v4859
    %5404 = vmatpush1.bf16.msra.mxu0 %v4858
    %5405 = vmatprep.subr.bf16.mxu0 %v4851
    %5406 = vmatpush1.bf16.msra.mxu0 %v4850
    %5407 = vmatprep.subr.bf16.mxu0 %v4843
    %5408 = vmatpush1.bf16.msra.mxu0 %v4842
    %5409 = vmatprep.subr.bf16.mxu0 %v4835
    %5410 = vmatpush1.bf16.msra.mxu0 %v4834
    %5411 = vmatprep.subr.bf16.mxu0 0
    %5412 = vmatpush2.bf16.msra.mxu0 0
    %5413 = vmatprep.subr.bf16.mxu0 0
    %5414 = vmatpush2.bf16.msra.mxu0 0
    %5415 = vmatprep.subr.bf16.mxu0 0
    %5416 = vmatpush2.bf16.msra.mxu0 0
    %5417 = vmatprep.subr.bf16.mxu0 0
    %5418 = vmatpush2.bf16.msra.mxu0 0
    %5419 = vmatprep.subr.bf16.mxu0 0
    %5420 = vmatpush2.bf16.msra.mxu0 0
    %5421 = vmatprep.subr.bf16.mxu0 0
    %5422 = vmatpush2.bf16.msra.mxu0 0
    %5423 = vmatprep.subr.bf16.mxu0 0
    %5424 = vmatpush2.bf16.msra.mxu0 0
    %5425 = vmatprep.subr.bf16.mxu0 0
    %5426 = vmatpush2.bf16.msra.mxu0 0
    %5427 = vmatprep.mubr.bf16.mxu0 0
    %5428 = vmatmul.mubr.bf16.gmra.mxu0 %v5353
    %v5429 = vpop.f32.mrf.mxu0
    %v5430 = vadd.f32 0.0, %v5429
    %v5431 = vpop.f32.mrf.mxu0
    %v5432 = vadd.f32 0.0, %v5431
    %v5433 = vpop.f32.mrf.mxu0
    %v5434 = vpop.f32.mrf.mxu0
    %5435 = vdwg.mxu0
    %5436 = vmatprep.subr.bf16.mxu0 %v4893
    %5437 = vmatpush1.bf16.msra.mxu0 %v4892
    %5438 = vmatprep.subr.bf16.mxu0 %v4885
    %5439 = vmatpush1.bf16.msra.mxu0 %v4884
    %5440 = vmatprep.subr.bf16.mxu0 %v4877
    %5441 = vmatpush1.bf16.msra.mxu0 %v4876
    %5442 = vmatprep.subr.bf16.mxu0 %v4869
    %5443 = vmatpush1.bf16.msra.mxu0 %v4868
    %5444 = vmatprep.subr.bf16.mxu0 %v4861
    %5445 = vmatpush1.bf16.msra.mxu0 %v4860
    %5446 = vmatprep.subr.bf16.mxu0 %v4853
    %5447 = vmatpush1.bf16.msra.mxu0 %v4852
    %5448 = vmatprep.subr.bf16.mxu0 %v4845
    %5449 = vmatpush1.bf16.msra.mxu0 %v4844
    %5450 = vmatprep.subr.bf16.mxu0 %v4837
    %5451 = vmatpush1.bf16.msra.mxu0 %v4836
    %5452 = vmatprep.subr.bf16.mxu0 0
    %5453 = vmatpush2.bf16.msra.mxu0 0
    %5454 = vmatprep.subr.bf16.mxu0 0
    %5455 = vmatpush2.bf16.msra.mxu0 0
    %5456 = vmatprep.subr.bf16.mxu0 0
    %5457 = vmatpush2.bf16.msra.mxu0 0
    %5458 = vmatprep.subr.bf16.mxu0 0
    %5459 = vmatpush2.bf16.msra.mxu0 0
    %5460 = vmatprep.subr.bf16.mxu0 0
    %5461 = vmatpush2.bf16.msra.mxu0 0
    %5462 = vmatprep.subr.bf16.mxu0 0
    %5463 = vmatpush2.bf16.msra.mxu0 0
    %5464 = vmatprep.subr.bf16.mxu0 0
    %5465 = vmatpush2.bf16.msra.mxu0 0
    %5466 = vmatprep.subr.bf16.mxu0 0
    %5467 = vmatpush2.bf16.msra.mxu0 0
    %5468 = vmatprep.mubr.bf16.mxu0 0
    %5469 = vmatmul.mubr.bf16.gmra.mxu0 %v5353
    %v5470 = vpop.f32.mrf.mxu0
    %v5471 = vadd.f32 0.0, %v5470
    %v5472 = vpop.f32.mrf.mxu0
    %v5473 = vadd.f32 0.0, %v5472
    %v5474 = vpop.f32.mrf.mxu0
    %v5475 = vpop.f32.mrf.mxu0
    %5476 = vdwg.mxu0
    %5477 = vmatprep.subr.bf16.mxu0 %v4895
    %5478 = vmatpush1.bf16.msra.mxu0 %v4894
    %5479 = vmatprep.subr.bf16.mxu0 %v4887
    %5480 = vmatpush1.bf16.msra.mxu0 %v4886
    %5481 = vmatprep.subr.bf16.mxu0 %v4879
    %5482 = vmatpush1.bf16.msra.mxu0 %v4878
    %5483 = vmatprep.subr.bf16.mxu0 %v4871
    %5484 = vmatpush1.bf16.msra.mxu0 %v4870
    %5485 = vmatprep.subr.bf16.mxu0 %v4863
    %5486 = vmatpush1.bf16.msra.mxu0 %v4862
    %5487 = vmatprep.subr.bf16.mxu0 %v4855
    %5488 = vmatpush1.bf16.msra.mxu0 %v4854
    %5489 = vmatprep.subr.bf16.mxu0 %v4847
    %5490 = vmatpush1.bf16.msra.mxu0 %v4846
    %5491 = vmatprep.subr.bf16.mxu0 %v4839
    %5492 = vmatpush1.bf16.msra.mxu0 %v4838
    %5493 = vmatprep.subr.bf16.mxu0 0
    %5494 = vmatpush2.bf16.msra.mxu0 0
    %5495 = vmatprep.subr.bf16.mxu0 0
    %5496 = vmatpush2.bf16.msra.mxu0 0
    %5497 = vmatprep.subr.bf16.mxu0 0
    %5498 = vmatpush2.bf16.msra.mxu0 0
    %5499 = vmatprep.subr.bf16.mxu0 0
    %5500 = vmatpush2.bf16.msra.mxu0 0
    %5501 = vmatprep.subr.bf16.mxu0 0
    %5502 = vmatpush2.bf16.msra.mxu0 0
    %5503 = vmatprep.subr.bf16.mxu0 0
    %5504 = vmatpush2.bf16.msra.mxu0 0
    %5505 = vmatprep.subr.bf16.mxu0 0
    %5506 = vmatpush2.bf16.msra.mxu0 0
    %5507 = vmatprep.subr.bf16.mxu0 0
    %5508 = vmatpush2.bf16.msra.mxu0 0
    %5509 = vmatprep.mubr.bf16.mxu0 0
    %5510 = vmatmul.mubr.bf16.gmra.mxu0 %v5353
    %v5511 = vpop.f32.mrf.mxu0
    %v5512 = vadd.f32 0.0, %v5511
    %v5513 = vpop.f32.mrf.mxu0
    %v5514 = vadd.f32 0.0, %v5513
    %v5515 = vpop.f32.mrf.mxu0
    %v5516 = vpop.f32.mrf.mxu0
    %5517 = vdwg.mxu0
    %v5518 = vsel %vm973, %v5389, %v5471
    %v5519 = vsel %vm973, %v5391, %v5473
    %v5520 = vsel %vm973, %v5430, %v5512
    %v5521 = vsel %vm973, %v5432, %v5514
    %v5522 = vadd.f32 %v3075, %v5518
    %v5523 = vadd.f32 %v3076, %v5519
    %v5524 = vadd.f32 %v3077, %v5520
    %v5525 = vadd.f32 %v3078, %v5521
    %v5526 = vxor.u32 %v5522, 2147483648
    %v5527 = vxor.u32 %v5523, 2147483648
    %v5528 = vxor.u32 %v5524, 2147483648
    %v5529 = vmul.f32 %v5526, 1.442695
    %v5530 = vpow.pop %v5529
    %v5531 = vmul.f32 %v5527, 1.442695
    %v5532 = vpow.pop %v5531
    %v5533 = vmul.f32 %v5528, 1.442695
    %v5534 = vpow.pop %v5533
    %v5535 = vadd.f32 %v5530, 1.0
    %v5536 = vadd.f32 %v5532, 1.0
    %v5537 = vadd.f32 %v5534, 1.0
    %v5538 = vrcp.pop %v5535
    %v5539 = vmul.f32 1.0, %v5538
    %v5540 = vrcp.pop %v5536
    %v5541 = vmul.f32 1.0, %v5540
    %v5542 = vrcp.pop %v5537
    %v5543 = vmul.f32 1.0, %v5542
    %v5544 = vtanh.pop %v5525
    %v5545 = vmul.f32 %v5541, %v5350
    %v5546 = vmul.f32 %v5539, %v5544
    %v5547 = vadd.f32 %v5545, %v5546
    %v5548 = vtanh.pop %v5547
    %v5549 = vmul.f32 %v5543, %v5548
    %v5550 = vpack.c.bf16 %v5549, %v5549
    %5551 = vmatprep.subr.bf16.mxu0 %v4889
    %5552 = vmatpush1.bf16.msra.mxu0 %v4888
    %5553 = vmatprep.subr.bf16.mxu0 %v4881
    %5554 = vmatpush1.bf16.msra.mxu0 %v4880
    %5555 = vmatprep.subr.bf16.mxu0 %v4873
    %5556 = vmatpush1.bf16.msra.mxu0 %v4872
    %5557 = vmatprep.subr.bf16.mxu0 %v4865
    %5558 = vmatpush1.bf16.msra.mxu0 %v4864
    %5559 = vmatprep.subr.bf16.mxu0 %v4857
    %5560 = vmatpush1.bf16.msra.mxu0 %v4856
    %5561 = vmatprep.subr.bf16.mxu0 %v4849
    %5562 = vmatpush1.bf16.msra.mxu0 %v4848
    %5563 = vmatprep.subr.bf16.mxu0 %v4841
    %5564 = vmatpush1.bf16.msra.mxu0 %v4840
    %5565 = vmatprep.subr.bf16.mxu0 %v4833
    %5566 = vmatpush1.bf16.msra.mxu0 %v4832
    %5567 = vmatprep.subr.bf16.mxu0 0
    %5568 = vmatpush2.bf16.msra.mxu0 0
    %5569 = vmatprep.subr.bf16.mxu0 0
    %5570 = vmatpush2.bf16.msra.mxu0 0
    %5571 = vmatprep.subr.bf16.mxu0 0
    %5572 = vmatpush2.bf16.msra.mxu0 0
    %5573 = vmatprep.subr.bf16.mxu0 0
    %5574 = vmatpush2.bf16.msra.mxu0 0
    %5575 = vmatprep.subr.bf16.mxu0 0
    %5576 = vmatpush2.bf16.msra.mxu0 0
    %5577 = vmatprep.subr.bf16.mxu0 0
    %5578 = vmatpush2.bf16.msra.mxu0 0
    %5579 = vmatprep.subr.bf16.mxu0 0
    %5580 = vmatpush2.bf16.msra.mxu0 0
    %5581 = vmatprep.subr.bf16.mxu0 0
    %5582 = vmatpush2.bf16.msra.mxu0 0
    %5583 = vmatprep.mubr.bf16.mxu0 0
    %5584 = vmatmul.mubr.bf16.gmra.mxu0 %v5550
    %v5585 = vpop.f32.mrf.mxu0
    %v5586 = vadd.f32 0.0, %v5585
    %v5587 = vpop.f32.mrf.mxu0
    %v5588 = vadd.f32 0.0, %v5587
    %v5589 = vpop.f32.mrf.mxu0
    %v5590 = vpop.f32.mrf.mxu0
    %5591 = vdwg.mxu0
    %5592 = vmatprep.subr.bf16.mxu0 %v4891
    %5593 = vmatpush1.bf16.msra.mxu0 %v4890
    %5594 = vmatprep.subr.bf16.mxu0 %v4883
    %5595 = vmatpush1.bf16.msra.mxu0 %v4882
    %5596 = vmatprep.subr.bf16.mxu0 %v4875
    %5597 = vmatpush1.bf16.msra.mxu0 %v4874
    %5598 = vmatprep.subr.bf16.mxu0 %v4867
    %5599 = vmatpush1.bf16.msra.mxu0 %v4866
    %5600 = vmatprep.subr.bf16.mxu0 %v4859
    %5601 = vmatpush1.bf16.msra.mxu0 %v4858
    %5602 = vmatprep.subr.bf16.mxu0 %v4851
    %5603 = vmatpush1.bf16.msra.mxu0 %v4850
    %5604 = vmatprep.subr.bf16.mxu0 %v4843
    %5605 = vmatpush1.bf16.msra.mxu0 %v4842
    %5606 = vmatprep.subr.bf16.mxu0 %v4835
    %5607 = vmatpush1.bf16.msra.mxu0 %v4834
    %5608 = vmatprep.subr.bf16.mxu0 0
    %5609 = vmatpush2.bf16.msra.mxu0 0
    %5610 = vmatprep.subr.bf16.mxu0 0
    %5611 = vmatpush2.bf16.msra.mxu0 0
    %5612 = vmatprep.subr.bf16.mxu0 0
    %5613 = vmatpush2.bf16.msra.mxu0 0
    %5614 = vmatprep.subr.bf16.mxu0 0
    %5615 = vmatpush2.bf16.msra.mxu0 0
    %5616 = vmatprep.subr.bf16.mxu0 0
    %5617 = vmatpush2.bf16.msra.mxu0 0
    %5618 = vmatprep.subr.bf16.mxu0 0
    %5619 = vmatpush2.bf16.msra.mxu0 0
    %5620 = vmatprep.subr.bf16.mxu0 0
    %5621 = vmatpush2.bf16.msra.mxu0 0
    %5622 = vmatprep.subr.bf16.mxu0 0
    %5623 = vmatpush2.bf16.msra.mxu0 0
    %5624 = vmatprep.mubr.bf16.mxu0 0
    %5625 = vmatmul.mubr.bf16.gmra.mxu0 %v5550
    %v5626 = vpop.f32.mrf.mxu0
    %v5627 = vadd.f32 0.0, %v5626
    %v5628 = vpop.f32.mrf.mxu0
    %v5629 = vadd.f32 0.0, %v5628
    %v5630 = vpop.f32.mrf.mxu0
    %v5631 = vpop.f32.mrf.mxu0
    %5632 = vdwg.mxu0
    %5633 = vmatprep.subr.bf16.mxu0 %v4893
    %5634 = vmatpush1.bf16.msra.mxu0 %v4892
    %5635 = vmatprep.subr.bf16.mxu0 %v4885
    %5636 = vmatpush1.bf16.msra.mxu0 %v4884
    %5637 = vmatprep.subr.bf16.mxu0 %v4877
    %5638 = vmatpush1.bf16.msra.mxu0 %v4876
    %5639 = vmatprep.subr.bf16.mxu0 %v4869
    %5640 = vmatpush1.bf16.msra.mxu0 %v4868
    %5641 = vmatprep.subr.bf16.mxu0 %v4861
    %5642 = vmatpush1.bf16.msra.mxu0 %v4860
    %5643 = vmatprep.subr.bf16.mxu0 %v4853
    %5644 = vmatpush1.bf16.msra.mxu0 %v4852
    %5645 = vmatprep.subr.bf16.mxu0 %v4845
    %5646 = vmatpush1.bf16.msra.mxu0 %v4844
    %5647 = vmatprep.subr.bf16.mxu0 %v4837
    %5648 = vmatpush1.bf16.msra.mxu0 %v4836
    %5649 = vmatprep.subr.bf16.mxu0 0
    %5650 = vmatpush2.bf16.msra.mxu0 0
    %5651 = vmatprep.subr.bf16.mxu0 0
    %5652 = vmatpush2.bf16.msra.mxu0 0
    %5653 = vmatprep.subr.bf16.mxu0 0
    %5654 = vmatpush2.bf16.msra.mxu0 0
    %5655 = vmatprep.subr.bf16.mxu0 0
    %5656 = vmatpush2.bf16.msra.mxu0 0
    %5657 = vmatprep.subr.bf16.mxu0 0
    %5658 = vmatpush2.bf16.msra.mxu0 0
    %5659 = vmatprep.subr.bf16.mxu0 0
    %5660 = vmatpush2.bf16.msra.mxu0 0
    %5661 = vmatprep.subr.bf16.mxu0 0
    %5662 = vmatpush2.bf16.msra.mxu0 0
    %5663 = vmatprep.subr.bf16.mxu0 0
    %5664 = vmatpush2.bf16.msra.mxu0 0
    %5665 = vmatprep.mubr.bf16.mxu0 0
    %5666 = vmatmul.mubr.bf16.gmra.mxu0 %v5550
    %v5667 = vpop.f32.mrf.mxu0
    %v5668 = vadd.f32 0.0, %v5667
    %v5669 = vpop.f32.mrf.mxu0
    %v5670 = vadd.f32 0.0, %v5669
    %v5671 = vpop.f32.mrf.mxu0
    %v5672 = vpop.f32.mrf.mxu0
    %5673 = vdwg.mxu0
    %5674 = vmatprep.subr.bf16.mxu0 %v4895
    %5675 = vmatpush1.bf16.msra.mxu0 %v4894
    %5676 = vmatprep.subr.bf16.mxu0 %v4887
    %5677 = vmatpush1.bf16.msra.mxu0 %v4886
    %5678 = vmatprep.subr.bf16.mxu0 %v4879
    %5679 = vmatpush1.bf16.msra.mxu0 %v4878
    %5680 = vmatprep.subr.bf16.mxu0 %v4871
    %5681 = vmatpush1.bf16.msra.mxu0 %v4870
    %5682 = vmatprep.subr.bf16.mxu0 %v4863
    %5683 = vmatpush1.bf16.msra.mxu0 %v4862
    %5684 = vmatprep.subr.bf16.mxu0 %v4855
    %5685 = vmatpush1.bf16.msra.mxu0 %v4854
    %5686 = vmatprep.subr.bf16.mxu0 %v4847
    %5687 = vmatpush1.bf16.msra.mxu0 %v4846
    %5688 = vmatprep.subr.bf16.mxu0 %v4839
    %5689 = vmatpush1.bf16.msra.mxu0 %v4838
    %5690 = vmatprep.subr.bf16.mxu0 0
    %5691 = vmatpush2.bf16.msra.mxu0 0
    %5692 = vmatprep.subr.bf16.mxu0 0
    %5693 = vmatpush2.bf16.msra.mxu0 0
    %5694 = vmatprep.subr.bf16.mxu0 0
    %5695 = vmatpush2.bf16.msra.mxu0 0
    %5696 = vmatprep.subr.bf16.mxu0 0
    %5697 = vmatpush2.bf16.msra.mxu0 0
    %5698 = vmatprep.subr.bf16.mxu0 0
    %5699 = vmatpush2.bf16.msra.mxu0 0
    %5700 = vmatprep.subr.bf16.mxu0 0
    %5701 = vmatpush2.bf16.msra.mxu0 0
    %5702 = vmatprep.subr.bf16.mxu0 0
    %5703 = vmatpush2.bf16.msra.mxu0 0
    %5704 = vmatprep.subr.bf16.mxu0 0
    %5705 = vmatpush2.bf16.msra.mxu0 0
    %5706 = vmatprep.mubr.bf16.mxu0 0
    %5707 = vmatmul.mubr.bf16.gmra.mxu0 %v5550
    %v5708 = vpop.f32.mrf.mxu0
    %v5709 = vadd.f32 0.0, %v5708
    %v5710 = vpop.f32.mrf.mxu0
    %v5711 = vadd.f32 0.0, %v5710
    %v5712 = vpop.f32.mrf.mxu0
    %v5713 = vpop.f32.mrf.mxu0
    %5714 = vdwg.mxu0
    %v5715 = vsel %vm973, %v5586, %v5668
    %v5716 = vsel %vm973, %v5588, %v5670
    %v5717 = vsel %vm973, %v5627, %v5709
    %v5718 = vsel %vm973, %v5629, %v5711
    %v5719 = vadd.f32 %v3442, %v5715
    %v5720 = vadd.f32 %v3443, %v5716
    %v5721 = vadd.f32 %v3444, %v5717
    %v5722 = vadd.f32 %v3445, %v5718
    %v5723 = vxor.u32 %v5719, 2147483648
    %v5724 = vxor.u32 %v5720, 2147483648
    %v5725 = vxor.u32 %v5721, 2147483648
    %v5726 = vmul.f32 %v5723, 1.442695
    %v5727 = vpow.pop %v5726
    %v5728 = vmul.f32 %v5724, 1.442695
    %v5729 = vpow.pop %v5728
    %v5730 = vmul.f32 %v5725, 1.442695
    %v5731 = vpow.pop %v5730
    %v5732 = vadd.f32 %v5727, 1.0
    %v5733 = vadd.f32 %v5729, 1.0
    %v5734 = vadd.f32 %v5731, 1.0
    %v5735 = vrcp.pop %v5732
    %v5736 = vmul.f32 1.0, %v5735
    %v5737 = vrcp.pop %v5733
    %v5738 = vmul.f32 1.0, %v5737
    %v5739 = vrcp.pop %v5734
    %v5740 = vmul.f32 1.0, %v5739
    %v5741 = vtanh.pop %v5722
    %v5742 = vmul.f32 %v5738, %v5547
    %v5743 = vmul.f32 %v5736, %v5741
    %v5744 = vadd.f32 %v5742, %v5743
    %v5745 = vtanh.pop %v5744
    %v5746 = vmul.f32 %v5740, %v5745
    %v5747 = vpack.c.bf16 %v5746, %v5746
    %5748 = vmatprep.subr.bf16.mxu0 %v4889
    %5749 = vmatpush1.bf16.msra.mxu0 %v4888
    %5750 = vmatprep.subr.bf16.mxu0 %v4881
    %5751 = vmatpush1.bf16.msra.mxu0 %v4880
    %5752 = vmatprep.subr.bf16.mxu0 %v4873
    %5753 = vmatpush1.bf16.msra.mxu0 %v4872
    %5754 = vmatprep.subr.bf16.mxu0 %v4865
    %5755 = vmatpush1.bf16.msra.mxu0 %v4864
    %5756 = vmatprep.subr.bf16.mxu0 %v4857
    %5757 = vmatpush1.bf16.msra.mxu0 %v4856
    %5758 = vmatprep.subr.bf16.mxu0 %v4849
    %5759 = vmatpush1.bf16.msra.mxu0 %v4848
    %5760 = vmatprep.subr.bf16.mxu0 %v4841
    %5761 = vmatpush1.bf16.msra.mxu0 %v4840
    %5762 = vmatprep.subr.bf16.mxu0 %v4833
    %5763 = vmatpush1.bf16.msra.mxu0 %v4832
    %5764 = vmatprep.subr.bf16.mxu0 0
    %5765 = vmatpush2.bf16.msra.mxu0 0
    %5766 = vmatprep.subr.bf16.mxu0 0
    %5767 = vmatpush2.bf16.msra.mxu0 0
    %5768 = vmatprep.subr.bf16.mxu0 0
    %5769 = vmatpush2.bf16.msra.mxu0 0
    %5770 = vmatprep.subr.bf16.mxu0 0
    %5771 = vmatpush2.bf16.msra.mxu0 0
    %5772 = vmatprep.subr.bf16.mxu0 0
    %5773 = vmatpush2.bf16.msra.mxu0 0
    %5774 = vmatprep.subr.bf16.mxu0 0
    %5775 = vmatpush2.bf16.msra.mxu0 0
    %5776 = vmatprep.subr.bf16.mxu0 0
    %5777 = vmatpush2.bf16.msra.mxu0 0
    %5778 = vmatprep.subr.bf16.mxu0 0
    %5779 = vmatpush2.bf16.msra.mxu0 0
    %5780 = vmatprep.mubr.bf16.mxu0 0
    %5781 = vmatmul.mubr.bf16.gmra.mxu0 %v5747
    %v5782 = vpop.f32.mrf.mxu0
    %v5783 = vadd.f32 0.0, %v5782
    %v5784 = vpop.f32.mrf.mxu0
    %v5785 = vadd.f32 0.0, %v5784
    %v5786 = vpop.f32.mrf.mxu0
    %v5787 = vpop.f32.mrf.mxu0
    %5788 = vdwg.mxu0
    %5789 = vmatprep.subr.bf16.mxu0 %v4891
    %5790 = vmatpush1.bf16.msra.mxu0 %v4890
    %5791 = vmatprep.subr.bf16.mxu0 %v4883
    %5792 = vmatpush1.bf16.msra.mxu0 %v4882
    %5793 = vmatprep.subr.bf16.mxu0 %v4875
    %5794 = vmatpush1.bf16.msra.mxu0 %v4874
    %5795 = vmatprep.subr.bf16.mxu0 %v4867
    %5796 = vmatpush1.bf16.msra.mxu0 %v4866
    %5797 = vmatprep.subr.bf16.mxu0 %v4859
    %5798 = vmatpush1.bf16.msra.mxu0 %v4858
    %5799 = vmatprep.subr.bf16.mxu0 %v4851
    %5800 = vmatpush1.bf16.msra.mxu0 %v4850
    %5801 = vmatprep.subr.bf16.mxu0 %v4843
    %5802 = vmatpush1.bf16.msra.mxu0 %v4842
    %5803 = vmatprep.subr.bf16.mxu0 %v4835
    %5804 = vmatpush1.bf16.msra.mxu0 %v4834
    %5805 = vmatprep.subr.bf16.mxu0 0
    %5806 = vmatpush2.bf16.msra.mxu0 0
    %5807 = vmatprep.subr.bf16.mxu0 0
    %5808 = vmatpush2.bf16.msra.mxu0 0
    %5809 = vmatprep.subr.bf16.mxu0 0
    %5810 = vmatpush2.bf16.msra.mxu0 0
    %5811 = vmatprep.subr.bf16.mxu0 0
    %5812 = vmatpush2.bf16.msra.mxu0 0
    %5813 = vmatprep.subr.bf16.mxu0 0
    %5814 = vmatpush2.bf16.msra.mxu0 0
    %5815 = vmatprep.subr.bf16.mxu0 0
    %5816 = vmatpush2.bf16.msra.mxu0 0
    %5817 = vmatprep.subr.bf16.mxu0 0
    %5818 = vmatpush2.bf16.msra.mxu0 0
    %5819 = vmatprep.subr.bf16.mxu0 0
    %5820 = vmatpush2.bf16.msra.mxu0 0
    %5821 = vmatprep.mubr.bf16.mxu0 0
    %5822 = vmatmul.mubr.bf16.gmra.mxu0 %v5747
    %v5823 = vpop.f32.mrf.mxu0
    %v5824 = vadd.f32 0.0, %v5823
    %v5825 = vpop.f32.mrf.mxu0
    %v5826 = vadd.f32 0.0, %v5825
    %v5827 = vpop.f32.mrf.mxu0
    %v5828 = vpop.f32.mrf.mxu0
    %5829 = vdwg.mxu0
    %5830 = vmatprep.subr.bf16.mxu0 %v4893
    %5831 = vmatpush1.bf16.msra.mxu0 %v4892
    %5832 = vmatprep.subr.bf16.mxu0 %v4885
    %5833 = vmatpush1.bf16.msra.mxu0 %v4884
    %5834 = vmatprep.subr.bf16.mxu0 %v4877
    %5835 = vmatpush1.bf16.msra.mxu0 %v4876
    %5836 = vmatprep.subr.bf16.mxu0 %v4869
    %5837 = vmatpush1.bf16.msra.mxu0 %v4868
    %5838 = vmatprep.subr.bf16.mxu0 %v4861
    %5839 = vmatpush1.bf16.msra.mxu0 %v4860
    %5840 = vmatprep.subr.bf16.mxu0 %v4853
    %5841 = vmatpush1.bf16.msra.mxu0 %v4852
    %5842 = vmatprep.subr.bf16.mxu0 %v4845
    %5843 = vmatpush1.bf16.msra.mxu0 %v4844
    %5844 = vmatprep.subr.bf16.mxu0 %v4837
    %5845 = vmatpush1.bf16.msra.mxu0 %v4836
    %5846 = vmatprep.subr.bf16.mxu0 0
    %5847 = vmatpush2.bf16.msra.mxu0 0
    %5848 = vmatprep.subr.bf16.mxu0 0
    %5849 = vmatpush2.bf16.msra.mxu0 0
    %5850 = vmatprep.subr.bf16.mxu0 0
    %5851 = vmatpush2.bf16.msra.mxu0 0
    %5852 = vmatprep.subr.bf16.mxu0 0
    %5853 = vmatpush2.bf16.msra.mxu0 0
    %5854 = vmatprep.subr.bf16.mxu0 0
    %5855 = vmatpush2.bf16.msra.mxu0 0
    %5856 = vmatprep.subr.bf16.mxu0 0
    %5857 = vmatpush2.bf16.msra.mxu0 0
    %5858 = vmatprep.subr.bf16.mxu0 0
    %5859 = vmatpush2.bf16.msra.mxu0 0
    %5860 = vmatprep.subr.bf16.mxu0 0
    %5861 = vmatpush2.bf16.msra.mxu0 0
    %5862 = vmatprep.mubr.bf16.mxu0 0
    %5863 = vmatmul.mubr.bf16.gmra.mxu0 %v5747
    %v5864 = vpop.f32.mrf.mxu0
    %v5865 = vadd.f32 0.0, %v5864
    %v5866 = vpop.f32.mrf.mxu0
    %v5867 = vadd.f32 0.0, %v5866
    %v5868 = vpop.f32.mrf.mxu0
    %v5869 = vpop.f32.mrf.mxu0
    %5870 = vdwg.mxu0
    %5871 = vmatprep.subr.bf16.mxu0 %v4895
    %5872 = vmatpush1.bf16.msra.mxu0 %v4894
    %5873 = vmatprep.subr.bf16.mxu0 %v4887
    %5874 = vmatpush1.bf16.msra.mxu0 %v4886
    %5875 = vmatprep.subr.bf16.mxu0 %v4879
    %5876 = vmatpush1.bf16.msra.mxu0 %v4878
    %5877 = vmatprep.subr.bf16.mxu0 %v4871
    %5878 = vmatpush1.bf16.msra.mxu0 %v4870
    %5879 = vmatprep.subr.bf16.mxu0 %v4863
    %5880 = vmatpush1.bf16.msra.mxu0 %v4862
    %5881 = vmatprep.subr.bf16.mxu0 %v4855
    %5882 = vmatpush1.bf16.msra.mxu0 %v4854
    %5883 = vmatprep.subr.bf16.mxu0 %v4847
    %5884 = vmatpush1.bf16.msra.mxu0 %v4846
    %5885 = vmatprep.subr.bf16.mxu0 %v4839
    %5886 = vmatpush1.bf16.msra.mxu0 %v4838
    %5887 = vmatprep.subr.bf16.mxu0 0
    %5888 = vmatpush2.bf16.msra.mxu0 0
    %5889 = vmatprep.subr.bf16.mxu0 0
    %5890 = vmatpush2.bf16.msra.mxu0 0
    %5891 = vmatprep.subr.bf16.mxu0 0
    %5892 = vmatpush2.bf16.msra.mxu0 0
    %5893 = vmatprep.subr.bf16.mxu0 0
    %5894 = vmatpush2.bf16.msra.mxu0 0
    %5895 = vmatprep.subr.bf16.mxu0 0
    %5896 = vmatpush2.bf16.msra.mxu0 0
    %5897 = vmatprep.subr.bf16.mxu0 0
    %5898 = vmatpush2.bf16.msra.mxu0 0
    %5899 = vmatprep.subr.bf16.mxu0 0
    %5900 = vmatpush2.bf16.msra.mxu0 0
    %5901 = vmatprep.subr.bf16.mxu0 0
    %5902 = vmatpush2.bf16.msra.mxu0 0
    %5903 = vmatprep.mubr.bf16.mxu0 0
    %5904 = vmatmul.mubr.bf16.gmra.mxu0 %v5747
    %v5905 = vpop.f32.mrf.mxu0
    %v5906 = vadd.f32 0.0, %v5905
    %v5907 = vpop.f32.mrf.mxu0
    %v5908 = vadd.f32 0.0, %v5907
    %v5909 = vpop.f32.mrf.mxu0
    %v5910 = vpop.f32.mrf.mxu0
    %5911 = vdwg.mxu0
    %v5912 = vsel %vm973, %v5783, %v5865
    %v5913 = vsel %vm973, %v5785, %v5867
    %v5914 = vsel %vm973, %v5824, %v5906
    %v5915 = vsel %vm973, %v5826, %v5908
    %v5916 = vadd.f32 %v3809, %v5912
    %v5917 = vadd.f32 %v3810, %v5913
    %v5918 = vadd.f32 %v3811, %v5914
    %v5919 = vadd.f32 %v3812, %v5915
    %v5920 = vxor.u32 %v5916, 2147483648
    %v5921 = vxor.u32 %v5917, 2147483648
    %v5922 = vxor.u32 %v5918, 2147483648
    %v5923 = vmul.f32 %v5920, 1.442695
    %v5924 = vpow.pop %v5923
    %v5925 = vmul.f32 %v5921, 1.442695
    %v5926 = vpow.pop %v5925
    %v5927 = vmul.f32 %v5922, 1.442695
    %v5928 = vpow.pop %v5927
    %v5929 = vadd.f32 %v5924, 1.0
    %v5930 = vadd.f32 %v5926, 1.0
    %v5931 = vadd.f32 %v5928, 1.0
    %v5932 = vrcp.pop %v5929
    %v5933 = vmul.f32 1.0, %v5932
    %v5934 = vrcp.pop %v5930
    %v5935 = vmul.f32 1.0, %v5934
    %v5936 = vrcp.pop %v5931
    %v5937 = vmul.f32 1.0, %v5936
    %v5938 = vtanh.pop %v5919
    %v5939 = vmul.f32 %v5935, %v5744
    %v5940 = vmul.f32 %v5933, %v5938
    %v5941 = vadd.f32 %v5939, %v5940
    %v5942 = vtanh.pop %v5941
    %v5943 = vmul.f32 %v5937, %v5942
    %v5944 = vpack.c.bf16 %v5943, %v5943
    %5945 = vmatprep.subr.bf16.mxu0 %v4889
    %5946 = vmatpush1.bf16.msra.mxu0 %v4888
    %5947 = vmatprep.subr.bf16.mxu0 %v4881
    %5948 = vmatpush1.bf16.msra.mxu0 %v4880
    %5949 = vmatprep.subr.bf16.mxu0 %v4873
    %5950 = vmatpush1.bf16.msra.mxu0 %v4872
    %5951 = vmatprep.subr.bf16.mxu0 %v4865
    %5952 = vmatpush1.bf16.msra.mxu0 %v4864
    %5953 = vmatprep.subr.bf16.mxu0 %v4857
    %5954 = vmatpush1.bf16.msra.mxu0 %v4856
    %5955 = vmatprep.subr.bf16.mxu0 %v4849
    %5956 = vmatpush1.bf16.msra.mxu0 %v4848
    %5957 = vmatprep.subr.bf16.mxu0 %v4841
    %5958 = vmatpush1.bf16.msra.mxu0 %v4840
    %5959 = vmatprep.subr.bf16.mxu0 %v4833
    %5960 = vmatpush1.bf16.msra.mxu0 %v4832
    %5961 = vmatprep.subr.bf16.mxu0 0
    %5962 = vmatpush2.bf16.msra.mxu0 0
    %5963 = vmatprep.subr.bf16.mxu0 0
    %5964 = vmatpush2.bf16.msra.mxu0 0
    %5965 = vmatprep.subr.bf16.mxu0 0
    %5966 = vmatpush2.bf16.msra.mxu0 0
    %5967 = vmatprep.subr.bf16.mxu0 0
    %5968 = vmatpush2.bf16.msra.mxu0 0
    %5969 = vmatprep.subr.bf16.mxu0 0
    %5970 = vmatpush2.bf16.msra.mxu0 0
    %5971 = vmatprep.subr.bf16.mxu0 0
    %5972 = vmatpush2.bf16.msra.mxu0 0
    %5973 = vmatprep.subr.bf16.mxu0 0
    %5974 = vmatpush2.bf16.msra.mxu0 0
    %5975 = vmatprep.subr.bf16.mxu0 0
    %5976 = vmatpush2.bf16.msra.mxu0 0
    %5977 = vmatprep.mubr.bf16.mxu0 0
    %5978 = vmatmul.mubr.bf16.gmra.mxu0 %v5944
    %v5979 = vpop.f32.mrf.mxu0
    %v5980 = vadd.f32 0.0, %v5979
    %v5981 = vpop.f32.mrf.mxu0
    %v5982 = vadd.f32 0.0, %v5981
    %v5983 = vpop.f32.mrf.mxu0
    %v5984 = vpop.f32.mrf.mxu0
    %5985 = vdwg.mxu0
    %5986 = vmatprep.subr.bf16.mxu0 %v4891
    %5987 = vmatpush1.bf16.msra.mxu0 %v4890
    %5988 = vmatprep.subr.bf16.mxu0 %v4883
    %5989 = vmatpush1.bf16.msra.mxu0 %v4882
    %5990 = vmatprep.subr.bf16.mxu0 %v4875
    %5991 = vmatpush1.bf16.msra.mxu0 %v4874
    %5992 = vmatprep.subr.bf16.mxu0 %v4867
    %5993 = vmatpush1.bf16.msra.mxu0 %v4866
    %5994 = vmatprep.subr.bf16.mxu0 %v4859
    %5995 = vmatpush1.bf16.msra.mxu0 %v4858
    %5996 = vmatprep.subr.bf16.mxu0 %v4851
    %5997 = vmatpush1.bf16.msra.mxu0 %v4850
    %5998 = vmatprep.subr.bf16.mxu0 %v4843
    %5999 = vmatpush1.bf16.msra.mxu0 %v4842
    %6000 = vmatprep.subr.bf16.mxu0 %v4835
    %6001 = vmatpush1.bf16.msra.mxu0 %v4834
    %6002 = vmatprep.subr.bf16.mxu0 0
    %6003 = vmatpush2.bf16.msra.mxu0 0
    %6004 = vmatprep.subr.bf16.mxu0 0
    %6005 = vmatpush2.bf16.msra.mxu0 0
    %6006 = vmatprep.subr.bf16.mxu0 0
    %6007 = vmatpush2.bf16.msra.mxu0 0
    %6008 = vmatprep.subr.bf16.mxu0 0
    %6009 = vmatpush2.bf16.msra.mxu0 0
    %6010 = vmatprep.subr.bf16.mxu0 0
    %6011 = vmatpush2.bf16.msra.mxu0 0
    %6012 = vmatprep.subr.bf16.mxu0 0
    %6013 = vmatpush2.bf16.msra.mxu0 0
    %6014 = vmatprep.subr.bf16.mxu0 0
    %6015 = vmatpush2.bf16.msra.mxu0 0
    %6016 = vmatprep.subr.bf16.mxu0 0
    %6017 = vmatpush2.bf16.msra.mxu0 0
    %6018 = vmatprep.mubr.bf16.mxu0 0
    %6019 = vmatmul.mubr.bf16.gmra.mxu0 %v5944
    %v6020 = vpop.f32.mrf.mxu0
    %v6021 = vadd.f32 0.0, %v6020
    %v6022 = vpop.f32.mrf.mxu0
    %v6023 = vadd.f32 0.0, %v6022
    %v6024 = vpop.f32.mrf.mxu0
    %v6025 = vpop.f32.mrf.mxu0
    %6026 = vdwg.mxu0
    %6027 = vmatprep.subr.bf16.mxu0 %v4893
    %6028 = vmatpush1.bf16.msra.mxu0 %v4892
    %6029 = vmatprep.subr.bf16.mxu0 %v4885
    %6030 = vmatpush1.bf16.msra.mxu0 %v4884
    %6031 = vmatprep.subr.bf16.mxu0 %v4877
    %6032 = vmatpush1.bf16.msra.mxu0 %v4876
    %6033 = vmatprep.subr.bf16.mxu0 %v4869
    %6034 = vmatpush1.bf16.msra.mxu0 %v4868
    %6035 = vmatprep.subr.bf16.mxu0 %v4861
    %6036 = vmatpush1.bf16.msra.mxu0 %v4860
    %6037 = vmatprep.subr.bf16.mxu0 %v4853
    %6038 = vmatpush1.bf16.msra.mxu0 %v4852
    %6039 = vmatprep.subr.bf16.mxu0 %v4845
    %6040 = vmatpush1.bf16.msra.mxu0 %v4844
    %6041 = vmatprep.subr.bf16.mxu0 %v4837
    %6042 = vmatpush1.bf16.msra.mxu0 %v4836
    %6043 = vmatprep.subr.bf16.mxu0 0
    %6044 = vmatpush2.bf16.msra.mxu0 0
    %6045 = vmatprep.subr.bf16.mxu0 0
    %6046 = vmatpush2.bf16.msra.mxu0 0
    %6047 = vmatprep.subr.bf16.mxu0 0
    %6048 = vmatpush2.bf16.msra.mxu0 0
    %6049 = vmatprep.subr.bf16.mxu0 0
    %6050 = vmatpush2.bf16.msra.mxu0 0
    %6051 = vmatprep.subr.bf16.mxu0 0
    %6052 = vmatpush2.bf16.msra.mxu0 0
    %6053 = vmatprep.subr.bf16.mxu0 0
    %6054 = vmatpush2.bf16.msra.mxu0 0
    %6055 = vmatprep.subr.bf16.mxu0 0
    %6056 = vmatpush2.bf16.msra.mxu0 0
    %6057 = vmatprep.subr.bf16.mxu0 0
    %6058 = vmatpush2.bf16.msra.mxu0 0
    %6059 = vmatprep.mubr.bf16.mxu0 0
    %6060 = vmatmul.mubr.bf16.gmra.mxu0 %v5944
    %v6061 = vpop.f32.mrf.mxu0
    %v6062 = vadd.f32 0.0, %v6061
    %v6063 = vpop.f32.mrf.mxu0
    %v6064 = vadd.f32 0.0, %v6063
    %v6065 = vpop.f32.mrf.mxu0
    %v6066 = vpop.f32.mrf.mxu0
    %6067 = vdwg.mxu0
    %6068 = vmatprep.subr.bf16.mxu0 %v4895
    %6069 = vmatpush1.bf16.msra.mxu0 %v4894
    %6070 = vmatprep.subr.bf16.mxu0 %v4887
    %6071 = vmatpush1.bf16.msra.mxu0 %v4886
    %6072 = vmatprep.subr.bf16.mxu0 %v4879
    %6073 = vmatpush1.bf16.msra.mxu0 %v4878
    %6074 = vmatprep.subr.bf16.mxu0 %v4871
    %6075 = vmatpush1.bf16.msra.mxu0 %v4870
    %6076 = vmatprep.subr.bf16.mxu0 %v4863
    %6077 = vmatpush1.bf16.msra.mxu0 %v4862
    %6078 = vmatprep.subr.bf16.mxu0 %v4855
    %6079 = vmatpush1.bf16.msra.mxu0 %v4854
    %6080 = vmatprep.subr.bf16.mxu0 %v4847
    %6081 = vmatpush1.bf16.msra.mxu0 %v4846
    %6082 = vmatprep.subr.bf16.mxu0 %v4839
    %6083 = vmatpush1.bf16.msra.mxu0 %v4838
    %6084 = vmatprep.subr.bf16.mxu0 0
    %6085 = vmatpush2.bf16.msra.mxu0 0
    %6086 = vmatprep.subr.bf16.mxu0 0
    %6087 = vmatpush2.bf16.msra.mxu0 0
    %6088 = vmatprep.subr.bf16.mxu0 0
    %6089 = vmatpush2.bf16.msra.mxu0 0
    %6090 = vmatprep.subr.bf16.mxu0 0
    %6091 = vmatpush2.bf16.msra.mxu0 0
    %6092 = vmatprep.subr.bf16.mxu0 0
    %6093 = vmatpush2.bf16.msra.mxu0 0
    %6094 = vmatprep.subr.bf16.mxu0 0
    %6095 = vmatpush2.bf16.msra.mxu0 0
    %6096 = vmatprep.subr.bf16.mxu0 0
    %6097 = vmatpush2.bf16.msra.mxu0 0
    %6098 = vmatprep.subr.bf16.mxu0 0
    %6099 = vmatpush2.bf16.msra.mxu0 0
    %6100 = vmatprep.mubr.bf16.mxu0 0
    %6101 = vmatmul.mubr.bf16.gmra.mxu0 %v5944
    %v6102 = vpop.f32.mrf.mxu0
    %v6103 = vadd.f32 0.0, %v6102
    %v6104 = vpop.f32.mrf.mxu0
    %v6105 = vadd.f32 0.0, %v6104
    %v6106 = vpop.f32.mrf.mxu0
    %v6107 = vpop.f32.mrf.mxu0
    %6108 = vdwg.mxu0
    %v6109 = vsel %vm973, %v5980, %v6062
    %v6110 = vsel %vm973, %v5982, %v6064
    %v6111 = vsel %vm973, %v6021, %v6103
    %v6112 = vsel %vm973, %v6023, %v6105
    %v6113 = vadd.f32 %v4176, %v6109
    %v6114 = vadd.f32 %v4177, %v6110
    %v6115 = vadd.f32 %v4178, %v6111
    %v6116 = vadd.f32 %v4179, %v6112
    %v6117 = vxor.u32 %v6113, 2147483648
    %v6118 = vxor.u32 %v6114, 2147483648
    %v6119 = vxor.u32 %v6115, 2147483648
    %v6120 = vmul.f32 %v6117, 1.442695
    %v6121 = vpow.pop %v6120
    %v6122 = vmul.f32 %v6118, 1.442695
    %v6123 = vpow.pop %v6122
    %v6124 = vmul.f32 %v6119, 1.442695
    %v6125 = vpow.pop %v6124
    %v6126 = vadd.f32 %v6121, 1.0
    %v6127 = vadd.f32 %v6123, 1.0
    %v6128 = vadd.f32 %v6125, 1.0
    %v6129 = vrcp.pop %v6126
    %v6130 = vmul.f32 1.0, %v6129
    %v6131 = vrcp.pop %v6127
    %v6132 = vmul.f32 1.0, %v6131
    %v6133 = vrcp.pop %v6128
    %v6134 = vmul.f32 1.0, %v6133
    %v6135 = vtanh.pop %v6116
    %v6136 = vmul.f32 %v6132, %v5941
    %v6137 = vmul.f32 %v6130, %v6135
    %v6138 = vadd.f32 %v6136, %v6137
    %v6139 = vtanh.pop %v6138
    %v6140 = vmul.f32 %v6134, %v6139
    %v6141 = vpack.c.bf16 %v6140, %v6140
    %6142 = vmatprep.subr.bf16.mxu0 %v4889
    %6143 = vmatpush1.bf16.msra.mxu0 %v4888
    %6144 = vmatprep.subr.bf16.mxu0 %v4881
    %6145 = vmatpush1.bf16.msra.mxu0 %v4880
    %6146 = vmatprep.subr.bf16.mxu0 %v4873
    %6147 = vmatpush1.bf16.msra.mxu0 %v4872
    %6148 = vmatprep.subr.bf16.mxu0 %v4865
    %6149 = vmatpush1.bf16.msra.mxu0 %v4864
    %6150 = vmatprep.subr.bf16.mxu0 %v4857
    %6151 = vmatpush1.bf16.msra.mxu0 %v4856
    %6152 = vmatprep.subr.bf16.mxu0 %v4849
    %6153 = vmatpush1.bf16.msra.mxu0 %v4848
    %6154 = vmatprep.subr.bf16.mxu0 %v4841
    %6155 = vmatpush1.bf16.msra.mxu0 %v4840
    %6156 = vmatprep.subr.bf16.mxu0 %v4833
    %6157 = vmatpush1.bf16.msra.mxu0 %v4832
    %6158 = vmatprep.subr.bf16.mxu0 0
    %6159 = vmatpush2.bf16.msra.mxu0 0
    %6160 = vmatprep.subr.bf16.mxu0 0
    %6161 = vmatpush2.bf16.msra.mxu0 0
    %6162 = vmatprep.subr.bf16.mxu0 0
    %6163 = vmatpush2.bf16.msra.mxu0 0
    %6164 = vmatprep.subr.bf16.mxu0 0
    %6165 = vmatpush2.bf16.msra.mxu0 0
    %6166 = vmatprep.subr.bf16.mxu0 0
    %6167 = vmatpush2.bf16.msra.mxu0 0
    %6168 = vmatprep.subr.bf16.mxu0 0
    %6169 = vmatpush2.bf16.msra.mxu0 0
    %6170 = vmatprep.subr.bf16.mxu0 0
    %6171 = vmatpush2.bf16.msra.mxu0 0
    %6172 = vmatprep.subr.bf16.mxu0 0
    %6173 = vmatpush2.bf16.msra.mxu0 0
    %6174 = vmatprep.mubr.bf16.mxu0 0
    %6175 = vmatmul.mubr.bf16.gmra.mxu0 %v6141
    %v6176 = vpop.f32.mrf.mxu0
    %v6177 = vadd.f32 0.0, %v6176
    %v6178 = vpop.f32.mrf.mxu0
    %v6179 = vadd.f32 0.0, %v6178
    %v6180 = vpop.f32.mrf.mxu0
    %v6181 = vpop.f32.mrf.mxu0
    %6182 = vdwg.mxu0
    %6183 = vmatprep.subr.bf16.mxu0 %v4891
    %6184 = vmatpush1.bf16.msra.mxu0 %v4890
    %6185 = vmatprep.subr.bf16.mxu0 %v4883
    %6186 = vmatpush1.bf16.msra.mxu0 %v4882
    %6187 = vmatprep.subr.bf16.mxu0 %v4875
    %6188 = vmatpush1.bf16.msra.mxu0 %v4874
    %6189 = vmatprep.subr.bf16.mxu0 %v4867
    %6190 = vmatpush1.bf16.msra.mxu0 %v4866
    %6191 = vmatprep.subr.bf16.mxu0 %v4859
    %6192 = vmatpush1.bf16.msra.mxu0 %v4858
    %6193 = vmatprep.subr.bf16.mxu0 %v4851
    %6194 = vmatpush1.bf16.msra.mxu0 %v4850
    %6195 = vmatprep.subr.bf16.mxu0 %v4843
    %6196 = vmatpush1.bf16.msra.mxu0 %v4842
    %6197 = vmatprep.subr.bf16.mxu0 %v4835
    %6198 = vmatpush1.bf16.msra.mxu0 %v4834
    %6199 = vmatprep.subr.bf16.mxu0 0
    %6200 = vmatpush2.bf16.msra.mxu0 0
    %6201 = vmatprep.subr.bf16.mxu0 0
    %6202 = vmatpush2.bf16.msra.mxu0 0
    %6203 = vmatprep.subr.bf16.mxu0 0
    %6204 = vmatpush2.bf16.msra.mxu0 0
    %6205 = vmatprep.subr.bf16.mxu0 0
    %6206 = vmatpush2.bf16.msra.mxu0 0
    %6207 = vmatprep.subr.bf16.mxu0 0
    %6208 = vmatpush2.bf16.msra.mxu0 0
    %6209 = vmatprep.subr.bf16.mxu0 0
    %6210 = vmatpush2.bf16.msra.mxu0 0
    %6211 = vmatprep.subr.bf16.mxu0 0
    %6212 = vmatpush2.bf16.msra.mxu0 0
    %6213 = vmatprep.subr.bf16.mxu0 0
    %6214 = vmatpush2.bf16.msra.mxu0 0
    %6215 = vmatprep.mubr.bf16.mxu0 0
    %6216 = vmatmul.mubr.bf16.gmra.mxu0 %v6141
    %v6217 = vpop.f32.mrf.mxu0
    %v6218 = vadd.f32 0.0, %v6217
    %v6219 = vpop.f32.mrf.mxu0
    %v6220 = vadd.f32 0.0, %v6219
    %v6221 = vpop.f32.mrf.mxu0
    %v6222 = vpop.f32.mrf.mxu0
    %6223 = vdwg.mxu0
    %6224 = vmatprep.subr.bf16.mxu0 %v4893
    %6225 = vmatpush1.bf16.msra.mxu0 %v4892
    %6226 = vmatprep.subr.bf16.mxu0 %v4885
    %6227 = vmatpush1.bf16.msra.mxu0 %v4884
    %6228 = vmatprep.subr.bf16.mxu0 %v4877
    %6229 = vmatpush1.bf16.msra.mxu0 %v4876
    %6230 = vmatprep.subr.bf16.mxu0 %v4869
    %6231 = vmatpush1.bf16.msra.mxu0 %v4868
    %6232 = vmatprep.subr.bf16.mxu0 %v4861
    %6233 = vmatpush1.bf16.msra.mxu0 %v4860
    %6234 = vmatprep.subr.bf16.mxu0 %v4853
    %6235 = vmatpush1.bf16.msra.mxu0 %v4852
    %6236 = vmatprep.subr.bf16.mxu0 %v4845
    %6237 = vmatpush1.bf16.msra.mxu0 %v4844
    %6238 = vmatprep.subr.bf16.mxu0 %v4837
    %6239 = vmatpush1.bf16.msra.mxu0 %v4836
    %6240 = vmatprep.subr.bf16.mxu0 0
    %6241 = vmatpush2.bf16.msra.mxu0 0
    %6242 = vmatprep.subr.bf16.mxu0 0
    %6243 = vmatpush2.bf16.msra.mxu0 0
    %6244 = vmatprep.subr.bf16.mxu0 0
    %6245 = vmatpush2.bf16.msra.mxu0 0
    %6246 = vmatprep.subr.bf16.mxu0 0
    %6247 = vmatpush2.bf16.msra.mxu0 0
    %6248 = vmatprep.subr.bf16.mxu0 0
    %6249 = vmatpush2.bf16.msra.mxu0 0
    %6250 = vmatprep.subr.bf16.mxu0 0
    %6251 = vmatpush2.bf16.msra.mxu0 0
    %6252 = vmatprep.subr.bf16.mxu0 0
    %6253 = vmatpush2.bf16.msra.mxu0 0
    %6254 = vmatprep.subr.bf16.mxu0 0
    %6255 = vmatpush2.bf16.msra.mxu0 0
    %6256 = vmatprep.mubr.bf16.mxu0 0
    %6257 = vmatmul.mubr.bf16.gmra.mxu0 %v6141
    %v6258 = vpop.f32.mrf.mxu0
    %v6259 = vadd.f32 0.0, %v6258
    %v6260 = vpop.f32.mrf.mxu0
    %v6261 = vadd.f32 0.0, %v6260
    %v6262 = vpop.f32.mrf.mxu0
    %v6263 = vpop.f32.mrf.mxu0
    %6264 = vdwg.mxu0
    %6265 = vmatprep.subr.bf16.mxu0 %v4895
    %6266 = vmatpush1.bf16.msra.mxu0 %v4894
    %6267 = vmatprep.subr.bf16.mxu0 %v4887
    %6268 = vmatpush1.bf16.msra.mxu0 %v4886
    %6269 = vmatprep.subr.bf16.mxu0 %v4879
    %6270 = vmatpush1.bf16.msra.mxu0 %v4878
    %6271 = vmatprep.subr.bf16.mxu0 %v4871
    %6272 = vmatpush1.bf16.msra.mxu0 %v4870
    %6273 = vmatprep.subr.bf16.mxu0 %v4863
    %6274 = vmatpush1.bf16.msra.mxu0 %v4862
    %6275 = vmatprep.subr.bf16.mxu0 %v4855
    %6276 = vmatpush1.bf16.msra.mxu0 %v4854
    %6277 = vmatprep.subr.bf16.mxu0 %v4847
    %6278 = vmatpush1.bf16.msra.mxu0 %v4846
    %6279 = vmatprep.subr.bf16.mxu0 %v4839
    %6280 = vmatpush1.bf16.msra.mxu0 %v4838
    %6281 = vmatprep.subr.bf16.mxu0 0
    %6282 = vmatpush2.bf16.msra.mxu0 0
    %6283 = vmatprep.subr.bf16.mxu0 0
    %6284 = vmatpush2.bf16.msra.mxu0 0
    %6285 = vmatprep.subr.bf16.mxu0 0
    %6286 = vmatpush2.bf16.msra.mxu0 0
    %6287 = vmatprep.subr.bf16.mxu0 0
    %6288 = vmatpush2.bf16.msra.mxu0 0
    %6289 = vmatprep.subr.bf16.mxu0 0
    %6290 = vmatpush2.bf16.msra.mxu0 0
    %6291 = vmatprep.subr.bf16.mxu0 0
    %6292 = vmatpush2.bf16.msra.mxu0 0
    %6293 = vmatprep.subr.bf16.mxu0 0
    %6294 = vmatpush2.bf16.msra.mxu0 0
    %6295 = vmatprep.subr.bf16.mxu0 0
    %6296 = vmatpush2.bf16.msra.mxu0 0
    %6297 = vmatprep.mubr.bf16.mxu0 0
    %6298 = vmatmul.mubr.bf16.gmra.mxu0 %v6141
    %v6299 = vpop.f32.mrf.mxu0
    %v6300 = vadd.f32 0.0, %v6299
    %v6301 = vpop.f32.mrf.mxu0
    %v6302 = vadd.f32 0.0, %v6301
    %v6303 = vpop.f32.mrf.mxu0
    %v6304 = vpop.f32.mrf.mxu0
    %6305 = vdwg.mxu0
    %v6306 = vsel %vm973, %v6177, %v6259
    %v6307 = vsel %vm973, %v6179, %v6261
    %v6308 = vsel %vm973, %v6218, %v6300
    %v6309 = vsel %vm973, %v6220, %v6302
    %v6310 = vadd.f32 %v4543, %v6306
    %v6311 = vadd.f32 %v4544, %v6307
    %v6312 = vadd.f32 %v4545, %v6308
    %v6313 = vadd.f32 %v4546, %v6309
    %v6314 = vxor.u32 %v6310, 2147483648
    %v6315 = vxor.u32 %v6311, 2147483648
    %v6316 = vxor.u32 %v6312, 2147483648
    %v6317 = vmul.f32 %v6314, 1.442695
    %v6318 = vpow.pop %v6317
    %v6319 = vmul.f32 %v6315, 1.442695
    %v6320 = vpow.pop %v6319
    %v6321 = vmul.f32 %v6316, 1.442695
    %v6322 = vpow.pop %v6321
    %v6323 = vadd.f32 %v6318, 1.0
    %v6324 = vadd.f32 %v6320, 1.0
    %v6325 = vadd.f32 %v6322, 1.0
    %v6326 = vrcp.pop %v6323
    %v6327 = vmul.f32 1.0, %v6326
    %v6328 = vrcp.pop %v6324
    %v6329 = vmul.f32 1.0, %v6328
    %v6330 = vrcp.pop %v6325
    %v6331 = vmul.f32 1.0, %v6330
    %v6332 = vtanh.pop %v6313
    %v6333 = vmul.f32 %v6329, %v6138
    %v6334 = vmul.f32 %v6327, %v6332
    %v6335 = vadd.f32 %v6333, %v6334
    %v6336 = vtanh.pop %v6335
    %v6337 = vmul.f32 %v6331, %v6336
    %s6338 = sld [smem:[#allocation16]]
    %v6339 = vstv %s6338
    %v6340 = vmul.f32 %v6339, %v4376
    %s6341 = sld [smem:[#allocation16 + $0x1]]
    %v6342 = vstv %s6341
    %v6343 = vmul.f32 %v6342, %v6337
    %v6344 = vadd.f32 %v6340, %v6343
    %6345 = vst [vmem:[#allocation17] sm:$0x3] %v6344
    // Predicated region
    $region70: #{tpu_custom_call.1} parent=1 // pred_check
      _
    $region71: #{tpu_custom_call.1} parent=1 // pred_check_branch
      %6347 = sbr.rel (0) target = $region73
    $region72: #{tpu_custom_call.1} parent=1 // pred_region
      %s6349 = ssub.s32 32, 32
      %6350 = vsyncadd [#allocation6], %s6349
      %s6352 = sshll.u32 [#allocation17], 4
      %s6353 = int_to_ptr.vmem [resolvable:$true] %s6352
      %6355 = dma.vmem_to_hbm [thread:$0]  %s6353, 32, %s10, [#allocation6]
    $region73: #{tpu_custom_call.1} parent=1 // pred_fallthru
      _
    // Predicated region
    $region74: #{tpu_custom_call.1} parent=1 // pred_check
      _
    $region75: #{tpu_custom_call.1} parent=1 // pred_check_branch
      %6357 = sbr.rel (0) target = $region77
    $region76: #{tpu_custom_call.1} parent=1 // pred_region
      %6358 = dma.done [#allocation6], 32
    $region77: #{tpu_custom_call.1} parent=1 // pred_fallthru
      _
    %6359 = vsyncpa [#allocation5], 1
    %6360 = vsyncpa [#allocation9], 1
    %6361 = vsyncpa [#allocation12], 1
    %6362 = vsyncpa [#allocation15], 1
    %6363 = vsyncpa [#allocation6], 1
    %6364 = vsyncpa [#allocation7], 1
  %6365 = vsyncmov [#allocation3]
  %s6366 = vpop.sfrf %6365
  %p6367 = scmp.eq.s32.totalorder %s6366, 0
  %p6368 = pneg %p6367
  %6370 = shalt.err (%p6368)

</llo_original>
